<compile_context>
chip_gen: v6e
topology: v6e:2x2x1
jax: 0.10.0
libtpu: 0.0.40
codegen_flags: <defaults>
</compile_context>

<pallas_src>
import jax
import jax.numpy as jnp
from jax.experimental import pallas as pl
from jax.experimental.pallas import tpu as pltpu

LANES = 128


def _round_up(n, m):
    return (n + m - 1) // m * m


# ---------------------------------------------------------------------------
# Pallas kernels
# ---------------------------------------------------------------------------
def _conv_relu_pool_kernel(cols_ref, w_ref, b_ref, o_ref):
    """Fused conv + bias + ReLU + 2x2 max-pool for a block of Bt images.

    cols_ref: (Bt, 4, Mp, K) bf16  pooled im2col (branch = 2x2 window position)
    w_ref   : (K, 128)       bf16  conv weights, rows in (ky, kx, ci) order
    b_ref   : (1, 128)       f32   bias, lane padded
    o_ref   : (Bt, Mp, 128)  bf16  pooled activation, lane dense
    """
    Bt, _four, Mp, K = cols_ref.shape
    # ONE tall MXU matmul for all images and all four pool positions.
    cols = cols_ref[...].reshape(Bt * 4 * Mp, K)
    acc = jnp.dot(cols, w_ref[...], preferred_element_type=jnp.float32)
    acc = acc.reshape(Bt, 4, Mp, LANES)
    # Max the raw accumulators first, then bias + ReLU once (shared bias +
    # monotonic ReLU -> identical result, 1/4 of the VPU epilogue work).
    pooled = jnp.maximum(jnp.maximum(acc[:, 0], acc[:, 1]),
                         jnp.maximum(acc[:, 2], acc[:, 3]))
    pooled = jnp.maximum(pooled + b_ref[...], 0.0)        # f32 epilogue
    o_ref[...] = pooled.astype(o_ref.dtype)               # bf16 store


def _fc_tail_kernel(x_ref, w1_ref, b1_ref, w2_ref, b2_ref, w3_ref, b3_ref,
                    o_ref):
    """fc1+ReLU+fc2+ReLU+fc3; intermediates never leave VMEM/vregs."""
    h = jnp.dot(x_ref[...], w1_ref[...], preferred_element_type=jnp.float32)
    h = jnp.maximum(h + b1_ref[...], 0.0)
    h = jnp.dot(h.astype(jnp.bfloat16), w2_ref[...],
                preferred_element_type=jnp.float32)
    h = jnp.maximum(h + b2_ref[...], 0.0)
    h = jnp.dot(h.astype(jnp.bfloat16), w3_ref[...],
                preferred_element_type=jnp.float32)
    o_ref[...] = (h + b3_ref[...]).astype(o_ref.dtype)


# ---------------------------------------------------------------------------
# Pallas-backed ops
# ---------------------------------------------------------------------------
def _pick_batch_tile(B, per_img_bytes, budget_bytes=4 * 1024 * 1024):
    """Images per grid step: whole batch when small, VMEM-bounded otherwise."""
    cap = max(1, budget_bytes // per_img_bytes)
    if B <= cap:
        return B                              # one step; work is overhead-bound
    # large batch: keep >=2 comparably sized steps (v7x megacore), bound VMEM
    return max(1, min(cap, pl.cdiv(B, 2)))


def conv_relu_pool_pallas(x_nhwc, wmat, bias, *, kh, kw, pad):
    """Conv2d(stride=1) + bias + ReLU + 2x2 max-pool (floor), one pallas_call.

    x_nhwc: (B, H, W, C) activation (C may already be the 128-padded channels).
    wmat  : (kh*kw*C, 128) bf16, rows in (ky, kx, ci) order, lane padded.
    bias  : (1, 128) f32, lane padded.
    Returns ((B, Mp, 128) bf16 pooled activation, (Hp, Wp, M)).
    """
    B, H, W, C = x_nhwc.shape
    if pad:
        x_nhwc = jnp.pad(x_nhwc, ((0, 0), (pad, pad), (pad, pad), (0, 0)))
    Hq, Wq = H + 2 * pad, W + 2 * pad
    Ho, Wo = Hq - kh + 1, Wq - kw + 1
    Hp, Wp = Ho // 2, Wo // 2                 # floor mode, like F.max_pool2d
    He, We = 2 * Hp, 2 * Wp                   # even part of conv output used
    K = kh * kw * C
    M = Hp * Wp
    Mp = _round_up(M, 8)                      # sublane-aligned row count

    # Build ONE pooled-im2col array (B, 4, Mp, K): unstrided shifted slabs,
    # then split the 2x2 pooling window off via reshape/transpose.
    slabs = [x_nhwc[:, ky:ky + He, kx:kx + We, :]
             for ky in range(kh) for kx in range(kw)]
    cols = jnp.concatenate(slabs, axis=-1)                  # (B, He, We, K)
    cols = cols.reshape(B, Hp, 2, Wp, 2, K).transpose(0, 2, 4, 1, 3, 5)
    cols = cols.reshape(B, 4, M, K)
    if Mp != M:
        cols = jnp.pad(cols, ((0, 0), (0, 0), (0, Mp - M), (0, 0)))
    cols = cols.astype(jnp.bfloat16)

    per_img = 4 * Mp * K * 2 + 4 * Mp * LANES * 4 + Mp * LANES * 2
    Bt = _pick_batch_tile(B, per_img)
    grid = (pl.cdiv(B, Bt),)

    flops = 2 * B * 4 * Mp * K * LANES
    bytes_acc = (B * 4 * Mp * K * 2 + K * LANES * 2 + LANES * 4
                 + B * Mp * LANES * 2)

    out = pl.pallas_call(
        _conv_relu_pool_kernel,
        out_shape=jax.ShapeDtypeStruct((B, Mp, LANES), jnp.bfloat16),
        grid=grid,
        in_specs=[
            pl.BlockSpec((Bt, 4, Mp, K), lambda i: (i, 0, 0, 0)),
            pl.BlockSpec((K, LANES), lambda i: (0, 0)),
            pl.BlockSpec((1, LANES), lambda i: (0, 0)),
        ],
        out_specs=pl.BlockSpec((Bt, Mp, LANES), lambda i: (i, 0, 0)),
        compiler_params=pltpu.CompilerParams(
            dimension_semantics=("parallel",)),
        cost_estimate=pl.CostEstimate(flops=flops, transcendentals=0,
                                      bytes_accessed=bytes_acc),
    )(cols, wmat, bias)
    return out, (Hp, Wp, M)


def fc_tail_pallas(x_bf16, w1, b1, w2, b2, w3, b3, *, n_out):
    """Fused fc1+ReLU+fc2+ReLU+fc3. x_bf16: (B, K) bf16; weights pre-padded."""
    B, K = x_bf16.shape
    N = LANES
    Bt = B if B <= 512 else 512               # bounded block for v7x 64MiB VMEM
    grid = (pl.cdiv(B, Bt),)

    flops = 2 * B * (K * N + N * N + N * N)
    bytes_acc = (B * K * 2 + (w1.size + w2.size + w3.size) * 2
                 + 3 * N * 4 + B * N * 4)

    out = pl.pallas_call(
        _fc_tail_kernel,
        out_shape=jax.ShapeDtypeStruct((B, N), jnp.float32),
        grid=grid,
        in_specs=[pl.BlockSpec((Bt, K), lambda i: (i, 0)),
                  pl.BlockSpec((K, N), lambda i: (0, 0)),
                  pl.BlockSpec((1, N), lambda i: (0, 0)),
                  pl.BlockSpec((N, N), lambda i: (0, 0)),
                  pl.BlockSpec((1, N), lambda i: (0, 0)),
                  pl.BlockSpec((N, N), lambda i: (0, 0)),
                  pl.BlockSpec((1, N), lambda i: (0, 0))],
        out_specs=pl.BlockSpec((Bt, N), lambda i: (i, 0)),
        compiler_params=pltpu.CompilerParams(
            dimension_semantics=("parallel",)),
        cost_estimate=pl.CostEstimate(flops=flops, transcendentals=0,
                                      bytes_accessed=bytes_acc),
    )(x_bf16, w1, b1, w2, b2, w3, b3)
    return out[:, :n_out]


# ---------------------------------------------------------------------------
# Parameter preparation (done ONCE, outside the jitted forward)
# ---------------------------------------------------------------------------
def prepare_params(p):
    CP = LANES

    # conv1: OIHW (6,1,3,3) -> (ky,kx,ci,co) -> (9,6) -> lane pad to (9,128)
    cw1 = p["w1"].transpose(2, 3, 1, 0).reshape(3 * 3 * 1, 6)
    cw1 = jnp.zeros((3 * 3 * 1, CP), jnp.float32).at[:, :6].set(cw1)
    cb1 = jnp.zeros((1, CP), jnp.float32).at[0, :6].set(p["b1"])

    # conv2 consumes the 128-padded conv1 activation: rows = (ky, kx, ci<128)
    w2t = p["w2"].transpose(2, 3, 1, 0)                       # (5,5,6,16)
    cw2 = jnp.zeros((5, 5, CP, 16), jnp.float32).at[:, :, :6, :].set(w2t)
    cw2 = cw2.reshape(5 * 5 * CP, 16)
    cw2 = jnp.zeros((5 * 5 * CP, CP), jnp.float32).at[:, :16].set(cw2)
    cb2 = jnp.zeros((1, CP), jnp.float32).at[0, :16].set(p["b2"])

    # fc1 expects the PyTorch NCHW (c,h,w) flatten; our features arrive as the
    # padded (Mp2=32 rows of h*5+w, 128 lanes of c) layout -> remap/pad once.
    Mp2 = _round_up(5 * 5, 8)                                 # 32
    f1 = (p["wf1"].reshape(120, 16, 5, 5).transpose(0, 2, 3, 1)
          .reshape(120, 25, 16))                              # [out, h*5+w, c]
    fw1 = jnp.zeros((120, Mp2, CP), jnp.float32).at[:, :25, :16].set(f1)
    fw1 = fw1.reshape(120, Mp2 * CP).T                        # (4096, 120)
    fw1 = jnp.zeros((Mp2 * CP, CP), jnp.float32).at[:, :120].set(fw1)
    fb1 = jnp.zeros((1, CP), jnp.float32).at[0, :120].set(p["bf1"])

    fw2 = jnp.zeros((CP, CP), jnp.float32).at[:120, :84].set(p["wf2"].T)
    fb2 = jnp.zeros((1, CP), jnp.float32).at[0, :84].set(p["bf2"])
    fw3 = jnp.zeros((CP, CP), jnp.float32).at[:84, :10].set(p["wf3"].T)
    fb3 = jnp.zeros((1, CP), jnp.float32).at[0, :10].set(p["bf3"])

    bf = jnp.bfloat16
    return {"cw1": cw1.astype(bf), "cb1": cb1,
            "cw2": cw2.astype(bf), "cb2": cb2,
            "fw1": fw1.astype(bf), "fb1": fb1,
            "fw2": fw2.astype(bf), "fb2": fb2,
            "fw3": fw3.astype(bf), "fb3": fb3}


# ---------------------------------------------------------------------------
# Net forward (matches the PyTorch module)
# ---------------------------------------------------------------------------
def net_forward(x, q):
    B = x.shape[0]
    x = x.transpose(0, 2, 3, 1)                                  # NCHW -> NHWC
    y, (h1, w1, m1) = conv_relu_pool_pallas(x, q["cw1"], q["cb1"],
                                            kh=3, kw=3, pad=2)   # (B,232,128)
    y = y[:, :m1, :].reshape(B, h1, w1, LANES)                   # (B,15,15,128)
    y, _ = conv_relu_pool_pallas(y, q["cw2"], q["cb2"],
                                 kh=5, kw=5, pad=0)              # (B,32,128)
    y = y.reshape(B, -1)                                         # (B,4096) free
    return fc_tail_pallas(y, q["fw1"], q["fb1"], q["fw2"], q["fb2"],
                          q["fw3"], q["fb3"], n_out=10)          # (B,10)


def ref_forward(x, p):
    """Pure-JAX f32 reference (PyTorch semantics, NCHW) for correctness."""
    def conv(x, w, b, pad):
        y = jax.lax.conv_general_dilated(
            x, w, (1, 1), [(pad, pad), (pad, pad)],
            dimension_numbers=("NCHW", "OIHW", "NCHW"))
        return jax.nn.relu(y + b[None, :, None, None])

    def pool(y):
        return jax.lax.reduce_window(y, -jnp.inf, jax.lax.max,
                                     (1, 1, 2, 2), (1, 1, 2, 2), "VALID")

    y = pool(conv(x, p["w1"], p["b1"], 2))
    y = pool(conv(y, p["w2"], p["b2"], 0))
    y = y.reshape(y.shape[0], -1)
    y = jax.nn.relu(y @ p["wf1"].T + p["bf1"])
    y = jax.nn.relu(y @ p["wf2"].T + p["bf2"])
    return y @ p["wf3"].T + p["bf3"]


def init_params(key):
    ks = jax.random.split(key, 10)

    def u(k, shape, fan_in):
        bound = 1.0 / jnp.sqrt(fan_in)
        return jax.random.uniform(k, shape, jnp.float32, -bound, bound)

    return {
        "w1": u(ks[0], (6, 1, 3, 3), 1 * 3 * 3),
        "b1": u(ks[1], (6,), 1 * 3 * 3),
        "w2": u(ks[2], (16, 6, 5, 5), 6 * 5 * 5),
        "b2": u(ks[3], (16,), 6 * 5 * 5),
        "wf1": u(ks[4], (120, 400), 400),
        "bf1": u(ks[5], (120,), 400),
        "wf2": u(ks[6], (84, 120), 120),
        "bf2": u(ks[7], (84,), 120),
        "wf3": u(ks[8], (10, 84), 84),
        "bf3": u(ks[9], (10,), 84),
    }


if __name__ == "__main__":
    key = jax.random.PRNGKey(0)
    kx, kp = jax.random.split(key)
    # MNIST-like input: batch=2, NCHW (1 channel, 28x28) so the flatten yields
    # 16*5*5 = 400 features, matching fc1.
    x = jax.random.normal(kx, (2, 1, 28, 28), jnp.float32)
    params = init_params(kp)
    prepared = prepare_params(params)          # weight pad/remap, done once

    out = jax.jit(net_forward)(x, prepared)
    out = jax.block_until_ready(out)
    assert out.shape == (2, 10), out.shape

    ref = jax.block_until_ready(ref_forward(x, params))
    max_err = float(jnp.max(jnp.abs(out - ref)))
    # bf16 MXU operands -> ~1% relative error budget through 5 layers
    assert max_err < 5e-2, f"mismatch vs reference: max abs err = {max_err}"

    print("KERNEL_OK")
</pallas_src>

<mosaic_0001>
module attributes {stable_mosaic.version = 11 : i64} {
  func.func @_conv_relu_pool_kernel(%arg0: i32, %arg1: memref<2x4x232x9xbf16, #tpu.memory_space<vmem>>, %arg2: memref<9x128xbf16, #tpu.memory_space<vmem>>, %arg3: memref<1x128xf32, #tpu.memory_space<vmem>>, %arg4: memref<2x232x128xbf16, #tpu.memory_space<vmem>>) attributes {dimension_semantics = [#tpu.dimension_semantics<parallel>], iteration_bounds = array<i64: 1>, scalar_prefetch = 0 : i64, scratch_operands = 0 : i64, tpu.core_type = #tpu.core_type<tc>, window_params = [{transform_indices = @transform_0, window_bounds = array<i64: 2, 4, 232, 9>}, {pipeline_mode = #tpu.pipeline_mode<synchronous>, transform_indices = @transform_1, window_bounds = array<i64: 9, 128>}, {pipeline_mode = #tpu.pipeline_mode<synchronous>, transform_indices = @transform_2, window_bounds = array<i64: 1, 128>}, {transform_indices = @transform_3, window_bounds = array<i64: 2, 232, 128>}]} {
    %c0 = arith.constant 0 : index
    %c0_0 = arith.constant 0 : index
    %c0_1 = arith.constant 0 : index
    %c0_2 = arith.constant 0 : index
    %0 = vector.load %arg1[%c0, %c0_0, %c0_1, %c0_2] : memref<2x4x232x9xbf16, #tpu.memory_space<vmem>>, vector<2x4x232x9xbf16>
    %1 = vector.shape_cast %0 : vector<2x4x232x9xbf16> to vector<1856x9xbf16>
    %c0_3 = arith.constant 0 : index
    %c0_4 = arith.constant 0 : index
    %2 = vector.load %arg2[%c0_3, %c0_4] : memref<9x128xbf16, #tpu.memory_space<vmem>>, vector<9x128xbf16>
    %cst = arith.constant dense<0.000000e+00> : vector<1856x128xf32>
    %3 = tpu.matmul %1, %2, %cst {dimension_numbers = #tpu.dot_dimension_numbers<[1], [0], [0], [1], [0, 0, 1, 1], [], []>} : vector<1856x9xbf16>, vector<9x128xbf16>, vector<1856x128xf32> -> vector<1856x128xf32>
    %4 = vector.shape_cast %3 : vector<1856x128xf32> to vector<2x4x232x128xf32>
    %5 = vector.extract_strided_slice %4 {offsets = [0, 0, 0, 0], sizes = [2, 1, 232, 128], strides = [1, 1, 1, 1]} : vector<2x4x232x128xf32> to vector<2x1x232x128xf32>
    %6 = vector.shape_cast %5 : vector<2x1x232x128xf32> to vector<2x232x128xf32>
    %7 = vector.extract_strided_slice %4 {offsets = [0, 1, 0, 0], sizes = [2, 1, 232, 128], strides = [1, 1, 1, 1]} : vector<2x4x232x128xf32> to vector<2x1x232x128xf32>
    %8 = vector.shape_cast %7 : vector<2x1x232x128xf32> to vector<2x232x128xf32>
    %9 = arith.maximumf %6, %8 : vector<2x232x128xf32>
    %10 = vector.extract_strided_slice %4 {offsets = [0, 2, 0, 0], sizes = [2, 1, 232, 128], strides = [1, 1, 1, 1]} : vector<2x4x232x128xf32> to vector<2x1x232x128xf32>
    %11 = vector.shape_cast %10 : vector<2x1x232x128xf32> to vector<2x232x128xf32>
    %12 = vector.extract_strided_slice %4 {offsets = [0, 3, 0, 0], sizes = [2, 1, 232, 128], strides = [1, 1, 1, 1]} : vector<2x4x232x128xf32> to vector<2x1x232x128xf32>
    %13 = vector.shape_cast %12 : vector<2x1x232x128xf32> to vector<2x232x128xf32>
    %14 = arith.maximumf %11, %13 : vector<2x232x128xf32>
    %15 = arith.maximumf %9, %14 : vector<2x232x128xf32>
    %c0_5 = arith.constant 0 : index
    %c0_6 = arith.constant 0 : index
    %16 = vector.load %arg3[%c0_5, %c0_6] : memref<1x128xf32, #tpu.memory_space<vmem>>, vector<1x128xf32>
    %17 = vector.shape_cast %16 : vector<1x128xf32> to vector<1x1x128xf32>
    %18 = vector.broadcast %17 : vector<1x1x128xf32> to vector<2x232x128xf32>
    %19 = arith.addf %15, %18 : vector<2x232x128xf32>
    %cst_7 = arith.constant 0.000000e+00 : f32
    %20 = vector.broadcast %cst_7 : f32 to vector<2x232x128xf32>
    %21 = arith.maximumf %19, %20 : vector<2x232x128xf32>
    %22 = arith.truncf %21 : vector<2x232x128xf32> to vector<2x232x128xbf16>
    %c0_8 = arith.constant 0 : index
    %c0_9 = arith.constant 0 : index
    %c0_10 = arith.constant 0 : index
    %23 = vector.load %arg4[%c0_8, %c0_9, %c0_10] : memref<2x232x128xbf16, #tpu.memory_space<vmem>>, vector<2x232x128xbf16>
    tpu.vector_store %arg4[%c0_8, %c0_9, %c0_10], %22 {strides = array<i32>} : memref<2x232x128xbf16, #tpu.memory_space<vmem>>, vector<2x232x128xbf16>,
    return
  }
  func.func @transform_0(%arg0: i32) -> (i32, i32, i32, i32) {
    %c0_i32 = arith.constant 0 : i32
    %c0_i32_0 = arith.constant 0 : i32
    %c0_i32_1 = arith.constant 0 : i32
    %c0_i32_2 = arith.constant 0 : i32
    return %arg0, %c0_i32, %c0_i32_0, %c0_i32_1 : i32, i32, i32, i32
  }
  func.func @transform_1(%arg0: i32) -> (i32, i32) {
    %c0_i32 = arith.constant 0 : i32
    %c0_i32_0 = arith.constant 0 : i32
    %c0_i32_1 = arith.constant 0 : i32
    return %c0_i32, %c0_i32_0 : i32, i32
  }
  func.func @transform_2(%arg0: i32) -> (i32, i32) {
    %c0_i32 = arith.constant 0 : i32
    %c0_i32_0 = arith.constant 0 : i32
    %c0_i32_1 = arith.constant 0 : i32
    return %c0_i32, %c0_i32_0 : i32, i32
  }
  func.func @transform_3(%arg0: i32) -> (i32, i32, i32) {
    %c0_i32 = arith.constant 0 : i32
    %c0_i32_0 = arith.constant 0 : i32
    %c0_i32_1 = arith.constant 0 : i32
    return %arg0, %c0_i32, %c0_i32_0 : i32, i32, i32
  }
}

module attributes {stable_mosaic.version = 11 : i64} {
  func.func @_conv_relu_pool_kernel(%arg0: i32, %arg1: memref<2x4x32x3200xbf16, #tpu.memory_space<vmem>>, %arg2: memref<3200x128xbf16, #tpu.memory_space<vmem>>, %arg3: memref<1x128xf32, #tpu.memory_space<vmem>>, %arg4: memref<2x32x128xbf16, #tpu.memory_space<vmem>>) attributes {dimension_semantics = [#tpu.dimension_semantics<parallel>], iteration_bounds = array<i64: 1>, scalar_prefetch = 0 : i64, scratch_operands = 0 : i64, tpu.core_type = #tpu.core_type<tc>, window_params = [{transform_indices = @transform_0, window_bounds = array<i64: 2, 4, 32, 3200>}, {pipeline_mode = #tpu.pipeline_mode<synchronous>, transform_indices = @transform_1, window_bounds = array<i64: 3200, 128>}, {pipeline_mode = #tpu.pipeline_mode<synchronous>, transform_indices = @transform_2, window_bounds = array<i64: 1, 128>}, {transform_indices = @transform_3, window_bounds = array<i64: 2, 32, 128>}]} {
    %c0 = arith.constant 0 : index
    %c0_0 = arith.constant 0 : index
    %c0_1 = arith.constant 0 : index
    %c0_2 = arith.constant 0 : index
    %0 = vector.load %arg1[%c0, %c0_0, %c0_1, %c0_2] : memref<2x4x32x3200xbf16, #tpu.memory_space<vmem>>, vector<2x4x32x3200xbf16>
    %1 = vector.shape_cast %0 : vector<2x4x32x3200xbf16> to vector<256x3200xbf16>
    %c0_3 = arith.constant 0 : index
    %c0_4 = arith.constant 0 : index
    %2 = vector.load %arg2[%c0_3, %c0_4] : memref<3200x128xbf16, #tpu.memory_space<vmem>>, vector<3200x128xbf16>
    %cst = arith.constant dense<0.000000e+00> : vector<256x128xf32>
    %3 = tpu.matmul %1, %2, %cst {dimension_numbers = #tpu.dot_dimension_numbers<[1], [0], [0], [1], [0, 0, 1, 1], [], []>} : vector<256x3200xbf16>, vector<3200x128xbf16>, vector<256x128xf32> -> vector<256x128xf32>
    %4 = vector.shape_cast %3 : vector<256x128xf32> to vector<2x4x32x128xf32>
    %5 = vector.extract_strided_slice %4 {offsets = [0, 0, 0, 0], sizes = [2, 1, 32, 128], strides = [1, 1, 1, 1]} : vector<2x4x32x128xf32> to vector<2x1x32x128xf32>
    %6 = vector.shape_cast %5 : vector<2x1x32x128xf32> to vector<2x32x128xf32>
    %7 = vector.extract_strided_slice %4 {offsets = [0, 1, 0, 0], sizes = [2, 1, 32, 128], strides = [1, 1, 1, 1]} : vector<2x4x32x128xf32> to vector<2x1x32x128xf32>
    %8 = vector.shape_cast %7 : vector<2x1x32x128xf32> to vector<2x32x128xf32>
    %9 = arith.maximumf %6, %8 : vector<2x32x128xf32>
    %10 = vector.extract_strided_slice %4 {offsets = [0, 2, 0, 0], sizes = [2, 1, 32, 128], strides = [1, 1, 1, 1]} : vector<2x4x32x128xf32> to vector<2x1x32x128xf32>
    %11 = vector.shape_cast %10 : vector<2x1x32x128xf32> to vector<2x32x128xf32>
    %12 = vector.extract_strided_slice %4 {offsets = [0, 3, 0, 0], sizes = [2, 1, 32, 128], strides = [1, 1, 1, 1]} : vector<2x4x32x128xf32> to vector<2x1x32x128xf32>
    %13 = vector.shape_cast %12 : vector<2x1x32x128xf32> to vector<2x32x128xf32>
    %14 = arith.maximumf %11, %13 : vector<2x32x128xf32>
    %15 = arith.maximumf %9, %14 : vector<2x32x128xf32>
    %c0_5 = arith.constant 0 : index
    %c0_6 = arith.constant 0 : index
    %16 = vector.load %arg3[%c0_5, %c0_6] : memref<1x128xf32, #tpu.memory_space<vmem>>, vector<1x128xf32>
    %17 = vector.shape_cast %16 : vector<1x128xf32> to vector<1x1x128xf32>
    %18 = vector.broadcast %17 : vector<1x1x128xf32> to vector<2x32x128xf32>
    %19 = arith.addf %15, %18 : vector<2x32x128xf32>
    %cst_7 = arith.constant 0.000000e+00 : f32
    %20 = vector.broadcast %cst_7 : f32 to vector<2x32x128xf32>
    %21 = arith.maximumf %19, %20 : vector<2x32x128xf32>
    %22 = arith.truncf %21 : vector<2x32x128xf32> to vector<2x32x128xbf16>
    %c0_8 = arith.constant 0 : index
    %c0_9 = arith.constant 0 : index
    %c0_10 = arith.constant 0 : index
    %23 = vector.load %arg4[%c0_8, %c0_9, %c0_10] : memref<2x32x128xbf16, #tpu.memory_space<vmem>>, vector<2x32x128xbf16>
    tpu.vector_store %arg4[%c0_8, %c0_9, %c0_10], %22 {strides = array<i32>} : memref<2x32x128xbf16, #tpu.memory_space<vmem>>, vector<2x32x128xbf16>,
    return
  }
  func.func @transform_0(%arg0: i32) -> (i32, i32, i32, i32) {
    %c0_i32 = arith.constant 0 : i32
    %c0_i32_0 = arith.constant 0 : i32
    %c0_i32_1 = arith.constant 0 : i32
    %c0_i32_2 = arith.constant 0 : i32
    return %arg0, %c0_i32, %c0_i32_0, %c0_i32_1 : i32, i32, i32, i32
  }
  func.func @transform_1(%arg0: i32) -> (i32, i32) {
    %c0_i32 = arith.constant 0 : i32
    %c0_i32_0 = arith.constant 0 : i32
    %c0_i32_1 = arith.constant 0 : i32
    return %c0_i32, %c0_i32_0 : i32, i32
  }
  func.func @transform_2(%arg0: i32) -> (i32, i32) {
    %c0_i32 = arith.constant 0 : i32
    %c0_i32_0 = arith.constant 0 : i32
    %c0_i32_1 = arith.constant 0 : i32
    return %c0_i32, %c0_i32_0 : i32, i32
  }
  func.func @transform_3(%arg0: i32) -> (i32, i32, i32) {
    %c0_i32 = arith.constant 0 : i32
    %c0_i32_0 = arith.constant 0 : i32
    %c0_i32_1 = arith.constant 0 : i32
    return %arg0, %c0_i32, %c0_i32_0 : i32, i32, i32
  }
}

module attributes {stable_mosaic.version = 11 : i64} {
  func.func @_fc_tail_kernel(%arg0: i32, %arg1: memref<2x4096xbf16, #tpu.memory_space<vmem>>, %arg2: memref<4096x128xbf16, #tpu.memory_space<vmem>>, %arg3: memref<1x128xf32, #tpu.memory_space<vmem>>, %arg4: memref<128x128xbf16, #tpu.memory_space<vmem>>, %arg5: memref<1x128xf32, #tpu.memory_space<vmem>>, %arg6: memref<128x128xbf16, #tpu.memory_space<vmem>>, %arg7: memref<1x128xf32, #tpu.memory_space<vmem>>, %arg8: memref<2x128xf32, #tpu.memory_space<vmem>>) attributes {dimension_semantics = [#tpu.dimension_semantics<parallel>], iteration_bounds = array<i64: 1>, scalar_prefetch = 0 : i64, scratch_operands = 0 : i64, tpu.core_type = #tpu.core_type<tc>, window_params = [{transform_indices = @transform_0, window_bounds = array<i64: 2, 4096>}, {pipeline_mode = #tpu.pipeline_mode<synchronous>, transform_indices = @transform_1, window_bounds = array<i64: 4096, 128>}, {pipeline_mode = #tpu.pipeline_mode<synchronous>, transform_indices = @transform_2, window_bounds = array<i64: 1, 128>}, {pipeline_mode = #tpu.pipeline_mode<synchronous>, transform_indices = @transform_3, window_bounds = array<i64: 128, 128>}, {pipeline_mode = #tpu.pipeline_mode<synchronous>, transform_indices = @transform_4, window_bounds = array<i64: 1, 128>}, {pipeline_mode = #tpu.pipeline_mode<synchronous>, transform_indices = @transform_5, window_bounds = array<i64: 128, 128>}, {pipeline_mode = #tpu.pipeline_mode<synchronous>, transform_indices = @transform_6, window_bounds = array<i64: 1, 128>}, {transform_indices = @transform_7, window_bounds = array<i64: 2, 128>}]} {
    %c0 = arith.constant 0 : index
    %c0_0 = arith.constant 0 : index
    %0 = vector.load %arg1[%c0, %c0_0] : memref<2x4096xbf16, #tpu.memory_space<vmem>>, vector<2x4096xbf16>
    %c0_1 = arith.constant 0 : index
    %c0_2 = arith.constant 0 : index
    %1 = vector.load %arg2[%c0_1, %c0_2] : memref<4096x128xbf16, #tpu.memory_space<vmem>>, vector<4096x128xbf16>
    %cst = arith.constant dense<0.000000e+00> : vector<2x128xf32>
    %2 = tpu.matmul %0, %1, %cst {dimension_numbers = #tpu.dot_dimension_numbers<[1], [0], [0], [1], [0, 0, 1, 1], [], []>} : vector<2x4096xbf16>, vector<4096x128xbf16>, vector<2x128xf32> -> vector<2x128xf32>
    %c0_3 = arith.constant 0 : index
    %c0_4 = arith.constant 0 : index
    %3 = vector.load %arg3[%c0_3, %c0_4] : memref<1x128xf32, #tpu.memory_space<vmem>>, vector<1x128xf32>
    %4 = vector.broadcast %3 : vector<1x128xf32> to vector<2x128xf32>
    %5 = arith.addf %2, %4 : vector<2x128xf32>
    %cst_5 = arith.constant 0.000000e+00 : f32
    %6 = vector.broadcast %cst_5 : f32 to vector<2x128xf32>
    %7 = arith.maximumf %5, %6 : vector<2x128xf32>
    %8 = arith.truncf %7 : vector<2x128xf32> to vector<2x128xbf16>
    %c0_6 = arith.constant 0 : index
    %c0_7 = arith.constant 0 : index
    %9 = vector.load %arg4[%c0_6, %c0_7] : memref<128x128xbf16, #tpu.memory_space<vmem>>, vector<128x128xbf16>
    %cst_8 = arith.constant dense<0.000000e+00> : vector<2x128xf32>
    %10 = tpu.matmul %8, %9, %cst_8 {dimension_numbers = #tpu.dot_dimension_numbers<[1], [0], [0], [1], [0, 0, 1, 1], [], []>} : vector<2x128xbf16>, vector<128x128xbf16>, vector<2x128xf32> -> vector<2x128xf32>
    %c0_9 = arith.constant 0 : index
    %c0_10 = arith.constant 0 : index
    %11 = vector.load %arg5[%c0_9, %c0_10] : memref<1x128xf32, #tpu.memory_space<vmem>>, vector<1x128xf32>
    %12 = vector.broadcast %11 : vector<1x128xf32> to vector<2x128xf32>
    %13 = arith.addf %10, %12 : vector<2x128xf32>
    %cst_11 = arith.constant 0.000000e+00 : f32
    %14 = vector.broadcast %cst_11 : f32 to vector<2x128xf32>
    %15 = arith.maximumf %13, %14 : vector<2x128xf32>
    %16 = arith.truncf %15 : vector<2x128xf32> to vector<2x128xbf16>
    %c0_12 = arith.constant 0 : index
    %c0_13 = arith.constant 0 : index
    %17 = vector.load %arg6[%c0_12, %c0_13] : memref<128x128xbf16, #tpu.memory_space<vmem>>, vector<128x128xbf16>
    %cst_14 = arith.constant dense<0.000000e+00> : vector<2x128xf32>
    %18 = tpu.matmul %16, %17, %cst_14 {dimension_numbers = #tpu.dot_dimension_numbers<[1], [0], [0], [1], [0, 0, 1, 1], [], []>} : vector<2x128xbf16>, vector<128x128xbf16>, vector<2x128xf32> -> vector<2x128xf32>
    %c0_15 = arith.constant 0 : index
    %c0_16 = arith.constant 0 : index
    %19 = vector.load %arg7[%c0_15, %c0_16] : memref<1x128xf32, #tpu.memory_space<vmem>>, vector<1x128xf32>
    %20 = vector.broadcast %19 : vector<1x128xf32> to vector<2x128xf32>
    %21 = arith.addf %18, %20 : vector<2x128xf32>
    %c0_17 = arith.constant 0 : index
    %c0_18 = arith.constant 0 : index
    %22 = vector.load %arg8[%c0_17, %c0_18] : memref<2x128xf32, #tpu.memory_space<vmem>>, vector<2x128xf32>
    tpu.vector_store %arg8[%c0_17, %c0_18], %21 {strides = array<i32>} : memref<2x128xf32, #tpu.memory_space<vmem>>, vector<2x128xf32>,
    return
  }
  func.func @transform_0(%arg0: i32) -> (i32, i32) {
    %c0_i32 = arith.constant 0 : i32
    %c0_i32_0 = arith.constant 0 : i32
    return %arg0, %c0_i32 : i32, i32
  }
  func.func @transform_1(%arg0: i32) -> (i32, i32) {
    %c0_i32 = arith.constant 0 : i32
    %c0_i32_0 = arith.constant 0 : i32
    %c0_i32_1 = arith.constant 0 : i32
    return %c0_i32, %c0_i32_0 : i32, i32
  }
  func.func @transform_2(%arg0: i32) -> (i32, i32) {
    %c0_i32 = arith.constant 0 : i32
    %c0_i32_0 = arith.constant 0 : i32
    %c0_i32_1 = arith.constant 0 : i32
    return %c0_i32, %c0_i32_0 : i32, i32
  }
  func.func @transform_3(%arg0: i32) -> (i32, i32) {
    %c0_i32 = arith.constant 0 : i32
    %c0_i32_0 = arith.constant 0 : i32
    %c0_i32_1 = arith.constant 0 : i32
    return %c0_i32, %c0_i32_0 : i32, i32
  }
  func.func @transform_4(%arg0: i32) -> (i32, i32) {
    %c0_i32 = arith.constant 0 : i32
    %c0_i32_0 = arith.constant 0 : i32
    %c0_i32_1 = arith.constant 0 : i32
    return %c0_i32, %c0_i32_0 : i32, i32
  }
  func.func @transform_5(%arg0: i32) -> (i32, i32) {
    %c0_i32 = arith.constant 0 : i32
    %c0_i32_0 = arith.constant 0 : i32
    %c0_i32_1 = arith.constant 0 : i32
    return %c0_i32, %c0_i32_0 : i32, i32
  }
  func.func @transform_6(%arg0: i32) -> (i32, i32) {
    %c0_i32 = arith.constant 0 : i32
    %c0_i32_0 = arith.constant 0 : i32
    %c0_i32_1 = arith.constant 0 : i32
    return %c0_i32, %c0_i32_0 : i32, i32
  }
  func.func @transform_7(%arg0: i32) -> (i32, i32) {
    %c0_i32 = arith.constant 0 : i32
    %c0_i32_0 = arith.constant 0 : i32
    return %arg0, %c0_i32 : i32, i32
  }
}

</mosaic_0001>

<llo_original>
// kernel: net_forward.3
$region0: #{net_forward.3}
  #allocation0 [shape = 'u32[]', space=smem, size = 0x4, offset = 0x4, fixed_abs, tag = 'smem constant byte address 0x4 - core index']
  #allocation1 [shape = 'u32[144,128]{1,0:T(1,128)}', space=vmem, size = 0x12000, scoped, tag = 'internal scratch']
  %s0 = inlined_call_operand.vmem [shape: bf16[2,4,232,9], index: 0, kind: input, shape index: {}]
  %s1 = inlined_call_operand.vmem [shape: bf16[9,128], index: 1, kind: input, shape index: {}]
  %s2 = inlined_call_operand.vmem [shape: f32[1,128], index: 2, kind: input, shape index: {}]
  %s3 = inlined_call_operand.vmem [shape: bf16[2,232,128], index: 3, kind: output, shape index: {}]
  %s4 = sld [smem:[#allocation0]]
  $region22: #{net_forward.3} parent=0
    _
  %s6 = ssub.s32 1, %s4
  %s7 = scalar_select 0, %s6, %s4
  // Predicated region
  $region2: #{net_forward.3} parent=0 // pred_check
    _
  $region3: #{net_forward.3} parent=0 // pred_check_branch
    %9 = sbr.rel (0) target = $region5
  $region4: #{net_forward.3} parent=0 // pred_region
    _
  $region5: #{net_forward.3} parent=0 // pred_fallthru
    _
  // Predicated region
  $region6: #{net_forward.3} parent=0 // pred_check
    _
  $region7: #{net_forward.3} parent=0 // pred_check_branch
    %11 = sbr.rel (0) target = $region9
  $region8: #{net_forward.3} parent=0 // pred_region
    _
  $region9: #{net_forward.3} parent=0 // pred_fallthru
    _
  // Predicated region
  $region10: #{net_forward.3} parent=0 // pred_check
    _
  $region11: #{net_forward.3} parent=0 // pred_check_branch
    %13 = sbr.rel (0) target = $region13
  $region12: #{net_forward.3} parent=0 // pred_region
    _
  $region13: #{net_forward.3} parent=0 // pred_fallthru
    _
  %v15 = vld [vmem:[%s0] sm:$0xf]
  %v16 = vld [vmem:[%s0 + $0x4] sm:$0xf]
  %v17 = vld [vmem:[%s0 + $0x8] sm:$0xf]
  %v18 = vld [vmem:[%s0 + $0xc] sm:$0xf]
  %v19 = vld [vmem:[%s0 + $0x10] sm:$0xf]
  %v20 = vld [vmem:[%s0 + $0x14] sm:$0xf]
  %v21 = vld [vmem:[%s0 + $0x18] sm:$0xf]
  %v22 = vld [vmem:[%s0 + $0x1c] sm:$0xf]
  %v23 = vld [vmem:[%s0 + $0x20] sm:$0xf]
  %v24 = vld [vmem:[%s0 + $0x24] sm:$0xf]
  %v25 = vld [vmem:[%s0 + $0x28] sm:$0xf]
  %v26 = vld [vmem:[%s0 + $0x2c] sm:$0xf]
  %v27 = vld [vmem:[%s0 + $0x30] sm:$0xf]
  %v28 = vld [vmem:[%s0 + $0x34] sm:$0xf]
  %v29 = vld [vmem:[%s0 + $0x38] sm:$0xf]
  %v30 = vld [vmem:[%s0 + $0x3c] sm:$0xf]
  %v31 = vld [vmem:[%s0 + $0x40] sm:$0xf]
  %v32 = vld [vmem:[%s0 + $0x44] sm:$0xf]
  %v33 = vld [vmem:[%s0 + $0x48] sm:$0xf]
  %v34 = vld [vmem:[%s0 + $0x4c] sm:$0xf]
  %v35 = vld [vmem:[%s0 + $0x50] sm:$0xf]
  %v36 = vld [vmem:[%s0 + $0x54] sm:$0xf]
  %v37 = vld [vmem:[%s0 + $0x58] sm:$0xf]
  %v38 = vld [vmem:[%s0 + $0x5c] sm:$0xf]
  %v39 = vld [vmem:[%s0 + $0x60] sm:$0xf]
  %v40 = vld [vmem:[%s0 + $0x64] sm:$0xf]
  %v41 = vld [vmem:[%s0 + $0x68] sm:$0xf]
  %v42 = vld [vmem:[%s0 + $0x6c] sm:$0xf]
  %v43 = vld [vmem:[%s0 + $0x70] sm:$0xf]
  %v44 = vld [vmem:[%s0 + $0x74] sm:$0xf]
  %v45 = vld [vmem:[%s0 + $0x78] sm:$0xf]
  %v46 = vld [vmem:[%s0 + $0x7c] sm:$0xf]
  %v47 = vld [vmem:[%s0 + $0x80] sm:$0xf]
  %v48 = vld [vmem:[%s0 + $0x84] sm:$0xf]
  %v49 = vld [vmem:[%s0 + $0x88] sm:$0xf]
  %v50 = vld [vmem:[%s0 + $0x8c] sm:$0xf]
  %v51 = vld [vmem:[%s0 + $0x90] sm:$0xf]
  %v52 = vld [vmem:[%s0 + $0x94] sm:$0xf]
  %v53 = vld [vmem:[%s0 + $0x98] sm:$0xf]
  %v54 = vld [vmem:[%s0 + $0x9c] sm:$0xf]
  %v55 = vld [vmem:[%s0 + $0xa0] sm:$0xf]
  %v56 = vld [vmem:[%s0 + $0xa4] sm:$0xf]
  %v57 = vld [vmem:[%s0 + $0xa8] sm:$0xf]
  %v58 = vld [vmem:[%s0 + $0xac] sm:$0xf]
  %v59 = vld [vmem:[%s0 + $0xb0] sm:$0xf]
  %v60 = vld [vmem:[%s0 + $0xb4] sm:$0xf]
  %v61 = vld [vmem:[%s0 + $0xb8] sm:$0xf]
  %v62 = vld [vmem:[%s0 + $0xbc] sm:$0xf]
  %v63 = vld [vmem:[%s0 + $0xc0] sm:$0xf]
  %v64 = vld [vmem:[%s0 + $0xc4] sm:$0xf]
  %v65 = vld [vmem:[%s0 + $0xc8] sm:$0xf]
  %v66 = vld [vmem:[%s0 + $0xcc] sm:$0xf]
  %v67 = vld [vmem:[%s0 + $0xd0] sm:$0xf]
  %v68 = vld [vmem:[%s0 + $0xd4] sm:$0xf]
  %v69 = vld [vmem:[%s0 + $0xd8] sm:$0xf]
  %v70 = vld [vmem:[%s0 + $0xdc] sm:$0xf]
  %v71 = vld [vmem:[%s0 + $0xe0] sm:$0xf]
  %v72 = vld [vmem:[%s0 + $0xe4] sm:$0xf]
  %v73 = vld [vmem:[%s0 + $0xe8] sm:$0xf]
  %v74 = vld [vmem:[%s0 + $0xec] sm:$0xf]
  %v75 = vld [vmem:[%s0 + $0xf0] sm:$0xf]
  %v76 = vld [vmem:[%s0 + $0xf4] sm:$0xf]
  %v77 = vld [vmem:[%s0 + $0xf8] sm:$0xf]
  %v78 = vld [vmem:[%s0 + $0xfc] sm:$0xf]
  %v79 = vld [vmem:[%s0 + $0x100] sm:$0xf]
  %v80 = vld [vmem:[%s0 + $0x104] sm:$0xf]
  %v81 = vld [vmem:[%s0 + $0x108] sm:$0xf]
  %v82 = vld [vmem:[%s0 + $0x10c] sm:$0xf]
  %v83 = vld [vmem:[%s0 + $0x110] sm:$0xf]
  %v84 = vld [vmem:[%s0 + $0x114] sm:$0xf]
  %v85 = vld [vmem:[%s0 + $0x118] sm:$0xf]
  %v86 = vld [vmem:[%s0 + $0x11c] sm:$0xf]
  %v87 = vld [vmem:[%s0 + $0x120] sm:$0xf]
  %v88 = vld [vmem:[%s0 + $0x124] sm:$0xf]
  %v89 = vld [vmem:[%s0 + $0x128] sm:$0xf]
  %v90 = vld [vmem:[%s0 + $0x12c] sm:$0xf]
  %v91 = vld [vmem:[%s0 + $0x130] sm:$0xf]
  %v92 = vld [vmem:[%s0 + $0x134] sm:$0xf]
  %v93 = vld [vmem:[%s0 + $0x138] sm:$0xf]
  %v94 = vld [vmem:[%s0 + $0x13c] sm:$0xf]
  %v95 = vld [vmem:[%s0 + $0x140] sm:$0xf]
  %v96 = vld [vmem:[%s0 + $0x144] sm:$0xf]
  %v97 = vld [vmem:[%s0 + $0x148] sm:$0xf]
  %v98 = vld [vmem:[%s0 + $0x14c] sm:$0xf]
  %v99 = vld [vmem:[%s0 + $0x150] sm:$0xf]
  %v100 = vld [vmem:[%s0 + $0x154] sm:$0xf]
  %v101 = vld [vmem:[%s0 + $0x158] sm:$0xf]
  %v102 = vld [vmem:[%s0 + $0x15c] sm:$0xf]
  %v103 = vld [vmem:[%s0 + $0x160] sm:$0xf]
  %v104 = vld [vmem:[%s0 + $0x164] sm:$0xf]
  %v105 = vld [vmem:[%s0 + $0x168] sm:$0xf]
  %v106 = vld [vmem:[%s0 + $0x16c] sm:$0xf]
  %v107 = vld [vmem:[%s0 + $0x170] sm:$0xf]
  %v108 = vld [vmem:[%s0 + $0x174] sm:$0xf]
  %v109 = vld [vmem:[%s0 + $0x178] sm:$0xf]
  %v110 = vld [vmem:[%s0 + $0x17c] sm:$0xf]
  %v111 = vld [vmem:[%s0 + $0x180] sm:$0xf]
  %v112 = vld [vmem:[%s0 + $0x184] sm:$0xf]
  %v113 = vld [vmem:[%s0 + $0x188] sm:$0xf]
  %v114 = vld [vmem:[%s0 + $0x18c] sm:$0xf]
  %v115 = vld [vmem:[%s0 + $0x190] sm:$0xf]
  %v116 = vld [vmem:[%s0 + $0x194] sm:$0xf]
  %v117 = vld [vmem:[%s0 + $0x198] sm:$0xf]
  %v118 = vld [vmem:[%s0 + $0x19c] sm:$0xf]
  %v119 = vld [vmem:[%s0 + $0x1a0] sm:$0xf]
  %v120 = vld [vmem:[%s0 + $0x1a4] sm:$0xf]
  %v121 = vld [vmem:[%s0 + $0x1a8] sm:$0xf]
  %v122 = vld [vmem:[%s0 + $0x1ac] sm:$0xf]
  %v123 = vld [vmem:[%s0 + $0x1b0] sm:$0xf]
  %v124 = vld [vmem:[%s0 + $0x1b4] sm:$0xf]
  %v125 = vld [vmem:[%s0 + $0x1b8] sm:$0xf]
  %v126 = vld [vmem:[%s0 + $0x1bc] sm:$0xf]
  %v127 = vld [vmem:[%s0 + $0x1c0] sm:$0xf]
  %v128 = vld [vmem:[%s0 + $0x1c4] sm:$0xf]
  %v129 = vld [vmem:[%s0 + $0x1c8] sm:$0xf]
  %v130 = vld [vmem:[%s0 + $0x1cc] sm:$0xf]
  %v131 = vld [vmem:[%s0 + $0x1d0] sm:$0xf]
  %v132 = vld [vmem:[%s0 + $0x1d4] sm:$0xf]
  %v133 = vld [vmem:[%s0 + $0x1d8] sm:$0xf]
  %v134 = vld [vmem:[%s0 + $0x1dc] sm:$0xf]
  %v135 = vld [vmem:[%s0 + $0x1e0] sm:$0xf]
  %v136 = vld [vmem:[%s0 + $0x1e4] sm:$0xf]
  %v137 = vld [vmem:[%s0 + $0x1e8] sm:$0xf]
  %v138 = vld [vmem:[%s0 + $0x1ec] sm:$0xf]
  %v139 = vld [vmem:[%s0 + $0x1f0] sm:$0xf]
  %v140 = vld [vmem:[%s0 + $0x1f4] sm:$0xf]
  %v141 = vld [vmem:[%s0 + $0x1f8] sm:$0xf]
  %v142 = vld [vmem:[%s0 + $0x1fc] sm:$0xf]
  %v143 = vld [vmem:[%s0 + $0x200] sm:$0xf]
  %v144 = vld [vmem:[%s0 + $0x204] sm:$0xf]
  %v145 = vld [vmem:[%s0 + $0x208] sm:$0xf]
  %v146 = vld [vmem:[%s0 + $0x20c] sm:$0xf]
  %v147 = vld [vmem:[%s0 + $0x210] sm:$0xf]
  %v148 = vld [vmem:[%s0 + $0x214] sm:$0xf]
  %v149 = vld [vmem:[%s0 + $0x218] sm:$0xf]
  %v150 = vld [vmem:[%s0 + $0x21c] sm:$0xf]
  %v151 = vld [vmem:[%s0 + $0x220] sm:$0xf]
  %v152 = vld [vmem:[%s0 + $0x224] sm:$0xf]
  %v153 = vld [vmem:[%s0 + $0x228] sm:$0xf]
  %v154 = vld [vmem:[%s0 + $0x22c] sm:$0xf]
  %v155 = vld [vmem:[%s0 + $0x230] sm:$0xf]
  %v156 = vld [vmem:[%s0 + $0x234] sm:$0xf]
  %v157 = vld [vmem:[%s0 + $0x238] sm:$0xf]
  %v158 = vld [vmem:[%s0 + $0x23c] sm:$0xf]
  %v159 = vld [vmem:[%s0 + $0x240] sm:$0xf]
  %v160 = vld [vmem:[%s0 + $0x244] sm:$0xf]
  %v161 = vld [vmem:[%s0 + $0x248] sm:$0xf]
  %v162 = vld [vmem:[%s0 + $0x24c] sm:$0xf]
  %v163 = vld [vmem:[%s0 + $0x250] sm:$0xf]
  %v164 = vld [vmem:[%s0 + $0x254] sm:$0xf]
  %v165 = vld [vmem:[%s0 + $0x258] sm:$0xf]
  %v166 = vld [vmem:[%s0 + $0x25c] sm:$0xf]
  %v167 = vld [vmem:[%s0 + $0x260] sm:$0xf]
  %v168 = vld [vmem:[%s0 + $0x264] sm:$0xf]
  %v169 = vld [vmem:[%s0 + $0x268] sm:$0xf]
  %v170 = vld [vmem:[%s0 + $0x26c] sm:$0xf]
  %v171 = vld [vmem:[%s0 + $0x270] sm:$0xf]
  %v172 = vld [vmem:[%s0 + $0x274] sm:$0xf]
  %v173 = vld [vmem:[%s0 + $0x278] sm:$0xf]
  %v174 = vld [vmem:[%s0 + $0x27c] sm:$0xf]
  %v175 = vld [vmem:[%s0 + $0x280] sm:$0xf]
  %v176 = vld [vmem:[%s0 + $0x284] sm:$0xf]
  %v177 = vld [vmem:[%s0 + $0x288] sm:$0xf]
  %v178 = vld [vmem:[%s0 + $0x28c] sm:$0xf]
  %v179 = vld [vmem:[%s0 + $0x290] sm:$0xf]
  %v180 = vld [vmem:[%s0 + $0x294] sm:$0xf]
  %v181 = vld [vmem:[%s0 + $0x298] sm:$0xf]
  %v182 = vld [vmem:[%s0 + $0x29c] sm:$0xf]
  %v183 = vld [vmem:[%s0 + $0x2a0] sm:$0xf]
  %v184 = vld [vmem:[%s0 + $0x2a4] sm:$0xf]
  %v185 = vld [vmem:[%s0 + $0x2a8] sm:$0xf]
  %v186 = vld [vmem:[%s0 + $0x2ac] sm:$0xf]
  %v187 = vld [vmem:[%s0 + $0x2b0] sm:$0xf]
  %v188 = vld [vmem:[%s0 + $0x2b4] sm:$0xf]
  %v189 = vld [vmem:[%s0 + $0x2b8] sm:$0xf]
  %v190 = vld [vmem:[%s0 + $0x2bc] sm:$0xf]
  %v191 = vld [vmem:[%s0 + $0x2c0] sm:$0xf]
  %v192 = vld [vmem:[%s0 + $0x2c4] sm:$0xf]
  %v193 = vld [vmem:[%s0 + $0x2c8] sm:$0xf]
  %v194 = vld [vmem:[%s0 + $0x2cc] sm:$0xf]
  %v195 = vld [vmem:[%s0 + $0x2d0] sm:$0xf]
  %v196 = vld [vmem:[%s0 + $0x2d4] sm:$0xf]
  %v197 = vld [vmem:[%s0 + $0x2d8] sm:$0xf]
  %v198 = vld [vmem:[%s0 + $0x2dc] sm:$0xf]
  %v199 = vld [vmem:[%s0 + $0x2e0] sm:$0xf]
  %v200 = vld [vmem:[%s0 + $0x2e4] sm:$0xf]
  %v201 = vld [vmem:[%s0 + $0x2e8] sm:$0xf]
  %v202 = vld [vmem:[%s0 + $0x2ec] sm:$0xf]
  %v203 = vld [vmem:[%s0 + $0x2f0] sm:$0xf]
  %v204 = vld [vmem:[%s0 + $0x2f4] sm:$0xf]
  %v205 = vld [vmem:[%s0 + $0x2f8] sm:$0xf]
  %v206 = vld [vmem:[%s0 + $0x2fc] sm:$0xf]
  %v207 = vld [vmem:[%s0 + $0x300] sm:$0xf]
  %v208 = vld [vmem:[%s0 + $0x304] sm:$0xf]
  %v209 = vld [vmem:[%s0 + $0x308] sm:$0xf]
  %v210 = vld [vmem:[%s0 + $0x30c] sm:$0xf]
  %v211 = vld [vmem:[%s0 + $0x310] sm:$0xf]
  %v212 = vld [vmem:[%s0 + $0x314] sm:$0xf]
  %v213 = vld [vmem:[%s0 + $0x318] sm:$0xf]
  %v214 = vld [vmem:[%s0 + $0x31c] sm:$0xf]
  %v215 = vld [vmem:[%s0 + $0x320] sm:$0xf]
  %v216 = vld [vmem:[%s0 + $0x324] sm:$0xf]
  %v217 = vld [vmem:[%s0 + $0x328] sm:$0xf]
  %v218 = vld [vmem:[%s0 + $0x32c] sm:$0xf]
  %v219 = vld [vmem:[%s0 + $0x330] sm:$0xf]
  %v220 = vld [vmem:[%s0 + $0x334] sm:$0xf]
  %v221 = vld [vmem:[%s0 + $0x338] sm:$0xf]
  %v222 = vld [vmem:[%s0 + $0x33c] sm:$0xf]
  %v223 = vld [vmem:[%s0 + $0x340] sm:$0xf]
  %v224 = vld [vmem:[%s0 + $0x344] sm:$0xf]
  %v225 = vld [vmem:[%s0 + $0x348] sm:$0xf]
  %v226 = vld [vmem:[%s0 + $0x34c] sm:$0xf]
  %v227 = vld [vmem:[%s0 + $0x350] sm:$0xf]
  %v228 = vld [vmem:[%s0 + $0x354] sm:$0xf]
  %v229 = vld [vmem:[%s0 + $0x358] sm:$0xf]
  %v230 = vld [vmem:[%s0 + $0x35c] sm:$0xf]
  %v231 = vld [vmem:[%s0 + $0x360] sm:$0xf]
  %v232 = vld [vmem:[%s0 + $0x364] sm:$0xf]
  %v233 = vld [vmem:[%s0 + $0x368] sm:$0xf]
  %v234 = vld [vmem:[%s0 + $0x36c] sm:$0xf]
  %v235 = vld [vmem:[%s0 + $0x370] sm:$0xf]
  %v236 = vld [vmem:[%s0 + $0x374] sm:$0xf]
  %v237 = vld [vmem:[%s0 + $0x378] sm:$0xf]
  %v238 = vld [vmem:[%s0 + $0x37c] sm:$0xf]
  %v239 = vld [vmem:[%s0 + $0x380] sm:$0xf]
  %v240 = vld [vmem:[%s0 + $0x384] sm:$0xf]
  %v241 = vld [vmem:[%s0 + $0x388] sm:$0xf]
  %v242 = vld [vmem:[%s0 + $0x38c] sm:$0xf]
  %v243 = vld [vmem:[%s0 + $0x390] sm:$0xf]
  %v244 = vld [vmem:[%s0 + $0x394] sm:$0xf]
  %v245 = vld [vmem:[%s0 + $0x398] sm:$0xf]
  %v246 = vld [vmem:[%s0 + $0x39c] sm:$0xf]
  %v247 = vld [vmem:[%s1] sm:$0xf]
  %v248 = vld [vmem:[%s1 + $0x4] sm:$0x1]
  %v481 = vunpack.c.l.b16 %v15
  %v482 = vunpack.c.l.b16 %v16
  %v483 = vunpack.c.l.b16 %v17
  %v484 = vunpack.c.l.b16 %v18
  %v485 = vunpack.c.l.b16 %v19
  %v486 = vunpack.c.l.b16 %v20
  %v487 = vunpack.c.l.b16 %v21
  %v488 = vunpack.c.l.b16 %v22
  %v489 = vunpack.c.l.b16 %v23
  %v490 = vunpack.c.l.b16 %v24
  %v491 = vunpack.c.l.b16 %v25
  %v492 = vunpack.c.l.b16 %v26
  %v493 = vunpack.c.l.b16 %v27
  %v494 = vunpack.c.l.b16 %v28
  %v495 = vunpack.c.l.b16 %v29
  %v496 = vunpack.c.l.b16 %v30
  %v497 = vunpack.c.l.b16 %v31
  %v498 = vunpack.c.l.b16 %v32
  %v499 = vunpack.c.l.b16 %v33
  %v500 = vunpack.c.l.b16 %v34
  %v501 = vunpack.c.l.b16 %v35
  %v502 = vunpack.c.l.b16 %v36
  %v503 = vunpack.c.l.b16 %v37
  %v504 = vunpack.c.l.b16 %v38
  %v505 = vunpack.c.l.b16 %v39
  %v506 = vunpack.c.l.b16 %v40
  %v507 = vunpack.c.l.b16 %v41
  %v508 = vunpack.c.l.b16 %v42
  %v509 = vunpack.c.l.b16 %v43
  %v510 = vunpack.c.l.b16 %v44
  %v511 = vunpack.c.l.b16 %v45
  %v512 = vunpack.c.l.b16 %v46
  %v513 = vunpack.c.l.b16 %v47
  %v514 = vunpack.c.l.b16 %v48
  %v515 = vunpack.c.l.b16 %v49
  %v516 = vunpack.c.l.b16 %v50
  %v517 = vunpack.c.l.b16 %v51
  %v518 = vunpack.c.l.b16 %v52
  %v519 = vunpack.c.l.b16 %v53
  %v520 = vunpack.c.l.b16 %v54
  %v521 = vunpack.c.l.b16 %v55
  %v522 = vunpack.c.l.b16 %v56
  %v523 = vunpack.c.l.b16 %v57
  %v524 = vunpack.c.l.b16 %v58
  %v525 = vunpack.c.l.b16 %v59
  %v526 = vunpack.c.l.b16 %v60
  %v527 = vunpack.c.l.b16 %v61
  %v528 = vunpack.c.l.b16 %v62
  %v529 = vunpack.c.l.b16 %v63
  %v530 = vunpack.c.l.b16 %v64
  %v531 = vunpack.c.l.b16 %v65
  %v532 = vunpack.c.l.b16 %v66
  %v533 = vunpack.c.l.b16 %v67
  %v534 = vunpack.c.l.b16 %v68
  %v535 = vunpack.c.l.b16 %v69
  %v536 = vunpack.c.l.b16 %v70
  %v537 = vunpack.c.l.b16 %v71
  %v538 = vunpack.c.l.b16 %v72
  %v539 = vunpack.c.l.b16 %v73
  %v540 = vunpack.c.l.b16 %v74
  %v541 = vunpack.c.l.b16 %v75
  %v542 = vunpack.c.l.b16 %v76
  %v543 = vunpack.c.l.b16 %v77
  %v544 = vunpack.c.l.b16 %v78
  %v545 = vunpack.c.l.b16 %v79
  %v546 = vunpack.c.l.b16 %v80
  %v547 = vunpack.c.l.b16 %v81
  %v548 = vunpack.c.l.b16 %v82
  %v549 = vunpack.c.l.b16 %v83
  %v550 = vunpack.c.l.b16 %v84
  %v551 = vunpack.c.l.b16 %v85
  %v552 = vunpack.c.l.b16 %v86
  %v553 = vunpack.c.l.b16 %v87
  %v554 = vunpack.c.l.b16 %v88
  %v555 = vunpack.c.l.b16 %v89
  %v556 = vunpack.c.l.b16 %v90
  %v557 = vunpack.c.l.b16 %v91
  %v558 = vunpack.c.l.b16 %v92
  %v559 = vunpack.c.l.b16 %v93
  %v560 = vunpack.c.l.b16 %v94
  %v561 = vunpack.c.l.b16 %v95
  %v562 = vunpack.c.l.b16 %v96
  %v563 = vunpack.c.l.b16 %v97
  %v564 = vunpack.c.l.b16 %v98
  %v565 = vunpack.c.l.b16 %v99
  %v566 = vunpack.c.l.b16 %v100
  %v567 = vunpack.c.l.b16 %v101
  %v568 = vunpack.c.l.b16 %v102
  %v569 = vunpack.c.l.b16 %v103
  %v570 = vunpack.c.l.b16 %v104
  %v571 = vunpack.c.l.b16 %v105
  %v572 = vunpack.c.l.b16 %v106
  %v573 = vunpack.c.l.b16 %v107
  %v574 = vunpack.c.l.b16 %v108
  %v575 = vunpack.c.l.b16 %v109
  %v576 = vunpack.c.l.b16 %v110
  %v577 = vunpack.c.l.b16 %v111
  %v578 = vunpack.c.l.b16 %v112
  %v579 = vunpack.c.l.b16 %v113
  %v580 = vunpack.c.l.b16 %v114
  %v581 = vunpack.c.l.b16 %v115
  %v582 = vunpack.c.l.b16 %v116
  %v583 = vunpack.c.l.b16 %v117
  %v584 = vunpack.c.l.b16 %v118
  %v585 = vunpack.c.l.b16 %v119
  %v586 = vunpack.c.l.b16 %v120
  %v587 = vunpack.c.l.b16 %v121
  %v588 = vunpack.c.l.b16 %v122
  %v589 = vunpack.c.l.b16 %v123
  %v590 = vunpack.c.l.b16 %v124
  %v591 = vunpack.c.l.b16 %v125
  %v592 = vunpack.c.l.b16 %v126
  %v593 = vunpack.c.l.b16 %v127
  %v594 = vunpack.c.l.b16 %v128
  %v595 = vunpack.c.l.b16 %v129
  %v596 = vunpack.c.l.b16 %v130
  %v597 = vunpack.c.l.b16 %v131
  %v598 = vunpack.c.l.b16 %v132
  %v599 = vunpack.c.l.b16 %v133
  %v600 = vunpack.c.l.b16 %v134
  %v601 = vunpack.c.l.b16 %v135
  %v602 = vunpack.c.l.b16 %v136
  %v603 = vunpack.c.l.b16 %v137
  %v604 = vunpack.c.l.b16 %v138
  %v605 = vunpack.c.l.b16 %v139
  %v606 = vunpack.c.l.b16 %v140
  %v607 = vunpack.c.l.b16 %v141
  %v608 = vunpack.c.l.b16 %v142
  %v609 = vunpack.c.l.b16 %v143
  %v610 = vunpack.c.l.b16 %v144
  %v611 = vunpack.c.l.b16 %v145
  %v612 = vunpack.c.l.b16 %v146
  %v613 = vunpack.c.l.b16 %v147
  %v614 = vunpack.c.l.b16 %v148
  %v615 = vunpack.c.l.b16 %v149
  %v616 = vunpack.c.l.b16 %v150
  %v617 = vunpack.c.l.b16 %v151
  %v618 = vunpack.c.l.b16 %v152
  %v619 = vunpack.c.l.b16 %v153
  %v620 = vunpack.c.l.b16 %v154
  %v621 = vunpack.c.l.b16 %v155
  %v622 = vunpack.c.l.b16 %v156
  %v623 = vunpack.c.l.b16 %v157
  %v624 = vunpack.c.l.b16 %v158
  %v625 = vunpack.c.l.b16 %v159
  %v626 = vunpack.c.l.b16 %v160
  %v627 = vunpack.c.l.b16 %v161
  %v628 = vunpack.c.l.b16 %v162
  %v629 = vunpack.c.l.b16 %v163
  %v630 = vunpack.c.l.b16 %v164
  %v631 = vunpack.c.l.b16 %v165
  %v632 = vunpack.c.l.b16 %v166
  %v633 = vunpack.c.l.b16 %v167
  %v634 = vunpack.c.l.b16 %v168
  %v635 = vunpack.c.l.b16 %v169
  %v636 = vunpack.c.l.b16 %v170
  %v637 = vunpack.c.l.b16 %v171
  %v638 = vunpack.c.l.b16 %v172
  %v639 = vunpack.c.l.b16 %v173
  %v640 = vunpack.c.l.b16 %v174
  %v641 = vunpack.c.l.b16 %v175
  %v642 = vunpack.c.l.b16 %v176
  %v643 = vunpack.c.l.b16 %v177
  %v644 = vunpack.c.l.b16 %v178
  %v645 = vunpack.c.l.b16 %v179
  %v646 = vunpack.c.l.b16 %v180
  %v647 = vunpack.c.l.b16 %v181
  %v648 = vunpack.c.l.b16 %v182
  %v649 = vunpack.c.l.b16 %v183
  %v650 = vunpack.c.l.b16 %v184
  %v651 = vunpack.c.l.b16 %v185
  %v652 = vunpack.c.l.b16 %v186
  %v653 = vunpack.c.l.b16 %v187
  %v654 = vunpack.c.l.b16 %v188
  %v655 = vunpack.c.l.b16 %v189
  %v656 = vunpack.c.l.b16 %v190
  %v657 = vunpack.c.l.b16 %v191
  %v658 = vunpack.c.l.b16 %v192
  %v659 = vunpack.c.l.b16 %v193
  %v660 = vunpack.c.l.b16 %v194
  %v661 = vunpack.c.l.b16 %v195
  %v662 = vunpack.c.l.b16 %v196
  %v663 = vunpack.c.l.b16 %v197
  %v664 = vunpack.c.l.b16 %v198
  %v665 = vunpack.c.l.b16 %v199
  %v666 = vunpack.c.l.b16 %v200
  %v667 = vunpack.c.l.b16 %v201
  %v668 = vunpack.c.l.b16 %v202
  %v669 = vunpack.c.l.b16 %v203
  %v670 = vunpack.c.l.b16 %v204
  %v671 = vunpack.c.l.b16 %v205
  %v672 = vunpack.c.l.b16 %v206
  %v673 = vunpack.c.l.b16 %v207
  %v674 = vunpack.c.l.b16 %v208
  %v675 = vunpack.c.l.b16 %v209
  %v676 = vunpack.c.l.b16 %v210
  %v677 = vunpack.c.l.b16 %v211
  %v678 = vunpack.c.l.b16 %v212
  %v679 = vunpack.c.l.b16 %v213
  %v680 = vunpack.c.l.b16 %v214
  %v681 = vunpack.c.l.b16 %v215
  %v682 = vunpack.c.l.b16 %v216
  %v683 = vunpack.c.l.b16 %v217
  %v684 = vunpack.c.l.b16 %v218
  %v685 = vunpack.c.l.b16 %v219
  %v686 = vunpack.c.l.b16 %v220
  %v687 = vunpack.c.l.b16 %v221
  %v688 = vunpack.c.l.b16 %v222
  %v689 = vunpack.c.l.b16 %v223
  %v690 = vunpack.c.l.b16 %v224
  %v691 = vunpack.c.l.b16 %v225
  %v692 = vunpack.c.l.b16 %v226
  %v693 = vunpack.c.l.b16 %v227
  %v694 = vunpack.c.l.b16 %v228
  %v695 = vunpack.c.l.b16 %v229
  %v696 = vunpack.c.l.b16 %v230
  %v697 = vunpack.c.l.b16 %v231
  %v698 = vunpack.c.l.b16 %v232
  %v699 = vunpack.c.l.b16 %v233
  %v700 = vunpack.c.l.b16 %v234
  %v701 = vunpack.c.l.b16 %v235
  %v702 = vunpack.c.l.b16 %v236
  %v703 = vunpack.c.l.b16 %v237
  %v704 = vunpack.c.l.b16 %v238
  %v705 = vunpack.c.l.b16 %v239
  %v706 = vunpack.c.l.b16 %v240
  %v707 = vunpack.c.l.b16 %v241
  %v708 = vunpack.c.l.b16 %v242
  %v709 = vunpack.c.l.b16 %v243
  %v710 = vunpack.c.l.b16 %v244
  %v711 = vunpack.c.l.b16 %v245
  %v712 = vunpack.c.l.b16 %v246
  %v713 = vpack.c.b16 %v482, %v481
  %v714 = vpack.c.b16 %v484, %v483
  %v715 = vpack.c.b16 %v486, %v485
  %v716 = vpack.c.b16 %v488, %v487
  %v717 = vpack.c.b16 %v490, %v489
  %v718 = vpack.c.b16 %v492, %v491
  %v719 = vpack.c.b16 %v494, %v493
  %v720 = vpack.c.b16 %v496, %v495
  %v721 = vpack.c.b16 %v498, %v497
  %v722 = vpack.c.b16 %v500, %v499
  %v723 = vpack.c.b16 %v502, %v501
  %v724 = vpack.c.b16 %v504, %v503
  %v725 = vpack.c.b16 %v506, %v505
  %v726 = vpack.c.b16 %v508, %v507
  %v727 = vpack.c.b16 %v510, %v509
  %v728 = vpack.c.b16 %v512, %v511
  %v729 = vpack.c.b16 %v514, %v513
  %v730 = vpack.c.b16 %v516, %v515
  %v731 = vpack.c.b16 %v518, %v517
  %v732 = vpack.c.b16 %v520, %v519
  %v733 = vpack.c.b16 %v522, %v521
  %v734 = vpack.c.b16 %v524, %v523
  %v735 = vpack.c.b16 %v526, %v525
  %v736 = vpack.c.b16 %v528, %v527
  %v737 = vpack.c.b16 %v530, %v529
  %v738 = vpack.c.b16 %v532, %v531
  %v739 = vpack.c.b16 %v534, %v533
  %v740 = vpack.c.b16 %v536, %v535
  %v741 = vpack.c.b16 %v538, %v537
  %v742 = vpack.c.b16 %v540, %v539
  %v743 = vpack.c.b16 %v542, %v541
  %v744 = vpack.c.b16 %v544, %v543
  %v745 = vpack.c.b16 %v546, %v545
  %v746 = vpack.c.b16 %v548, %v547
  %v747 = vpack.c.b16 %v550, %v549
  %v748 = vpack.c.b16 %v552, %v551
  %v749 = vpack.c.b16 %v554, %v553
  %v750 = vpack.c.b16 %v556, %v555
  %v751 = vpack.c.b16 %v558, %v557
  %v752 = vpack.c.b16 %v560, %v559
  %v753 = vpack.c.b16 %v562, %v561
  %v754 = vpack.c.b16 %v564, %v563
  %v755 = vpack.c.b16 %v566, %v565
  %v756 = vpack.c.b16 %v568, %v567
  %v757 = vpack.c.b16 %v570, %v569
  %v758 = vpack.c.b16 %v572, %v571
  %v759 = vpack.c.b16 %v574, %v573
  %v760 = vpack.c.b16 %v576, %v575
  %v761 = vpack.c.b16 %v578, %v577
  %v762 = vpack.c.b16 %v580, %v579
  %v763 = vpack.c.b16 %v582, %v581
  %v764 = vpack.c.b16 %v584, %v583
  %v765 = vpack.c.b16 %v586, %v585
  %v766 = vpack.c.b16 %v588, %v587
  %v767 = vpack.c.b16 %v590, %v589
  %v768 = vpack.c.b16 %v592, %v591
  %v769 = vpack.c.b16 %v594, %v593
  %v770 = vpack.c.b16 %v596, %v595
  %v771 = vpack.c.b16 %v598, %v597
  %v772 = vpack.c.b16 %v600, %v599
  %v773 = vpack.c.b16 %v602, %v601
  %v774 = vpack.c.b16 %v604, %v603
  %v775 = vpack.c.b16 %v606, %v605
  %v776 = vpack.c.b16 %v608, %v607
  %v777 = vpack.c.b16 %v610, %v609
  %v778 = vpack.c.b16 %v612, %v611
  %v779 = vpack.c.b16 %v614, %v613
  %v780 = vpack.c.b16 %v616, %v615
  %v781 = vpack.c.b16 %v618, %v617
  %v782 = vpack.c.b16 %v620, %v619
  %v783 = vpack.c.b16 %v622, %v621
  %v784 = vpack.c.b16 %v624, %v623
  %v785 = vpack.c.b16 %v626, %v625
  %v786 = vpack.c.b16 %v628, %v627
  %v787 = vpack.c.b16 %v630, %v629
  %v788 = vpack.c.b16 %v632, %v631
  %v789 = vpack.c.b16 %v634, %v633
  %v790 = vpack.c.b16 %v636, %v635
  %v791 = vpack.c.b16 %v638, %v637
  %v792 = vpack.c.b16 %v640, %v639
  %v793 = vpack.c.b16 %v642, %v641
  %v794 = vpack.c.b16 %v644, %v643
  %v795 = vpack.c.b16 %v646, %v645
  %v796 = vpack.c.b16 %v648, %v647
  %v797 = vpack.c.b16 %v650, %v649
  %v798 = vpack.c.b16 %v652, %v651
  %v799 = vpack.c.b16 %v654, %v653
  %v800 = vpack.c.b16 %v656, %v655
  %v801 = vpack.c.b16 %v658, %v657
  %v802 = vpack.c.b16 %v660, %v659
  %v803 = vpack.c.b16 %v662, %v661
  %v804 = vpack.c.b16 %v664, %v663
  %v805 = vpack.c.b16 %v666, %v665
  %v806 = vpack.c.b16 %v668, %v667
  %v807 = vpack.c.b16 %v670, %v669
  %v808 = vpack.c.b16 %v672, %v671
  %v809 = vpack.c.b16 %v674, %v673
  %v810 = vpack.c.b16 %v676, %v675
  %v811 = vpack.c.b16 %v678, %v677
  %v812 = vpack.c.b16 %v680, %v679
  %v813 = vpack.c.b16 %v682, %v681
  %v814 = vpack.c.b16 %v684, %v683
  %v815 = vpack.c.b16 %v686, %v685
  %v816 = vpack.c.b16 %v688, %v687
  %v817 = vpack.c.b16 %v690, %v689
  %v818 = vpack.c.b16 %v692, %v691
  %v819 = vpack.c.b16 %v694, %v693
  %v820 = vpack.c.b16 %v696, %v695
  %v821 = vpack.c.b16 %v698, %v697
  %v822 = vpack.c.b16 %v700, %v699
  %v823 = vpack.c.b16 %v702, %v701
  %v824 = vpack.c.b16 %v704, %v703
  %v825 = vpack.c.b16 %v706, %v705
  %v826 = vpack.c.b16 %v708, %v707
  %v827 = vpack.c.b16 %v710, %v709
  %v828 = vpack.c.b16 %v712, %v711
  %v831 = vunpack.c.l.b16 %v247
  %v832 = vunpack.c.l.b16 %v248
  %v833 = vpack.c.b16 %v832, %v831
  %vm834 = vcmask 72704
  %v836 = vsel %vm834, %v713, 0
  %v839 = vsel %vm834, %v714, 0
  %v842 = vsel %vm834, %v715, 0
  %v845 = vsel %vm834, %v716, 0
  %v848 = vsel %vm834, %v717, 0
  %v851 = vsel %vm834, %v718, 0
  %v854 = vsel %vm834, %v719, 0
  %v857 = vsel %vm834, %v720, 0
  %v860 = vsel %vm834, %v721, 0
  %v863 = vsel %vm834, %v722, 0
  %v866 = vsel %vm834, %v723, 0
  %v869 = vsel %vm834, %v724, 0
  %v872 = vsel %vm834, %v725, 0
  %v875 = vsel %vm834, %v726, 0
  %v878 = vsel %vm834, %v727, 0
  %v881 = vsel %vm834, %v728, 0
  %v884 = vsel %vm834, %v729, 0
  %v887 = vsel %vm834, %v730, 0
  %v890 = vsel %vm834, %v731, 0
  %v893 = vsel %vm834, %v732, 0
  %v896 = vsel %vm834, %v733, 0
  %v899 = vsel %vm834, %v734, 0
  %v902 = vsel %vm834, %v735, 0
  %v905 = vsel %vm834, %v736, 0
  %v908 = vsel %vm834, %v737, 0
  %v911 = vsel %vm834, %v738, 0
  %v914 = vsel %vm834, %v739, 0
  %v917 = vsel %vm834, %v740, 0
  %v920 = vsel %vm834, %v741, 0
  %v923 = vsel %vm834, %v742, 0
  %v926 = vsel %vm834, %v743, 0
  %v929 = vsel %vm834, %v744, 0
  %v932 = vsel %vm834, %v745, 0
  %v935 = vsel %vm834, %v746, 0
  %v938 = vsel %vm834, %v747, 0
  %v941 = vsel %vm834, %v748, 0
  %v944 = vsel %vm834, %v749, 0
  %v947 = vsel %vm834, %v750, 0
  %v950 = vsel %vm834, %v751, 0
  %v953 = vsel %vm834, %v752, 0
  %v956 = vsel %vm834, %v753, 0
  %v959 = vsel %vm834, %v754, 0
  %v962 = vsel %vm834, %v755, 0
  %v965 = vsel %vm834, %v756, 0
  %v968 = vsel %vm834, %v757, 0
  %v971 = vsel %vm834, %v758, 0
  %v974 = vsel %vm834, %v759, 0
  %v977 = vsel %vm834, %v760, 0
  %v980 = vsel %vm834, %v761, 0
  %v983 = vsel %vm834, %v762, 0
  %v986 = vsel %vm834, %v763, 0
  %v989 = vsel %vm834, %v764, 0
  %v992 = vsel %vm834, %v765, 0
  %v995 = vsel %vm834, %v766, 0
  %v998 = vsel %vm834, %v767, 0
  %v1001 = vsel %vm834, %v768, 0
  %v1004 = vsel %vm834, %v769, 0
  %v1007 = vsel %vm834, %v770, 0
  %v1010 = vsel %vm834, %v771, 0
  %v1013 = vsel %vm834, %v772, 0
  %v1016 = vsel %vm834, %v773, 0
  %v1019 = vsel %vm834, %v774, 0
  %v1022 = vsel %vm834, %v775, 0
  %v1025 = vsel %vm834, %v776, 0
  %v1028 = vsel %vm834, %v777, 0
  %v1031 = vsel %vm834, %v778, 0
  %v1034 = vsel %vm834, %v779, 0
  %v1037 = vsel %vm834, %v780, 0
  %v1040 = vsel %vm834, %v781, 0
  %v1043 = vsel %vm834, %v782, 0
  %v1046 = vsel %vm834, %v783, 0
  %v1049 = vsel %vm834, %v784, 0
  %v1052 = vsel %vm834, %v785, 0
  %v1055 = vsel %vm834, %v786, 0
  %v1058 = vsel %vm834, %v787, 0
  %v1061 = vsel %vm834, %v788, 0
  %v1064 = vsel %vm834, %v789, 0
  %v1067 = vsel %vm834, %v790, 0
  %v1070 = vsel %vm834, %v791, 0
  %v1073 = vsel %vm834, %v792, 0
  %v1076 = vsel %vm834, %v793, 0
  %v1079 = vsel %vm834, %v794, 0
  %v1082 = vsel %vm834, %v795, 0
  %v1085 = vsel %vm834, %v796, 0
  %v1088 = vsel %vm834, %v797, 0
  %v1091 = vsel %vm834, %v798, 0
  %v1094 = vsel %vm834, %v799, 0
  %v1097 = vsel %vm834, %v800, 0
  %v1100 = vsel %vm834, %v801, 0
  %v1103 = vsel %vm834, %v802, 0
  %v1106 = vsel %vm834, %v803, 0
  %v1109 = vsel %vm834, %v804, 0
  %v1112 = vsel %vm834, %v805, 0
  %v1115 = vsel %vm834, %v806, 0
  %v1118 = vsel %vm834, %v807, 0
  %v1121 = vsel %vm834, %v808, 0
  %v1124 = vsel %vm834, %v809, 0
  %v1127 = vsel %vm834, %v810, 0
  %v1130 = vsel %vm834, %v811, 0
  %v1133 = vsel %vm834, %v812, 0
  %v1136 = vsel %vm834, %v813, 0
  %v1139 = vsel %vm834, %v814, 0
  %v1142 = vsel %vm834, %v815, 0
  %v1145 = vsel %vm834, %v816, 0
  %v1148 = vsel %vm834, %v817, 0
  %v1151 = vsel %vm834, %v818, 0
  %v1154 = vsel %vm834, %v819, 0
  %v1157 = vsel %vm834, %v820, 0
  %v1160 = vsel %vm834, %v821, 0
  %v1163 = vsel %vm834, %v822, 0
  %v1166 = vsel %vm834, %v823, 0
  %v1169 = vsel %vm834, %v824, 0
  %v1172 = vsel %vm834, %v825, 0
  %v1175 = vsel %vm834, %v826, 0
  %v1178 = vsel %vm834, %v827, 0
  %v1181 = vsel %vm834, %v828, 0
  %vm1183 = vcmask 1043456
  %vm1184 = vcmask 1044480
  %v1185 = vsel %vm1183, 4294967295, 65535
  %v1186 = vsel %vm1184, %v1185, 0
  %v1188 = vand.u32 %v833, %v1186
  %1190 = vmatprep.subr.bf16.mxu0 0
  %1191 = vmatpush1.bf16.msra.mxu0 0
  %1192 = vmatprep.subr.bf16.mxu0 0
  %1193 = vmatpush1.bf16.msra.mxu0 0
  %1194 = vmatprep.subr.bf16.mxu0 0
  %1195 = vmatpush1.bf16.msra.mxu0 0
  %1196 = vmatprep.subr.bf16.mxu0 0
  %1197 = vmatpush1.bf16.msra.mxu0 0
  %1198 = vmatprep.subr.bf16.mxu0 0
  %1199 = vmatpush1.bf16.msra.mxu0 0
  %1200 = vmatprep.subr.bf16.mxu0 0
  %1201 = vmatpush1.bf16.msra.mxu0 0
  %1202 = vmatprep.subr.bf16.mxu0 0
  %1203 = vmatpush1.bf16.msra.mxu0 0
  %1204 = vmatprep.subr.bf16.mxu0 0
  %1205 = vmatpush1.bf16.msra.mxu0 %v1188
  %1206 = vmatprep.subr.bf16.mxu0 0
  %1207 = vmatpush2.bf16.msra.mxu0 0
  %1208 = vmatprep.subr.bf16.mxu0 0
  %1209 = vmatpush2.bf16.msra.mxu0 0
  %1210 = vmatprep.subr.bf16.mxu0 0
  %1211 = vmatpush2.bf16.msra.mxu0 0
  %1212 = vmatprep.subr.bf16.mxu0 0
  %1213 = vmatpush2.bf16.msra.mxu0 0
  %1214 = vmatprep.subr.bf16.mxu0 0
  %1215 = vmatpush2.bf16.msra.mxu0 0
  %1216 = vmatprep.subr.bf16.mxu0 0
  %1217 = vmatpush2.bf16.msra.mxu0 0
  %1218 = vmatprep.subr.bf16.mxu0 0
  %1219 = vmatpush2.bf16.msra.mxu0 0
  %1220 = vmatprep.subr.bf16.mxu0 0
  %1221 = vmatpush2.bf16.msra.mxu0 0
  %1222 = vmatprep.mubr.bf16.mxu0 0
  %1223 = vmatmul.mubr.bf16.gmra.mxu0 %v836
  %v1224 = vpop.f32.mrf.mxu0
  %v1225 = vadd.f32 0.0, %v1224
  %v1226 = vpop.f32.mrf.mxu0
  %v1227 = vpop.f32.mrf.mxu0
  %v1228 = vadd.f32 0.0, %v1227
  %v1229 = vpop.f32.mrf.mxu0
  %1230 = vmatprep.mubr.bf16.mxu0 0
  %1231 = vmatmul.mubr.bf16.gmra.mxu0 %v839
  %v1232 = vpop.f32.mrf.mxu0
  %v1233 = vadd.f32 0.0, %v1232
  %v1234 = vpop.f32.mrf.mxu0
  %v1235 = vpop.f32.mrf.mxu0
  %v1236 = vadd.f32 0.0, %v1235
  %v1237 = vpop.f32.mrf.mxu0
  %1238 = vmatprep.mubr.bf16.mxu0 0
  %1239 = vmatmul.mubr.bf16.gmra.mxu0 %v842
  %v1240 = vpop.f32.mrf.mxu0
  %v1241 = vadd.f32 0.0, %v1240
  %v1242 = vpop.f32.mrf.mxu0
  %v1243 = vpop.f32.mrf.mxu0
  %v1244 = vadd.f32 0.0, %v1243
  %v1245 = vpop.f32.mrf.mxu0
  %1246 = vmatprep.mubr.bf16.mxu0 0
  %1247 = vmatmul.mubr.bf16.gmra.mxu0 %v845
  %v1248 = vpop.f32.mrf.mxu0
  %v1249 = vadd.f32 0.0, %v1248
  %v1250 = vpop.f32.mrf.mxu0
  %v1251 = vpop.f32.mrf.mxu0
  %v1252 = vadd.f32 0.0, %v1251
  %v1253 = vpop.f32.mrf.mxu0
  %1254 = vmatprep.mubr.bf16.mxu0 0
  %1255 = vmatmul.mubr.bf16.gmra.mxu0 %v848
  %v1256 = vpop.f32.mrf.mxu0
  %v1257 = vadd.f32 0.0, %v1256
  %v1258 = vpop.f32.mrf.mxu0
  %v1259 = vpop.f32.mrf.mxu0
  %v1260 = vadd.f32 0.0, %v1259
  %v1261 = vpop.f32.mrf.mxu0
  %1262 = vmatprep.mubr.bf16.mxu0 0
  %1263 = vmatmul.mubr.bf16.gmra.mxu0 %v851
  %v1264 = vpop.f32.mrf.mxu0
  %v1265 = vadd.f32 0.0, %v1264
  %v1266 = vpop.f32.mrf.mxu0
  %v1267 = vpop.f32.mrf.mxu0
  %v1268 = vadd.f32 0.0, %v1267
  %v1269 = vpop.f32.mrf.mxu0
  %1270 = vmatprep.mubr.bf16.mxu0 0
  %1271 = vmatmul.mubr.bf16.gmra.mxu0 %v854
  %v1272 = vpop.f32.mrf.mxu0
  %v1273 = vadd.f32 0.0, %v1272
  %v1274 = vpop.f32.mrf.mxu0
  %v1275 = vpop.f32.mrf.mxu0
  %v1276 = vadd.f32 0.0, %v1275
  %v1277 = vpop.f32.mrf.mxu0
  %1278 = vmatprep.mubr.bf16.mxu0 0
  %1279 = vmatmul.mubr.bf16.gmra.mxu0 %v857
  %v1280 = vpop.f32.mrf.mxu0
  %v1281 = vadd.f32 0.0, %v1280
  %v1282 = vpop.f32.mrf.mxu0
  %v1283 = vpop.f32.mrf.mxu0
  %v1284 = vadd.f32 0.0, %v1283
  %v1285 = vpop.f32.mrf.mxu0
  %1286 = vmatprep.mubr.bf16.mxu0 0
  %1287 = vmatmul.mubr.bf16.gmra.mxu0 %v860
  %v1288 = vpop.f32.mrf.mxu0
  %v1289 = vadd.f32 0.0, %v1288
  %v1290 = vpop.f32.mrf.mxu0
  %v1291 = vpop.f32.mrf.mxu0
  %v1292 = vadd.f32 0.0, %v1291
  %v1293 = vpop.f32.mrf.mxu0
  %1294 = vmatprep.mubr.bf16.mxu0 0
  %1295 = vmatmul.mubr.bf16.gmra.mxu0 %v863
  %v1296 = vpop.f32.mrf.mxu0
  %v1297 = vadd.f32 0.0, %v1296
  %v1298 = vpop.f32.mrf.mxu0
  %v1299 = vpop.f32.mrf.mxu0
  %v1300 = vadd.f32 0.0, %v1299
  %v1301 = vpop.f32.mrf.mxu0
  %1302 = vmatprep.mubr.bf16.mxu0 0
  %1303 = vmatmul.mubr.bf16.gmra.mxu0 %v866
  %v1304 = vpop.f32.mrf.mxu0
  %v1305 = vadd.f32 0.0, %v1304
  %v1306 = vpop.f32.mrf.mxu0
  %v1307 = vpop.f32.mrf.mxu0
  %v1308 = vadd.f32 0.0, %v1307
  %v1309 = vpop.f32.mrf.mxu0
  %1310 = vmatprep.mubr.bf16.mxu0 0
  %1311 = vmatmul.mubr.bf16.gmra.mxu0 %v869
  %v1312 = vpop.f32.mrf.mxu0
  %v1313 = vadd.f32 0.0, %v1312
  %v1314 = vpop.f32.mrf.mxu0
  %v1315 = vpop.f32.mrf.mxu0
  %v1316 = vadd.f32 0.0, %v1315
  %v1317 = vpop.f32.mrf.mxu0
  %1318 = vmatprep.mubr.bf16.mxu0 0
  %1319 = vmatmul.mubr.bf16.gmra.mxu0 %v872
  %v1320 = vpop.f32.mrf.mxu0
  %v1321 = vadd.f32 0.0, %v1320
  %v1322 = vpop.f32.mrf.mxu0
  %v1323 = vpop.f32.mrf.mxu0
  %v1324 = vadd.f32 0.0, %v1323
  %v1325 = vpop.f32.mrf.mxu0
  %1326 = vmatprep.mubr.bf16.mxu0 0
  %1327 = vmatmul.mubr.bf16.gmra.mxu0 %v875
  %v1328 = vpop.f32.mrf.mxu0
  %v1329 = vadd.f32 0.0, %v1328
  %v1330 = vpop.f32.mrf.mxu0
  %v1331 = vpop.f32.mrf.mxu0
  %v1332 = vadd.f32 0.0, %v1331
  %v1333 = vpop.f32.mrf.mxu0
  %1334 = vmatprep.mubr.bf16.mxu0 0
  %1335 = vmatmul.mubr.bf16.gmra.mxu0 %v878
  %v1336 = vpop.f32.mrf.mxu0
  %v1337 = vadd.f32 0.0, %v1336
  %v1338 = vpop.f32.mrf.mxu0
  %v1339 = vpop.f32.mrf.mxu0
  %v1340 = vadd.f32 0.0, %v1339
  %v1341 = vpop.f32.mrf.mxu0
  %1342 = vmatprep.mubr.bf16.mxu0 0
  %1343 = vmatmul.mubr.bf16.gmra.mxu0 %v881
  %v1344 = vpop.f32.mrf.mxu0
  %v1345 = vadd.f32 0.0, %v1344
  %v1346 = vpop.f32.mrf.mxu0
  %v1347 = vpop.f32.mrf.mxu0
  %v1348 = vadd.f32 0.0, %v1347
  %v1349 = vpop.f32.mrf.mxu0
  %1350 = vmatprep.mubr.bf16.mxu0 0
  %1351 = vmatmul.mubr.bf16.gmra.mxu0 %v884
  %v1352 = vpop.f32.mrf.mxu0
  %v1353 = vadd.f32 0.0, %v1352
  %v1354 = vpop.f32.mrf.mxu0
  %v1355 = vpop.f32.mrf.mxu0
  %v1356 = vadd.f32 0.0, %v1355
  %v1357 = vpop.f32.mrf.mxu0
  %1358 = vmatprep.mubr.bf16.mxu0 0
  %1359 = vmatmul.mubr.bf16.gmra.mxu0 %v887
  %v1360 = vpop.f32.mrf.mxu0
  %v1361 = vadd.f32 0.0, %v1360
  %v1362 = vpop.f32.mrf.mxu0
  %v1363 = vpop.f32.mrf.mxu0
  %v1364 = vadd.f32 0.0, %v1363
  %v1365 = vpop.f32.mrf.mxu0
  %1366 = vmatprep.mubr.bf16.mxu0 0
  %1367 = vmatmul.mubr.bf16.gmra.mxu0 %v890
  %v1368 = vpop.f32.mrf.mxu0
  %v1369 = vadd.f32 0.0, %v1368
  %v1370 = vpop.f32.mrf.mxu0
  %v1371 = vpop.f32.mrf.mxu0
  %v1372 = vadd.f32 0.0, %v1371
  %v1373 = vpop.f32.mrf.mxu0
  %1374 = vmatprep.mubr.bf16.mxu0 0
  %1375 = vmatmul.mubr.bf16.gmra.mxu0 %v893
  %v1376 = vpop.f32.mrf.mxu0
  %v1377 = vadd.f32 0.0, %v1376
  %v1378 = vpop.f32.mrf.mxu0
  %v1379 = vpop.f32.mrf.mxu0
  %v1380 = vadd.f32 0.0, %v1379
  %v1381 = vpop.f32.mrf.mxu0
  %1382 = vmatprep.mubr.bf16.mxu0 0
  %1383 = vmatmul.mubr.bf16.gmra.mxu0 %v896
  %v1384 = vpop.f32.mrf.mxu0
  %v1385 = vadd.f32 0.0, %v1384
  %v1386 = vpop.f32.mrf.mxu0
  %v1387 = vpop.f32.mrf.mxu0
  %v1388 = vadd.f32 0.0, %v1387
  %v1389 = vpop.f32.mrf.mxu0
  %1390 = vmatprep.mubr.bf16.mxu0 0
  %1391 = vmatmul.mubr.bf16.gmra.mxu0 %v899
  %v1392 = vpop.f32.mrf.mxu0
  %v1393 = vadd.f32 0.0, %v1392
  %v1394 = vpop.f32.mrf.mxu0
  %v1395 = vpop.f32.mrf.mxu0
  %v1396 = vadd.f32 0.0, %v1395
  %v1397 = vpop.f32.mrf.mxu0
  %1398 = vmatprep.mubr.bf16.mxu0 0
  %1399 = vmatmul.mubr.bf16.gmra.mxu0 %v902
  %v1400 = vpop.f32.mrf.mxu0
  %v1401 = vadd.f32 0.0, %v1400
  %v1402 = vpop.f32.mrf.mxu0
  %v1403 = vpop.f32.mrf.mxu0
  %v1404 = vadd.f32 0.0, %v1403
  %v1405 = vpop.f32.mrf.mxu0
  %1406 = vmatprep.mubr.bf16.mxu0 0
  %1407 = vmatmul.mubr.bf16.gmra.mxu0 %v905
  %v1408 = vpop.f32.mrf.mxu0
  %v1409 = vadd.f32 0.0, %v1408
  %v1410 = vpop.f32.mrf.mxu0
  %v1411 = vpop.f32.mrf.mxu0
  %v1412 = vadd.f32 0.0, %v1411
  %v1413 = vpop.f32.mrf.mxu0
  %1414 = vmatprep.mubr.bf16.mxu0 0
  %1415 = vmatmul.mubr.bf16.gmra.mxu0 %v908
  %v1416 = vpop.f32.mrf.mxu0
  %v1417 = vadd.f32 0.0, %v1416
  %v1418 = vpop.f32.mrf.mxu0
  %v1419 = vpop.f32.mrf.mxu0
  %v1420 = vadd.f32 0.0, %v1419
  %v1421 = vpop.f32.mrf.mxu0
  %1422 = vmatprep.mubr.bf16.mxu0 0
  %1423 = vmatmul.mubr.bf16.gmra.mxu0 %v911
  %v1424 = vpop.f32.mrf.mxu0
  %v1425 = vadd.f32 0.0, %v1424
  %v1426 = vpop.f32.mrf.mxu0
  %v1427 = vpop.f32.mrf.mxu0
  %v1428 = vadd.f32 0.0, %v1427
  %v1429 = vpop.f32.mrf.mxu0
  %1430 = vmatprep.mubr.bf16.mxu0 0
  %1431 = vmatmul.mubr.bf16.gmra.mxu0 %v914
  %v1432 = vpop.f32.mrf.mxu0
  %v1433 = vadd.f32 0.0, %v1432
  %v1434 = vpop.f32.mrf.mxu0
  %v1435 = vpop.f32.mrf.mxu0
  %v1436 = vadd.f32 0.0, %v1435
  %v1437 = vpop.f32.mrf.mxu0
  %1438 = vmatprep.mubr.bf16.mxu0 0
  %1439 = vmatmul.mubr.bf16.gmra.mxu0 %v917
  %v1440 = vpop.f32.mrf.mxu0
  %v1441 = vadd.f32 0.0, %v1440
  %v1442 = vpop.f32.mrf.mxu0
  %v1443 = vpop.f32.mrf.mxu0
  %v1444 = vadd.f32 0.0, %v1443
  %v1445 = vpop.f32.mrf.mxu0
  %1446 = vmatprep.mubr.bf16.mxu0 0
  %1447 = vmatmul.mubr.bf16.gmra.mxu0 %v920
  %v1448 = vpop.f32.mrf.mxu0
  %v1449 = vadd.f32 0.0, %v1448
  %v1450 = vpop.f32.mrf.mxu0
  %v1451 = vpop.f32.mrf.mxu0
  %v1452 = vadd.f32 0.0, %v1451
  %v1453 = vpop.f32.mrf.mxu0
  %1454 = vmatprep.mubr.bf16.mxu0 0
  %1455 = vmatmul.mubr.bf16.gmra.mxu0 %v923
  %v1456 = vpop.f32.mrf.mxu0
  %v1457 = vadd.f32 0.0, %v1456
  %v1458 = vpop.f32.mrf.mxu0
  %v1459 = vpop.f32.mrf.mxu0
  %v1460 = vadd.f32 0.0, %v1459
  %v1461 = vpop.f32.mrf.mxu0
  %1462 = vmatprep.mubr.bf16.mxu0 0
  %1463 = vmatmul.mubr.bf16.gmra.mxu0 %v926
  %v1464 = vpop.f32.mrf.mxu0
  %v1465 = vadd.f32 0.0, %v1464
  %v1466 = vpop.f32.mrf.mxu0
  %v1467 = vpop.f32.mrf.mxu0
  %v1468 = vadd.f32 0.0, %v1467
  %v1469 = vpop.f32.mrf.mxu0
  %1470 = vmatprep.mubr.bf16.mxu0 0
  %1471 = vmatmul.mubr.bf16.gmra.mxu0 %v929
  %v1472 = vpop.f32.mrf.mxu0
  %v1473 = vadd.f32 0.0, %v1472
  %v1474 = vpop.f32.mrf.mxu0
  %v1475 = vpop.f32.mrf.mxu0
  %v1476 = vadd.f32 0.0, %v1475
  %v1477 = vpop.f32.mrf.mxu0
  %1478 = vmatprep.mubr.bf16.mxu0 0
  %1479 = vmatmul.mubr.bf16.gmra.mxu0 %v932
  %v1480 = vpop.f32.mrf.mxu0
  %v1481 = vadd.f32 0.0, %v1480
  %v1482 = vpop.f32.mrf.mxu0
  %v1483 = vpop.f32.mrf.mxu0
  %v1484 = vadd.f32 0.0, %v1483
  %v1485 = vpop.f32.mrf.mxu0
  %1486 = vmatprep.mubr.bf16.mxu0 0
  %1487 = vmatmul.mubr.bf16.gmra.mxu0 %v935
  %v1488 = vpop.f32.mrf.mxu0
  %v1489 = vadd.f32 0.0, %v1488
  %v1490 = vpop.f32.mrf.mxu0
  %v1491 = vpop.f32.mrf.mxu0
  %v1492 = vadd.f32 0.0, %v1491
  %v1493 = vpop.f32.mrf.mxu0
  %1494 = vmatprep.mubr.bf16.mxu0 0
  %1495 = vmatmul.mubr.bf16.gmra.mxu0 %v938
  %v1496 = vpop.f32.mrf.mxu0
  %v1497 = vadd.f32 0.0, %v1496
  %v1498 = vpop.f32.mrf.mxu0
  %v1499 = vpop.f32.mrf.mxu0
  %v1500 = vadd.f32 0.0, %v1499
  %v1501 = vpop.f32.mrf.mxu0
  %1502 = vmatprep.mubr.bf16.mxu0 0
  %1503 = vmatmul.mubr.bf16.gmra.mxu0 %v941
  %v1504 = vpop.f32.mrf.mxu0
  %v1505 = vadd.f32 0.0, %v1504
  %v1506 = vpop.f32.mrf.mxu0
  %v1507 = vpop.f32.mrf.mxu0
  %v1508 = vadd.f32 0.0, %v1507
  %v1509 = vpop.f32.mrf.mxu0
  %1510 = vmatprep.mubr.bf16.mxu0 0
  %1511 = vmatmul.mubr.bf16.gmra.mxu0 %v944
  %v1512 = vpop.f32.mrf.mxu0
  %v1513 = vadd.f32 0.0, %v1512
  %v1514 = vpop.f32.mrf.mxu0
  %v1515 = vpop.f32.mrf.mxu0
  %v1516 = vadd.f32 0.0, %v1515
  %v1517 = vpop.f32.mrf.mxu0
  %1518 = vmatprep.mubr.bf16.mxu0 0
  %1519 = vmatmul.mubr.bf16.gmra.mxu0 %v947
  %v1520 = vpop.f32.mrf.mxu0
  %v1521 = vadd.f32 0.0, %v1520
  %v1522 = vpop.f32.mrf.mxu0
  %v1523 = vpop.f32.mrf.mxu0
  %v1524 = vadd.f32 0.0, %v1523
  %v1525 = vpop.f32.mrf.mxu0
  %1526 = vmatprep.mubr.bf16.mxu0 0
  %1527 = vmatmul.mubr.bf16.gmra.mxu0 %v950
  %v1528 = vpop.f32.mrf.mxu0
  %v1529 = vadd.f32 0.0, %v1528
  %v1530 = vpop.f32.mrf.mxu0
  %v1531 = vpop.f32.mrf.mxu0
  %v1532 = vadd.f32 0.0, %v1531
  %v1533 = vpop.f32.mrf.mxu0
  %1534 = vmatprep.mubr.bf16.mxu0 0
  %1535 = vmatmul.mubr.bf16.gmra.mxu0 %v953
  %v1536 = vpop.f32.mrf.mxu0
  %v1537 = vadd.f32 0.0, %v1536
  %v1538 = vpop.f32.mrf.mxu0
  %v1539 = vpop.f32.mrf.mxu0
  %v1540 = vadd.f32 0.0, %v1539
  %v1541 = vpop.f32.mrf.mxu0
  %1542 = vmatprep.mubr.bf16.mxu0 0
  %1543 = vmatmul.mubr.bf16.gmra.mxu0 %v956
  %v1544 = vpop.f32.mrf.mxu0
  %v1545 = vadd.f32 0.0, %v1544
  %v1546 = vpop.f32.mrf.mxu0
  %v1547 = vpop.f32.mrf.mxu0
  %v1548 = vadd.f32 0.0, %v1547
  %v1549 = vpop.f32.mrf.mxu0
  %1550 = vmatprep.mubr.bf16.mxu0 0
  %1551 = vmatmul.mubr.bf16.gmra.mxu0 %v959
  %v1552 = vpop.f32.mrf.mxu0
  %v1553 = vadd.f32 0.0, %v1552
  %v1554 = vpop.f32.mrf.mxu0
  %v1555 = vpop.f32.mrf.mxu0
  %v1556 = vadd.f32 0.0, %v1555
  %v1557 = vpop.f32.mrf.mxu0
  %1558 = vmatprep.mubr.bf16.mxu0 0
  %1559 = vmatmul.mubr.bf16.gmra.mxu0 %v962
  %v1560 = vpop.f32.mrf.mxu0
  %v1561 = vadd.f32 0.0, %v1560
  %v1562 = vpop.f32.mrf.mxu0
  %v1563 = vpop.f32.mrf.mxu0
  %v1564 = vadd.f32 0.0, %v1563
  %v1565 = vpop.f32.mrf.mxu0
  %1566 = vmatprep.mubr.bf16.mxu0 0
  %1567 = vmatmul.mubr.bf16.gmra.mxu0 %v965
  %v1568 = vpop.f32.mrf.mxu0
  %v1569 = vadd.f32 0.0, %v1568
  %v1570 = vpop.f32.mrf.mxu0
  %v1571 = vpop.f32.mrf.mxu0
  %v1572 = vadd.f32 0.0, %v1571
  %v1573 = vpop.f32.mrf.mxu0
  %1574 = vmatprep.mubr.bf16.mxu0 0
  %1575 = vmatmul.mubr.bf16.gmra.mxu0 %v968
  %v1576 = vpop.f32.mrf.mxu0
  %v1577 = vadd.f32 0.0, %v1576
  %v1578 = vpop.f32.mrf.mxu0
  %v1579 = vpop.f32.mrf.mxu0
  %v1580 = vadd.f32 0.0, %v1579
  %v1581 = vpop.f32.mrf.mxu0
  %1582 = vmatprep.mubr.bf16.mxu0 0
  %1583 = vmatmul.mubr.bf16.gmra.mxu0 %v971
  %v1584 = vpop.f32.mrf.mxu0
  %v1585 = vadd.f32 0.0, %v1584
  %v1586 = vpop.f32.mrf.mxu0
  %v1587 = vpop.f32.mrf.mxu0
  %v1588 = vadd.f32 0.0, %v1587
  %v1589 = vpop.f32.mrf.mxu0
  %1590 = vmatprep.mubr.bf16.mxu0 0
  %1591 = vmatmul.mubr.bf16.gmra.mxu0 %v974
  %v1592 = vpop.f32.mrf.mxu0
  %v1593 = vadd.f32 0.0, %v1592
  %v1594 = vpop.f32.mrf.mxu0
  %v1595 = vpop.f32.mrf.mxu0
  %v1596 = vadd.f32 0.0, %v1595
  %v1597 = vpop.f32.mrf.mxu0
  %1598 = vmatprep.mubr.bf16.mxu0 0
  %1599 = vmatmul.mubr.bf16.gmra.mxu0 %v977
  %v1600 = vpop.f32.mrf.mxu0
  %v1601 = vadd.f32 0.0, %v1600
  %v1602 = vpop.f32.mrf.mxu0
  %v1603 = vpop.f32.mrf.mxu0
  %v1604 = vadd.f32 0.0, %v1603
  %v1605 = vpop.f32.mrf.mxu0
  %1606 = vmatprep.mubr.bf16.mxu0 0
  %1607 = vmatmul.mubr.bf16.gmra.mxu0 %v980
  %v1608 = vpop.f32.mrf.mxu0
  %v1609 = vadd.f32 0.0, %v1608
  %v1610 = vpop.f32.mrf.mxu0
  %v1611 = vpop.f32.mrf.mxu0
  %v1612 = vadd.f32 0.0, %v1611
  %v1613 = vpop.f32.mrf.mxu0
  %1614 = vmatprep.mubr.bf16.mxu0 0
  %1615 = vmatmul.mubr.bf16.gmra.mxu0 %v983
  %v1616 = vpop.f32.mrf.mxu0
  %v1617 = vadd.f32 0.0, %v1616
  %v1618 = vpop.f32.mrf.mxu0
  %v1619 = vpop.f32.mrf.mxu0
  %v1620 = vadd.f32 0.0, %v1619
  %v1621 = vpop.f32.mrf.mxu0
  %1622 = vmatprep.mubr.bf16.mxu0 0
  %1623 = vmatmul.mubr.bf16.gmra.mxu0 %v986
  %v1624 = vpop.f32.mrf.mxu0
  %v1625 = vadd.f32 0.0, %v1624
  %v1626 = vpop.f32.mrf.mxu0
  %v1627 = vpop.f32.mrf.mxu0
  %v1628 = vadd.f32 0.0, %v1627
  %v1629 = vpop.f32.mrf.mxu0
  %1630 = vmatprep.mubr.bf16.mxu0 0
  %1631 = vmatmul.mubr.bf16.gmra.mxu0 %v989
  %v1632 = vpop.f32.mrf.mxu0
  %v1633 = vadd.f32 0.0, %v1632
  %v1634 = vpop.f32.mrf.mxu0
  %v1635 = vpop.f32.mrf.mxu0
  %v1636 = vadd.f32 0.0, %v1635
  %v1637 = vpop.f32.mrf.mxu0
  %1638 = vmatprep.mubr.bf16.mxu0 0
  %1639 = vmatmul.mubr.bf16.gmra.mxu0 %v992
  %v1640 = vpop.f32.mrf.mxu0
  %v1641 = vadd.f32 0.0, %v1640
  %v1642 = vpop.f32.mrf.mxu0
  %v1643 = vpop.f32.mrf.mxu0
  %v1644 = vadd.f32 0.0, %v1643
  %v1645 = vpop.f32.mrf.mxu0
  %1646 = vmatprep.mubr.bf16.mxu0 0
  %1647 = vmatmul.mubr.bf16.gmra.mxu0 %v995
  %v1648 = vpop.f32.mrf.mxu0
  %v1649 = vadd.f32 0.0, %v1648
  %v1650 = vpop.f32.mrf.mxu0
  %v1651 = vpop.f32.mrf.mxu0
  %v1652 = vadd.f32 0.0, %v1651
  %v1653 = vpop.f32.mrf.mxu0
  %1654 = vmatprep.mubr.bf16.mxu0 0
  %1655 = vmatmul.mubr.bf16.gmra.mxu0 %v998
  %v1656 = vpop.f32.mrf.mxu0
  %v1657 = vadd.f32 0.0, %v1656
  %v1658 = vpop.f32.mrf.mxu0
  %v1659 = vpop.f32.mrf.mxu0
  %v1660 = vadd.f32 0.0, %v1659
  %v1661 = vpop.f32.mrf.mxu0
  %1662 = vmatprep.mubr.bf16.mxu0 0
  %1663 = vmatmul.mubr.bf16.gmra.mxu0 %v1001
  %v1664 = vpop.f32.mrf.mxu0
  %v1665 = vadd.f32 0.0, %v1664
  %v1666 = vpop.f32.mrf.mxu0
  %v1667 = vpop.f32.mrf.mxu0
  %v1668 = vadd.f32 0.0, %v1667
  %v1669 = vpop.f32.mrf.mxu0
  %1670 = vmatprep.mubr.bf16.mxu0 0
  %1671 = vmatmul.mubr.bf16.gmra.mxu0 %v1004
  %v1672 = vpop.f32.mrf.mxu0
  %v1673 = vadd.f32 0.0, %v1672
  %v1674 = vpop.f32.mrf.mxu0
  %v1675 = vpop.f32.mrf.mxu0
  %v1676 = vadd.f32 0.0, %v1675
  %v1677 = vpop.f32.mrf.mxu0
  %1678 = vmatprep.mubr.bf16.mxu0 0
  %1679 = vmatmul.mubr.bf16.gmra.mxu0 %v1007
  %v1680 = vpop.f32.mrf.mxu0
  %v1681 = vadd.f32 0.0, %v1680
  %v1682 = vpop.f32.mrf.mxu0
  %v1683 = vpop.f32.mrf.mxu0
  %v1684 = vadd.f32 0.0, %v1683
  %v1685 = vpop.f32.mrf.mxu0
  %1686 = vmatprep.mubr.bf16.mxu0 0
  %1687 = vmatmul.mubr.bf16.gmra.mxu0 %v1010
  %v1688 = vpop.f32.mrf.mxu0
  %v1689 = vadd.f32 0.0, %v1688
  %v1690 = vpop.f32.mrf.mxu0
  %v1691 = vpop.f32.mrf.mxu0
  %v1692 = vadd.f32 0.0, %v1691
  %v1693 = vpop.f32.mrf.mxu0
  %1694 = vmatprep.mubr.bf16.mxu0 0
  %1695 = vmatmul.mubr.bf16.gmra.mxu0 %v1013
  %v1696 = vpop.f32.mrf.mxu0
  %v1697 = vadd.f32 0.0, %v1696
  %v1698 = vpop.f32.mrf.mxu0
  %v1699 = vpop.f32.mrf.mxu0
  %v1700 = vadd.f32 0.0, %v1699
  %v1701 = vpop.f32.mrf.mxu0
  %1702 = vmatprep.mubr.bf16.mxu0 0
  %1703 = vmatmul.mubr.bf16.gmra.mxu0 %v1016
  %v1704 = vpop.f32.mrf.mxu0
  %v1705 = vadd.f32 0.0, %v1704
  %v1706 = vpop.f32.mrf.mxu0
  %v1707 = vpop.f32.mrf.mxu0
  %v1708 = vadd.f32 0.0, %v1707
  %v1709 = vpop.f32.mrf.mxu0
  %1710 = vmatprep.mubr.bf16.mxu0 0
  %1711 = vmatmul.mubr.bf16.gmra.mxu0 %v1019
  %v1712 = vpop.f32.mrf.mxu0
  %v1713 = vadd.f32 0.0, %v1712
  %v1714 = vpop.f32.mrf.mxu0
  %v1715 = vpop.f32.mrf.mxu0
  %v1716 = vadd.f32 0.0, %v1715
  %v1717 = vpop.f32.mrf.mxu0
  %1718 = vmatprep.mubr.bf16.mxu0 0
  %1719 = vmatmul.mubr.bf16.gmra.mxu0 %v1022
  %v1720 = vpop.f32.mrf.mxu0
  %v1721 = vadd.f32 0.0, %v1720
  %v1722 = vpop.f32.mrf.mxu0
  %v1723 = vpop.f32.mrf.mxu0
  %v1724 = vadd.f32 0.0, %v1723
  %v1725 = vpop.f32.mrf.mxu0
  %1726 = vmatprep.mubr.bf16.mxu0 0
  %1727 = vmatmul.mubr.bf16.gmra.mxu0 %v1025
  %v1728 = vpop.f32.mrf.mxu0
  %v1729 = vadd.f32 0.0, %v1728
  %v1730 = vpop.f32.mrf.mxu0
  %v1731 = vpop.f32.mrf.mxu0
  %v1732 = vadd.f32 0.0, %v1731
  %v1733 = vpop.f32.mrf.mxu0
  %1734 = vmatprep.mubr.bf16.mxu0 0
  %1735 = vmatmul.mubr.bf16.gmra.mxu0 %v1028
  %v1736 = vpop.f32.mrf.mxu0
  %v1737 = vadd.f32 0.0, %v1736
  %v1738 = vpop.f32.mrf.mxu0
  %v1739 = vpop.f32.mrf.mxu0
  %v1740 = vadd.f32 0.0, %v1739
  %v1741 = vpop.f32.mrf.mxu0
  %1742 = vmatprep.mubr.bf16.mxu0 0
  %1743 = vmatmul.mubr.bf16.gmra.mxu0 %v1031
  %v1744 = vpop.f32.mrf.mxu0
  %v1745 = vadd.f32 0.0, %v1744
  %v1746 = vpop.f32.mrf.mxu0
  %v1747 = vpop.f32.mrf.mxu0
  %v1748 = vadd.f32 0.0, %v1747
  %v1749 = vpop.f32.mrf.mxu0
  %1750 = vmatprep.mubr.bf16.mxu0 0
  %1751 = vmatmul.mubr.bf16.gmra.mxu0 %v1034
  %v1752 = vpop.f32.mrf.mxu0
  %v1753 = vadd.f32 0.0, %v1752
  %v1754 = vpop.f32.mrf.mxu0
  %v1755 = vpop.f32.mrf.mxu0
  %v1756 = vadd.f32 0.0, %v1755
  %v1757 = vpop.f32.mrf.mxu0
  %1758 = vmatprep.mubr.bf16.mxu0 0
  %1759 = vmatmul.mubr.bf16.gmra.mxu0 %v1037
  %v1760 = vpop.f32.mrf.mxu0
  %v1761 = vadd.f32 0.0, %v1760
  %v1762 = vpop.f32.mrf.mxu0
  %v1763 = vpop.f32.mrf.mxu0
  %v1764 = vadd.f32 0.0, %v1763
  %v1765 = vpop.f32.mrf.mxu0
  %1766 = vmatprep.mubr.bf16.mxu0 0
  %1767 = vmatmul.mubr.bf16.gmra.mxu0 %v1040
  %v1768 = vpop.f32.mrf.mxu0
  %v1769 = vadd.f32 0.0, %v1768
  %v1770 = vpop.f32.mrf.mxu0
  %v1771 = vpop.f32.mrf.mxu0
  %v1772 = vadd.f32 0.0, %v1771
  %v1773 = vpop.f32.mrf.mxu0
  %1774 = vmatprep.mubr.bf16.mxu0 0
  %1775 = vmatmul.mubr.bf16.gmra.mxu0 %v1043
  %v1776 = vpop.f32.mrf.mxu0
  %v1777 = vadd.f32 0.0, %v1776
  %v1778 = vpop.f32.mrf.mxu0
  %v1779 = vpop.f32.mrf.mxu0
  %v1780 = vadd.f32 0.0, %v1779
  %v1781 = vpop.f32.mrf.mxu0
  %1782 = vmatprep.mubr.bf16.mxu0 0
  %1783 = vmatmul.mubr.bf16.gmra.mxu0 %v1046
  %v1784 = vpop.f32.mrf.mxu0
  %v1785 = vadd.f32 0.0, %v1784
  %v1786 = vpop.f32.mrf.mxu0
  %v1787 = vpop.f32.mrf.mxu0
  %v1788 = vadd.f32 0.0, %v1787
  %v1789 = vpop.f32.mrf.mxu0
  %1790 = vmatprep.mubr.bf16.mxu0 0
  %1791 = vmatmul.mubr.bf16.gmra.mxu0 %v1049
  %v1792 = vpop.f32.mrf.mxu0
  %v1793 = vadd.f32 0.0, %v1792
  %v1794 = vpop.f32.mrf.mxu0
  %v1795 = vpop.f32.mrf.mxu0
  %v1796 = vadd.f32 0.0, %v1795
  %v1797 = vpop.f32.mrf.mxu0
  %1798 = vmatprep.mubr.bf16.mxu0 0
  %1799 = vmatmul.mubr.bf16.gmra.mxu0 %v1052
  %v1800 = vpop.f32.mrf.mxu0
  %v1801 = vadd.f32 0.0, %v1800
  %v1802 = vpop.f32.mrf.mxu0
  %v1803 = vpop.f32.mrf.mxu0
  %v1804 = vadd.f32 0.0, %v1803
  %v1805 = vpop.f32.mrf.mxu0
  %1806 = vmatprep.mubr.bf16.mxu0 0
  %1807 = vmatmul.mubr.bf16.gmra.mxu0 %v1055
  %v1808 = vpop.f32.mrf.mxu0
  %v1809 = vadd.f32 0.0, %v1808
  %v1810 = vpop.f32.mrf.mxu0
  %v1811 = vpop.f32.mrf.mxu0
  %v1812 = vadd.f32 0.0, %v1811
  %v1813 = vpop.f32.mrf.mxu0
  %1814 = vmatprep.mubr.bf16.mxu0 0
  %1815 = vmatmul.mubr.bf16.gmra.mxu0 %v1058
  %v1816 = vpop.f32.mrf.mxu0
  %v1817 = vadd.f32 0.0, %v1816
  %v1818 = vpop.f32.mrf.mxu0
  %v1819 = vpop.f32.mrf.mxu0
  %v1820 = vadd.f32 0.0, %v1819
  %v1821 = vpop.f32.mrf.mxu0
  %1822 = vmatprep.mubr.bf16.mxu0 0
  %1823 = vmatmul.mubr.bf16.gmra.mxu0 %v1061
  %v1824 = vpop.f32.mrf.mxu0
  %v1825 = vadd.f32 0.0, %v1824
  %v1826 = vpop.f32.mrf.mxu0
  %v1827 = vpop.f32.mrf.mxu0
  %v1828 = vadd.f32 0.0, %v1827
  %v1829 = vpop.f32.mrf.mxu0
  %1830 = vmatprep.mubr.bf16.mxu0 0
  %1831 = vmatmul.mubr.bf16.gmra.mxu0 %v1064
  %v1832 = vpop.f32.mrf.mxu0
  %v1833 = vadd.f32 0.0, %v1832
  %v1834 = vpop.f32.mrf.mxu0
  %v1835 = vpop.f32.mrf.mxu0
  %v1836 = vadd.f32 0.0, %v1835
  %v1837 = vpop.f32.mrf.mxu0
  %1838 = vmatprep.mubr.bf16.mxu0 0
  %1839 = vmatmul.mubr.bf16.gmra.mxu0 %v1067
  %v1840 = vpop.f32.mrf.mxu0
  %v1841 = vadd.f32 0.0, %v1840
  %v1842 = vpop.f32.mrf.mxu0
  %v1843 = vpop.f32.mrf.mxu0
  %v1844 = vadd.f32 0.0, %v1843
  %v1845 = vpop.f32.mrf.mxu0
  %1846 = vmatprep.mubr.bf16.mxu0 0
  %1847 = vmatmul.mubr.bf16.gmra.mxu0 %v1070
  %v1848 = vpop.f32.mrf.mxu0
  %v1849 = vadd.f32 0.0, %v1848
  %v1850 = vpop.f32.mrf.mxu0
  %v1851 = vpop.f32.mrf.mxu0
  %v1852 = vadd.f32 0.0, %v1851
  %v1853 = vpop.f32.mrf.mxu0
  %1854 = vmatprep.mubr.bf16.mxu0 0
  %1855 = vmatmul.mubr.bf16.gmra.mxu0 %v1073
  %v1856 = vpop.f32.mrf.mxu0
  %v1857 = vadd.f32 0.0, %v1856
  %v1858 = vpop.f32.mrf.mxu0
  %v1859 = vpop.f32.mrf.mxu0
  %v1860 = vadd.f32 0.0, %v1859
  %v1861 = vpop.f32.mrf.mxu0
  %1862 = vmatprep.mubr.bf16.mxu0 0
  %1863 = vmatmul.mubr.bf16.gmra.mxu0 %v1076
  %v1864 = vpop.f32.mrf.mxu0
  %v1865 = vadd.f32 0.0, %v1864
  %v1866 = vpop.f32.mrf.mxu0
  %v1867 = vpop.f32.mrf.mxu0
  %v1868 = vadd.f32 0.0, %v1867
  %v1869 = vpop.f32.mrf.mxu0
  %1870 = vmatprep.mubr.bf16.mxu0 0
  %1871 = vmatmul.mubr.bf16.gmra.mxu0 %v1079
  %v1872 = vpop.f32.mrf.mxu0
  %v1873 = vadd.f32 0.0, %v1872
  %v1874 = vpop.f32.mrf.mxu0
  %v1875 = vpop.f32.mrf.mxu0
  %v1876 = vadd.f32 0.0, %v1875
  %v1877 = vpop.f32.mrf.mxu0
  %1878 = vmatprep.mubr.bf16.mxu0 0
  %1879 = vmatmul.mubr.bf16.gmra.mxu0 %v1082
  %v1880 = vpop.f32.mrf.mxu0
  %v1881 = vadd.f32 0.0, %v1880
  %v1882 = vpop.f32.mrf.mxu0
  %v1883 = vpop.f32.mrf.mxu0
  %v1884 = vadd.f32 0.0, %v1883
  %v1885 = vpop.f32.mrf.mxu0
  %1886 = vmatprep.mubr.bf16.mxu0 0
  %1887 = vmatmul.mubr.bf16.gmra.mxu0 %v1085
  %v1888 = vpop.f32.mrf.mxu0
  %v1889 = vadd.f32 0.0, %v1888
  %v1890 = vpop.f32.mrf.mxu0
  %v1891 = vpop.f32.mrf.mxu0
  %v1892 = vadd.f32 0.0, %v1891
  %v1893 = vpop.f32.mrf.mxu0
  %1894 = vmatprep.mubr.bf16.mxu0 0
  %1895 = vmatmul.mubr.bf16.gmra.mxu0 %v1088
  %v1896 = vpop.f32.mrf.mxu0
  %v1897 = vadd.f32 0.0, %v1896
  %v1898 = vpop.f32.mrf.mxu0
  %v1899 = vpop.f32.mrf.mxu0
  %v1900 = vadd.f32 0.0, %v1899
  %v1901 = vpop.f32.mrf.mxu0
  %1902 = vmatprep.mubr.bf16.mxu0 0
  %1903 = vmatmul.mubr.bf16.gmra.mxu0 %v1091
  %v1904 = vpop.f32.mrf.mxu0
  %v1905 = vadd.f32 0.0, %v1904
  %v1906 = vpop.f32.mrf.mxu0
  %v1907 = vpop.f32.mrf.mxu0
  %v1908 = vadd.f32 0.0, %v1907
  %v1909 = vpop.f32.mrf.mxu0
  %1910 = vmatprep.mubr.bf16.mxu0 0
  %1911 = vmatmul.mubr.bf16.gmra.mxu0 %v1094
  %v1912 = vpop.f32.mrf.mxu0
  %v1913 = vadd.f32 0.0, %v1912
  %v1914 = vpop.f32.mrf.mxu0
  %v1915 = vpop.f32.mrf.mxu0
  %v1916 = vadd.f32 0.0, %v1915
  %v1917 = vpop.f32.mrf.mxu0
  %1918 = vmatprep.mubr.bf16.mxu0 0
  %1919 = vmatmul.mubr.bf16.gmra.mxu0 %v1097
  %v1920 = vpop.f32.mrf.mxu0
  %v1921 = vadd.f32 0.0, %v1920
  %v1922 = vpop.f32.mrf.mxu0
  %v1923 = vpop.f32.mrf.mxu0
  %v1924 = vadd.f32 0.0, %v1923
  %v1925 = vpop.f32.mrf.mxu0
  %1926 = vmatprep.mubr.bf16.mxu0 0
  %1927 = vmatmul.mubr.bf16.gmra.mxu0 %v1100
  %v1928 = vpop.f32.mrf.mxu0
  %v1929 = vadd.f32 0.0, %v1928
  %v1930 = vpop.f32.mrf.mxu0
  %v1931 = vpop.f32.mrf.mxu0
  %v1932 = vadd.f32 0.0, %v1931
  %v1933 = vpop.f32.mrf.mxu0
  %1934 = vmatprep.mubr.bf16.mxu0 0
  %1935 = vmatmul.mubr.bf16.gmra.mxu0 %v1103
  %v1936 = vpop.f32.mrf.mxu0
  %v1937 = vadd.f32 0.0, %v1936
  %v1938 = vpop.f32.mrf.mxu0
  %v1939 = vpop.f32.mrf.mxu0
  %v1940 = vadd.f32 0.0, %v1939
  %v1941 = vpop.f32.mrf.mxu0
  %1942 = vmatprep.mubr.bf16.mxu0 0
  %1943 = vmatmul.mubr.bf16.gmra.mxu0 %v1106
  %v1944 = vpop.f32.mrf.mxu0
  %v1945 = vadd.f32 0.0, %v1944
  %v1946 = vpop.f32.mrf.mxu0
  %v1947 = vpop.f32.mrf.mxu0
  %v1948 = vadd.f32 0.0, %v1947
  %v1949 = vpop.f32.mrf.mxu0
  %1950 = vmatprep.mubr.bf16.mxu0 0
  %1951 = vmatmul.mubr.bf16.gmra.mxu0 %v1109
  %v1952 = vpop.f32.mrf.mxu0
  %v1953 = vadd.f32 0.0, %v1952
  %v1954 = vpop.f32.mrf.mxu0
  %v1955 = vpop.f32.mrf.mxu0
  %v1956 = vadd.f32 0.0, %v1955
  %v1957 = vpop.f32.mrf.mxu0
  %1958 = vmatprep.mubr.bf16.mxu0 0
  %1959 = vmatmul.mubr.bf16.gmra.mxu0 %v1112
  %v1960 = vpop.f32.mrf.mxu0
  %v1961 = vadd.f32 0.0, %v1960
  %v1962 = vpop.f32.mrf.mxu0
  %v1963 = vpop.f32.mrf.mxu0
  %v1964 = vadd.f32 0.0, %v1963
  %v1965 = vpop.f32.mrf.mxu0
  %1966 = vmatprep.mubr.bf16.mxu0 0
  %1967 = vmatmul.mubr.bf16.gmra.mxu0 %v1115
  %v1968 = vpop.f32.mrf.mxu0
  %v1969 = vadd.f32 0.0, %v1968
  %v1970 = vpop.f32.mrf.mxu0
  %v1971 = vpop.f32.mrf.mxu0
  %v1972 = vadd.f32 0.0, %v1971
  %v1973 = vpop.f32.mrf.mxu0
  %1974 = vmatprep.mubr.bf16.mxu0 0
  %1975 = vmatmul.mubr.bf16.gmra.mxu0 %v1118
  %v1976 = vpop.f32.mrf.mxu0
  %v1977 = vadd.f32 0.0, %v1976
  %v1978 = vpop.f32.mrf.mxu0
  %v1979 = vpop.f32.mrf.mxu0
  %v1980 = vadd.f32 0.0, %v1979
  %v1981 = vpop.f32.mrf.mxu0
  %1982 = vmatprep.mubr.bf16.mxu0 0
  %1983 = vmatmul.mubr.bf16.gmra.mxu0 %v1121
  %v1984 = vpop.f32.mrf.mxu0
  %v1985 = vadd.f32 0.0, %v1984
  %v1986 = vpop.f32.mrf.mxu0
  %v1987 = vpop.f32.mrf.mxu0
  %v1988 = vadd.f32 0.0, %v1987
  %v1989 = vpop.f32.mrf.mxu0
  %1990 = vmatprep.mubr.bf16.mxu0 0
  %1991 = vmatmul.mubr.bf16.gmra.mxu0 %v1124
  %v1992 = vpop.f32.mrf.mxu0
  %v1993 = vadd.f32 0.0, %v1992
  %v1994 = vpop.f32.mrf.mxu0
  %v1995 = vpop.f32.mrf.mxu0
  %v1996 = vadd.f32 0.0, %v1995
  %v1997 = vpop.f32.mrf.mxu0
  %1998 = vmatprep.mubr.bf16.mxu0 0
  %1999 = vmatmul.mubr.bf16.gmra.mxu0 %v1127
  %v2000 = vpop.f32.mrf.mxu0
  %v2001 = vadd.f32 0.0, %v2000
  %v2002 = vpop.f32.mrf.mxu0
  %v2003 = vpop.f32.mrf.mxu0
  %v2004 = vadd.f32 0.0, %v2003
  %v2005 = vpop.f32.mrf.mxu0
  %2006 = vmatprep.mubr.bf16.mxu0 0
  %2007 = vmatmul.mubr.bf16.gmra.mxu0 %v1130
  %v2008 = vpop.f32.mrf.mxu0
  %v2009 = vadd.f32 0.0, %v2008
  %v2010 = vpop.f32.mrf.mxu0
  %v2011 = vpop.f32.mrf.mxu0
  %v2012 = vadd.f32 0.0, %v2011
  %v2013 = vpop.f32.mrf.mxu0
  %2014 = vmatprep.mubr.bf16.mxu0 0
  %2015 = vmatmul.mubr.bf16.gmra.mxu0 %v1133
  %v2016 = vpop.f32.mrf.mxu0
  %v2017 = vadd.f32 0.0, %v2016
  %v2018 = vpop.f32.mrf.mxu0
  %v2019 = vpop.f32.mrf.mxu0
  %v2020 = vadd.f32 0.0, %v2019
  %v2021 = vpop.f32.mrf.mxu0
  %2022 = vmatprep.mubr.bf16.mxu0 0
  %2023 = vmatmul.mubr.bf16.gmra.mxu0 %v1136
  %v2024 = vpop.f32.mrf.mxu0
  %v2025 = vadd.f32 0.0, %v2024
  %v2026 = vpop.f32.mrf.mxu0
  %v2027 = vpop.f32.mrf.mxu0
  %v2028 = vadd.f32 0.0, %v2027
  %v2029 = vpop.f32.mrf.mxu0
  %2030 = vmatprep.mubr.bf16.mxu0 0
  %2031 = vmatmul.mubr.bf16.gmra.mxu0 %v1139
  %v2032 = vpop.f32.mrf.mxu0
  %v2033 = vadd.f32 0.0, %v2032
  %v2034 = vpop.f32.mrf.mxu0
  %v2035 = vpop.f32.mrf.mxu0
  %v2036 = vadd.f32 0.0, %v2035
  %v2037 = vpop.f32.mrf.mxu0
  %2038 = vmatprep.mubr.bf16.mxu0 0
  %2039 = vmatmul.mubr.bf16.gmra.mxu0 %v1142
  %v2040 = vpop.f32.mrf.mxu0
  %v2041 = vadd.f32 0.0, %v2040
  %v2042 = vpop.f32.mrf.mxu0
  %v2043 = vpop.f32.mrf.mxu0
  %v2044 = vadd.f32 0.0, %v2043
  %v2045 = vpop.f32.mrf.mxu0
  %2046 = vmatprep.mubr.bf16.mxu0 0
  %2047 = vmatmul.mubr.bf16.gmra.mxu0 %v1145
  %v2048 = vpop.f32.mrf.mxu0
  %v2049 = vadd.f32 0.0, %v2048
  %v2050 = vpop.f32.mrf.mxu0
  %v2051 = vpop.f32.mrf.mxu0
  %v2052 = vadd.f32 0.0, %v2051
  %v2053 = vpop.f32.mrf.mxu0
  %2054 = vmatprep.mubr.bf16.mxu0 0
  %2055 = vmatmul.mubr.bf16.gmra.mxu0 %v1148
  %v2056 = vpop.f32.mrf.mxu0
  %v2057 = vadd.f32 0.0, %v2056
  %v2058 = vpop.f32.mrf.mxu0
  %v2059 = vpop.f32.mrf.mxu0
  %v2060 = vadd.f32 0.0, %v2059
  %v2061 = vpop.f32.mrf.mxu0
  %2062 = vmatprep.mubr.bf16.mxu0 0
  %2063 = vmatmul.mubr.bf16.gmra.mxu0 %v1151
  %v2064 = vpop.f32.mrf.mxu0
  %v2065 = vadd.f32 0.0, %v2064
  %v2066 = vpop.f32.mrf.mxu0
  %v2067 = vpop.f32.mrf.mxu0
  %v2068 = vadd.f32 0.0, %v2067
  %v2069 = vpop.f32.mrf.mxu0
  %2070 = vmatprep.mubr.bf16.mxu0 0
  %2071 = vmatmul.mubr.bf16.gmra.mxu0 %v1154
  %v2072 = vpop.f32.mrf.mxu0
  %v2073 = vadd.f32 0.0, %v2072
  %v2074 = vpop.f32.mrf.mxu0
  %v2075 = vpop.f32.mrf.mxu0
  %v2076 = vadd.f32 0.0, %v2075
  %v2077 = vpop.f32.mrf.mxu0
  %2078 = vmatprep.mubr.bf16.mxu0 0
  %2079 = vmatmul.mubr.bf16.gmra.mxu0 %v1157
  %v2080 = vpop.f32.mrf.mxu0
  %v2081 = vadd.f32 0.0, %v2080
  %v2082 = vpop.f32.mrf.mxu0
  %v2083 = vpop.f32.mrf.mxu0
  %v2084 = vadd.f32 0.0, %v2083
  %v2085 = vpop.f32.mrf.mxu0
  %2086 = vmatprep.mubr.bf16.mxu0 0
  %2087 = vmatmul.mubr.bf16.gmra.mxu0 %v1160
  %v2088 = vpop.f32.mrf.mxu0
  %v2089 = vadd.f32 0.0, %v2088
  %v2090 = vpop.f32.mrf.mxu0
  %v2091 = vpop.f32.mrf.mxu0
  %v2092 = vadd.f32 0.0, %v2091
  %v2093 = vpop.f32.mrf.mxu0
  %2094 = vmatprep.mubr.bf16.mxu0 0
  %2095 = vmatmul.mubr.bf16.gmra.mxu0 %v1163
  %v2096 = vpop.f32.mrf.mxu0
  %v2097 = vadd.f32 0.0, %v2096
  %v2098 = vpop.f32.mrf.mxu0
  %v2099 = vpop.f32.mrf.mxu0
  %v2100 = vadd.f32 0.0, %v2099
  %v2101 = vpop.f32.mrf.mxu0
  %2102 = vmatprep.mubr.bf16.mxu0 0
  %2103 = vmatmul.mubr.bf16.gmra.mxu0 %v1166
  %v2104 = vpop.f32.mrf.mxu0
  %v2105 = vadd.f32 0.0, %v2104
  %v2106 = vpop.f32.mrf.mxu0
  %v2107 = vpop.f32.mrf.mxu0
  %v2108 = vadd.f32 0.0, %v2107
  %v2109 = vpop.f32.mrf.mxu0
  %2110 = vmatprep.mubr.bf16.mxu0 0
  %2111 = vmatmul.mubr.bf16.gmra.mxu0 %v1169
  %v2112 = vpop.f32.mrf.mxu0
  %v2113 = vadd.f32 0.0, %v2112
  %v2114 = vpop.f32.mrf.mxu0
  %v2115 = vpop.f32.mrf.mxu0
  %v2116 = vadd.f32 0.0, %v2115
  %v2117 = vpop.f32.mrf.mxu0
  %2118 = vmatprep.mubr.bf16.mxu0 0
  %2119 = vmatmul.mubr.bf16.gmra.mxu0 %v1172
  %v2120 = vpop.f32.mrf.mxu0
  %v2121 = vadd.f32 0.0, %v2120
  %v2122 = vpop.f32.mrf.mxu0
  %v2123 = vpop.f32.mrf.mxu0
  %v2124 = vadd.f32 0.0, %v2123
  %v2125 = vpop.f32.mrf.mxu0
  %2126 = vmatprep.mubr.bf16.mxu0 0
  %2127 = vmatmul.mubr.bf16.gmra.mxu0 %v1175
  %v2128 = vpop.f32.mrf.mxu0
  %v2129 = vadd.f32 0.0, %v2128
  %v2130 = vpop.f32.mrf.mxu0
  %v2131 = vpop.f32.mrf.mxu0
  %v2132 = vadd.f32 0.0, %v2131
  %v2133 = vpop.f32.mrf.mxu0
  %2134 = vmatprep.mubr.bf16.mxu0 0
  %2135 = vmatmul.mubr.bf16.gmra.mxu0 %v1178
  %v2136 = vpop.f32.mrf.mxu0
  %v2137 = vadd.f32 0.0, %v2136
  %v2138 = vpop.f32.mrf.mxu0
  %v2139 = vpop.f32.mrf.mxu0
  %v2140 = vadd.f32 0.0, %v2139
  %v2141 = vpop.f32.mrf.mxu0
  %2142 = vmatprep.mubr.bf16.mxu0 0
  %2143 = vmatmul.mubr.bf16.gmra.mxu0 %v1181
  %v2144 = vpop.f32.mrf.mxu0
  %v2145 = vadd.f32 0.0, %v2144
  %v2146 = vpop.f32.mrf.mxu0
  %v2147 = vpop.f32.mrf.mxu0
  %v2148 = vadd.f32 0.0, %v2147
  %v2149 = vpop.f32.mrf.mxu0
  %2150 = vdwg.mxu0
  %v2151 = vmax.f32 %v1225, %v1340
  %v2152 = vmax.f32 %v1228, %v1345
  %v2153 = vmax.f32 %v1233, %v1348
  %v2154 = vmax.f32 %v1236, %v1353
  %v2155 = vmax.f32 %v1241, %v1356
  %v2156 = vmax.f32 %v1244, %v1361
  %v2157 = vmax.f32 %v1249, %v1364
  %v2158 = vmax.f32 %v1252, %v1369
  %v2159 = vmax.f32 %v1257, %v1372
  %v2160 = vmax.f32 %v1260, %v1377
  %v2161 = vmax.f32 %v1265, %v1380
  %v2162 = vmax.f32 %v1268, %v1385
  %v2163 = vmax.f32 %v1273, %v1388
  %v2164 = vmax.f32 %v1276, %v1393
  %v2165 = vmax.f32 %v1281, %v1396
  %v2166 = vmax.f32 %v1284, %v1401
  %v2167 = vmax.f32 %v1289, %v1404
  %v2168 = vmax.f32 %v1292, %v1409
  %v2169 = vmax.f32 %v1297, %v1412
  %v2170 = vmax.f32 %v1300, %v1417
  %v2171 = vmax.f32 %v1305, %v1420
  %v2172 = vmax.f32 %v1308, %v1425
  %v2173 = vmax.f32 %v1313, %v1428
  %v2174 = vmax.f32 %v1316, %v1433
  %v2175 = vmax.f32 %v1321, %v1436
  %v2176 = vmax.f32 %v1324, %v1441
  %v2177 = vmax.f32 %v1329, %v1444
  %v2178 = vmax.f32 %v1332, %v1449
  %v2179 = vmax.f32 %v1337, %v1452
  %v2180 = vmax.f32 %v1689, %v1804
  %v2181 = vmax.f32 %v1692, %v1809
  %v2182 = vmax.f32 %v1697, %v1812
  %v2183 = vmax.f32 %v1700, %v1817
  %v2184 = vmax.f32 %v1705, %v1820
  %v2185 = vmax.f32 %v1708, %v1825
  %v2186 = vmax.f32 %v1713, %v1828
  %v2187 = vmax.f32 %v1716, %v1833
  %v2188 = vmax.f32 %v1721, %v1836
  %v2189 = vmax.f32 %v1724, %v1841
  %v2190 = vmax.f32 %v1729, %v1844
  %v2191 = vmax.f32 %v1732, %v1849
  %v2192 = vmax.f32 %v1737, %v1852
  %v2193 = vmax.f32 %v1740, %v1857
  %v2194 = vmax.f32 %v1745, %v1860
  %v2195 = vmax.f32 %v1748, %v1865
  %v2196 = vmax.f32 %v1753, %v1868
  %v2197 = vmax.f32 %v1756, %v1873
  %v2198 = vmax.f32 %v1761, %v1876
  %v2199 = vmax.f32 %v1764, %v1881
  %v2200 = vmax.f32 %v1769, %v1884
  %v2201 = vmax.f32 %v1772, %v1889
  %v2202 = vmax.f32 %v1777, %v1892
  %v2203 = vmax.f32 %v1780, %v1897
  %v2204 = vmax.f32 %v1785, %v1900
  %v2205 = vmax.f32 %v1788, %v1905
  %v2206 = vmax.f32 %v1793, %v1908
  %v2207 = vmax.f32 %v1796, %v1913
  %v2208 = vmax.f32 %v1801, %v1916
  %v2209 = vmax.f32 %v1457, %v1572
  %v2210 = vmax.f32 %v1460, %v1577
  %v2211 = vmax.f32 %v1465, %v1580
  %v2212 = vmax.f32 %v1468, %v1585
  %v2213 = vmax.f32 %v1473, %v1588
  %v2214 = vmax.f32 %v1476, %v1593
  %v2215 = vmax.f32 %v1481, %v1596
  %v2216 = vmax.f32 %v1484, %v1601
  %v2217 = vmax.f32 %v1489, %v1604
  %v2218 = vmax.f32 %v1492, %v1609
  %v2219 = vmax.f32 %v1497, %v1612
  %v2220 = vmax.f32 %v1500, %v1617
  %v2221 = vmax.f32 %v1505, %v1620
  %v2222 = vmax.f32 %v1508, %v1625
  %v2223 = vmax.f32 %v1513, %v1628
  %v2224 = vmax.f32 %v1516, %v1633
  %v2225 = vmax.f32 %v1521, %v1636
  %v2226 = vmax.f32 %v1524, %v1641
  %v2227 = vmax.f32 %v1529, %v1644
  %v2228 = vmax.f32 %v1532, %v1649
  %v2229 = vmax.f32 %v1537, %v1652
  %v2230 = vmax.f32 %v1540, %v1657
  %v2231 = vmax.f32 %v1545, %v1660
  %v2232 = vmax.f32 %v1548, %v1665
  %v2233 = vmax.f32 %v1553, %v1668
  %v2234 = vmax.f32 %v1556, %v1673
  %v2235 = vmax.f32 %v1561, %v1676
  %v2236 = vmax.f32 %v1564, %v1681
  %v2237 = vmax.f32 %v1569, %v1684
  %v2238 = vmax.f32 %v1921, %v2036
  %v2239 = vmax.f32 %v1924, %v2041
  %v2240 = vmax.f32 %v1929, %v2044
  %v2241 = vmax.f32 %v1932, %v2049
  %v2242 = vmax.f32 %v1937, %v2052
  %v2243 = vmax.f32 %v1940, %v2057
  %v2244 = vmax.f32 %v1945, %v2060
  %v2245 = vmax.f32 %v1948, %v2065
  %v2246 = vmax.f32 %v1953, %v2068
  %v2247 = vmax.f32 %v1956, %v2073
  %v2248 = vmax.f32 %v1961, %v2076
  %v2249 = vmax.f32 %v1964, %v2081
  %v2250 = vmax.f32 %v1969, %v2084
  %v2251 = vmax.f32 %v1972, %v2089
  %v2252 = vmax.f32 %v1977, %v2092
  %v2253 = vmax.f32 %v1980, %v2097
  %v2254 = vmax.f32 %v1985, %v2100
  %v2255 = vmax.f32 %v1988, %v2105
  %v2256 = vmax.f32 %v1993, %v2108
  %v2257 = vmax.f32 %v1996, %v2113
  %v2258 = vmax.f32 %v2001, %v2116
  %v2259 = vmax.f32 %v2004, %v2121
  %v2260 = vmax.f32 %v2009, %v2124
  %v2261 = vmax.f32 %v2012, %v2129
  %v2262 = vmax.f32 %v2017, %v2132
  %v2263 = vmax.f32 %v2020, %v2137
  %v2264 = vmax.f32 %v2025, %v2140
  %v2265 = vmax.f32 %v2028, %v2145
  %v2266 = vmax.f32 %v2033, %v2148
  %v2267 = vmax.f32 %v2151, %v2209
  %v2268 = vmax.f32 %v2152, %v2210
  %v2269 = vmax.f32 %v2153, %v2211
  %v2270 = vmax.f32 %v2154, %v2212
  %v2271 = vmax.f32 %v2155, %v2213
  %v2272 = vmax.f32 %v2156, %v2214
  %v2273 = vmax.f32 %v2157, %v2215
  %v2274 = vmax.f32 %v2158, %v2216
  %v2275 = vmax.f32 %v2159, %v2217
  %v2276 = vmax.f32 %v2160, %v2218
  %v2277 = vmax.f32 %v2161, %v2219
  %v2278 = vmax.f32 %v2162, %v2220
  %v2279 = vmax.f32 %v2163, %v2221
  %v2280 = vmax.f32 %v2164, %v2222
  %v2281 = vmax.f32 %v2165, %v2223
  %v2282 = vmax.f32 %v2166, %v2224
  %v2283 = vmax.f32 %v2167, %v2225
  %v2284 = vmax.f32 %v2168, %v2226
  %v2285 = vmax.f32 %v2169, %v2227
  %v2286 = vmax.f32 %v2170, %v2228
  %v2287 = vmax.f32 %v2171, %v2229
  %v2288 = vmax.f32 %v2172, %v2230
  %v2289 = vmax.f32 %v2173, %v2231
  %v2290 = vmax.f32 %v2174, %v2232
  %v2291 = vmax.f32 %v2175, %v2233
  %v2292 = vmax.f32 %v2176, %v2234
  %v2293 = vmax.f32 %v2177, %v2235
  %v2294 = vmax.f32 %v2178, %v2236
  %v2295 = vmax.f32 %v2179, %v2237
  %v2296 = vmax.f32 %v2180, %v2238
  %v2297 = vmax.f32 %v2181, %v2239
  %v2298 = vmax.f32 %v2182, %v2240
  %v2299 = vmax.f32 %v2183, %v2241
  %v2300 = vmax.f32 %v2184, %v2242
  %v2301 = vmax.f32 %v2185, %v2243
  %v2302 = vmax.f32 %v2186, %v2244
  %v2303 = vmax.f32 %v2187, %v2245
  %v2304 = vmax.f32 %v2188, %v2246
  %v2305 = vmax.f32 %v2189, %v2247
  %v2306 = vmax.f32 %v2190, %v2248
  %v2307 = vmax.f32 %v2191, %v2249
  %v2308 = vmax.f32 %v2192, %v2250
  %v2309 = vmax.f32 %v2193, %v2251
  %v2310 = vmax.f32 %v2194, %v2252
  %v2311 = vmax.f32 %v2195, %v2253
  %v2312 = vmax.f32 %v2196, %v2254
  %v2313 = vmax.f32 %v2197, %v2255
  %v2314 = vmax.f32 %v2198, %v2256
  %v2315 = vmax.f32 %v2199, %v2257
  %v2316 = vmax.f32 %v2200, %v2258
  %v2317 = vmax.f32 %v2201, %v2259
  %v2318 = vmax.f32 %v2202, %v2260
  %v2319 = vmax.f32 %v2203, %v2261
  %v2320 = vmax.f32 %v2204, %v2262
  %v2321 = vmax.f32 %v2205, %v2263
  %v2322 = vmax.f32 %v2206, %v2264
  %v2323 = vmax.f32 %v2207, %v2265
  %v2324 = vmax.f32 %v2208, %v2266
  %v2325 = vld [vmem:[%s2] sm:$0x1]
  %v2327 = vlaneseq
  %v2328 = vshrl.u32 %v2327, 7
  %v2329 = vsub.s32 0, %v2328
  %v2330 = vrot.slane %v2325, %v2329
  %v2332 = vadd.f32 %v2267, %v2330
  %v2333 = vadd.f32 %v2268, %v2330
  %v2334 = vadd.f32 %v2269, %v2330
  %v2335 = vadd.f32 %v2270, %v2330
  %v2336 = vadd.f32 %v2271, %v2330
  %v2337 = vadd.f32 %v2272, %v2330
  %v2338 = vadd.f32 %v2273, %v2330
  %v2339 = vadd.f32 %v2274, %v2330
  %v2340 = vadd.f32 %v2275, %v2330
  %v2341 = vadd.f32 %v2276, %v2330
  %v2342 = vadd.f32 %v2277, %v2330
  %v2343 = vadd.f32 %v2278, %v2330
  %v2344 = vadd.f32 %v2279, %v2330
  %v2345 = vadd.f32 %v2280, %v2330
  %v2346 = vadd.f32 %v2281, %v2330
  %v2347 = vadd.f32 %v2282, %v2330
  %v2348 = vadd.f32 %v2283, %v2330
  %v2349 = vadd.f32 %v2284, %v2330
  %v2350 = vadd.f32 %v2285, %v2330
  %v2351 = vadd.f32 %v2286, %v2330
  %v2352 = vadd.f32 %v2287, %v2330
  %v2353 = vadd.f32 %v2288, %v2330
  %v2354 = vadd.f32 %v2289, %v2330
  %v2355 = vadd.f32 %v2290, %v2330
  %v2356 = vadd.f32 %v2291, %v2330
  %v2357 = vadd.f32 %v2292, %v2330
  %v2358 = vadd.f32 %v2293, %v2330
  %v2359 = vadd.f32 %v2294, %v2330
  %v2360 = vadd.f32 %v2295, %v2330
  %v2361 = vadd.f32 %v2296, %v2330
  %v2362 = vadd.f32 %v2297, %v2330
  %v2363 = vadd.f32 %v2298, %v2330
  %v2364 = vadd.f32 %v2299, %v2330
  %v2365 = vadd.f32 %v2300, %v2330
  %v2366 = vadd.f32 %v2301, %v2330
  %v2367 = vadd.f32 %v2302, %v2330
  %v2368 = vadd.f32 %v2303, %v2330
  %v2369 = vadd.f32 %v2304, %v2330
  %v2370 = vadd.f32 %v2305, %v2330
  %v2371 = vadd.f32 %v2306, %v2330
  %v2372 = vadd.f32 %v2307, %v2330
  %v2373 = vadd.f32 %v2308, %v2330
  %v2374 = vadd.f32 %v2309, %v2330
  %v2375 = vadd.f32 %v2310, %v2330
  %v2376 = vadd.f32 %v2311, %v2330
  %v2377 = vadd.f32 %v2312, %v2330
  %v2378 = vadd.f32 %v2313, %v2330
  %v2379 = vadd.f32 %v2314, %v2330
  %v2380 = vadd.f32 %v2315, %v2330
  %v2381 = vadd.f32 %v2316, %v2330
  %v2382 = vadd.f32 %v2317, %v2330
  %v2383 = vadd.f32 %v2318, %v2330
  %v2384 = vadd.f32 %v2319, %v2330
  %v2385 = vadd.f32 %v2320, %v2330
  %v2386 = vadd.f32 %v2321, %v2330
  %v2387 = vadd.f32 %v2322, %v2330
  %v2388 = vadd.f32 %v2323, %v2330
  %v2389 = vadd.f32 %v2324, %v2330
  %v2390 = vmax.f32 %v2332, 0.0
  %v2391 = vmax.f32 %v2333, 0.0
  %v2392 = vmax.f32 %v2334, 0.0
  %v2393 = vmax.f32 %v2335, 0.0
  %v2394 = vmax.f32 %v2336, 0.0
  %v2395 = vmax.f32 %v2337, 0.0
  %v2396 = vmax.f32 %v2338, 0.0
  %v2397 = vmax.f32 %v2339, 0.0
  %v2398 = vmax.f32 %v2340, 0.0
  %v2399 = vmax.f32 %v2341, 0.0
  %v2400 = vmax.f32 %v2342, 0.0
  %v2401 = vmax.f32 %v2343, 0.0
  %v2402 = vmax.f32 %v2344, 0.0
  %v2403 = vmax.f32 %v2345, 0.0
  %v2404 = vmax.f32 %v2346, 0.0
  %v2405 = vmax.f32 %v2347, 0.0
  %v2406 = vmax.f32 %v2348, 0.0
  %v2407 = vmax.f32 %v2349, 0.0
  %v2408 = vmax.f32 %v2350, 0.0
  %v2409 = vmax.f32 %v2351, 0.0
  %v2410 = vmax.f32 %v2352, 0.0
  %v2411 = vmax.f32 %v2353, 0.0
  %v2412 = vmax.f32 %v2354, 0.0
  %v2413 = vmax.f32 %v2355, 0.0
  %v2414 = vmax.f32 %v2356, 0.0
  %v2415 = vmax.f32 %v2357, 0.0
  %v2416 = vmax.f32 %v2358, 0.0
  %v2417 = vmax.f32 %v2359, 0.0
  %v2418 = vmax.f32 %v2360, 0.0
  %v2419 = vmax.f32 %v2361, 0.0
  %v2420 = vmax.f32 %v2362, 0.0
  %v2421 = vmax.f32 %v2363, 0.0
  %v2422 = vmax.f32 %v2364, 0.0
  %v2423 = vmax.f32 %v2365, 0.0
  %v2424 = vmax.f32 %v2366, 0.0
  %v2425 = vmax.f32 %v2367, 0.0
  %v2426 = vmax.f32 %v2368, 0.0
  %v2427 = vmax.f32 %v2369, 0.0
  %v2428 = vmax.f32 %v2370, 0.0
  %v2429 = vmax.f32 %v2371, 0.0
  %v2430 = vmax.f32 %v2372, 0.0
  %v2431 = vmax.f32 %v2373, 0.0
  %v2432 = vmax.f32 %v2374, 0.0
  %v2433 = vmax.f32 %v2375, 0.0
  %v2434 = vmax.f32 %v2376, 0.0
  %v2435 = vmax.f32 %v2377, 0.0
  %v2436 = vmax.f32 %v2378, 0.0
  %v2437 = vmax.f32 %v2379, 0.0
  %v2438 = vmax.f32 %v2380, 0.0
  %v2439 = vmax.f32 %v2381, 0.0
  %v2440 = vmax.f32 %v2382, 0.0
  %v2441 = vmax.f32 %v2383, 0.0
  %v2442 = vmax.f32 %v2384, 0.0
  %v2443 = vmax.f32 %v2385, 0.0
  %v2444 = vmax.f32 %v2386, 0.0
  %v2445 = vmax.f32 %v2387, 0.0
  %v2446 = vmax.f32 %v2388, 0.0
  %v2447 = vmax.f32 %v2389, 0.0
  %v2448 = vpack.c.bf16 %v2391, %v2390
  %v2449 = vpack.c.bf16 %v2393, %v2392
  %v2450 = vpack.c.bf16 %v2395, %v2394
  %v2451 = vpack.c.bf16 %v2397, %v2396
  %v2452 = vpack.c.bf16 %v2399, %v2398
  %v2453 = vpack.c.bf16 %v2401, %v2400
  %v2454 = vpack.c.bf16 %v2403, %v2402
  %v2455 = vpack.c.bf16 %v2405, %v2404
  %v2456 = vpack.c.bf16 %v2407, %v2406
  %v2457 = vpack.c.bf16 %v2409, %v2408
  %v2458 = vpack.c.bf16 %v2411, %v2410
  %v2459 = vpack.c.bf16 %v2413, %v2412
  %v2460 = vpack.c.bf16 %v2415, %v2414
  %v2461 = vpack.c.bf16 %v2417, %v2416
  %v2462 = vpack.c.bf16 %v2418, %v2418
  %v2463 = vpack.c.bf16 %v2420, %v2419
  %v2464 = vpack.c.bf16 %v2422, %v2421
  %v2465 = vpack.c.bf16 %v2424, %v2423
  %v2466 = vpack.c.bf16 %v2426, %v2425
  %v2467 = vpack.c.bf16 %v2428, %v2427
  %v2468 = vpack.c.bf16 %v2430, %v2429
  %v2469 = vpack.c.bf16 %v2432, %v2431
  %v2470 = vpack.c.bf16 %v2434, %v2433
  %v2471 = vpack.c.bf16 %v2436, %v2435
  %v2472 = vpack.c.bf16 %v2438, %v2437
  %v2473 = vpack.c.bf16 %v2440, %v2439
  %v2474 = vpack.c.bf16 %v2442, %v2441
  %v2475 = vpack.c.bf16 %v2444, %v2443
  %v2476 = vpack.c.bf16 %v2446, %v2445
  %v2477 = vpack.c.bf16 %v2447, %v2447
  %v2508 = vunpack.c.l.b16 %v2448
  %v2509 = vunpack.c.h.b16 %v2448
  %v2510 = vunpack.c.l.b16 %v2449
  %v2511 = vunpack.c.h.b16 %v2449
  %v2512 = vunpack.c.l.b16 %v2450
  %v2513 = vunpack.c.h.b16 %v2450
  %v2514 = vunpack.c.l.b16 %v2451
  %v2515 = vunpack.c.h.b16 %v2451
  %v2516 = vunpack.c.l.b16 %v2452
  %v2517 = vunpack.c.h.b16 %v2452
  %v2518 = vunpack.c.l.b16 %v2453
  %v2519 = vunpack.c.h.b16 %v2453
  %v2520 = vunpack.c.l.b16 %v2454
  %v2521 = vunpack.c.h.b16 %v2454
  %v2522 = vunpack.c.l.b16 %v2455
  %v2523 = vunpack.c.h.b16 %v2455
  %v2524 = vunpack.c.l.b16 %v2456
  %v2525 = vunpack.c.h.b16 %v2456
  %v2526 = vunpack.c.l.b16 %v2457
  %v2527 = vunpack.c.h.b16 %v2457
  %v2528 = vunpack.c.l.b16 %v2458
  %v2529 = vunpack.c.h.b16 %v2458
  %v2530 = vunpack.c.l.b16 %v2459
  %v2531 = vunpack.c.h.b16 %v2459
  %v2532 = vunpack.c.l.b16 %v2460
  %v2533 = vunpack.c.h.b16 %v2460
  %v2534 = vunpack.c.l.b16 %v2461
  %v2535 = vunpack.c.h.b16 %v2461
  %v2536 = vunpack.c.l.b16 %v2462
  %v2537 = vunpack.c.l.b16 %v2463
  %v2538 = vunpack.c.h.b16 %v2463
  %v2539 = vunpack.c.l.b16 %v2464
  %v2540 = vunpack.c.h.b16 %v2464
  %v2541 = vunpack.c.l.b16 %v2465
  %v2542 = vunpack.c.h.b16 %v2465
  %v2543 = vunpack.c.l.b16 %v2466
  %v2544 = vunpack.c.h.b16 %v2466
  %v2545 = vunpack.c.l.b16 %v2467
  %v2546 = vunpack.c.h.b16 %v2467
  %v2547 = vunpack.c.l.b16 %v2468
  %v2548 = vunpack.c.h.b16 %v2468
  %v2549 = vunpack.c.l.b16 %v2469
  %v2550 = vunpack.c.h.b16 %v2469
  %v2551 = vunpack.c.l.b16 %v2470
  %v2552 = vunpack.c.h.b16 %v2470
  %v2553 = vunpack.c.l.b16 %v2471
  %v2554 = vunpack.c.h.b16 %v2471
  %v2555 = vunpack.c.l.b16 %v2472
  %v2556 = vunpack.c.h.b16 %v2472
  %v2557 = vunpack.c.l.b16 %v2473
  %v2558 = vunpack.c.h.b16 %v2473
  %v2559 = vunpack.c.l.b16 %v2474
  %v2560 = vunpack.c.h.b16 %v2474
  %v2561 = vunpack.c.l.b16 %v2475
  %v2562 = vunpack.c.h.b16 %v2475
  %v2563 = vunpack.c.l.b16 %v2476
  %v2564 = vunpack.c.h.b16 %v2476
  %v2565 = vunpack.c.l.b16 %v2477
  %v2566 = vpack.c.b16 %v2508, %v2508
  %v2567 = vpack.c.b16 %v2509, %v2509
  %v2568 = vpack.c.b16 %v2510, %v2510
  %v2569 = vpack.c.b16 %v2511, %v2511
  %v2570 = vpack.c.b16 %v2512, %v2512
  %v2571 = vpack.c.b16 %v2513, %v2513
  %v2572 = vpack.c.b16 %v2514, %v2514
  %v2573 = vpack.c.b16 %v2515, %v2515
  %v2574 = vpack.c.b16 %v2516, %v2516
  %v2575 = vpack.c.b16 %v2517, %v2517
  %v2576 = vpack.c.b16 %v2518, %v2518
  %v2577 = vpack.c.b16 %v2519, %v2519
  %v2578 = vpack.c.b16 %v2520, %v2520
  %v2579 = vpack.c.b16 %v2521, %v2521
  %v2580 = vpack.c.b16 %v2522, %v2522
  %v2581 = vpack.c.b16 %v2523, %v2523
  %v2582 = vpack.c.b16 %v2524, %v2524
  %v2583 = vpack.c.b16 %v2525, %v2525
  %v2584 = vpack.c.b16 %v2526, %v2526
  %v2585 = vpack.c.b16 %v2527, %v2527
  %v2586 = vpack.c.b16 %v2528, %v2528
  %v2587 = vpack.c.b16 %v2529, %v2529
  %v2588 = vpack.c.b16 %v2530, %v2530
  %v2589 = vpack.c.b16 %v2531, %v2531
  %v2590 = vpack.c.b16 %v2532, %v2532
  %v2591 = vpack.c.b16 %v2533, %v2533
  %v2592 = vpack.c.b16 %v2534, %v2534
  %v2593 = vpack.c.b16 %v2535, %v2535
  %v2594 = vpack.c.b16 %v2536, %v2536
  %v2595 = vpack.c.b16 %v2537, %v2537
  %v2596 = vpack.c.b16 %v2538, %v2538
  %v2597 = vpack.c.b16 %v2539, %v2539
  %v2598 = vpack.c.b16 %v2540, %v2540
  %v2599 = vpack.c.b16 %v2541, %v2541
  %v2600 = vpack.c.b16 %v2542, %v2542
  %v2601 = vpack.c.b16 %v2543, %v2543
  %v2602 = vpack.c.b16 %v2544, %v2544
  %v2603 = vpack.c.b16 %v2545, %v2545
  %v2604 = vpack.c.b16 %v2546, %v2546
  %v2605 = vpack.c.b16 %v2547, %v2547
  %v2606 = vpack.c.b16 %v2548, %v2548
  %v2607 = vpack.c.b16 %v2549, %v2549
  %v2608 = vpack.c.b16 %v2550, %v2550
  %v2609 = vpack.c.b16 %v2551, %v2551
  %v2610 = vpack.c.b16 %v2552, %v2552
  %v2611 = vpack.c.b16 %v2553, %v2553
  %v2612 = vpack.c.b16 %v2554, %v2554
  %v2613 = vpack.c.b16 %v2555, %v2555
  %v2614 = vpack.c.b16 %v2556, %v2556
  %v2615 = vpack.c.b16 %v2557, %v2557
  %v2616 = vpack.c.b16 %v2558, %v2558
  %v2617 = vpack.c.b16 %v2559, %v2559
  %v2618 = vpack.c.b16 %v2560, %v2560
  %v2619 = vpack.c.b16 %v2561, %v2561
  %v2620 = vpack.c.b16 %v2562, %v2562
  %v2621 = vpack.c.b16 %v2563, %v2563
  %v2622 = vpack.c.b16 %v2564, %v2564
  %v2623 = vpack.c.b16 %v2565, %v2565
  %2682 = vst [vmem:[%s3] sm:$0xf] %v2566
  %2683 = vst [vmem:[%s3 + $0x4] sm:$0xf] %v2567
  %2684 = vst [vmem:[%s3 + $0x8] sm:$0xf] %v2568
  %2685 = vst [vmem:[%s3 + $0xc] sm:$0xf] %v2569
  %2686 = vst [vmem:[%s3 + $0x10] sm:$0xf] %v2570
  %2687 = vst [vmem:[%s3 + $0x14] sm:$0xf] %v2571
  %2688 = vst [vmem:[%s3 + $0x18] sm:$0xf] %v2572
  %2689 = vst [vmem:[%s3 + $0x1c] sm:$0xf] %v2573
  %2690 = vst [vmem:[%s3 + $0x20] sm:$0xf] %v2574
  %2691 = vst [vmem:[%s3 + $0x24] sm:$0xf] %v2575
  %2692 = vst [vmem:[%s3 + $0x28] sm:$0xf] %v2576
  %2693 = vst [vmem:[%s3 + $0x2c] sm:$0xf] %v2577
  %2694 = vst [vmem:[%s3 + $0x30] sm:$0xf] %v2578
  %2695 = vst [vmem:[%s3 + $0x34] sm:$0xf] %v2579
  %2696 = vst [vmem:[%s3 + $0x38] sm:$0xf] %v2580
  %2697 = vst [vmem:[%s3 + $0x3c] sm:$0xf] %v2581
  %2698 = vst [vmem:[%s3 + $0x40] sm:$0xf] %v2582
  %2699 = vst [vmem:[%s3 + $0x44] sm:$0xf] %v2583
  %2700 = vst [vmem:[%s3 + $0x48] sm:$0xf] %v2584
  %2701 = vst [vmem:[%s3 + $0x4c] sm:$0xf] %v2585
  %2702 = vst [vmem:[%s3 + $0x50] sm:$0xf] %v2586
  %2703 = vst [vmem:[%s3 + $0x54] sm:$0xf] %v2587
  %2704 = vst [vmem:[%s3 + $0x58] sm:$0xf] %v2588
  %2705 = vst [vmem:[%s3 + $0x5c] sm:$0xf] %v2589
  %2706 = vst [vmem:[%s3 + $0x60] sm:$0xf] %v2590
  %2707 = vst [vmem:[%s3 + $0x64] sm:$0xf] %v2591
  %2708 = vst [vmem:[%s3 + $0x68] sm:$0xf] %v2592
  %2709 = vst [vmem:[%s3 + $0x6c] sm:$0xf] %v2593
  %2710 = vst [vmem:[%s3 + $0x70] sm:$0xf] %v2594
  %2711 = vst [vmem:[%s3 + $0x74] sm:$0xf] %v2595
  %2712 = vst [vmem:[%s3 + $0x78] sm:$0xf] %v2596
  %2713 = vst [vmem:[%s3 + $0x7c] sm:$0xf] %v2597
  %2714 = vst [vmem:[%s3 + $0x80] sm:$0xf] %v2598
  %2715 = vst [vmem:[%s3 + $0x84] sm:$0xf] %v2599
  %2716 = vst [vmem:[%s3 + $0x88] sm:$0xf] %v2600
  %2717 = vst [vmem:[%s3 + $0x8c] sm:$0xf] %v2601
  %2718 = vst [vmem:[%s3 + $0x90] sm:$0xf] %v2602
  %2719 = vst [vmem:[%s3 + $0x94] sm:$0xf] %v2603
  %2720 = vst [vmem:[%s3 + $0x98] sm:$0xf] %v2604
  %2721 = vst [vmem:[%s3 + $0x9c] sm:$0xf] %v2605
  %2722 = vst [vmem:[%s3 + $0xa0] sm:$0xf] %v2606
  %2723 = vst [vmem:[%s3 + $0xa4] sm:$0xf] %v2607
  %2724 = vst [vmem:[%s3 + $0xa8] sm:$0xf] %v2608
  %2725 = vst [vmem:[%s3 + $0xac] sm:$0xf] %v2609
  %2726 = vst [vmem:[%s3 + $0xb0] sm:$0xf] %v2610
  %2727 = vst [vmem:[%s3 + $0xb4] sm:$0xf] %v2611
  %2728 = vst [vmem:[%s3 + $0xb8] sm:$0xf] %v2612
  %2729 = vst [vmem:[%s3 + $0xbc] sm:$0xf] %v2613
  %2730 = vst [vmem:[%s3 + $0xc0] sm:$0xf] %v2614
  %2731 = vst [vmem:[%s3 + $0xc4] sm:$0xf] %v2615
  %2732 = vst [vmem:[%s3 + $0xc8] sm:$0xf] %v2616
  %2733 = vst [vmem:[%s3 + $0xcc] sm:$0xf] %v2617
  %2734 = vst [vmem:[%s3 + $0xd0] sm:$0xf] %v2618
  %2735 = vst [vmem:[%s3 + $0xd4] sm:$0xf] %v2619
  %2736 = vst [vmem:[%s3 + $0xd8] sm:$0xf] %v2620
  %2737 = vst [vmem:[%s3 + $0xdc] sm:$0xf] %v2621
  %2738 = vst [vmem:[%s3 + $0xe0] sm:$0xf] %v2622
  %2739 = vst [vmem:[%s3 + $0xe4] sm:$0xf] %v2623
  // Predicated region
  $region14: #{net_forward.3} parent=0 // pred_check
    _
  $region15: #{net_forward.3} parent=0 // pred_check_branch
    %2741 = sbr.rel (0) target = $region17
  $region16: #{net_forward.3} parent=0 // pred_region
    _
  $region17: #{net_forward.3} parent=0 // pred_fallthru
    _
  // Predicated region
  $region18: #{net_forward.3} parent=0 // pred_check
    _
  $region19: #{net_forward.3} parent=0 // pred_check_branch
    %2743 = sbr.rel (0) target = $region21
  $region20: #{net_forward.3} parent=0 // pred_region
    _
  $region21: #{net_forward.3} parent=0 // pred_fallthru
    _

// kernel: net_forward.4
$region0: #{net_forward.4}
  #allocation0 [shape = 'u32[]', space=smem, size = 0x4, offset = 0x4, fixed_abs, tag = 'smem constant byte address 0x4 - core index']
  #allocation1 [shape = 'u32[144,128]{1,0:T(1,128)}', space=vmem, size = 0x12000, scoped, tag = 'internal scratch']
  %s0 = inlined_call_operand.vmem [shape: bf16[2,4,32,3200], index: 0, kind: input, shape index: {}]
  %s1 = inlined_call_operand.vmem [shape: bf16[3200,128], index: 1, kind: input, shape index: {}]
  %s2 = inlined_call_operand.vmem [shape: f32[1,128], index: 2, kind: input, shape index: {}]
  %s3 = inlined_call_operand.vmem [shape: bf16[2,32,128], index: 3, kind: output, shape index: {}]
  %s4 = sld [smem:[#allocation0]]
  $region22: #{net_forward.4} parent=0
    _
  %s6 = ssub.s32 1, %s4
  %s7 = scalar_select 0, %s6, %s4
  // Predicated region
  $region2: #{net_forward.4} parent=0 // pred_check
    _
  $region3: #{net_forward.4} parent=0 // pred_check_branch
    %9 = sbr.rel (0) target = $region5
  $region4: #{net_forward.4} parent=0 // pred_region
    _
  $region5: #{net_forward.4} parent=0 // pred_fallthru
    _
  // Predicated region
  $region6: #{net_forward.4} parent=0 // pred_check
    _
  $region7: #{net_forward.4} parent=0 // pred_check_branch
    %11 = sbr.rel (0) target = $region9
  $region8: #{net_forward.4} parent=0 // pred_region
    _
  $region9: #{net_forward.4} parent=0 // pred_fallthru
    _
  // Predicated region
  $region10: #{net_forward.4} parent=0 // pred_check
    _
  $region11: #{net_forward.4} parent=0 // pred_check_branch
    %13 = sbr.rel (0) target = $region13
  $region12: #{net_forward.4} parent=0 // pred_region
    _
  $region13: #{net_forward.4} parent=0 // pred_fallthru
    _
  %v15 = vld [vmem:[%s0] sm:$0xff]
  %v16 = vld [vmem:[%s0 + $0x8] sm:$0xff]
  %v17 = vld [vmem:[%s0 + $0x10] sm:$0xff]
  %v18 = vld [vmem:[%s0 + $0x18] sm:$0xff]
  %v19 = vld [vmem:[%s0 + $0x20] sm:$0xff]
  %v20 = vld [vmem:[%s0 + $0x28] sm:$0xff]
  %v21 = vld [vmem:[%s0 + $0x30] sm:$0xff]
  %v22 = vld [vmem:[%s0 + $0x38] sm:$0xff]
  %v23 = vld [vmem:[%s0 + $0x40] sm:$0xff]
  %v24 = vld [vmem:[%s0 + $0x48] sm:$0xff]
  %v25 = vld [vmem:[%s0 + $0x50] sm:$0xff]
  %v26 = vld [vmem:[%s0 + $0x58] sm:$0xff]
  %v27 = vld [vmem:[%s0 + $0x60] sm:$0xf]
  %v28 = vld [vmem:[%s0 + $0x64] sm:$0xff]
  %v29 = vld [vmem:[%s0 + $0x6c] sm:$0xff]
  %v30 = vld [vmem:[%s0 + $0x74] sm:$0xff]
  %v31 = vld [vmem:[%s0 + $0x7c] sm:$0xff]
  %v32 = vld [vmem:[%s0 + $0x84] sm:$0xff]
  %v33 = vld [vmem:[%s0 + $0x8c] sm:$0xff]
  %v34 = vld [vmem:[%s0 + $0x94] sm:$0xff]
  %v35 = vld [vmem:[%s0 + $0x9c] sm:$0xff]
  %v36 = vld [vmem:[%s0 + $0xa4] sm:$0xff]
  %v37 = vld [vmem:[%s0 + $0xac] sm:$0xff]
  %v38 = vld [vmem:[%s0 + $0xb4] sm:$0xff]
  %v39 = vld [vmem:[%s0 + $0xbc] sm:$0xff]
  %v40 = vld [vmem:[%s0 + $0xc4] sm:$0xf]
  %v41 = vld [vmem:[%s0 + $0xc8] sm:$0xff]
  %v42 = vld [vmem:[%s0 + $0xd0] sm:$0xff]
  %v43 = vld [vmem:[%s0 + $0xd8] sm:$0xff]
  %v44 = vld [vmem:[%s0 + $0xe0] sm:$0xff]
  %v45 = vld [vmem:[%s0 + $0xe8] sm:$0xff]
  %v46 = vld [vmem:[%s0 + $0xf0] sm:$0xff]
  %v47 = vld [vmem:[%s0 + $0xf8] sm:$0xff]
  %v48 = vld [vmem:[%s0 + $0x100] sm:$0xff]
  %v49 = vld [vmem:[%s0 + $0x108] sm:$0xff]
  %v50 = vld [vmem:[%s0 + $0x110] sm:$0xff]
  %v51 = vld [vmem:[%s0 + $0x118] sm:$0xff]
  %v52 = vld [vmem:[%s0 + $0x120] sm:$0xff]
  %v53 = vld [vmem:[%s0 + $0x128] sm:$0xf]
  %v54 = vld [vmem:[%s0 + $0x12c] sm:$0xff]
  %v55 = vld [vmem:[%s0 + $0x134] sm:$0xff]
  %v56 = vld [vmem:[%s0 + $0x13c] sm:$0xff]
  %v57 = vld [vmem:[%s0 + $0x144] sm:$0xff]
  %v58 = vld [vmem:[%s0 + $0x14c] sm:$0xff]
  %v59 = vld [vmem:[%s0 + $0x154] sm:$0xff]
  %v60 = vld [vmem:[%s0 + $0x15c] sm:$0xff]
  %v61 = vld [vmem:[%s0 + $0x164] sm:$0xff]
  %v62 = vld [vmem:[%s0 + $0x16c] sm:$0xff]
  %v63 = vld [vmem:[%s0 + $0x174] sm:$0xff]
  %v64 = vld [vmem:[%s0 + $0x17c] sm:$0xff]
  %v65 = vld [vmem:[%s0 + $0x184] sm:$0xff]
  %v66 = vld [vmem:[%s0 + $0x18c] sm:$0xf]
  %v67 = vld [vmem:[%s0 + $0x190] sm:$0xff]
  %v68 = vld [vmem:[%s0 + $0x198] sm:$0xff]
  %v69 = vld [vmem:[%s0 + $0x1a0] sm:$0xff]
  %v70 = vld [vmem:[%s0 + $0x1a8] sm:$0xff]
  %v71 = vld [vmem:[%s0 + $0x1b0] sm:$0xff]
  %v72 = vld [vmem:[%s0 + $0x1b8] sm:$0xff]
  %v73 = vld [vmem:[%s0 + $0x1c0] sm:$0xff]
  %v74 = vld [vmem:[%s0 + $0x1c8] sm:$0xff]
  %v75 = vld [vmem:[%s0 + $0x1d0] sm:$0xff]
  %v76 = vld [vmem:[%s0 + $0x1d8] sm:$0xff]
  %v77 = vld [vmem:[%s0 + $0x1e0] sm:$0xff]
  %v78 = vld [vmem:[%s0 + $0x1e8] sm:$0xff]
  %v79 = vld [vmem:[%s0 + $0x1f0] sm:$0xf]
  %v80 = vld [vmem:[%s0 + $0x1f4] sm:$0xff]
  %v81 = vld [vmem:[%s0 + $0x1fc] sm:$0xff]
  %v82 = vld [vmem:[%s0 + $0x204] sm:$0xff]
  %v83 = vld [vmem:[%s0 + $0x20c] sm:$0xff]
  %v84 = vld [vmem:[%s0 + $0x214] sm:$0xff]
  %v85 = vld [vmem:[%s0 + $0x21c] sm:$0xff]
  %v86 = vld [vmem:[%s0 + $0x224] sm:$0xff]
  %v87 = vld [vmem:[%s0 + $0x22c] sm:$0xff]
  %v88 = vld [vmem:[%s0 + $0x234] sm:$0xff]
  %v89 = vld [vmem:[%s0 + $0x23c] sm:$0xff]
  %v90 = vld [vmem:[%s0 + $0x244] sm:$0xff]
  %v91 = vld [vmem:[%s0 + $0x24c] sm:$0xff]
  %v92 = vld [vmem:[%s0 + $0x254] sm:$0xf]
  %v93 = vld [vmem:[%s0 + $0x258] sm:$0xff]
  %v94 = vld [vmem:[%s0 + $0x260] sm:$0xff]
  %v95 = vld [vmem:[%s0 + $0x268] sm:$0xff]
  %v96 = vld [vmem:[%s0 + $0x270] sm:$0xff]
  %v97 = vld [vmem:[%s0 + $0x278] sm:$0xff]
  %v98 = vld [vmem:[%s0 + $0x280] sm:$0xff]
  %v99 = vld [vmem:[%s0 + $0x288] sm:$0xff]
  %v100 = vld [vmem:[%s0 + $0x290] sm:$0xff]
  %v101 = vld [vmem:[%s0 + $0x298] sm:$0xff]
  %v102 = vld [vmem:[%s0 + $0x2a0] sm:$0xff]
  %v103 = vld [vmem:[%s0 + $0x2a8] sm:$0xff]
  %v104 = vld [vmem:[%s0 + $0x2b0] sm:$0xff]
  %v105 = vld [vmem:[%s0 + $0x2b8] sm:$0xf]
  %v106 = vld [vmem:[%s0 + $0x2bc] sm:$0xff]
  %v107 = vld [vmem:[%s0 + $0x2c4] sm:$0xff]
  %v108 = vld [vmem:[%s0 + $0x2cc] sm:$0xff]
  %v109 = vld [vmem:[%s0 + $0x2d4] sm:$0xff]
  %v110 = vld [vmem:[%s0 + $0x2dc] sm:$0xff]
  %v111 = vld [vmem:[%s0 + $0x2e4] sm:$0xff]
  %v112 = vld [vmem:[%s0 + $0x2ec] sm:$0xff]
  %v113 = vld [vmem:[%s0 + $0x2f4] sm:$0xff]
  %v114 = vld [vmem:[%s0 + $0x2fc] sm:$0xff]
  %v115 = vld [vmem:[%s0 + $0x304] sm:$0xff]
  %v116 = vld [vmem:[%s0 + $0x30c] sm:$0xff]
  %v117 = vld [vmem:[%s0 + $0x314] sm:$0xff]
  %v118 = vld [vmem:[%s0 + $0x31c] sm:$0xf]
  %v119 = vld [vmem:[%s0 + $0x320] sm:$0xff]
  %v120 = vld [vmem:[%s0 + $0x328] sm:$0xff]
  %v121 = vld [vmem:[%s0 + $0x330] sm:$0xff]
  %v122 = vld [vmem:[%s0 + $0x338] sm:$0xff]
  %v123 = vld [vmem:[%s0 + $0x340] sm:$0xff]
  %v124 = vld [vmem:[%s0 + $0x348] sm:$0xff]
  %v125 = vld [vmem:[%s0 + $0x350] sm:$0xff]
  %v126 = vld [vmem:[%s0 + $0x358] sm:$0xff]
  %v127 = vld [vmem:[%s0 + $0x360] sm:$0xff]
  %v128 = vld [vmem:[%s0 + $0x368] sm:$0xff]
  %v129 = vld [vmem:[%s0 + $0x370] sm:$0xff]
  %v130 = vld [vmem:[%s0 + $0x378] sm:$0xff]
  %v131 = vld [vmem:[%s0 + $0x380] sm:$0xf]
  %v132 = vld [vmem:[%s0 + $0x384] sm:$0xff]
  %v133 = vld [vmem:[%s0 + $0x38c] sm:$0xff]
  %v134 = vld [vmem:[%s0 + $0x394] sm:$0xff]
  %v135 = vld [vmem:[%s0 + $0x39c] sm:$0xff]
  %v136 = vld [vmem:[%s0 + $0x3a4] sm:$0xff]
  %v137 = vld [vmem:[%s0 + $0x3ac] sm:$0xff]
  %v138 = vld [vmem:[%s0 + $0x3b4] sm:$0xff]
  %v139 = vld [vmem:[%s0 + $0x3bc] sm:$0xff]
  %v140 = vld [vmem:[%s0 + $0x3c4] sm:$0xff]
  %v141 = vld [vmem:[%s0 + $0x3cc] sm:$0xff]
  %v142 = vld [vmem:[%s0 + $0x3d4] sm:$0xff]
  %v143 = vld [vmem:[%s0 + $0x3dc] sm:$0xff]
  %v144 = vld [vmem:[%s0 + $0x3e4] sm:$0xf]
  %v145 = vld [vmem:[%s0 + $0x3e8] sm:$0xff]
  %v146 = vld [vmem:[%s0 + $0x3f0] sm:$0xff]
  %v147 = vld [vmem:[%s0 + $0x3f8] sm:$0xff]
  %v148 = vld [vmem:[%s0 + $0x400] sm:$0xff]
  %v149 = vld [vmem:[%s0 + $0x408] sm:$0xff]
  %v150 = vld [vmem:[%s0 + $0x410] sm:$0xff]
  %v151 = vld [vmem:[%s0 + $0x418] sm:$0xff]
  %v152 = vld [vmem:[%s0 + $0x420] sm:$0xff]
  %v153 = vld [vmem:[%s0 + $0x428] sm:$0xff]
  %v154 = vld [vmem:[%s0 + $0x430] sm:$0xff]
  %v155 = vld [vmem:[%s0 + $0x438] sm:$0xff]
  %v156 = vld [vmem:[%s0 + $0x440] sm:$0xff]
  %v157 = vld [vmem:[%s0 + $0x448] sm:$0xf]
  %v158 = vld [vmem:[%s0 + $0x44c] sm:$0xff]
  %v159 = vld [vmem:[%s0 + $0x454] sm:$0xff]
  %v160 = vld [vmem:[%s0 + $0x45c] sm:$0xff]
  %v161 = vld [vmem:[%s0 + $0x464] sm:$0xff]
  %v162 = vld [vmem:[%s0 + $0x46c] sm:$0xff]
  %v163 = vld [vmem:[%s0 + $0x474] sm:$0xff]
  %v164 = vld [vmem:[%s0 + $0x47c] sm:$0xff]
  %v165 = vld [vmem:[%s0 + $0x484] sm:$0xff]
  %v166 = vld [vmem:[%s0 + $0x48c] sm:$0xff]
  %v167 = vld [vmem:[%s0 + $0x494] sm:$0xff]
  %v168 = vld [vmem:[%s0 + $0x49c] sm:$0xff]
  %v169 = vld [vmem:[%s0 + $0x4a4] sm:$0xff]
  %v170 = vld [vmem:[%s0 + $0x4ac] sm:$0xf]
  %v171 = vld [vmem:[%s0 + $0x4b0] sm:$0xff]
  %v172 = vld [vmem:[%s0 + $0x4b8] sm:$0xff]
  %v173 = vld [vmem:[%s0 + $0x4c0] sm:$0xff]
  %v174 = vld [vmem:[%s0 + $0x4c8] sm:$0xff]
  %v175 = vld [vmem:[%s0 + $0x4d0] sm:$0xff]
  %v176 = vld [vmem:[%s0 + $0x4d8] sm:$0xff]
  %v177 = vld [vmem:[%s0 + $0x4e0] sm:$0xff]
  %v178 = vld [vmem:[%s0 + $0x4e8] sm:$0xff]
  %v179 = vld [vmem:[%s0 + $0x4f0] sm:$0xff]
  %v180 = vld [vmem:[%s0 + $0x4f8] sm:$0xff]
  %v181 = vld [vmem:[%s0 + $0x500] sm:$0xff]
  %v182 = vld [vmem:[%s0 + $0x508] sm:$0xff]
  %v183 = vld [vmem:[%s0 + $0x510] sm:$0xf]
  %v184 = vld [vmem:[%s0 + $0x514] sm:$0xff]
  %v185 = vld [vmem:[%s0 + $0x51c] sm:$0xff]
  %v186 = vld [vmem:[%s0 + $0x524] sm:$0xff]
  %v187 = vld [vmem:[%s0 + $0x52c] sm:$0xff]
  %v188 = vld [vmem:[%s0 + $0x534] sm:$0xff]
  %v189 = vld [vmem:[%s0 + $0x53c] sm:$0xff]
  %v190 = vld [vmem:[%s0 + $0x544] sm:$0xff]
  %v191 = vld [vmem:[%s0 + $0x54c] sm:$0xff]
  %v192 = vld [vmem:[%s0 + $0x554] sm:$0xff]
  %v193 = vld [vmem:[%s0 + $0x55c] sm:$0xff]
  %v194 = vld [vmem:[%s0 + $0x564] sm:$0xff]
  %v195 = vld [vmem:[%s0 + $0x56c] sm:$0xff]
  %v196 = vld [vmem:[%s0 + $0x574] sm:$0xf]
  %v197 = vld [vmem:[%s0 + $0x578] sm:$0xff]
  %v198 = vld [vmem:[%s0 + $0x580] sm:$0xff]
  %v199 = vld [vmem:[%s0 + $0x588] sm:$0xff]
  %v200 = vld [vmem:[%s0 + $0x590] sm:$0xff]
  %v201 = vld [vmem:[%s0 + $0x598] sm:$0xff]
  %v202 = vld [vmem:[%s0 + $0x5a0] sm:$0xff]
  %v203 = vld [vmem:[%s0 + $0x5a8] sm:$0xff]
  %v204 = vld [vmem:[%s0 + $0x5b0] sm:$0xff]
  %v205 = vld [vmem:[%s0 + $0x5b8] sm:$0xff]
  %v206 = vld [vmem:[%s0 + $0x5c0] sm:$0xff]
  %v207 = vld [vmem:[%s0 + $0x5c8] sm:$0xff]
  %v208 = vld [vmem:[%s0 + $0x5d0] sm:$0xff]
  %v209 = vld [vmem:[%s0 + $0x5d8] sm:$0xf]
  %v210 = vld [vmem:[%s0 + $0x5dc] sm:$0xff]
  %v211 = vld [vmem:[%s0 + $0x5e4] sm:$0xff]
  %v212 = vld [vmem:[%s0 + $0x5ec] sm:$0xff]
  %v213 = vld [vmem:[%s0 + $0x5f4] sm:$0xff]
  %v214 = vld [vmem:[%s0 + $0x5fc] sm:$0xff]
  %v215 = vld [vmem:[%s0 + $0x604] sm:$0xff]
  %v216 = vld [vmem:[%s0 + $0x60c] sm:$0xff]
  %v217 = vld [vmem:[%s0 + $0x614] sm:$0xff]
  %v218 = vld [vmem:[%s0 + $0x61c] sm:$0xff]
  %v219 = vld [vmem:[%s0 + $0x624] sm:$0xff]
  %v220 = vld [vmem:[%s0 + $0x62c] sm:$0xff]
  %v221 = vld [vmem:[%s0 + $0x634] sm:$0xff]
  %v222 = vld [vmem:[%s0 + $0x63c] sm:$0xf]
  %v223 = vld [vmem:[%s0 + $0x640] sm:$0xff]
  %v224 = vld [vmem:[%s0 + $0x648] sm:$0xff]
  %v225 = vld [vmem:[%s0 + $0x650] sm:$0xff]
  %v226 = vld [vmem:[%s0 + $0x658] sm:$0xff]
  %v227 = vld [vmem:[%s0 + $0x660] sm:$0xff]
  %v228 = vld [vmem:[%s0 + $0x668] sm:$0xff]
  %v229 = vld [vmem:[%s0 + $0x670] sm:$0xff]
  %v230 = vld [vmem:[%s0 + $0x678] sm:$0xff]
  %v231 = vld [vmem:[%s0 + $0x680] sm:$0xff]
  %v232 = vld [vmem:[%s0 + $0x688] sm:$0xff]
  %v233 = vld [vmem:[%s0 + $0x690] sm:$0xff]
  %v234 = vld [vmem:[%s0 + $0x698] sm:$0xff]
  %v235 = vld [vmem:[%s0 + $0x6a0] sm:$0xf]
  %v236 = vld [vmem:[%s0 + $0x6a4] sm:$0xff]
  %v237 = vld [vmem:[%s0 + $0x6ac] sm:$0xff]
  %v238 = vld [vmem:[%s0 + $0x6b4] sm:$0xff]
  %v239 = vld [vmem:[%s0 + $0x6bc] sm:$0xff]
  %v240 = vld [vmem:[%s0 + $0x6c4] sm:$0xff]
  %v241 = vld [vmem:[%s0 + $0x6cc] sm:$0xff]
  %v242 = vld [vmem:[%s0 + $0x6d4] sm:$0xff]
  %v243 = vld [vmem:[%s0 + $0x6dc] sm:$0xff]
  %v244 = vld [vmem:[%s0 + $0x6e4] sm:$0xff]
  %v245 = vld [vmem:[%s0 + $0x6ec] sm:$0xff]
  %v246 = vld [vmem:[%s0 + $0x6f4] sm:$0xff]
  %v247 = vld [vmem:[%s0 + $0x6fc] sm:$0xff]
  %v248 = vld [vmem:[%s0 + $0x704] sm:$0xf]
  %v249 = vld [vmem:[%s0 + $0x708] sm:$0xff]
  %v250 = vld [vmem:[%s0 + $0x710] sm:$0xff]
  %v251 = vld [vmem:[%s0 + $0x718] sm:$0xff]
  %v252 = vld [vmem:[%s0 + $0x720] sm:$0xff]
  %v253 = vld [vmem:[%s0 + $0x728] sm:$0xff]
  %v254 = vld [vmem:[%s0 + $0x730] sm:$0xff]
  %v255 = vld [vmem:[%s0 + $0x738] sm:$0xff]
  %v256 = vld [vmem:[%s0 + $0x740] sm:$0xff]
  %v257 = vld [vmem:[%s0 + $0x748] sm:$0xff]
  %v258 = vld [vmem:[%s0 + $0x750] sm:$0xff]
  %v259 = vld [vmem:[%s0 + $0x758] sm:$0xff]
  %v260 = vld [vmem:[%s0 + $0x760] sm:$0xff]
  %v261 = vld [vmem:[%s0 + $0x768] sm:$0xf]
  %v262 = vld [vmem:[%s0 + $0x76c] sm:$0xff]
  %v263 = vld [vmem:[%s0 + $0x774] sm:$0xff]
  %v264 = vld [vmem:[%s0 + $0x77c] sm:$0xff]
  %v265 = vld [vmem:[%s0 + $0x784] sm:$0xff]
  %v266 = vld [vmem:[%s0 + $0x78c] sm:$0xff]
  %v267 = vld [vmem:[%s0 + $0x794] sm:$0xff]
  %v268 = vld [vmem:[%s0 + $0x79c] sm:$0xff]
  %v269 = vld [vmem:[%s0 + $0x7a4] sm:$0xff]
  %v270 = vld [vmem:[%s0 + $0x7ac] sm:$0xff]
  %v271 = vld [vmem:[%s0 + $0x7b4] sm:$0xff]
  %v272 = vld [vmem:[%s0 + $0x7bc] sm:$0xff]
  %v273 = vld [vmem:[%s0 + $0x7c4] sm:$0xff]
  %v274 = vld [vmem:[%s0 + $0x7cc] sm:$0xf]
  %v275 = vld [vmem:[%s0 + $0x7d0] sm:$0xff]
  %v276 = vld [vmem:[%s0 + $0x7d8] sm:$0xff]
  %v277 = vld [vmem:[%s0 + $0x7e0] sm:$0xff]
  %v278 = vld [vmem:[%s0 + $0x7e8] sm:$0xff]
  %v279 = vld [vmem:[%s0 + $0x7f0] sm:$0xff]
  %v280 = vld [vmem:[%s0 + $0x7f8] sm:$0xff]
  %v281 = vld [vmem:[%s0 + $0x800] sm:$0xff]
  %v282 = vld [vmem:[%s0 + $0x808] sm:$0xff]
  %v283 = vld [vmem:[%s0 + $0x810] sm:$0xff]
  %v284 = vld [vmem:[%s0 + $0x818] sm:$0xff]
  %v285 = vld [vmem:[%s0 + $0x820] sm:$0xff]
  %v286 = vld [vmem:[%s0 + $0x828] sm:$0xff]
  %v287 = vld [vmem:[%s0 + $0x830] sm:$0xf]
  %v288 = vld [vmem:[%s0 + $0x834] sm:$0xff]
  %v289 = vld [vmem:[%s0 + $0x83c] sm:$0xff]
  %v290 = vld [vmem:[%s0 + $0x844] sm:$0xff]
  %v291 = vld [vmem:[%s0 + $0x84c] sm:$0xff]
  %v292 = vld [vmem:[%s0 + $0x854] sm:$0xff]
  %v293 = vld [vmem:[%s0 + $0x85c] sm:$0xff]
  %v294 = vld [vmem:[%s0 + $0x864] sm:$0xff]
  %v295 = vld [vmem:[%s0 + $0x86c] sm:$0xff]
  %v296 = vld [vmem:[%s0 + $0x874] sm:$0xff]
  %v297 = vld [vmem:[%s0 + $0x87c] sm:$0xff]
  %v298 = vld [vmem:[%s0 + $0x884] sm:$0xff]
  %v299 = vld [vmem:[%s0 + $0x88c] sm:$0xff]
  %v300 = vld [vmem:[%s0 + $0x894] sm:$0xf]
  %v301 = vld [vmem:[%s0 + $0x898] sm:$0xff]
  %v302 = vld [vmem:[%s0 + $0x8a0] sm:$0xff]
  %v303 = vld [vmem:[%s0 + $0x8a8] sm:$0xff]
  %v304 = vld [vmem:[%s0 + $0x8b0] sm:$0xff]
  %v305 = vld [vmem:[%s0 + $0x8b8] sm:$0xff]
  %v306 = vld [vmem:[%s0 + $0x8c0] sm:$0xff]
  %v307 = vld [vmem:[%s0 + $0x8c8] sm:$0xff]
  %v308 = vld [vmem:[%s0 + $0x8d0] sm:$0xff]
  %v309 = vld [vmem:[%s0 + $0x8d8] sm:$0xff]
  %v310 = vld [vmem:[%s0 + $0x8e0] sm:$0xff]
  %v311 = vld [vmem:[%s0 + $0x8e8] sm:$0xff]
  %v312 = vld [vmem:[%s0 + $0x8f0] sm:$0xff]
  %v313 = vld [vmem:[%s0 + $0x8f8] sm:$0xf]
  %v314 = vld [vmem:[%s0 + $0x8fc] sm:$0xff]
  %v315 = vld [vmem:[%s0 + $0x904] sm:$0xff]
  %v316 = vld [vmem:[%s0 + $0x90c] sm:$0xff]
  %v317 = vld [vmem:[%s0 + $0x914] sm:$0xff]
  %v318 = vld [vmem:[%s0 + $0x91c] sm:$0xff]
  %v319 = vld [vmem:[%s0 + $0x924] sm:$0xff]
  %v320 = vld [vmem:[%s0 + $0x92c] sm:$0xff]
  %v321 = vld [vmem:[%s0 + $0x934] sm:$0xff]
  %v322 = vld [vmem:[%s0 + $0x93c] sm:$0xff]
  %v323 = vld [vmem:[%s0 + $0x944] sm:$0xff]
  %v324 = vld [vmem:[%s0 + $0x94c] sm:$0xff]
  %v325 = vld [vmem:[%s0 + $0x954] sm:$0xff]
  %v326 = vld [vmem:[%s0 + $0x95c] sm:$0xf]
  %v327 = vld [vmem:[%s0 + $0x960] sm:$0xff]
  %v328 = vld [vmem:[%s0 + $0x968] sm:$0xff]
  %v329 = vld [vmem:[%s0 + $0x970] sm:$0xff]
  %v330 = vld [vmem:[%s0 + $0x978] sm:$0xff]
  %v331 = vld [vmem:[%s0 + $0x980] sm:$0xff]
  %v332 = vld [vmem:[%s0 + $0x988] sm:$0xff]
  %v333 = vld [vmem:[%s0 + $0x990] sm:$0xff]
  %v334 = vld [vmem:[%s0 + $0x998] sm:$0xff]
  %v335 = vld [vmem:[%s0 + $0x9a0] sm:$0xff]
  %v336 = vld [vmem:[%s0 + $0x9a8] sm:$0xff]
  %v337 = vld [vmem:[%s0 + $0x9b0] sm:$0xff]
  %v338 = vld [vmem:[%s0 + $0x9b8] sm:$0xff]
  %v339 = vld [vmem:[%s0 + $0x9c0] sm:$0xf]
  %v340 = vld [vmem:[%s0 + $0x9c4] sm:$0xff]
  %v341 = vld [vmem:[%s0 + $0x9cc] sm:$0xff]
  %v342 = vld [vmem:[%s0 + $0x9d4] sm:$0xff]
  %v343 = vld [vmem:[%s0 + $0x9dc] sm:$0xff]
  %v344 = vld [vmem:[%s0 + $0x9e4] sm:$0xff]
  %v345 = vld [vmem:[%s0 + $0x9ec] sm:$0xff]
  %v346 = vld [vmem:[%s0 + $0x9f4] sm:$0xff]
  %v347 = vld [vmem:[%s0 + $0x9fc] sm:$0xff]
  %v348 = vld [vmem:[%s0 + $0xa04] sm:$0xff]
  %v349 = vld [vmem:[%s0 + $0xa0c] sm:$0xff]
  %v350 = vld [vmem:[%s0 + $0xa14] sm:$0xff]
  %v351 = vld [vmem:[%s0 + $0xa1c] sm:$0xff]
  %v352 = vld [vmem:[%s0 + $0xa24] sm:$0xf]
  %v353 = vld [vmem:[%s0 + $0xa28] sm:$0xff]
  %v354 = vld [vmem:[%s0 + $0xa30] sm:$0xff]
  %v355 = vld [vmem:[%s0 + $0xa38] sm:$0xff]
  %v356 = vld [vmem:[%s0 + $0xa40] sm:$0xff]
  %v357 = vld [vmem:[%s0 + $0xa48] sm:$0xff]
  %v358 = vld [vmem:[%s0 + $0xa50] sm:$0xff]
  %v359 = vld [vmem:[%s0 + $0xa58] sm:$0xff]
  %v360 = vld [vmem:[%s0 + $0xa60] sm:$0xff]
  %v361 = vld [vmem:[%s0 + $0xa68] sm:$0xff]
  %v362 = vld [vmem:[%s0 + $0xa70] sm:$0xff]
  %v363 = vld [vmem:[%s0 + $0xa78] sm:$0xff]
  %v364 = vld [vmem:[%s0 + $0xa80] sm:$0xff]
  %v365 = vld [vmem:[%s0 + $0xa88] sm:$0xf]
  %v366 = vld [vmem:[%s0 + $0xa8c] sm:$0xff]
  %v367 = vld [vmem:[%s0 + $0xa94] sm:$0xff]
  %v368 = vld [vmem:[%s0 + $0xa9c] sm:$0xff]
  %v369 = vld [vmem:[%s0 + $0xaa4] sm:$0xff]
  %v370 = vld [vmem:[%s0 + $0xaac] sm:$0xff]
  %v371 = vld [vmem:[%s0 + $0xab4] sm:$0xff]
  %v372 = vld [vmem:[%s0 + $0xabc] sm:$0xff]
  %v373 = vld [vmem:[%s0 + $0xac4] sm:$0xff]
  %v374 = vld [vmem:[%s0 + $0xacc] sm:$0xff]
  %v375 = vld [vmem:[%s0 + $0xad4] sm:$0xff]
  %v376 = vld [vmem:[%s0 + $0xadc] sm:$0xff]
  %v377 = vld [vmem:[%s0 + $0xae4] sm:$0xff]
  %v378 = vld [vmem:[%s0 + $0xaec] sm:$0xf]
  %v379 = vld [vmem:[%s0 + $0xaf0] sm:$0xff]
  %v380 = vld [vmem:[%s0 + $0xaf8] sm:$0xff]
  %v381 = vld [vmem:[%s0 + $0xb00] sm:$0xff]
  %v382 = vld [vmem:[%s0 + $0xb08] sm:$0xff]
  %v383 = vld [vmem:[%s0 + $0xb10] sm:$0xff]
  %v384 = vld [vmem:[%s0 + $0xb18] sm:$0xff]
  %v385 = vld [vmem:[%s0 + $0xb20] sm:$0xff]
  %v386 = vld [vmem:[%s0 + $0xb28] sm:$0xff]
  %v387 = vld [vmem:[%s0 + $0xb30] sm:$0xff]
  %v388 = vld [vmem:[%s0 + $0xb38] sm:$0xff]
  %v389 = vld [vmem:[%s0 + $0xb40] sm:$0xff]
  %v390 = vld [vmem:[%s0 + $0xb48] sm:$0xff]
  %v391 = vld [vmem:[%s0 + $0xb50] sm:$0xf]
  %v392 = vld [vmem:[%s0 + $0xb54] sm:$0xff]
  %v393 = vld [vmem:[%s0 + $0xb5c] sm:$0xff]
  %v394 = vld [vmem:[%s0 + $0xb64] sm:$0xff]
  %v395 = vld [vmem:[%s0 + $0xb6c] sm:$0xff]
  %v396 = vld [vmem:[%s0 + $0xb74] sm:$0xff]
  %v397 = vld [vmem:[%s0 + $0xb7c] sm:$0xff]
  %v398 = vld [vmem:[%s0 + $0xb84] sm:$0xff]
  %v399 = vld [vmem:[%s0 + $0xb8c] sm:$0xff]
  %v400 = vld [vmem:[%s0 + $0xb94] sm:$0xff]
  %v401 = vld [vmem:[%s0 + $0xb9c] sm:$0xff]
  %v402 = vld [vmem:[%s0 + $0xba4] sm:$0xff]
  %v403 = vld [vmem:[%s0 + $0xbac] sm:$0xff]
  %v404 = vld [vmem:[%s0 + $0xbb4] sm:$0xf]
  %v405 = vld [vmem:[%s0 + $0xbb8] sm:$0xff]
  %v406 = vld [vmem:[%s0 + $0xbc0] sm:$0xff]
  %v407 = vld [vmem:[%s0 + $0xbc8] sm:$0xff]
  %v408 = vld [vmem:[%s0 + $0xbd0] sm:$0xff]
  %v409 = vld [vmem:[%s0 + $0xbd8] sm:$0xff]
  %v410 = vld [vmem:[%s0 + $0xbe0] sm:$0xff]
  %v411 = vld [vmem:[%s0 + $0xbe8] sm:$0xff]
  %v412 = vld [vmem:[%s0 + $0xbf0] sm:$0xff]
  %v413 = vld [vmem:[%s0 + $0xbf8] sm:$0xff]
  %v414 = vld [vmem:[%s0 + $0xc00] sm:$0xff]
  %v415 = vld [vmem:[%s0 + $0xc08] sm:$0xff]
  %v416 = vld [vmem:[%s0 + $0xc10] sm:$0xff]
  %v417 = vld [vmem:[%s0 + $0xc18] sm:$0xf]
  %v418 = vld [vmem:[%s0 + $0xc1c] sm:$0xff]
  %v419 = vld [vmem:[%s0 + $0xc24] sm:$0xff]
  %v420 = vld [vmem:[%s0 + $0xc2c] sm:$0xff]
  %v421 = vld [vmem:[%s0 + $0xc34] sm:$0xff]
  %v422 = vld [vmem:[%s0 + $0xc3c] sm:$0xff]
  %v423 = vld [vmem:[%s0 + $0xc44] sm:$0xff]
  %v424 = vld [vmem:[%s0 + $0xc4c] sm:$0xff]
  %v425 = vld [vmem:[%s0 + $0xc54] sm:$0xff]
  %v426 = vld [vmem:[%s0 + $0xc5c] sm:$0xff]
  %v427 = vld [vmem:[%s0 + $0xc64] sm:$0xff]
  %v428 = vld [vmem:[%s0 + $0xc6c] sm:$0xff]
  %v429 = vld [vmem:[%s0 + $0xc74] sm:$0xff]
  %v430 = vld [vmem:[%s0 + $0xc7c] sm:$0xf]
  %v431 = vld [vmem:[%s1] sm:$0xf]
  %v432 = vld [vmem:[%s1 + $0x4] sm:$0xf]
  %v433 = vld [vmem:[%s1 + $0x8] sm:$0xf]
  %v434 = vld [vmem:[%s1 + $0xc] sm:$0xf]
  %v435 = vld [vmem:[%s1 + $0x10] sm:$0xf]
  %v436 = vld [vmem:[%s1 + $0x14] sm:$0xf]
  %v437 = vld [vmem:[%s1 + $0x18] sm:$0xf]
  %v438 = vld [vmem:[%s1 + $0x1c] sm:$0xf]
  %v439 = vld [vmem:[%s1 + $0x20] sm:$0xf]
  %v440 = vld [vmem:[%s1 + $0x24] sm:$0xf]
  %v441 = vld [vmem:[%s1 + $0x28] sm:$0xf]
  %v442 = vld [vmem:[%s1 + $0x2c] sm:$0xf]
  %v443 = vld [vmem:[%s1 + $0x30] sm:$0xf]
  %v444 = vld [vmem:[%s1 + $0x34] sm:$0xf]
  %v445 = vld [vmem:[%s1 + $0x38] sm:$0xf]
  %v446 = vld [vmem:[%s1 + $0x3c] sm:$0xf]
  %v447 = vld [vmem:[%s1 + $0x40] sm:$0xf]
  %v448 = vld [vmem:[%s1 + $0x44] sm:$0xf]
  %v449 = vld [vmem:[%s1 + $0x48] sm:$0xf]
  %v450 = vld [vmem:[%s1 + $0x4c] sm:$0xf]
  %v451 = vld [vmem:[%s1 + $0x50] sm:$0xf]
  %v452 = vld [vmem:[%s1 + $0x54] sm:$0xf]
  %v453 = vld [vmem:[%s1 + $0x58] sm:$0xf]
  %v454 = vld [vmem:[%s1 + $0x5c] sm:$0xf]
  %v455 = vld [vmem:[%s1 + $0x60] sm:$0xf]
  %v456 = vld [vmem:[%s1 + $0x64] sm:$0xf]
  %v457 = vld [vmem:[%s1 + $0x68] sm:$0xf]
  %v458 = vld [vmem:[%s1 + $0x6c] sm:$0xf]
  %v459 = vld [vmem:[%s1 + $0x70] sm:$0xf]
  %v460 = vld [vmem:[%s1 + $0x74] sm:$0xf]
  %v461 = vld [vmem:[%s1 + $0x78] sm:$0xf]
  %v462 = vld [vmem:[%s1 + $0x7c] sm:$0xf]
  %v463 = vld [vmem:[%s1 + $0x80] sm:$0xf]
  %v464 = vld [vmem:[%s1 + $0x84] sm:$0xf]
  %v465 = vld [vmem:[%s1 + $0x88] sm:$0xf]
  %v466 = vld [vmem:[%s1 + $0x8c] sm:$0xf]
  %v467 = vld [vmem:[%s1 + $0x90] sm:$0xf]
  %v468 = vld [vmem:[%s1 + $0x94] sm:$0xf]
  %v469 = vld [vmem:[%s1 + $0x98] sm:$0xf]
  %v470 = vld [vmem:[%s1 + $0x9c] sm:$0xf]
  %v471 = vld [vmem:[%s1 + $0xa0] sm:$0xf]
  %v472 = vld [vmem:[%s1 + $0xa4] sm:$0xf]
  %v473 = vld [vmem:[%s1 + $0xa8] sm:$0xf]
  %v474 = vld [vmem:[%s1 + $0xac] sm:$0xf]
  %v475 = vld [vmem:[%s1 + $0xb0] sm:$0xf]
  %v476 = vld [vmem:[%s1 + $0xb4] sm:$0xf]
  %v477 = vld [vmem:[%s1 + $0xb8] sm:$0xf]
  %v478 = vld [vmem:[%s1 + $0xbc] sm:$0xf]
  %v479 = vld [vmem:[%s1 + $0xc0] sm:$0xf]
  %v480 = vld [vmem:[%s1 + $0xc4] sm:$0xf]
  %v481 = vld [vmem:[%s1 + $0xc8] sm:$0xf]
  %v482 = vld [vmem:[%s1 + $0xcc] sm:$0xf]
  %v483 = vld [vmem:[%s1 + $0xd0] sm:$0xf]
  %v484 = vld [vmem:[%s1 + $0xd4] sm:$0xf]
  %v485 = vld [vmem:[%s1 + $0xd8] sm:$0xf]
  %v486 = vld [vmem:[%s1 + $0xdc] sm:$0xf]
  %v487 = vld [vmem:[%s1 + $0xe0] sm:$0xf]
  %v488 = vld [vmem:[%s1 + $0xe4] sm:$0xf]
  %v489 = vld [vmem:[%s1 + $0xe8] sm:$0xf]
  %v490 = vld [vmem:[%s1 + $0xec] sm:$0xf]
  %v491 = vld [vmem:[%s1 + $0xf0] sm:$0xf]
  %v492 = vld [vmem:[%s1 + $0xf4] sm:$0xf]
  %v493 = vld [vmem:[%s1 + $0xf8] sm:$0xf]
  %v494 = vld [vmem:[%s1 + $0xfc] sm:$0xf]
  %v495 = vld [vmem:[%s1 + $0x100] sm:$0xf]
  %v496 = vld [vmem:[%s1 + $0x104] sm:$0xf]
  %v497 = vld [vmem:[%s1 + $0x108] sm:$0xf]
  %v498 = vld [vmem:[%s1 + $0x10c] sm:$0xf]
  %v499 = vld [vmem:[%s1 + $0x110] sm:$0xf]
  %v500 = vld [vmem:[%s1 + $0x114] sm:$0xf]
  %v501 = vld [vmem:[%s1 + $0x118] sm:$0xf]
  %v502 = vld [vmem:[%s1 + $0x11c] sm:$0xf]
  %v503 = vld [vmem:[%s1 + $0x120] sm:$0xf]
  %v504 = vld [vmem:[%s1 + $0x124] sm:$0xf]
  %v505 = vld [vmem:[%s1 + $0x128] sm:$0xf]
  %v506 = vld [vmem:[%s1 + $0x12c] sm:$0xf]
  %v507 = vld [vmem:[%s1 + $0x130] sm:$0xf]
  %v508 = vld [vmem:[%s1 + $0x134] sm:$0xf]
  %v509 = vld [vmem:[%s1 + $0x138] sm:$0xf]
  %v510 = vld [vmem:[%s1 + $0x13c] sm:$0xf]
  %v511 = vld [vmem:[%s1 + $0x140] sm:$0xf]
  %v512 = vld [vmem:[%s1 + $0x144] sm:$0xf]
  %v513 = vld [vmem:[%s1 + $0x148] sm:$0xf]
  %v514 = vld [vmem:[%s1 + $0x14c] sm:$0xf]
  %v515 = vld [vmem:[%s1 + $0x150] sm:$0xf]
  %v516 = vld [vmem:[%s1 + $0x154] sm:$0xf]
  %v517 = vld [vmem:[%s1 + $0x158] sm:$0xf]
  %v518 = vld [vmem:[%s1 + $0x15c] sm:$0xf]
  %v519 = vld [vmem:[%s1 + $0x160] sm:$0xf]
  %v520 = vld [vmem:[%s1 + $0x164] sm:$0xf]
  %v521 = vld [vmem:[%s1 + $0x168] sm:$0xf]
  %v522 = vld [vmem:[%s1 + $0x16c] sm:$0xf]
  %v523 = vld [vmem:[%s1 + $0x170] sm:$0xf]
  %v524 = vld [vmem:[%s1 + $0x174] sm:$0xf]
  %v525 = vld [vmem:[%s1 + $0x178] sm:$0xf]
  %v526 = vld [vmem:[%s1 + $0x17c] sm:$0xf]
  %v527 = vld [vmem:[%s1 + $0x180] sm:$0xf]
  %v528 = vld [vmem:[%s1 + $0x184] sm:$0xf]
  %v529 = vld [vmem:[%s1 + $0x188] sm:$0xf]
  %v530 = vld [vmem:[%s1 + $0x18c] sm:$0xf]
  %v531 = vld [vmem:[%s1 + $0x190] sm:$0xf]
  %v532 = vld [vmem:[%s1 + $0x194] sm:$0xf]
  %v533 = vld [vmem:[%s1 + $0x198] sm:$0xf]
  %v534 = vld [vmem:[%s1 + $0x19c] sm:$0xf]
  %v535 = vld [vmem:[%s1 + $0x1a0] sm:$0xf]
  %v536 = vld [vmem:[%s1 + $0x1a4] sm:$0xf]
  %v537 = vld [vmem:[%s1 + $0x1a8] sm:$0xf]
  %v538 = vld [vmem:[%s1 + $0x1ac] sm:$0xf]
  %v539 = vld [vmem:[%s1 + $0x1b0] sm:$0xf]
  %v540 = vld [vmem:[%s1 + $0x1b4] sm:$0xf]
  %v541 = vld [vmem:[%s1 + $0x1b8] sm:$0xf]
  %v542 = vld [vmem:[%s1 + $0x1bc] sm:$0xf]
  %v543 = vld [vmem:[%s1 + $0x1c0] sm:$0xf]
  %v544 = vld [vmem:[%s1 + $0x1c4] sm:$0xf]
  %v545 = vld [vmem:[%s1 + $0x1c8] sm:$0xf]
  %v546 = vld [vmem:[%s1 + $0x1cc] sm:$0xf]
  %v547 = vld [vmem:[%s1 + $0x1d0] sm:$0xf]
  %v548 = vld [vmem:[%s1 + $0x1d4] sm:$0xf]
  %v549 = vld [vmem:[%s1 + $0x1d8] sm:$0xf]
  %v550 = vld [vmem:[%s1 + $0x1dc] sm:$0xf]
  %v551 = vld [vmem:[%s1 + $0x1e0] sm:$0xf]
  %v552 = vld [vmem:[%s1 + $0x1e4] sm:$0xf]
  %v553 = vld [vmem:[%s1 + $0x1e8] sm:$0xf]
  %v554 = vld [vmem:[%s1 + $0x1ec] sm:$0xf]
  %v555 = vld [vmem:[%s1 + $0x1f0] sm:$0xf]
  %v556 = vld [vmem:[%s1 + $0x1f4] sm:$0xf]
  %v557 = vld [vmem:[%s1 + $0x1f8] sm:$0xf]
  %v558 = vld [vmem:[%s1 + $0x1fc] sm:$0xf]
  %v559 = vld [vmem:[%s1 + $0x200] sm:$0xf]
  %v560 = vld [vmem:[%s1 + $0x204] sm:$0xf]
  %v561 = vld [vmem:[%s1 + $0x208] sm:$0xf]
  %v562 = vld [vmem:[%s1 + $0x20c] sm:$0xf]
  %v563 = vld [vmem:[%s1 + $0x210] sm:$0xf]
  %v564 = vld [vmem:[%s1 + $0x214] sm:$0xf]
  %v565 = vld [vmem:[%s1 + $0x218] sm:$0xf]
  %v566 = vld [vmem:[%s1 + $0x21c] sm:$0xf]
  %v567 = vld [vmem:[%s1 + $0x220] sm:$0xf]
  %v568 = vld [vmem:[%s1 + $0x224] sm:$0xf]
  %v569 = vld [vmem:[%s1 + $0x228] sm:$0xf]
  %v570 = vld [vmem:[%s1 + $0x22c] sm:$0xf]
  %v571 = vld [vmem:[%s1 + $0x230] sm:$0xf]
  %v572 = vld [vmem:[%s1 + $0x234] sm:$0xf]
  %v573 = vld [vmem:[%s1 + $0x238] sm:$0xf]
  %v574 = vld [vmem:[%s1 + $0x23c] sm:$0xf]
  %v575 = vld [vmem:[%s1 + $0x240] sm:$0xf]
  %v576 = vld [vmem:[%s1 + $0x244] sm:$0xf]
  %v577 = vld [vmem:[%s1 + $0x248] sm:$0xf]
  %v578 = vld [vmem:[%s1 + $0x24c] sm:$0xf]
  %v579 = vld [vmem:[%s1 + $0x250] sm:$0xf]
  %v580 = vld [vmem:[%s1 + $0x254] sm:$0xf]
  %v581 = vld [vmem:[%s1 + $0x258] sm:$0xf]
  %v582 = vld [vmem:[%s1 + $0x25c] sm:$0xf]
  %v583 = vld [vmem:[%s1 + $0x260] sm:$0xf]
  %v584 = vld [vmem:[%s1 + $0x264] sm:$0xf]
  %v585 = vld [vmem:[%s1 + $0x268] sm:$0xf]
  %v586 = vld [vmem:[%s1 + $0x26c] sm:$0xf]
  %v587 = vld [vmem:[%s1 + $0x270] sm:$0xf]
  %v588 = vld [vmem:[%s1 + $0x274] sm:$0xf]
  %v589 = vld [vmem:[%s1 + $0x278] sm:$0xf]
  %v590 = vld [vmem:[%s1 + $0x27c] sm:$0xf]
  %v591 = vld [vmem:[%s1 + $0x280] sm:$0xf]
  %v592 = vld [vmem:[%s1 + $0x284] sm:$0xf]
  %v593 = vld [vmem:[%s1 + $0x288] sm:$0xf]
  %v594 = vld [vmem:[%s1 + $0x28c] sm:$0xf]
  %v595 = vld [vmem:[%s1 + $0x290] sm:$0xf]
  %v596 = vld [vmem:[%s1 + $0x294] sm:$0xf]
  %v597 = vld [vmem:[%s1 + $0x298] sm:$0xf]
  %v598 = vld [vmem:[%s1 + $0x29c] sm:$0xf]
  %v599 = vld [vmem:[%s1 + $0x2a0] sm:$0xf]
  %v600 = vld [vmem:[%s1 + $0x2a4] sm:$0xf]
  %v601 = vld [vmem:[%s1 + $0x2a8] sm:$0xf]
  %v602 = vld [vmem:[%s1 + $0x2ac] sm:$0xf]
  %v603 = vld [vmem:[%s1 + $0x2b0] sm:$0xf]
  %v604 = vld [vmem:[%s1 + $0x2b4] sm:$0xf]
  %v605 = vld [vmem:[%s1 + $0x2b8] sm:$0xf]
  %v606 = vld [vmem:[%s1 + $0x2bc] sm:$0xf]
  %v607 = vld [vmem:[%s1 + $0x2c0] sm:$0xf]
  %v608 = vld [vmem:[%s1 + $0x2c4] sm:$0xf]
  %v609 = vld [vmem:[%s1 + $0x2c8] sm:$0xf]
  %v610 = vld [vmem:[%s1 + $0x2cc] sm:$0xf]
  %v611 = vld [vmem:[%s1 + $0x2d0] sm:$0xf]
  %v612 = vld [vmem:[%s1 + $0x2d4] sm:$0xf]
  %v613 = vld [vmem:[%s1 + $0x2d8] sm:$0xf]
  %v614 = vld [vmem:[%s1 + $0x2dc] sm:$0xf]
  %v615 = vld [vmem:[%s1 + $0x2e0] sm:$0xf]
  %v616 = vld [vmem:[%s1 + $0x2e4] sm:$0xf]
  %v617 = vld [vmem:[%s1 + $0x2e8] sm:$0xf]
  %v618 = vld [vmem:[%s1 + $0x2ec] sm:$0xf]
  %v619 = vld [vmem:[%s1 + $0x2f0] sm:$0xf]
  %v620 = vld [vmem:[%s1 + $0x2f4] sm:$0xf]
  %v621 = vld [vmem:[%s1 + $0x2f8] sm:$0xf]
  %v622 = vld [vmem:[%s1 + $0x2fc] sm:$0xf]
  %v623 = vld [vmem:[%s1 + $0x300] sm:$0xf]
  %v624 = vld [vmem:[%s1 + $0x304] sm:$0xf]
  %v625 = vld [vmem:[%s1 + $0x308] sm:$0xf]
  %v626 = vld [vmem:[%s1 + $0x30c] sm:$0xf]
  %v627 = vld [vmem:[%s1 + $0x310] sm:$0xf]
  %v628 = vld [vmem:[%s1 + $0x314] sm:$0xf]
  %v629 = vld [vmem:[%s1 + $0x318] sm:$0xf]
  %v630 = vld [vmem:[%s1 + $0x31c] sm:$0xf]
  %v631 = vld [vmem:[%s1 + $0x320] sm:$0xf]
  %v632 = vld [vmem:[%s1 + $0x324] sm:$0xf]
  %v633 = vld [vmem:[%s1 + $0x328] sm:$0xf]
  %v634 = vld [vmem:[%s1 + $0x32c] sm:$0xf]
  %v635 = vld [vmem:[%s1 + $0x330] sm:$0xf]
  %v636 = vld [vmem:[%s1 + $0x334] sm:$0xf]
  %v637 = vld [vmem:[%s1 + $0x338] sm:$0xf]
  %v638 = vld [vmem:[%s1 + $0x33c] sm:$0xf]
  %v639 = vld [vmem:[%s1 + $0x340] sm:$0xf]
  %v640 = vld [vmem:[%s1 + $0x344] sm:$0xf]
  %v641 = vld [vmem:[%s1 + $0x348] sm:$0xf]
  %v642 = vld [vmem:[%s1 + $0x34c] sm:$0xf]
  %v643 = vld [vmem:[%s1 + $0x350] sm:$0xf]
  %v644 = vld [vmem:[%s1 + $0x354] sm:$0xf]
  %v645 = vld [vmem:[%s1 + $0x358] sm:$0xf]
  %v646 = vld [vmem:[%s1 + $0x35c] sm:$0xf]
  %v647 = vld [vmem:[%s1 + $0x360] sm:$0xf]
  %v648 = vld [vmem:[%s1 + $0x364] sm:$0xf]
  %v649 = vld [vmem:[%s1 + $0x368] sm:$0xf]
  %v650 = vld [vmem:[%s1 + $0x36c] sm:$0xf]
  %v651 = vld [vmem:[%s1 + $0x370] sm:$0xf]
  %v652 = vld [vmem:[%s1 + $0x374] sm:$0xf]
  %v653 = vld [vmem:[%s1 + $0x378] sm:$0xf]
  %v654 = vld [vmem:[%s1 + $0x37c] sm:$0xf]
  %v655 = vld [vmem:[%s1 + $0x380] sm:$0xf]
  %v656 = vld [vmem:[%s1 + $0x384] sm:$0xf]
  %v657 = vld [vmem:[%s1 + $0x388] sm:$0xf]
  %v658 = vld [vmem:[%s1 + $0x38c] sm:$0xf]
  %v659 = vld [vmem:[%s1 + $0x390] sm:$0xf]
  %v660 = vld [vmem:[%s1 + $0x394] sm:$0xf]
  %v661 = vld [vmem:[%s1 + $0x398] sm:$0xf]
  %v662 = vld [vmem:[%s1 + $0x39c] sm:$0xf]
  %v663 = vld [vmem:[%s1 + $0x3a0] sm:$0xf]
  %v664 = vld [vmem:[%s1 + $0x3a4] sm:$0xf]
  %v665 = vld [vmem:[%s1 + $0x3a8] sm:$0xf]
  %v666 = vld [vmem:[%s1 + $0x3ac] sm:$0xf]
  %v667 = vld [vmem:[%s1 + $0x3b0] sm:$0xf]
  %v668 = vld [vmem:[%s1 + $0x3b4] sm:$0xf]
  %v669 = vld [vmem:[%s1 + $0x3b8] sm:$0xf]
  %v670 = vld [vmem:[%s1 + $0x3bc] sm:$0xf]
  %v671 = vld [vmem:[%s1 + $0x3c0] sm:$0xf]
  %v672 = vld [vmem:[%s1 + $0x3c4] sm:$0xf]
  %v673 = vld [vmem:[%s1 + $0x3c8] sm:$0xf]
  %v674 = vld [vmem:[%s1 + $0x3cc] sm:$0xf]
  %v675 = vld [vmem:[%s1 + $0x3d0] sm:$0xf]
  %v676 = vld [vmem:[%s1 + $0x3d4] sm:$0xf]
  %v677 = vld [vmem:[%s1 + $0x3d8] sm:$0xf]
  %v678 = vld [vmem:[%s1 + $0x3dc] sm:$0xf]
  %v679 = vld [vmem:[%s1 + $0x3e0] sm:$0xf]
  %v680 = vld [vmem:[%s1 + $0x3e4] sm:$0xf]
  %v681 = vld [vmem:[%s1 + $0x3e8] sm:$0xf]
  %v682 = vld [vmem:[%s1 + $0x3ec] sm:$0xf]
  %v683 = vld [vmem:[%s1 + $0x3f0] sm:$0xf]
  %v684 = vld [vmem:[%s1 + $0x3f4] sm:$0xf]
  %v685 = vld [vmem:[%s1 + $0x3f8] sm:$0xf]
  %v686 = vld [vmem:[%s1 + $0x3fc] sm:$0xf]
  %v687 = vld [vmem:[%s1 + $0x400] sm:$0xf]
  %v688 = vld [vmem:[%s1 + $0x404] sm:$0xf]
  %v689 = vld [vmem:[%s1 + $0x408] sm:$0xf]
  %v690 = vld [vmem:[%s1 + $0x40c] sm:$0xf]
  %v691 = vld [vmem:[%s1 + $0x410] sm:$0xf]
  %v692 = vld [vmem:[%s1 + $0x414] sm:$0xf]
  %v693 = vld [vmem:[%s1 + $0x418] sm:$0xf]
  %v694 = vld [vmem:[%s1 + $0x41c] sm:$0xf]
  %v695 = vld [vmem:[%s1 + $0x420] sm:$0xf]
  %v696 = vld [vmem:[%s1 + $0x424] sm:$0xf]
  %v697 = vld [vmem:[%s1 + $0x428] sm:$0xf]
  %v698 = vld [vmem:[%s1 + $0x42c] sm:$0xf]
  %v699 = vld [vmem:[%s1 + $0x430] sm:$0xf]
  %v700 = vld [vmem:[%s1 + $0x434] sm:$0xf]
  %v701 = vld [vmem:[%s1 + $0x438] sm:$0xf]
  %v702 = vld [vmem:[%s1 + $0x43c] sm:$0xf]
  %v703 = vld [vmem:[%s1 + $0x440] sm:$0xf]
  %v704 = vld [vmem:[%s1 + $0x444] sm:$0xf]
  %v705 = vld [vmem:[%s1 + $0x448] sm:$0xf]
  %v706 = vld [vmem:[%s1 + $0x44c] sm:$0xf]
  %v707 = vld [vmem:[%s1 + $0x450] sm:$0xf]
  %v708 = vld [vmem:[%s1 + $0x454] sm:$0xf]
  %v709 = vld [vmem:[%s1 + $0x458] sm:$0xf]
  %v710 = vld [vmem:[%s1 + $0x45c] sm:$0xf]
  %v711 = vld [vmem:[%s1 + $0x460] sm:$0xf]
  %v712 = vld [vmem:[%s1 + $0x464] sm:$0xf]
  %v713 = vld [vmem:[%s1 + $0x468] sm:$0xf]
  %v714 = vld [vmem:[%s1 + $0x46c] sm:$0xf]
  %v715 = vld [vmem:[%s1 + $0x470] sm:$0xf]
  %v716 = vld [vmem:[%s1 + $0x474] sm:$0xf]
  %v717 = vld [vmem:[%s1 + $0x478] sm:$0xf]
  %v718 = vld [vmem:[%s1 + $0x47c] sm:$0xf]
  %v719 = vld [vmem:[%s1 + $0x480] sm:$0xf]
  %v720 = vld [vmem:[%s1 + $0x484] sm:$0xf]
  %v721 = vld [vmem:[%s1 + $0x488] sm:$0xf]
  %v722 = vld [vmem:[%s1 + $0x48c] sm:$0xf]
  %v723 = vld [vmem:[%s1 + $0x490] sm:$0xf]
  %v724 = vld [vmem:[%s1 + $0x494] sm:$0xf]
  %v725 = vld [vmem:[%s1 + $0x498] sm:$0xf]
  %v726 = vld [vmem:[%s1 + $0x49c] sm:$0xf]
  %v727 = vld [vmem:[%s1 + $0x4a0] sm:$0xf]
  %v728 = vld [vmem:[%s1 + $0x4a4] sm:$0xf]
  %v729 = vld [vmem:[%s1 + $0x4a8] sm:$0xf]
  %v730 = vld [vmem:[%s1 + $0x4ac] sm:$0xf]
  %v731 = vld [vmem:[%s1 + $0x4b0] sm:$0xf]
  %v732 = vld [vmem:[%s1 + $0x4b4] sm:$0xf]
  %v733 = vld [vmem:[%s1 + $0x4b8] sm:$0xf]
  %v734 = vld [vmem:[%s1 + $0x4bc] sm:$0xf]
  %v735 = vld [vmem:[%s1 + $0x4c0] sm:$0xf]
  %v736 = vld [vmem:[%s1 + $0x4c4] sm:$0xf]
  %v737 = vld [vmem:[%s1 + $0x4c8] sm:$0xf]
  %v738 = vld [vmem:[%s1 + $0x4cc] sm:$0xf]
  %v739 = vld [vmem:[%s1 + $0x4d0] sm:$0xf]
  %v740 = vld [vmem:[%s1 + $0x4d4] sm:$0xf]
  %v741 = vld [vmem:[%s1 + $0x4d8] sm:$0xf]
  %v742 = vld [vmem:[%s1 + $0x4dc] sm:$0xf]
  %v743 = vld [vmem:[%s1 + $0x4e0] sm:$0xf]
  %v744 = vld [vmem:[%s1 + $0x4e4] sm:$0xf]
  %v745 = vld [vmem:[%s1 + $0x4e8] sm:$0xf]
  %v746 = vld [vmem:[%s1 + $0x4ec] sm:$0xf]
  %v747 = vld [vmem:[%s1 + $0x4f0] sm:$0xf]
  %v748 = vld [vmem:[%s1 + $0x4f4] sm:$0xf]
  %v749 = vld [vmem:[%s1 + $0x4f8] sm:$0xf]
  %v750 = vld [vmem:[%s1 + $0x4fc] sm:$0xf]
  %v751 = vld [vmem:[%s1 + $0x500] sm:$0xf]
  %v752 = vld [vmem:[%s1 + $0x504] sm:$0xf]
  %v753 = vld [vmem:[%s1 + $0x508] sm:$0xf]
  %v754 = vld [vmem:[%s1 + $0x50c] sm:$0xf]
  %v755 = vld [vmem:[%s1 + $0x510] sm:$0xf]
  %v756 = vld [vmem:[%s1 + $0x514] sm:$0xf]
  %v757 = vld [vmem:[%s1 + $0x518] sm:$0xf]
  %v758 = vld [vmem:[%s1 + $0x51c] sm:$0xf]
  %v759 = vld [vmem:[%s1 + $0x520] sm:$0xf]
  %v760 = vld [vmem:[%s1 + $0x524] sm:$0xf]
  %v761 = vld [vmem:[%s1 + $0x528] sm:$0xf]
  %v762 = vld [vmem:[%s1 + $0x52c] sm:$0xf]
  %v763 = vld [vmem:[%s1 + $0x530] sm:$0xf]
  %v764 = vld [vmem:[%s1 + $0x534] sm:$0xf]
  %v765 = vld [vmem:[%s1 + $0x538] sm:$0xf]
  %v766 = vld [vmem:[%s1 + $0x53c] sm:$0xf]
  %v767 = vld [vmem:[%s1 + $0x540] sm:$0xf]
  %v768 = vld [vmem:[%s1 + $0x544] sm:$0xf]
  %v769 = vld [vmem:[%s1 + $0x548] sm:$0xf]
  %v770 = vld [vmem:[%s1 + $0x54c] sm:$0xf]
  %v771 = vld [vmem:[%s1 + $0x550] sm:$0xf]
  %v772 = vld [vmem:[%s1 + $0x554] sm:$0xf]
  %v773 = vld [vmem:[%s1 + $0x558] sm:$0xf]
  %v774 = vld [vmem:[%s1 + $0x55c] sm:$0xf]
  %v775 = vld [vmem:[%s1 + $0x560] sm:$0xf]
  %v776 = vld [vmem:[%s1 + $0x564] sm:$0xf]
  %v777 = vld [vmem:[%s1 + $0x568] sm:$0xf]
  %v778 = vld [vmem:[%s1 + $0x56c] sm:$0xf]
  %v779 = vld [vmem:[%s1 + $0x570] sm:$0xf]
  %v780 = vld [vmem:[%s1 + $0x574] sm:$0xf]
  %v781 = vld [vmem:[%s1 + $0x578] sm:$0xf]
  %v782 = vld [vmem:[%s1 + $0x57c] sm:$0xf]
  %v783 = vld [vmem:[%s1 + $0x580] sm:$0xf]
  %v784 = vld [vmem:[%s1 + $0x584] sm:$0xf]
  %v785 = vld [vmem:[%s1 + $0x588] sm:$0xf]
  %v786 = vld [vmem:[%s1 + $0x58c] sm:$0xf]
  %v787 = vld [vmem:[%s1 + $0x590] sm:$0xf]
  %v788 = vld [vmem:[%s1 + $0x594] sm:$0xf]
  %v789 = vld [vmem:[%s1 + $0x598] sm:$0xf]
  %v790 = vld [vmem:[%s1 + $0x59c] sm:$0xf]
  %v791 = vld [vmem:[%s1 + $0x5a0] sm:$0xf]
  %v792 = vld [vmem:[%s1 + $0x5a4] sm:$0xf]
  %v793 = vld [vmem:[%s1 + $0x5a8] sm:$0xf]
  %v794 = vld [vmem:[%s1 + $0x5ac] sm:$0xf]
  %v795 = vld [vmem:[%s1 + $0x5b0] sm:$0xf]
  %v796 = vld [vmem:[%s1 + $0x5b4] sm:$0xf]
  %v797 = vld [vmem:[%s1 + $0x5b8] sm:$0xf]
  %v798 = vld [vmem:[%s1 + $0x5bc] sm:$0xf]
  %v799 = vld [vmem:[%s1 + $0x5c0] sm:$0xf]
  %v800 = vld [vmem:[%s1 + $0x5c4] sm:$0xf]
  %v801 = vld [vmem:[%s1 + $0x5c8] sm:$0xf]
  %v802 = vld [vmem:[%s1 + $0x5cc] sm:$0xf]
  %v803 = vld [vmem:[%s1 + $0x5d0] sm:$0xf]
  %v804 = vld [vmem:[%s1 + $0x5d4] sm:$0xf]
  %v805 = vld [vmem:[%s1 + $0x5d8] sm:$0xf]
  %v806 = vld [vmem:[%s1 + $0x5dc] sm:$0xf]
  %v807 = vld [vmem:[%s1 + $0x5e0] sm:$0xf]
  %v808 = vld [vmem:[%s1 + $0x5e4] sm:$0xf]
  %v809 = vld [vmem:[%s1 + $0x5e8] sm:$0xf]
  %v810 = vld [vmem:[%s1 + $0x5ec] sm:$0xf]
  %v811 = vld [vmem:[%s1 + $0x5f0] sm:$0xf]
  %v812 = vld [vmem:[%s1 + $0x5f4] sm:$0xf]
  %v813 = vld [vmem:[%s1 + $0x5f8] sm:$0xf]
  %v814 = vld [vmem:[%s1 + $0x5fc] sm:$0xf]
  %v815 = vld [vmem:[%s1 + $0x600] sm:$0xf]
  %v816 = vld [vmem:[%s1 + $0x604] sm:$0xf]
  %v817 = vld [vmem:[%s1 + $0x608] sm:$0xf]
  %v818 = vld [vmem:[%s1 + $0x60c] sm:$0xf]
  %v819 = vld [vmem:[%s1 + $0x610] sm:$0xf]
  %v820 = vld [vmem:[%s1 + $0x614] sm:$0xf]
  %v821 = vld [vmem:[%s1 + $0x618] sm:$0xf]
  %v822 = vld [vmem:[%s1 + $0x61c] sm:$0xf]
  %v823 = vld [vmem:[%s1 + $0x620] sm:$0xf]
  %v824 = vld [vmem:[%s1 + $0x624] sm:$0xf]
  %v825 = vld [vmem:[%s1 + $0x628] sm:$0xf]
  %v826 = vld [vmem:[%s1 + $0x62c] sm:$0xf]
  %v827 = vld [vmem:[%s1 + $0x630] sm:$0xf]
  %v828 = vld [vmem:[%s1 + $0x634] sm:$0xf]
  %v829 = vld [vmem:[%s1 + $0x638] sm:$0xf]
  %v830 = vld [vmem:[%s1 + $0x63c] sm:$0xf]
  %v1247 = vunpack.c.l.b16 %v15
  %v1248 = vunpack.c.h.b16 %v15
  %v1249 = vunpack.c.l.b16 %v16
  %v1250 = vunpack.c.h.b16 %v16
  %v1251 = vunpack.c.l.b16 %v17
  %v1252 = vunpack.c.h.b16 %v17
  %v1253 = vunpack.c.l.b16 %v18
  %v1254 = vunpack.c.h.b16 %v18
  %v1255 = vunpack.c.l.b16 %v19
  %v1256 = vunpack.c.h.b16 %v19
  %v1257 = vunpack.c.l.b16 %v20
  %v1258 = vunpack.c.h.b16 %v20
  %v1259 = vunpack.c.l.b16 %v21
  %v1260 = vunpack.c.h.b16 %v21
  %v1261 = vunpack.c.l.b16 %v22
  %v1262 = vunpack.c.h.b16 %v22
  %v1263 = vunpack.c.l.b16 %v23
  %v1264 = vunpack.c.h.b16 %v23
  %v1265 = vunpack.c.l.b16 %v24
  %v1266 = vunpack.c.h.b16 %v24
  %v1267 = vunpack.c.l.b16 %v25
  %v1268 = vunpack.c.h.b16 %v25
  %v1269 = vunpack.c.l.b16 %v26
  %v1270 = vunpack.c.h.b16 %v26
  %v1271 = vunpack.c.l.b16 %v27
  %v1272 = vunpack.c.l.b16 %v28
  %v1273 = vunpack.c.h.b16 %v28
  %v1274 = vunpack.c.l.b16 %v29
  %v1275 = vunpack.c.h.b16 %v29
  %v1276 = vunpack.c.l.b16 %v30
  %v1277 = vunpack.c.h.b16 %v30
  %v1278 = vunpack.c.l.b16 %v31
  %v1279 = vunpack.c.h.b16 %v31
  %v1280 = vunpack.c.l.b16 %v32
  %v1281 = vunpack.c.h.b16 %v32
  %v1282 = vunpack.c.l.b16 %v33
  %v1283 = vunpack.c.h.b16 %v33
  %v1284 = vunpack.c.l.b16 %v34
  %v1285 = vunpack.c.h.b16 %v34
  %v1286 = vunpack.c.l.b16 %v35
  %v1287 = vunpack.c.h.b16 %v35
  %v1288 = vunpack.c.l.b16 %v36
  %v1289 = vunpack.c.h.b16 %v36
  %v1290 = vunpack.c.l.b16 %v37
  %v1291 = vunpack.c.h.b16 %v37
  %v1292 = vunpack.c.l.b16 %v38
  %v1293 = vunpack.c.h.b16 %v38
  %v1294 = vunpack.c.l.b16 %v39
  %v1295 = vunpack.c.h.b16 %v39
  %v1296 = vunpack.c.l.b16 %v40
  %v1297 = vunpack.c.l.b16 %v41
  %v1298 = vunpack.c.h.b16 %v41
  %v1299 = vunpack.c.l.b16 %v42
  %v1300 = vunpack.c.h.b16 %v42
  %v1301 = vunpack.c.l.b16 %v43
  %v1302 = vunpack.c.h.b16 %v43
  %v1303 = vunpack.c.l.b16 %v44
  %v1304 = vunpack.c.h.b16 %v44
  %v1305 = vunpack.c.l.b16 %v45
  %v1306 = vunpack.c.h.b16 %v45
  %v1307 = vunpack.c.l.b16 %v46
  %v1308 = vunpack.c.h.b16 %v46
  %v1309 = vunpack.c.l.b16 %v47
  %v1310 = vunpack.c.h.b16 %v47
  %v1311 = vunpack.c.l.b16 %v48
  %v1312 = vunpack.c.h.b16 %v48
  %v1313 = vunpack.c.l.b16 %v49
  %v1314 = vunpack.c.h.b16 %v49
  %v1315 = vunpack.c.l.b16 %v50
  %v1316 = vunpack.c.h.b16 %v50
  %v1317 = vunpack.c.l.b16 %v51
  %v1318 = vunpack.c.h.b16 %v51
  %v1319 = vunpack.c.l.b16 %v52
  %v1320 = vunpack.c.h.b16 %v52
  %v1321 = vunpack.c.l.b16 %v53
  %v1322 = vunpack.c.l.b16 %v54
  %v1323 = vunpack.c.h.b16 %v54
  %v1324 = vunpack.c.l.b16 %v55
  %v1325 = vunpack.c.h.b16 %v55
  %v1326 = vunpack.c.l.b16 %v56
  %v1327 = vunpack.c.h.b16 %v56
  %v1328 = vunpack.c.l.b16 %v57
  %v1329 = vunpack.c.h.b16 %v57
  %v1330 = vunpack.c.l.b16 %v58
  %v1331 = vunpack.c.h.b16 %v58
  %v1332 = vunpack.c.l.b16 %v59
  %v1333 = vunpack.c.h.b16 %v59
  %v1334 = vunpack.c.l.b16 %v60
  %v1335 = vunpack.c.h.b16 %v60
  %v1336 = vunpack.c.l.b16 %v61
  %v1337 = vunpack.c.h.b16 %v61
  %v1338 = vunpack.c.l.b16 %v62
  %v1339 = vunpack.c.h.b16 %v62
  %v1340 = vunpack.c.l.b16 %v63
  %v1341 = vunpack.c.h.b16 %v63
  %v1342 = vunpack.c.l.b16 %v64
  %v1343 = vunpack.c.h.b16 %v64
  %v1344 = vunpack.c.l.b16 %v65
  %v1345 = vunpack.c.h.b16 %v65
  %v1346 = vunpack.c.l.b16 %v66
  %v1347 = vunpack.c.l.b16 %v67
  %v1348 = vunpack.c.h.b16 %v67
  %v1349 = vunpack.c.l.b16 %v68
  %v1350 = vunpack.c.h.b16 %v68
  %v1351 = vunpack.c.l.b16 %v69
  %v1352 = vunpack.c.h.b16 %v69
  %v1353 = vunpack.c.l.b16 %v70
  %v1354 = vunpack.c.h.b16 %v70
  %v1355 = vunpack.c.l.b16 %v71
  %v1356 = vunpack.c.h.b16 %v71
  %v1357 = vunpack.c.l.b16 %v72
  %v1358 = vunpack.c.h.b16 %v72
  %v1359 = vunpack.c.l.b16 %v73
  %v1360 = vunpack.c.h.b16 %v73
  %v1361 = vunpack.c.l.b16 %v74
  %v1362 = vunpack.c.h.b16 %v74
  %v1363 = vunpack.c.l.b16 %v75
  %v1364 = vunpack.c.h.b16 %v75
  %v1365 = vunpack.c.l.b16 %v76
  %v1366 = vunpack.c.h.b16 %v76
  %v1367 = vunpack.c.l.b16 %v77
  %v1368 = vunpack.c.h.b16 %v77
  %v1369 = vunpack.c.l.b16 %v78
  %v1370 = vunpack.c.h.b16 %v78
  %v1371 = vunpack.c.l.b16 %v79
  %v1372 = vunpack.c.l.b16 %v80
  %v1373 = vunpack.c.h.b16 %v80
  %v1374 = vunpack.c.l.b16 %v81
  %v1375 = vunpack.c.h.b16 %v81
  %v1376 = vunpack.c.l.b16 %v82
  %v1377 = vunpack.c.h.b16 %v82
  %v1378 = vunpack.c.l.b16 %v83
  %v1379 = vunpack.c.h.b16 %v83
  %v1380 = vunpack.c.l.b16 %v84
  %v1381 = vunpack.c.h.b16 %v84
  %v1382 = vunpack.c.l.b16 %v85
  %v1383 = vunpack.c.h.b16 %v85
  %v1384 = vunpack.c.l.b16 %v86
  %v1385 = vunpack.c.h.b16 %v86
  %v1386 = vunpack.c.l.b16 %v87
  %v1387 = vunpack.c.h.b16 %v87
  %v1388 = vunpack.c.l.b16 %v88
  %v1389 = vunpack.c.h.b16 %v88
  %v1390 = vunpack.c.l.b16 %v89
  %v1391 = vunpack.c.h.b16 %v89
  %v1392 = vunpack.c.l.b16 %v90
  %v1393 = vunpack.c.h.b16 %v90
  %v1394 = vunpack.c.l.b16 %v91
  %v1395 = vunpack.c.h.b16 %v91
  %v1396 = vunpack.c.l.b16 %v92
  %v1397 = vunpack.c.l.b16 %v93
  %v1398 = vunpack.c.h.b16 %v93
  %v1399 = vunpack.c.l.b16 %v94
  %v1400 = vunpack.c.h.b16 %v94
  %v1401 = vunpack.c.l.b16 %v95
  %v1402 = vunpack.c.h.b16 %v95
  %v1403 = vunpack.c.l.b16 %v96
  %v1404 = vunpack.c.h.b16 %v96
  %v1405 = vunpack.c.l.b16 %v97
  %v1406 = vunpack.c.h.b16 %v97
  %v1407 = vunpack.c.l.b16 %v98
  %v1408 = vunpack.c.h.b16 %v98
  %v1409 = vunpack.c.l.b16 %v99
  %v1410 = vunpack.c.h.b16 %v99
  %v1411 = vunpack.c.l.b16 %v100
  %v1412 = vunpack.c.h.b16 %v100
  %v1413 = vunpack.c.l.b16 %v101
  %v1414 = vunpack.c.h.b16 %v101
  %v1415 = vunpack.c.l.b16 %v102
  %v1416 = vunpack.c.h.b16 %v102
  %v1417 = vunpack.c.l.b16 %v103
  %v1418 = vunpack.c.h.b16 %v103
  %v1419 = vunpack.c.l.b16 %v104
  %v1420 = vunpack.c.h.b16 %v104
  %v1421 = vunpack.c.l.b16 %v105
  %v1422 = vunpack.c.l.b16 %v106
  %v1423 = vunpack.c.h.b16 %v106
  %v1424 = vunpack.c.l.b16 %v107
  %v1425 = vunpack.c.h.b16 %v107
  %v1426 = vunpack.c.l.b16 %v108
  %v1427 = vunpack.c.h.b16 %v108
  %v1428 = vunpack.c.l.b16 %v109
  %v1429 = vunpack.c.h.b16 %v109
  %v1430 = vunpack.c.l.b16 %v110
  %v1431 = vunpack.c.h.b16 %v110
  %v1432 = vunpack.c.l.b16 %v111
  %v1433 = vunpack.c.h.b16 %v111
  %v1434 = vunpack.c.l.b16 %v112
  %v1435 = vunpack.c.h.b16 %v112
  %v1436 = vunpack.c.l.b16 %v113
  %v1437 = vunpack.c.h.b16 %v113
  %v1438 = vunpack.c.l.b16 %v114
  %v1439 = vunpack.c.h.b16 %v114
  %v1440 = vunpack.c.l.b16 %v115
  %v1441 = vunpack.c.h.b16 %v115
  %v1442 = vunpack.c.l.b16 %v116
  %v1443 = vunpack.c.h.b16 %v116
  %v1444 = vunpack.c.l.b16 %v117
  %v1445 = vunpack.c.h.b16 %v117
  %v1446 = vunpack.c.l.b16 %v118
  %v1447 = vunpack.c.l.b16 %v119
  %v1448 = vunpack.c.h.b16 %v119
  %v1449 = vunpack.c.l.b16 %v120
  %v1450 = vunpack.c.h.b16 %v120
  %v1451 = vunpack.c.l.b16 %v121
  %v1452 = vunpack.c.h.b16 %v121
  %v1453 = vunpack.c.l.b16 %v122
  %v1454 = vunpack.c.h.b16 %v122
  %v1455 = vunpack.c.l.b16 %v123
  %v1456 = vunpack.c.h.b16 %v123
  %v1457 = vunpack.c.l.b16 %v124
  %v1458 = vunpack.c.h.b16 %v124
  %v1459 = vunpack.c.l.b16 %v125
  %v1460 = vunpack.c.h.b16 %v125
  %v1461 = vunpack.c.l.b16 %v126
  %v1462 = vunpack.c.h.b16 %v126
  %v1463 = vunpack.c.l.b16 %v127
  %v1464 = vunpack.c.h.b16 %v127
  %v1465 = vunpack.c.l.b16 %v128
  %v1466 = vunpack.c.h.b16 %v128
  %v1467 = vunpack.c.l.b16 %v129
  %v1468 = vunpack.c.h.b16 %v129
  %v1469 = vunpack.c.l.b16 %v130
  %v1470 = vunpack.c.h.b16 %v130
  %v1471 = vunpack.c.l.b16 %v131
  %v1472 = vunpack.c.l.b16 %v132
  %v1473 = vunpack.c.h.b16 %v132
  %v1474 = vunpack.c.l.b16 %v133
  %v1475 = vunpack.c.h.b16 %v133
  %v1476 = vunpack.c.l.b16 %v134
  %v1477 = vunpack.c.h.b16 %v134
  %v1478 = vunpack.c.l.b16 %v135
  %v1479 = vunpack.c.h.b16 %v135
  %v1480 = vunpack.c.l.b16 %v136
  %v1481 = vunpack.c.h.b16 %v136
  %v1482 = vunpack.c.l.b16 %v137
  %v1483 = vunpack.c.h.b16 %v137
  %v1484 = vunpack.c.l.b16 %v138
  %v1485 = vunpack.c.h.b16 %v138
  %v1486 = vunpack.c.l.b16 %v139
  %v1487 = vunpack.c.h.b16 %v139
  %v1488 = vunpack.c.l.b16 %v140
  %v1489 = vunpack.c.h.b16 %v140
  %v1490 = vunpack.c.l.b16 %v141
  %v1491 = vunpack.c.h.b16 %v141
  %v1492 = vunpack.c.l.b16 %v142
  %v1493 = vunpack.c.h.b16 %v142
  %v1494 = vunpack.c.l.b16 %v143
  %v1495 = vunpack.c.h.b16 %v143
  %v1496 = vunpack.c.l.b16 %v144
  %v1497 = vunpack.c.l.b16 %v145
  %v1498 = vunpack.c.h.b16 %v145
  %v1499 = vunpack.c.l.b16 %v146
  %v1500 = vunpack.c.h.b16 %v146
  %v1501 = vunpack.c.l.b16 %v147
  %v1502 = vunpack.c.h.b16 %v147
  %v1503 = vunpack.c.l.b16 %v148
  %v1504 = vunpack.c.h.b16 %v148
  %v1505 = vunpack.c.l.b16 %v149
  %v1506 = vunpack.c.h.b16 %v149
  %v1507 = vunpack.c.l.b16 %v150
  %v1508 = vunpack.c.h.b16 %v150
  %v1509 = vunpack.c.l.b16 %v151
  %v1510 = vunpack.c.h.b16 %v151
  %v1511 = vunpack.c.l.b16 %v152
  %v1512 = vunpack.c.h.b16 %v152
  %v1513 = vunpack.c.l.b16 %v153
  %v1514 = vunpack.c.h.b16 %v153
  %v1515 = vunpack.c.l.b16 %v154
  %v1516 = vunpack.c.h.b16 %v154
  %v1517 = vunpack.c.l.b16 %v155
  %v1518 = vunpack.c.h.b16 %v155
  %v1519 = vunpack.c.l.b16 %v156
  %v1520 = vunpack.c.h.b16 %v156
  %v1521 = vunpack.c.l.b16 %v157
  %v1522 = vunpack.c.l.b16 %v158
  %v1523 = vunpack.c.h.b16 %v158
  %v1524 = vunpack.c.l.b16 %v159
  %v1525 = vunpack.c.h.b16 %v159
  %v1526 = vunpack.c.l.b16 %v160
  %v1527 = vunpack.c.h.b16 %v160
  %v1528 = vunpack.c.l.b16 %v161
  %v1529 = vunpack.c.h.b16 %v161
  %v1530 = vunpack.c.l.b16 %v162
  %v1531 = vunpack.c.h.b16 %v162
  %v1532 = vunpack.c.l.b16 %v163
  %v1533 = vunpack.c.h.b16 %v163
  %v1534 = vunpack.c.l.b16 %v164
  %v1535 = vunpack.c.h.b16 %v164
  %v1536 = vunpack.c.l.b16 %v165
  %v1537 = vunpack.c.h.b16 %v165
  %v1538 = vunpack.c.l.b16 %v166
  %v1539 = vunpack.c.h.b16 %v166
  %v1540 = vunpack.c.l.b16 %v167
  %v1541 = vunpack.c.h.b16 %v167
  %v1542 = vunpack.c.l.b16 %v168
  %v1543 = vunpack.c.h.b16 %v168
  %v1544 = vunpack.c.l.b16 %v169
  %v1545 = vunpack.c.h.b16 %v169
  %v1546 = vunpack.c.l.b16 %v170
  %v1547 = vunpack.c.l.b16 %v171
  %v1548 = vunpack.c.h.b16 %v171
  %v1549 = vunpack.c.l.b16 %v172
  %v1550 = vunpack.c.h.b16 %v172
  %v1551 = vunpack.c.l.b16 %v173
  %v1552 = vunpack.c.h.b16 %v173
  %v1553 = vunpack.c.l.b16 %v174
  %v1554 = vunpack.c.h.b16 %v174
  %v1555 = vunpack.c.l.b16 %v175
  %v1556 = vunpack.c.h.b16 %v175
  %v1557 = vunpack.c.l.b16 %v176
  %v1558 = vunpack.c.h.b16 %v176
  %v1559 = vunpack.c.l.b16 %v177
  %v1560 = vunpack.c.h.b16 %v177
  %v1561 = vunpack.c.l.b16 %v178
  %v1562 = vunpack.c.h.b16 %v178
  %v1563 = vunpack.c.l.b16 %v179
  %v1564 = vunpack.c.h.b16 %v179
  %v1565 = vunpack.c.l.b16 %v180
  %v1566 = vunpack.c.h.b16 %v180
  %v1567 = vunpack.c.l.b16 %v181
  %v1568 = vunpack.c.h.b16 %v181
  %v1569 = vunpack.c.l.b16 %v182
  %v1570 = vunpack.c.h.b16 %v182
  %v1571 = vunpack.c.l.b16 %v183
  %v1572 = vunpack.c.l.b16 %v184
  %v1573 = vunpack.c.h.b16 %v184
  %v1574 = vunpack.c.l.b16 %v185
  %v1575 = vunpack.c.h.b16 %v185
  %v1576 = vunpack.c.l.b16 %v186
  %v1577 = vunpack.c.h.b16 %v186
  %v1578 = vunpack.c.l.b16 %v187
  %v1579 = vunpack.c.h.b16 %v187
  %v1580 = vunpack.c.l.b16 %v188
  %v1581 = vunpack.c.h.b16 %v188
  %v1582 = vunpack.c.l.b16 %v189
  %v1583 = vunpack.c.h.b16 %v189
  %v1584 = vunpack.c.l.b16 %v190
  %v1585 = vunpack.c.h.b16 %v190
  %v1586 = vunpack.c.l.b16 %v191
  %v1587 = vunpack.c.h.b16 %v191
  %v1588 = vunpack.c.l.b16 %v192
  %v1589 = vunpack.c.h.b16 %v192
  %v1590 = vunpack.c.l.b16 %v193
  %v1591 = vunpack.c.h.b16 %v193
  %v1592 = vunpack.c.l.b16 %v194
  %v1593 = vunpack.c.h.b16 %v194
  %v1594 = vunpack.c.l.b16 %v195
  %v1595 = vunpack.c.h.b16 %v195
  %v1596 = vunpack.c.l.b16 %v196
  %v1597 = vunpack.c.l.b16 %v197
  %v1598 = vunpack.c.h.b16 %v197
  %v1599 = vunpack.c.l.b16 %v198
  %v1600 = vunpack.c.h.b16 %v198
  %v1601 = vunpack.c.l.b16 %v199
  %v1602 = vunpack.c.h.b16 %v199
  %v1603 = vunpack.c.l.b16 %v200
  %v1604 = vunpack.c.h.b16 %v200
  %v1605 = vunpack.c.l.b16 %v201
  %v1606 = vunpack.c.h.b16 %v201
  %v1607 = vunpack.c.l.b16 %v202
  %v1608 = vunpack.c.h.b16 %v202
  %v1609 = vunpack.c.l.b16 %v203
  %v1610 = vunpack.c.h.b16 %v203
  %v1611 = vunpack.c.l.b16 %v204
  %v1612 = vunpack.c.h.b16 %v204
  %v1613 = vunpack.c.l.b16 %v205
  %v1614 = vunpack.c.h.b16 %v205
  %v1615 = vunpack.c.l.b16 %v206
  %v1616 = vunpack.c.h.b16 %v206
  %v1617 = vunpack.c.l.b16 %v207
  %v1618 = vunpack.c.h.b16 %v207
  %v1619 = vunpack.c.l.b16 %v208
  %v1620 = vunpack.c.h.b16 %v208
  %v1621 = vunpack.c.l.b16 %v209
  %v1622 = vunpack.c.l.b16 %v210
  %v1623 = vunpack.c.h.b16 %v210
  %v1624 = vunpack.c.l.b16 %v211
  %v1625 = vunpack.c.h.b16 %v211
  %v1626 = vunpack.c.l.b16 %v212
  %v1627 = vunpack.c.h.b16 %v212
  %v1628 = vunpack.c.l.b16 %v213
  %v1629 = vunpack.c.h.b16 %v213
  %v1630 = vunpack.c.l.b16 %v214
  %v1631 = vunpack.c.h.b16 %v214
  %v1632 = vunpack.c.l.b16 %v215
  %v1633 = vunpack.c.h.b16 %v215
  %v1634 = vunpack.c.l.b16 %v216
  %v1635 = vunpack.c.h.b16 %v216
  %v1636 = vunpack.c.l.b16 %v217
  %v1637 = vunpack.c.h.b16 %v217
  %v1638 = vunpack.c.l.b16 %v218
  %v1639 = vunpack.c.h.b16 %v218
  %v1640 = vunpack.c.l.b16 %v219
  %v1641 = vunpack.c.h.b16 %v219
  %v1642 = vunpack.c.l.b16 %v220
  %v1643 = vunpack.c.h.b16 %v220
  %v1644 = vunpack.c.l.b16 %v221
  %v1645 = vunpack.c.h.b16 %v221
  %v1646 = vunpack.c.l.b16 %v222
  %v1647 = vunpack.c.l.b16 %v223
  %v1648 = vunpack.c.h.b16 %v223
  %v1649 = vunpack.c.l.b16 %v224
  %v1650 = vunpack.c.h.b16 %v224
  %v1651 = vunpack.c.l.b16 %v225
  %v1652 = vunpack.c.h.b16 %v225
  %v1653 = vunpack.c.l.b16 %v226
  %v1654 = vunpack.c.h.b16 %v226
  %v1655 = vunpack.c.l.b16 %v227
  %v1656 = vunpack.c.h.b16 %v227
  %v1657 = vunpack.c.l.b16 %v228
  %v1658 = vunpack.c.h.b16 %v228
  %v1659 = vunpack.c.l.b16 %v229
  %v1660 = vunpack.c.h.b16 %v229
  %v1661 = vunpack.c.l.b16 %v230
  %v1662 = vunpack.c.h.b16 %v230
  %v1663 = vunpack.c.l.b16 %v231
  %v1664 = vunpack.c.h.b16 %v231
  %v1665 = vunpack.c.l.b16 %v232
  %v1666 = vunpack.c.h.b16 %v232
  %v1667 = vunpack.c.l.b16 %v233
  %v1668 = vunpack.c.h.b16 %v233
  %v1669 = vunpack.c.l.b16 %v234
  %v1670 = vunpack.c.h.b16 %v234
  %v1671 = vunpack.c.l.b16 %v235
  %v1672 = vunpack.c.l.b16 %v236
  %v1673 = vunpack.c.h.b16 %v236
  %v1674 = vunpack.c.l.b16 %v237
  %v1675 = vunpack.c.h.b16 %v237
  %v1676 = vunpack.c.l.b16 %v238
  %v1677 = vunpack.c.h.b16 %v238
  %v1678 = vunpack.c.l.b16 %v239
  %v1679 = vunpack.c.h.b16 %v239
  %v1680 = vunpack.c.l.b16 %v240
  %v1681 = vunpack.c.h.b16 %v240
  %v1682 = vunpack.c.l.b16 %v241
  %v1683 = vunpack.c.h.b16 %v241
  %v1684 = vunpack.c.l.b16 %v242
  %v1685 = vunpack.c.h.b16 %v242
  %v1686 = vunpack.c.l.b16 %v243
  %v1687 = vunpack.c.h.b16 %v243
  %v1688 = vunpack.c.l.b16 %v244
  %v1689 = vunpack.c.h.b16 %v244
  %v1690 = vunpack.c.l.b16 %v245
  %v1691 = vunpack.c.h.b16 %v245
  %v1692 = vunpack.c.l.b16 %v246
  %v1693 = vunpack.c.h.b16 %v246
  %v1694 = vunpack.c.l.b16 %v247
  %v1695 = vunpack.c.h.b16 %v247
  %v1696 = vunpack.c.l.b16 %v248
  %v1697 = vunpack.c.l.b16 %v249
  %v1698 = vunpack.c.h.b16 %v249
  %v1699 = vunpack.c.l.b16 %v250
  %v1700 = vunpack.c.h.b16 %v250
  %v1701 = vunpack.c.l.b16 %v251
  %v1702 = vunpack.c.h.b16 %v251
  %v1703 = vunpack.c.l.b16 %v252
  %v1704 = vunpack.c.h.b16 %v252
  %v1705 = vunpack.c.l.b16 %v253
  %v1706 = vunpack.c.h.b16 %v253
  %v1707 = vunpack.c.l.b16 %v254
  %v1708 = vunpack.c.h.b16 %v254
  %v1709 = vunpack.c.l.b16 %v255
  %v1710 = vunpack.c.h.b16 %v255
  %v1711 = vunpack.c.l.b16 %v256
  %v1712 = vunpack.c.h.b16 %v256
  %v1713 = vunpack.c.l.b16 %v257
  %v1714 = vunpack.c.h.b16 %v257
  %v1715 = vunpack.c.l.b16 %v258
  %v1716 = vunpack.c.h.b16 %v258
  %v1717 = vunpack.c.l.b16 %v259
  %v1718 = vunpack.c.h.b16 %v259
  %v1719 = vunpack.c.l.b16 %v260
  %v1720 = vunpack.c.h.b16 %v260
  %v1721 = vunpack.c.l.b16 %v261
  %v1722 = vunpack.c.l.b16 %v262
  %v1723 = vunpack.c.h.b16 %v262
  %v1724 = vunpack.c.l.b16 %v263
  %v1725 = vunpack.c.h.b16 %v263
  %v1726 = vunpack.c.l.b16 %v264
  %v1727 = vunpack.c.h.b16 %v264
  %v1728 = vunpack.c.l.b16 %v265
  %v1729 = vunpack.c.h.b16 %v265
  %v1730 = vunpack.c.l.b16 %v266
  %v1731 = vunpack.c.h.b16 %v266
  %v1732 = vunpack.c.l.b16 %v267
  %v1733 = vunpack.c.h.b16 %v267
  %v1734 = vunpack.c.l.b16 %v268
  %v1735 = vunpack.c.h.b16 %v268
  %v1736 = vunpack.c.l.b16 %v269
  %v1737 = vunpack.c.h.b16 %v269
  %v1738 = vunpack.c.l.b16 %v270
  %v1739 = vunpack.c.h.b16 %v270
  %v1740 = vunpack.c.l.b16 %v271
  %v1741 = vunpack.c.h.b16 %v271
  %v1742 = vunpack.c.l.b16 %v272
  %v1743 = vunpack.c.h.b16 %v272
  %v1744 = vunpack.c.l.b16 %v273
  %v1745 = vunpack.c.h.b16 %v273
  %v1746 = vunpack.c.l.b16 %v274
  %v1747 = vunpack.c.l.b16 %v275
  %v1748 = vunpack.c.h.b16 %v275
  %v1749 = vunpack.c.l.b16 %v276
  %v1750 = vunpack.c.h.b16 %v276
  %v1751 = vunpack.c.l.b16 %v277
  %v1752 = vunpack.c.h.b16 %v277
  %v1753 = vunpack.c.l.b16 %v278
  %v1754 = vunpack.c.h.b16 %v278
  %v1755 = vunpack.c.l.b16 %v279
  %v1756 = vunpack.c.h.b16 %v279
  %v1757 = vunpack.c.l.b16 %v280
  %v1758 = vunpack.c.h.b16 %v280
  %v1759 = vunpack.c.l.b16 %v281
  %v1760 = vunpack.c.h.b16 %v281
  %v1761 = vunpack.c.l.b16 %v282
  %v1762 = vunpack.c.h.b16 %v282
  %v1763 = vunpack.c.l.b16 %v283
  %v1764 = vunpack.c.h.b16 %v283
  %v1765 = vunpack.c.l.b16 %v284
  %v1766 = vunpack.c.h.b16 %v284
  %v1767 = vunpack.c.l.b16 %v285
  %v1768 = vunpack.c.h.b16 %v285
  %v1769 = vunpack.c.l.b16 %v286
  %v1770 = vunpack.c.h.b16 %v286
  %v1771 = vunpack.c.l.b16 %v287
  %v1772 = vunpack.c.l.b16 %v288
  %v1773 = vunpack.c.h.b16 %v288
  %v1774 = vunpack.c.l.b16 %v289
  %v1775 = vunpack.c.h.b16 %v289
  %v1776 = vunpack.c.l.b16 %v290
  %v1777 = vunpack.c.h.b16 %v290
  %v1778 = vunpack.c.l.b16 %v291
  %v1779 = vunpack.c.h.b16 %v291
  %v1780 = vunpack.c.l.b16 %v292
  %v1781 = vunpack.c.h.b16 %v292
  %v1782 = vunpack.c.l.b16 %v293
  %v1783 = vunpack.c.h.b16 %v293
  %v1784 = vunpack.c.l.b16 %v294
  %v1785 = vunpack.c.h.b16 %v294
  %v1786 = vunpack.c.l.b16 %v295
  %v1787 = vunpack.c.h.b16 %v295
  %v1788 = vunpack.c.l.b16 %v296
  %v1789 = vunpack.c.h.b16 %v296
  %v1790 = vunpack.c.l.b16 %v297
  %v1791 = vunpack.c.h.b16 %v297
  %v1792 = vunpack.c.l.b16 %v298
  %v1793 = vunpack.c.h.b16 %v298
  %v1794 = vunpack.c.l.b16 %v299
  %v1795 = vunpack.c.h.b16 %v299
  %v1796 = vunpack.c.l.b16 %v300
  %v1797 = vunpack.c.l.b16 %v301
  %v1798 = vunpack.c.h.b16 %v301
  %v1799 = vunpack.c.l.b16 %v302
  %v1800 = vunpack.c.h.b16 %v302
  %v1801 = vunpack.c.l.b16 %v303
  %v1802 = vunpack.c.h.b16 %v303
  %v1803 = vunpack.c.l.b16 %v304
  %v1804 = vunpack.c.h.b16 %v304
  %v1805 = vunpack.c.l.b16 %v305
  %v1806 = vunpack.c.h.b16 %v305
  %v1807 = vunpack.c.l.b16 %v306
  %v1808 = vunpack.c.h.b16 %v306
  %v1809 = vunpack.c.l.b16 %v307
  %v1810 = vunpack.c.h.b16 %v307
  %v1811 = vunpack.c.l.b16 %v308
  %v1812 = vunpack.c.h.b16 %v308
  %v1813 = vunpack.c.l.b16 %v309
  %v1814 = vunpack.c.h.b16 %v309
  %v1815 = vunpack.c.l.b16 %v310
  %v1816 = vunpack.c.h.b16 %v310
  %v1817 = vunpack.c.l.b16 %v311
  %v1818 = vunpack.c.h.b16 %v311
  %v1819 = vunpack.c.l.b16 %v312
  %v1820 = vunpack.c.h.b16 %v312
  %v1821 = vunpack.c.l.b16 %v313
  %v1822 = vunpack.c.l.b16 %v314
  %v1823 = vunpack.c.h.b16 %v314
  %v1824 = vunpack.c.l.b16 %v315
  %v1825 = vunpack.c.h.b16 %v315
  %v1826 = vunpack.c.l.b16 %v316
  %v1827 = vunpack.c.h.b16 %v316
  %v1828 = vunpack.c.l.b16 %v317
  %v1829 = vunpack.c.h.b16 %v317
  %v1830 = vunpack.c.l.b16 %v318
  %v1831 = vunpack.c.h.b16 %v318
  %v1832 = vunpack.c.l.b16 %v319
  %v1833 = vunpack.c.h.b16 %v319
  %v1834 = vunpack.c.l.b16 %v320
  %v1835 = vunpack.c.h.b16 %v320
  %v1836 = vunpack.c.l.b16 %v321
  %v1837 = vunpack.c.h.b16 %v321
  %v1838 = vunpack.c.l.b16 %v322
  %v1839 = vunpack.c.h.b16 %v322
  %v1840 = vunpack.c.l.b16 %v323
  %v1841 = vunpack.c.h.b16 %v323
  %v1842 = vunpack.c.l.b16 %v324
  %v1843 = vunpack.c.h.b16 %v324
  %v1844 = vunpack.c.l.b16 %v325
  %v1845 = vunpack.c.h.b16 %v325
  %v1846 = vunpack.c.l.b16 %v326
  %v1847 = vunpack.c.l.b16 %v327
  %v1848 = vunpack.c.h.b16 %v327
  %v1849 = vunpack.c.l.b16 %v328
  %v1850 = vunpack.c.h.b16 %v328
  %v1851 = vunpack.c.l.b16 %v329
  %v1852 = vunpack.c.h.b16 %v329
  %v1853 = vunpack.c.l.b16 %v330
  %v1854 = vunpack.c.h.b16 %v330
  %v1855 = vunpack.c.l.b16 %v331
  %v1856 = vunpack.c.h.b16 %v331
  %v1857 = vunpack.c.l.b16 %v332
  %v1858 = vunpack.c.h.b16 %v332
  %v1859 = vunpack.c.l.b16 %v333
  %v1860 = vunpack.c.h.b16 %v333
  %v1861 = vunpack.c.l.b16 %v334
  %v1862 = vunpack.c.h.b16 %v334
  %v1863 = vunpack.c.l.b16 %v335
  %v1864 = vunpack.c.h.b16 %v335
  %v1865 = vunpack.c.l.b16 %v336
  %v1866 = vunpack.c.h.b16 %v336
  %v1867 = vunpack.c.l.b16 %v337
  %v1868 = vunpack.c.h.b16 %v337
  %v1869 = vunpack.c.l.b16 %v338
  %v1870 = vunpack.c.h.b16 %v338
  %v1871 = vunpack.c.l.b16 %v339
  %v1872 = vunpack.c.l.b16 %v340
  %v1873 = vunpack.c.h.b16 %v340
  %v1874 = vunpack.c.l.b16 %v341
  %v1875 = vunpack.c.h.b16 %v341
  %v1876 = vunpack.c.l.b16 %v342
  %v1877 = vunpack.c.h.b16 %v342
  %v1878 = vunpack.c.l.b16 %v343
  %v1879 = vunpack.c.h.b16 %v343
  %v1880 = vunpack.c.l.b16 %v344
  %v1881 = vunpack.c.h.b16 %v344
  %v1882 = vunpack.c.l.b16 %v345
  %v1883 = vunpack.c.h.b16 %v345
  %v1884 = vunpack.c.l.b16 %v346
  %v1885 = vunpack.c.h.b16 %v346
  %v1886 = vunpack.c.l.b16 %v347
  %v1887 = vunpack.c.h.b16 %v347
  %v1888 = vunpack.c.l.b16 %v348
  %v1889 = vunpack.c.h.b16 %v348
  %v1890 = vunpack.c.l.b16 %v349
  %v1891 = vunpack.c.h.b16 %v349
  %v1892 = vunpack.c.l.b16 %v350
  %v1893 = vunpack.c.h.b16 %v350
  %v1894 = vunpack.c.l.b16 %v351
  %v1895 = vunpack.c.h.b16 %v351
  %v1896 = vunpack.c.l.b16 %v352
  %v1897 = vunpack.c.l.b16 %v353
  %v1898 = vunpack.c.h.b16 %v353
  %v1899 = vunpack.c.l.b16 %v354
  %v1900 = vunpack.c.h.b16 %v354
  %v1901 = vunpack.c.l.b16 %v355
  %v1902 = vunpack.c.h.b16 %v355
  %v1903 = vunpack.c.l.b16 %v356
  %v1904 = vunpack.c.h.b16 %v356
  %v1905 = vunpack.c.l.b16 %v357
  %v1906 = vunpack.c.h.b16 %v357
  %v1907 = vunpack.c.l.b16 %v358
  %v1908 = vunpack.c.h.b16 %v358
  %v1909 = vunpack.c.l.b16 %v359
  %v1910 = vunpack.c.h.b16 %v359
  %v1911 = vunpack.c.l.b16 %v360
  %v1912 = vunpack.c.h.b16 %v360
  %v1913 = vunpack.c.l.b16 %v361
  %v1914 = vunpack.c.h.b16 %v361
  %v1915 = vunpack.c.l.b16 %v362
  %v1916 = vunpack.c.h.b16 %v362
  %v1917 = vunpack.c.l.b16 %v363
  %v1918 = vunpack.c.h.b16 %v363
  %v1919 = vunpack.c.l.b16 %v364
  %v1920 = vunpack.c.h.b16 %v364
  %v1921 = vunpack.c.l.b16 %v365
  %v1922 = vunpack.c.l.b16 %v366
  %v1923 = vunpack.c.h.b16 %v366
  %v1924 = vunpack.c.l.b16 %v367
  %v1925 = vunpack.c.h.b16 %v367
  %v1926 = vunpack.c.l.b16 %v368
  %v1927 = vunpack.c.h.b16 %v368
  %v1928 = vunpack.c.l.b16 %v369
  %v1929 = vunpack.c.h.b16 %v369
  %v1930 = vunpack.c.l.b16 %v370
  %v1931 = vunpack.c.h.b16 %v370
  %v1932 = vunpack.c.l.b16 %v371
  %v1933 = vunpack.c.h.b16 %v371
  %v1934 = vunpack.c.l.b16 %v372
  %v1935 = vunpack.c.h.b16 %v372
  %v1936 = vunpack.c.l.b16 %v373
  %v1937 = vunpack.c.h.b16 %v373
  %v1938 = vunpack.c.l.b16 %v374
  %v1939 = vunpack.c.h.b16 %v374
  %v1940 = vunpack.c.l.b16 %v375
  %v1941 = vunpack.c.h.b16 %v375
  %v1942 = vunpack.c.l.b16 %v376
  %v1943 = vunpack.c.h.b16 %v376
  %v1944 = vunpack.c.l.b16 %v377
  %v1945 = vunpack.c.h.b16 %v377
  %v1946 = vunpack.c.l.b16 %v378
  %v1947 = vunpack.c.l.b16 %v379
  %v1948 = vunpack.c.h.b16 %v379
  %v1949 = vunpack.c.l.b16 %v380
  %v1950 = vunpack.c.h.b16 %v380
  %v1951 = vunpack.c.l.b16 %v381
  %v1952 = vunpack.c.h.b16 %v381
  %v1953 = vunpack.c.l.b16 %v382
  %v1954 = vunpack.c.h.b16 %v382
  %v1955 = vunpack.c.l.b16 %v383
  %v1956 = vunpack.c.h.b16 %v383
  %v1957 = vunpack.c.l.b16 %v384
  %v1958 = vunpack.c.h.b16 %v384
  %v1959 = vunpack.c.l.b16 %v385
  %v1960 = vunpack.c.h.b16 %v385
  %v1961 = vunpack.c.l.b16 %v386
  %v1962 = vunpack.c.h.b16 %v386
  %v1963 = vunpack.c.l.b16 %v387
  %v1964 = vunpack.c.h.b16 %v387
  %v1965 = vunpack.c.l.b16 %v388
  %v1966 = vunpack.c.h.b16 %v388
  %v1967 = vunpack.c.l.b16 %v389
  %v1968 = vunpack.c.h.b16 %v389
  %v1969 = vunpack.c.l.b16 %v390
  %v1970 = vunpack.c.h.b16 %v390
  %v1971 = vunpack.c.l.b16 %v391
  %v1972 = vunpack.c.l.b16 %v392
  %v1973 = vunpack.c.h.b16 %v392
  %v1974 = vunpack.c.l.b16 %v393
  %v1975 = vunpack.c.h.b16 %v393
  %v1976 = vunpack.c.l.b16 %v394
  %v1977 = vunpack.c.h.b16 %v394
  %v1978 = vunpack.c.l.b16 %v395
  %v1979 = vunpack.c.h.b16 %v395
  %v1980 = vunpack.c.l.b16 %v396
  %v1981 = vunpack.c.h.b16 %v396
  %v1982 = vunpack.c.l.b16 %v397
  %v1983 = vunpack.c.h.b16 %v397
  %v1984 = vunpack.c.l.b16 %v398
  %v1985 = vunpack.c.h.b16 %v398
  %v1986 = vunpack.c.l.b16 %v399
  %v1987 = vunpack.c.h.b16 %v399
  %v1988 = vunpack.c.l.b16 %v400
  %v1989 = vunpack.c.h.b16 %v400
  %v1990 = vunpack.c.l.b16 %v401
  %v1991 = vunpack.c.h.b16 %v401
  %v1992 = vunpack.c.l.b16 %v402
  %v1993 = vunpack.c.h.b16 %v402
  %v1994 = vunpack.c.l.b16 %v403
  %v1995 = vunpack.c.h.b16 %v403
  %v1996 = vunpack.c.l.b16 %v404
  %v1997 = vunpack.c.l.b16 %v405
  %v1998 = vunpack.c.h.b16 %v405
  %v1999 = vunpack.c.l.b16 %v406
  %v2000 = vunpack.c.h.b16 %v406
  %v2001 = vunpack.c.l.b16 %v407
  %v2002 = vunpack.c.h.b16 %v407
  %v2003 = vunpack.c.l.b16 %v408
  %v2004 = vunpack.c.h.b16 %v408
  %v2005 = vunpack.c.l.b16 %v409
  %v2006 = vunpack.c.h.b16 %v409
  %v2007 = vunpack.c.l.b16 %v410
  %v2008 = vunpack.c.h.b16 %v410
  %v2009 = vunpack.c.l.b16 %v411
  %v2010 = vunpack.c.h.b16 %v411
  %v2011 = vunpack.c.l.b16 %v412
  %v2012 = vunpack.c.h.b16 %v412
  %v2013 = vunpack.c.l.b16 %v413
  %v2014 = vunpack.c.h.b16 %v413
  %v2015 = vunpack.c.l.b16 %v414
  %v2016 = vunpack.c.h.b16 %v414
  %v2017 = vunpack.c.l.b16 %v415
  %v2018 = vunpack.c.h.b16 %v415
  %v2019 = vunpack.c.l.b16 %v416
  %v2020 = vunpack.c.h.b16 %v416
  %v2021 = vunpack.c.l.b16 %v417
  %v2022 = vunpack.c.l.b16 %v418
  %v2023 = vunpack.c.h.b16 %v418
  %v2024 = vunpack.c.l.b16 %v419
  %v2025 = vunpack.c.h.b16 %v419
  %v2026 = vunpack.c.l.b16 %v420
  %v2027 = vunpack.c.h.b16 %v420
  %v2028 = vunpack.c.l.b16 %v421
  %v2029 = vunpack.c.h.b16 %v421
  %v2030 = vunpack.c.l.b16 %v422
  %v2031 = vunpack.c.h.b16 %v422
  %v2032 = vunpack.c.l.b16 %v423
  %v2033 = vunpack.c.h.b16 %v423
  %v2034 = vunpack.c.l.b16 %v424
  %v2035 = vunpack.c.h.b16 %v424
  %v2036 = vunpack.c.l.b16 %v425
  %v2037 = vunpack.c.h.b16 %v425
  %v2038 = vunpack.c.l.b16 %v426
  %v2039 = vunpack.c.h.b16 %v426
  %v2040 = vunpack.c.l.b16 %v427
  %v2041 = vunpack.c.h.b16 %v427
  %v2042 = vunpack.c.l.b16 %v428
  %v2043 = vunpack.c.h.b16 %v428
  %v2044 = vunpack.c.l.b16 %v429
  %v2045 = vunpack.c.h.b16 %v429
  %v2046 = vunpack.c.l.b16 %v430
  %v2047 = vpack.c.b16 %v1272, %v1247
  %v2048 = vpack.c.b16 %v1273, %v1248
  %v2049 = vpack.c.b16 %v1274, %v1249
  %v2050 = vpack.c.b16 %v1275, %v1250
  %v2051 = vpack.c.b16 %v1276, %v1251
  %v2052 = vpack.c.b16 %v1277, %v1252
  %v2053 = vpack.c.b16 %v1278, %v1253
  %v2054 = vpack.c.b16 %v1279, %v1254
  %v2055 = vpack.c.b16 %v1280, %v1255
  %v2056 = vpack.c.b16 %v1281, %v1256
  %v2057 = vpack.c.b16 %v1282, %v1257
  %v2058 = vpack.c.b16 %v1283, %v1258
  %v2059 = vpack.c.b16 %v1284, %v1259
  %v2060 = vpack.c.b16 %v1285, %v1260
  %v2061 = vpack.c.b16 %v1286, %v1261
  %v2062 = vpack.c.b16 %v1287, %v1262
  %v2063 = vpack.c.b16 %v1288, %v1263
  %v2064 = vpack.c.b16 %v1289, %v1264
  %v2065 = vpack.c.b16 %v1290, %v1265
  %v2066 = vpack.c.b16 %v1291, %v1266
  %v2067 = vpack.c.b16 %v1292, %v1267
  %v2068 = vpack.c.b16 %v1293, %v1268
  %v2069 = vpack.c.b16 %v1294, %v1269
  %v2070 = vpack.c.b16 %v1295, %v1270
  %v2071 = vpack.c.b16 %v1296, %v1271
  %v2072 = vpack.c.b16 %v1322, %v1297
  %v2073 = vpack.c.b16 %v1323, %v1298
  %v2074 = vpack.c.b16 %v1324, %v1299
  %v2075 = vpack.c.b16 %v1325, %v1300
  %v2076 = vpack.c.b16 %v1326, %v1301
  %v2077 = vpack.c.b16 %v1327, %v1302
  %v2078 = vpack.c.b16 %v1328, %v1303
  %v2079 = vpack.c.b16 %v1329, %v1304
  %v2080 = vpack.c.b16 %v1330, %v1305
  %v2081 = vpack.c.b16 %v1331, %v1306
  %v2082 = vpack.c.b16 %v1332, %v1307
  %v2083 = vpack.c.b16 %v1333, %v1308
  %v2084 = vpack.c.b16 %v1334, %v1309
  %v2085 = vpack.c.b16 %v1335, %v1310
  %v2086 = vpack.c.b16 %v1336, %v1311
  %v2087 = vpack.c.b16 %v1337, %v1312
  %v2088 = vpack.c.b16 %v1338, %v1313
  %v2089 = vpack.c.b16 %v1339, %v1314
  %v2090 = vpack.c.b16 %v1340, %v1315
  %v2091 = vpack.c.b16 %v1341, %v1316
  %v2092 = vpack.c.b16 %v1342, %v1317
  %v2093 = vpack.c.b16 %v1343, %v1318
  %v2094 = vpack.c.b16 %v1344, %v1319
  %v2095 = vpack.c.b16 %v1345, %v1320
  %v2096 = vpack.c.b16 %v1346, %v1321
  %v2097 = vpack.c.b16 %v1372, %v1347
  %v2098 = vpack.c.b16 %v1373, %v1348
  %v2099 = vpack.c.b16 %v1374, %v1349
  %v2100 = vpack.c.b16 %v1375, %v1350
  %v2101 = vpack.c.b16 %v1376, %v1351
  %v2102 = vpack.c.b16 %v1377, %v1352
  %v2103 = vpack.c.b16 %v1378, %v1353
  %v2104 = vpack.c.b16 %v1379, %v1354
  %v2105 = vpack.c.b16 %v1380, %v1355
  %v2106 = vpack.c.b16 %v1381, %v1356
  %v2107 = vpack.c.b16 %v1382, %v1357
  %v2108 = vpack.c.b16 %v1383, %v1358
  %v2109 = vpack.c.b16 %v1384, %v1359
  %v2110 = vpack.c.b16 %v1385, %v1360
  %v2111 = vpack.c.b16 %v1386, %v1361
  %v2112 = vpack.c.b16 %v1387, %v1362
  %v2113 = vpack.c.b16 %v1388, %v1363
  %v2114 = vpack.c.b16 %v1389, %v1364
  %v2115 = vpack.c.b16 %v1390, %v1365
  %v2116 = vpack.c.b16 %v1391, %v1366
  %v2117 = vpack.c.b16 %v1392, %v1367
  %v2118 = vpack.c.b16 %v1393, %v1368
  %v2119 = vpack.c.b16 %v1394, %v1369
  %v2120 = vpack.c.b16 %v1395, %v1370
  %v2121 = vpack.c.b16 %v1396, %v1371
  %v2122 = vpack.c.b16 %v1422, %v1397
  %v2123 = vpack.c.b16 %v1423, %v1398
  %v2124 = vpack.c.b16 %v1424, %v1399
  %v2125 = vpack.c.b16 %v1425, %v1400
  %v2126 = vpack.c.b16 %v1426, %v1401
  %v2127 = vpack.c.b16 %v1427, %v1402
  %v2128 = vpack.c.b16 %v1428, %v1403
  %v2129 = vpack.c.b16 %v1429, %v1404
  %v2130 = vpack.c.b16 %v1430, %v1405
  %v2131 = vpack.c.b16 %v1431, %v1406
  %v2132 = vpack.c.b16 %v1432, %v1407
  %v2133 = vpack.c.b16 %v1433, %v1408
  %v2134 = vpack.c.b16 %v1434, %v1409
  %v2135 = vpack.c.b16 %v1435, %v1410
  %v2136 = vpack.c.b16 %v1436, %v1411
  %v2137 = vpack.c.b16 %v1437, %v1412
  %v2138 = vpack.c.b16 %v1438, %v1413
  %v2139 = vpack.c.b16 %v1439, %v1414
  %v2140 = vpack.c.b16 %v1440, %v1415
  %v2141 = vpack.c.b16 %v1441, %v1416
  %v2142 = vpack.c.b16 %v1442, %v1417
  %v2143 = vpack.c.b16 %v1443, %v1418
  %v2144 = vpack.c.b16 %v1444, %v1419
  %v2145 = vpack.c.b16 %v1445, %v1420
  %v2146 = vpack.c.b16 %v1446, %v1421
  %v2147 = vpack.c.b16 %v1472, %v1447
  %v2148 = vpack.c.b16 %v1473, %v1448
  %v2149 = vpack.c.b16 %v1474, %v1449
  %v2150 = vpack.c.b16 %v1475, %v1450
  %v2151 = vpack.c.b16 %v1476, %v1451
  %v2152 = vpack.c.b16 %v1477, %v1452
  %v2153 = vpack.c.b16 %v1478, %v1453
  %v2154 = vpack.c.b16 %v1479, %v1454
  %v2155 = vpack.c.b16 %v1480, %v1455
  %v2156 = vpack.c.b16 %v1481, %v1456
  %v2157 = vpack.c.b16 %v1482, %v1457
  %v2158 = vpack.c.b16 %v1483, %v1458
  %v2159 = vpack.c.b16 %v1484, %v1459
  %v2160 = vpack.c.b16 %v1485, %v1460
  %v2161 = vpack.c.b16 %v1486, %v1461
  %v2162 = vpack.c.b16 %v1487, %v1462
  %v2163 = vpack.c.b16 %v1488, %v1463
  %v2164 = vpack.c.b16 %v1489, %v1464
  %v2165 = vpack.c.b16 %v1490, %v1465
  %v2166 = vpack.c.b16 %v1491, %v1466
  %v2167 = vpack.c.b16 %v1492, %v1467
  %v2168 = vpack.c.b16 %v1493, %v1468
  %v2169 = vpack.c.b16 %v1494, %v1469
  %v2170 = vpack.c.b16 %v1495, %v1470
  %v2171 = vpack.c.b16 %v1496, %v1471
  %v2172 = vpack.c.b16 %v1522, %v1497
  %v2173 = vpack.c.b16 %v1523, %v1498
  %v2174 = vpack.c.b16 %v1524, %v1499
  %v2175 = vpack.c.b16 %v1525, %v1500
  %v2176 = vpack.c.b16 %v1526, %v1501
  %v2177 = vpack.c.b16 %v1527, %v1502
  %v2178 = vpack.c.b16 %v1528, %v1503
  %v2179 = vpack.c.b16 %v1529, %v1504
  %v2180 = vpack.c.b16 %v1530, %v1505
  %v2181 = vpack.c.b16 %v1531, %v1506
  %v2182 = vpack.c.b16 %v1532, %v1507
  %v2183 = vpack.c.b16 %v1533, %v1508
  %v2184 = vpack.c.b16 %v1534, %v1509
  %v2185 = vpack.c.b16 %v1535, %v1510
  %v2186 = vpack.c.b16 %v1536, %v1511
  %v2187 = vpack.c.b16 %v1537, %v1512
  %v2188 = vpack.c.b16 %v1538, %v1513
  %v2189 = vpack.c.b16 %v1539, %v1514
  %v2190 = vpack.c.b16 %v1540, %v1515
  %v2191 = vpack.c.b16 %v1541, %v1516
  %v2192 = vpack.c.b16 %v1542, %v1517
  %v2193 = vpack.c.b16 %v1543, %v1518
  %v2194 = vpack.c.b16 %v1544, %v1519
  %v2195 = vpack.c.b16 %v1545, %v1520
  %v2196 = vpack.c.b16 %v1546, %v1521
  %v2197 = vpack.c.b16 %v1572, %v1547
  %v2198 = vpack.c.b16 %v1573, %v1548
  %v2199 = vpack.c.b16 %v1574, %v1549
  %v2200 = vpack.c.b16 %v1575, %v1550
  %v2201 = vpack.c.b16 %v1576, %v1551
  %v2202 = vpack.c.b16 %v1577, %v1552
  %v2203 = vpack.c.b16 %v1578, %v1553
  %v2204 = vpack.c.b16 %v1579, %v1554
  %v2205 = vpack.c.b16 %v1580, %v1555
  %v2206 = vpack.c.b16 %v1581, %v1556
  %v2207 = vpack.c.b16 %v1582, %v1557
  %v2208 = vpack.c.b16 %v1583, %v1558
  %v2209 = vpack.c.b16 %v1584, %v1559
  %v2210 = vpack.c.b16 %v1585, %v1560
  %v2211 = vpack.c.b16 %v1586, %v1561
  %v2212 = vpack.c.b16 %v1587, %v1562
  %v2213 = vpack.c.b16 %v1588, %v1563
  %v2214 = vpack.c.b16 %v1589, %v1564
  %v2215 = vpack.c.b16 %v1590, %v1565
  %v2216 = vpack.c.b16 %v1591, %v1566
  %v2217 = vpack.c.b16 %v1592, %v1567
  %v2218 = vpack.c.b16 %v1593, %v1568
  %v2219 = vpack.c.b16 %v1594, %v1569
  %v2220 = vpack.c.b16 %v1595, %v1570
  %v2221 = vpack.c.b16 %v1596, %v1571
  %v2222 = vpack.c.b16 %v1622, %v1597
  %v2223 = vpack.c.b16 %v1623, %v1598
  %v2224 = vpack.c.b16 %v1624, %v1599
  %v2225 = vpack.c.b16 %v1625, %v1600
  %v2226 = vpack.c.b16 %v1626, %v1601
  %v2227 = vpack.c.b16 %v1627, %v1602
  %v2228 = vpack.c.b16 %v1628, %v1603
  %v2229 = vpack.c.b16 %v1629, %v1604
  %v2230 = vpack.c.b16 %v1630, %v1605
  %v2231 = vpack.c.b16 %v1631, %v1606
  %v2232 = vpack.c.b16 %v1632, %v1607
  %v2233 = vpack.c.b16 %v1633, %v1608
  %v2234 = vpack.c.b16 %v1634, %v1609
  %v2235 = vpack.c.b16 %v1635, %v1610
  %v2236 = vpack.c.b16 %v1636, %v1611
  %v2237 = vpack.c.b16 %v1637, %v1612
  %v2238 = vpack.c.b16 %v1638, %v1613
  %v2239 = vpack.c.b16 %v1639, %v1614
  %v2240 = vpack.c.b16 %v1640, %v1615
  %v2241 = vpack.c.b16 %v1641, %v1616
  %v2242 = vpack.c.b16 %v1642, %v1617
  %v2243 = vpack.c.b16 %v1643, %v1618
  %v2244 = vpack.c.b16 %v1644, %v1619
  %v2245 = vpack.c.b16 %v1645, %v1620
  %v2246 = vpack.c.b16 %v1646, %v1621
  %v2247 = vpack.c.b16 %v1672, %v1647
  %v2248 = vpack.c.b16 %v1673, %v1648
  %v2249 = vpack.c.b16 %v1674, %v1649
  %v2250 = vpack.c.b16 %v1675, %v1650
  %v2251 = vpack.c.b16 %v1676, %v1651
  %v2252 = vpack.c.b16 %v1677, %v1652
  %v2253 = vpack.c.b16 %v1678, %v1653
  %v2254 = vpack.c.b16 %v1679, %v1654
  %v2255 = vpack.c.b16 %v1680, %v1655
  %v2256 = vpack.c.b16 %v1681, %v1656
  %v2257 = vpack.c.b16 %v1682, %v1657
  %v2258 = vpack.c.b16 %v1683, %v1658
  %v2259 = vpack.c.b16 %v1684, %v1659
  %v2260 = vpack.c.b16 %v1685, %v1660
  %v2261 = vpack.c.b16 %v1686, %v1661
  %v2262 = vpack.c.b16 %v1687, %v1662
  %v2263 = vpack.c.b16 %v1688, %v1663
  %v2264 = vpack.c.b16 %v1689, %v1664
  %v2265 = vpack.c.b16 %v1690, %v1665
  %v2266 = vpack.c.b16 %v1691, %v1666
  %v2267 = vpack.c.b16 %v1692, %v1667
  %v2268 = vpack.c.b16 %v1693, %v1668
  %v2269 = vpack.c.b16 %v1694, %v1669
  %v2270 = vpack.c.b16 %v1695, %v1670
  %v2271 = vpack.c.b16 %v1696, %v1671
  %v2272 = vpack.c.b16 %v1722, %v1697
  %v2273 = vpack.c.b16 %v1723, %v1698
  %v2274 = vpack.c.b16 %v1724, %v1699
  %v2275 = vpack.c.b16 %v1725, %v1700
  %v2276 = vpack.c.b16 %v1726, %v1701
  %v2277 = vpack.c.b16 %v1727, %v1702
  %v2278 = vpack.c.b16 %v1728, %v1703
  %v2279 = vpack.c.b16 %v1729, %v1704
  %v2280 = vpack.c.b16 %v1730, %v1705
  %v2281 = vpack.c.b16 %v1731, %v1706
  %v2282 = vpack.c.b16 %v1732, %v1707
  %v2283 = vpack.c.b16 %v1733, %v1708
  %v2284 = vpack.c.b16 %v1734, %v1709
  %v2285 = vpack.c.b16 %v1735, %v1710
  %v2286 = vpack.c.b16 %v1736, %v1711
  %v2287 = vpack.c.b16 %v1737, %v1712
  %v2288 = vpack.c.b16 %v1738, %v1713
  %v2289 = vpack.c.b16 %v1739, %v1714
  %v2290 = vpack.c.b16 %v1740, %v1715
  %v2291 = vpack.c.b16 %v1741, %v1716
  %v2292 = vpack.c.b16 %v1742, %v1717
  %v2293 = vpack.c.b16 %v1743, %v1718
  %v2294 = vpack.c.b16 %v1744, %v1719
  %v2295 = vpack.c.b16 %v1745, %v1720
  %v2296 = vpack.c.b16 %v1746, %v1721
  %v2297 = vpack.c.b16 %v1772, %v1747
  %v2298 = vpack.c.b16 %v1773, %v1748
  %v2299 = vpack.c.b16 %v1774, %v1749
  %v2300 = vpack.c.b16 %v1775, %v1750
  %v2301 = vpack.c.b16 %v1776, %v1751
  %v2302 = vpack.c.b16 %v1777, %v1752
  %v2303 = vpack.c.b16 %v1778, %v1753
  %v2304 = vpack.c.b16 %v1779, %v1754
  %v2305 = vpack.c.b16 %v1780, %v1755
  %v2306 = vpack.c.b16 %v1781, %v1756
  %v2307 = vpack.c.b16 %v1782, %v1757
  %v2308 = vpack.c.b16 %v1783, %v1758
  %v2309 = vpack.c.b16 %v1784, %v1759
  %v2310 = vpack.c.b16 %v1785, %v1760
  %v2311 = vpack.c.b16 %v1786, %v1761
  %v2312 = vpack.c.b16 %v1787, %v1762
  %v2313 = vpack.c.b16 %v1788, %v1763
  %v2314 = vpack.c.b16 %v1789, %v1764
  %v2315 = vpack.c.b16 %v1790, %v1765
  %v2316 = vpack.c.b16 %v1791, %v1766
  %v2317 = vpack.c.b16 %v1792, %v1767
  %v2318 = vpack.c.b16 %v1793, %v1768
  %v2319 = vpack.c.b16 %v1794, %v1769
  %v2320 = vpack.c.b16 %v1795, %v1770
  %v2321 = vpack.c.b16 %v1796, %v1771
  %v2322 = vpack.c.b16 %v1822, %v1797
  %v2323 = vpack.c.b16 %v1823, %v1798
  %v2324 = vpack.c.b16 %v1824, %v1799
  %v2325 = vpack.c.b16 %v1825, %v1800
  %v2326 = vpack.c.b16 %v1826, %v1801
  %v2327 = vpack.c.b16 %v1827, %v1802
  %v2328 = vpack.c.b16 %v1828, %v1803
  %v2329 = vpack.c.b16 %v1829, %v1804
  %v2330 = vpack.c.b16 %v1830, %v1805
  %v2331 = vpack.c.b16 %v1831, %v1806
  %v2332 = vpack.c.b16 %v1832, %v1807
  %v2333 = vpack.c.b16 %v1833, %v1808
  %v2334 = vpack.c.b16 %v1834, %v1809
  %v2335 = vpack.c.b16 %v1835, %v1810
  %v2336 = vpack.c.b16 %v1836, %v1811
  %v2337 = vpack.c.b16 %v1837, %v1812
  %v2338 = vpack.c.b16 %v1838, %v1813
  %v2339 = vpack.c.b16 %v1839, %v1814
  %v2340 = vpack.c.b16 %v1840, %v1815
  %v2341 = vpack.c.b16 %v1841, %v1816
  %v2342 = vpack.c.b16 %v1842, %v1817
  %v2343 = vpack.c.b16 %v1843, %v1818
  %v2344 = vpack.c.b16 %v1844, %v1819
  %v2345 = vpack.c.b16 %v1845, %v1820
  %v2346 = vpack.c.b16 %v1846, %v1821
  %v2347 = vpack.c.b16 %v1872, %v1847
  %v2348 = vpack.c.b16 %v1873, %v1848
  %v2349 = vpack.c.b16 %v1874, %v1849
  %v2350 = vpack.c.b16 %v1875, %v1850
  %v2351 = vpack.c.b16 %v1876, %v1851
  %v2352 = vpack.c.b16 %v1877, %v1852
  %v2353 = vpack.c.b16 %v1878, %v1853
  %v2354 = vpack.c.b16 %v1879, %v1854
  %v2355 = vpack.c.b16 %v1880, %v1855
  %v2356 = vpack.c.b16 %v1881, %v1856
  %v2357 = vpack.c.b16 %v1882, %v1857
  %v2358 = vpack.c.b16 %v1883, %v1858
  %v2359 = vpack.c.b16 %v1884, %v1859
  %v2360 = vpack.c.b16 %v1885, %v1860
  %v2361 = vpack.c.b16 %v1886, %v1861
  %v2362 = vpack.c.b16 %v1887, %v1862
  %v2363 = vpack.c.b16 %v1888, %v1863
  %v2364 = vpack.c.b16 %v1889, %v1864
  %v2365 = vpack.c.b16 %v1890, %v1865
  %v2366 = vpack.c.b16 %v1891, %v1866
  %v2367 = vpack.c.b16 %v1892, %v1867
  %v2368 = vpack.c.b16 %v1893, %v1868
  %v2369 = vpack.c.b16 %v1894, %v1869
  %v2370 = vpack.c.b16 %v1895, %v1870
  %v2371 = vpack.c.b16 %v1896, %v1871
  %v2372 = vpack.c.b16 %v1922, %v1897
  %v2373 = vpack.c.b16 %v1923, %v1898
  %v2374 = vpack.c.b16 %v1924, %v1899
  %v2375 = vpack.c.b16 %v1925, %v1900
  %v2376 = vpack.c.b16 %v1926, %v1901
  %v2377 = vpack.c.b16 %v1927, %v1902
  %v2378 = vpack.c.b16 %v1928, %v1903
  %v2379 = vpack.c.b16 %v1929, %v1904
  %v2380 = vpack.c.b16 %v1930, %v1905
  %v2381 = vpack.c.b16 %v1931, %v1906
  %v2382 = vpack.c.b16 %v1932, %v1907
  %v2383 = vpack.c.b16 %v1933, %v1908
  %v2384 = vpack.c.b16 %v1934, %v1909
  %v2385 = vpack.c.b16 %v1935, %v1910
  %v2386 = vpack.c.b16 %v1936, %v1911
  %v2387 = vpack.c.b16 %v1937, %v1912
  %v2388 = vpack.c.b16 %v1938, %v1913
  %v2389 = vpack.c.b16 %v1939, %v1914
  %v2390 = vpack.c.b16 %v1940, %v1915
  %v2391 = vpack.c.b16 %v1941, %v1916
  %v2392 = vpack.c.b16 %v1942, %v1917
  %v2393 = vpack.c.b16 %v1943, %v1918
  %v2394 = vpack.c.b16 %v1944, %v1919
  %v2395 = vpack.c.b16 %v1945, %v1920
  %v2396 = vpack.c.b16 %v1946, %v1921
  %v2397 = vpack.c.b16 %v1972, %v1947
  %v2398 = vpack.c.b16 %v1973, %v1948
  %v2399 = vpack.c.b16 %v1974, %v1949
  %v2400 = vpack.c.b16 %v1975, %v1950
  %v2401 = vpack.c.b16 %v1976, %v1951
  %v2402 = vpack.c.b16 %v1977, %v1952
  %v2403 = vpack.c.b16 %v1978, %v1953
  %v2404 = vpack.c.b16 %v1979, %v1954
  %v2405 = vpack.c.b16 %v1980, %v1955
  %v2406 = vpack.c.b16 %v1981, %v1956
  %v2407 = vpack.c.b16 %v1982, %v1957
  %v2408 = vpack.c.b16 %v1983, %v1958
  %v2409 = vpack.c.b16 %v1984, %v1959
  %v2410 = vpack.c.b16 %v1985, %v1960
  %v2411 = vpack.c.b16 %v1986, %v1961
  %v2412 = vpack.c.b16 %v1987, %v1962
  %v2413 = vpack.c.b16 %v1988, %v1963
  %v2414 = vpack.c.b16 %v1989, %v1964
  %v2415 = vpack.c.b16 %v1990, %v1965
  %v2416 = vpack.c.b16 %v1991, %v1966
  %v2417 = vpack.c.b16 %v1992, %v1967
  %v2418 = vpack.c.b16 %v1993, %v1968
  %v2419 = vpack.c.b16 %v1994, %v1969
  %v2420 = vpack.c.b16 %v1995, %v1970
  %v2421 = vpack.c.b16 %v1996, %v1971
  %v2422 = vpack.c.b16 %v2022, %v1997
  %v2423 = vpack.c.b16 %v2023, %v1998
  %v2424 = vpack.c.b16 %v2024, %v1999
  %v2425 = vpack.c.b16 %v2025, %v2000
  %v2426 = vpack.c.b16 %v2026, %v2001
  %v2427 = vpack.c.b16 %v2027, %v2002
  %v2428 = vpack.c.b16 %v2028, %v2003
  %v2429 = vpack.c.b16 %v2029, %v2004
  %v2430 = vpack.c.b16 %v2030, %v2005
  %v2431 = vpack.c.b16 %v2031, %v2006
  %v2432 = vpack.c.b16 %v2032, %v2007
  %v2433 = vpack.c.b16 %v2033, %v2008
  %v2434 = vpack.c.b16 %v2034, %v2009
  %v2435 = vpack.c.b16 %v2035, %v2010
  %v2436 = vpack.c.b16 %v2036, %v2011
  %v2437 = vpack.c.b16 %v2037, %v2012
  %v2438 = vpack.c.b16 %v2038, %v2013
  %v2439 = vpack.c.b16 %v2039, %v2014
  %v2440 = vpack.c.b16 %v2040, %v2015
  %v2441 = vpack.c.b16 %v2041, %v2016
  %v2442 = vpack.c.b16 %v2042, %v2017
  %v2443 = vpack.c.b16 %v2043, %v2018
  %v2444 = vpack.c.b16 %v2044, %v2019
  %v2445 = vpack.c.b16 %v2045, %v2020
  %v2446 = vpack.c.b16 %v2046, %v2021
  %v3247 = vunpack.c.l.b16 %v431
  %v3248 = vunpack.c.l.b16 %v432
  %v3249 = vunpack.c.l.b16 %v433
  %v3250 = vunpack.c.l.b16 %v434
  %v3251 = vunpack.c.l.b16 %v435
  %v3252 = vunpack.c.l.b16 %v436
  %v3253 = vunpack.c.l.b16 %v437
  %v3254 = vunpack.c.l.b16 %v438
  %v3255 = vunpack.c.l.b16 %v439
  %v3256 = vunpack.c.l.b16 %v440
  %v3257 = vunpack.c.l.b16 %v441
  %v3258 = vunpack.c.l.b16 %v442
  %v3259 = vunpack.c.l.b16 %v443
  %v3260 = vunpack.c.l.b16 %v444
  %v3261 = vunpack.c.l.b16 %v445
  %v3262 = vunpack.c.l.b16 %v446
  %v3263 = vunpack.c.l.b16 %v447
  %v3264 = vunpack.c.l.b16 %v448
  %v3265 = vunpack.c.l.b16 %v449
  %v3266 = vunpack.c.l.b16 %v450
  %v3267 = vunpack.c.l.b16 %v451
  %v3268 = vunpack.c.l.b16 %v452
  %v3269 = vunpack.c.l.b16 %v453
  %v3270 = vunpack.c.l.b16 %v454
  %v3271 = vunpack.c.l.b16 %v455
  %v3272 = vunpack.c.l.b16 %v456
  %v3273 = vunpack.c.l.b16 %v457
  %v3274 = vunpack.c.l.b16 %v458
  %v3275 = vunpack.c.l.b16 %v459
  %v3276 = vunpack.c.l.b16 %v460
  %v3277 = vunpack.c.l.b16 %v461
  %v3278 = vunpack.c.l.b16 %v462
  %v3279 = vunpack.c.l.b16 %v463
  %v3280 = vunpack.c.l.b16 %v464
  %v3281 = vunpack.c.l.b16 %v465
  %v3282 = vunpack.c.l.b16 %v466
  %v3283 = vunpack.c.l.b16 %v467
  %v3284 = vunpack.c.l.b16 %v468
  %v3285 = vunpack.c.l.b16 %v469
  %v3286 = vunpack.c.l.b16 %v470
  %v3287 = vunpack.c.l.b16 %v471
  %v3288 = vunpack.c.l.b16 %v472
  %v3289 = vunpack.c.l.b16 %v473
  %v3290 = vunpack.c.l.b16 %v474
  %v3291 = vunpack.c.l.b16 %v475
  %v3292 = vunpack.c.l.b16 %v476
  %v3293 = vunpack.c.l.b16 %v477
  %v3294 = vunpack.c.l.b16 %v478
  %v3295 = vunpack.c.l.b16 %v479
  %v3296 = vunpack.c.l.b16 %v480
  %v3297 = vunpack.c.l.b16 %v481
  %v3298 = vunpack.c.l.b16 %v482
  %v3299 = vunpack.c.l.b16 %v483
  %v3300 = vunpack.c.l.b16 %v484
  %v3301 = vunpack.c.l.b16 %v485
  %v3302 = vunpack.c.l.b16 %v486
  %v3303 = vunpack.c.l.b16 %v487
  %v3304 = vunpack.c.l.b16 %v488
  %v3305 = vunpack.c.l.b16 %v489
  %v3306 = vunpack.c.l.b16 %v490
  %v3307 = vunpack.c.l.b16 %v491
  %v3308 = vunpack.c.l.b16 %v492
  %v3309 = vunpack.c.l.b16 %v493
  %v3310 = vunpack.c.l.b16 %v494
  %v3311 = vunpack.c.l.b16 %v495
  %v3312 = vunpack.c.l.b16 %v496
  %v3313 = vunpack.c.l.b16 %v497
  %v3314 = vunpack.c.l.b16 %v498
  %v3315 = vunpack.c.l.b16 %v499
  %v3316 = vunpack.c.l.b16 %v500
  %v3317 = vunpack.c.l.b16 %v501
  %v3318 = vunpack.c.l.b16 %v502
  %v3319 = vunpack.c.l.b16 %v503
  %v3320 = vunpack.c.l.b16 %v504
  %v3321 = vunpack.c.l.b16 %v505
  %v3322 = vunpack.c.l.b16 %v506
  %v3323 = vunpack.c.l.b16 %v507
  %v3324 = vunpack.c.l.b16 %v508
  %v3325 = vunpack.c.l.b16 %v509
  %v3326 = vunpack.c.l.b16 %v510
  %v3327 = vunpack.c.l.b16 %v511
  %v3328 = vunpack.c.l.b16 %v512
  %v3329 = vunpack.c.l.b16 %v513
  %v3330 = vunpack.c.l.b16 %v514
  %v3331 = vunpack.c.l.b16 %v515
  %v3332 = vunpack.c.l.b16 %v516
  %v3333 = vunpack.c.l.b16 %v517
  %v3334 = vunpack.c.l.b16 %v518
  %v3335 = vunpack.c.l.b16 %v519
  %v3336 = vunpack.c.l.b16 %v520
  %v3337 = vunpack.c.l.b16 %v521
  %v3338 = vunpack.c.l.b16 %v522
  %v3339 = vunpack.c.l.b16 %v523
  %v3340 = vunpack.c.l.b16 %v524
  %v3341 = vunpack.c.l.b16 %v525
  %v3342 = vunpack.c.l.b16 %v526
  %v3343 = vunpack.c.l.b16 %v527
  %v3344 = vunpack.c.l.b16 %v528
  %v3345 = vunpack.c.l.b16 %v529
  %v3346 = vunpack.c.l.b16 %v530
  %v3347 = vunpack.c.l.b16 %v531
  %v3348 = vunpack.c.l.b16 %v532
  %v3349 = vunpack.c.l.b16 %v533
  %v3350 = vunpack.c.l.b16 %v534
  %v3351 = vunpack.c.l.b16 %v535
  %v3352 = vunpack.c.l.b16 %v536
  %v3353 = vunpack.c.l.b16 %v537
  %v3354 = vunpack.c.l.b16 %v538
  %v3355 = vunpack.c.l.b16 %v539
  %v3356 = vunpack.c.l.b16 %v540
  %v3357 = vunpack.c.l.b16 %v541
  %v3358 = vunpack.c.l.b16 %v542
  %v3359 = vunpack.c.l.b16 %v543
  %v3360 = vunpack.c.l.b16 %v544
  %v3361 = vunpack.c.l.b16 %v545
  %v3362 = vunpack.c.l.b16 %v546
  %v3363 = vunpack.c.l.b16 %v547
  %v3364 = vunpack.c.l.b16 %v548
  %v3365 = vunpack.c.l.b16 %v549
  %v3366 = vunpack.c.l.b16 %v550
  %v3367 = vunpack.c.l.b16 %v551
  %v3368 = vunpack.c.l.b16 %v552
  %v3369 = vunpack.c.l.b16 %v553
  %v3370 = vunpack.c.l.b16 %v554
  %v3371 = vunpack.c.l.b16 %v555
  %v3372 = vunpack.c.l.b16 %v556
  %v3373 = vunpack.c.l.b16 %v557
  %v3374 = vunpack.c.l.b16 %v558
  %v3375 = vunpack.c.l.b16 %v559
  %v3376 = vunpack.c.l.b16 %v560
  %v3377 = vunpack.c.l.b16 %v561
  %v3378 = vunpack.c.l.b16 %v562
  %v3379 = vunpack.c.l.b16 %v563
  %v3380 = vunpack.c.l.b16 %v564
  %v3381 = vunpack.c.l.b16 %v565
  %v3382 = vunpack.c.l.b16 %v566
  %v3383 = vunpack.c.l.b16 %v567
  %v3384 = vunpack.c.l.b16 %v568
  %v3385 = vunpack.c.l.b16 %v569
  %v3386 = vunpack.c.l.b16 %v570
  %v3387 = vunpack.c.l.b16 %v571
  %v3388 = vunpack.c.l.b16 %v572
  %v3389 = vunpack.c.l.b16 %v573
  %v3390 = vunpack.c.l.b16 %v574
  %v3391 = vunpack.c.l.b16 %v575
  %v3392 = vunpack.c.l.b16 %v576
  %v3393 = vunpack.c.l.b16 %v577
  %v3394 = vunpack.c.l.b16 %v578
  %v3395 = vunpack.c.l.b16 %v579
  %v3396 = vunpack.c.l.b16 %v580
  %v3397 = vunpack.c.l.b16 %v581
  %v3398 = vunpack.c.l.b16 %v582
  %v3399 = vunpack.c.l.b16 %v583
  %v3400 = vunpack.c.l.b16 %v584
  %v3401 = vunpack.c.l.b16 %v585
  %v3402 = vunpack.c.l.b16 %v586
  %v3403 = vunpack.c.l.b16 %v587
  %v3404 = vunpack.c.l.b16 %v588
  %v3405 = vunpack.c.l.b16 %v589
  %v3406 = vunpack.c.l.b16 %v590
  %v3407 = vunpack.c.l.b16 %v591
  %v3408 = vunpack.c.l.b16 %v592
  %v3409 = vunpack.c.l.b16 %v593
  %v3410 = vunpack.c.l.b16 %v594
  %v3411 = vunpack.c.l.b16 %v595
  %v3412 = vunpack.c.l.b16 %v596
  %v3413 = vunpack.c.l.b16 %v597
  %v3414 = vunpack.c.l.b16 %v598
  %v3415 = vunpack.c.l.b16 %v599
  %v3416 = vunpack.c.l.b16 %v600
  %v3417 = vunpack.c.l.b16 %v601
  %v3418 = vunpack.c.l.b16 %v602
  %v3419 = vunpack.c.l.b16 %v603
  %v3420 = vunpack.c.l.b16 %v604
  %v3421 = vunpack.c.l.b16 %v605
  %v3422 = vunpack.c.l.b16 %v606
  %v3423 = vunpack.c.l.b16 %v607
  %v3424 = vunpack.c.l.b16 %v608
  %v3425 = vunpack.c.l.b16 %v609
  %v3426 = vunpack.c.l.b16 %v610
  %v3427 = vunpack.c.l.b16 %v611
  %v3428 = vunpack.c.l.b16 %v612
  %v3429 = vunpack.c.l.b16 %v613
  %v3430 = vunpack.c.l.b16 %v614
  %v3431 = vunpack.c.l.b16 %v615
  %v3432 = vunpack.c.l.b16 %v616
  %v3433 = vunpack.c.l.b16 %v617
  %v3434 = vunpack.c.l.b16 %v618
  %v3435 = vunpack.c.l.b16 %v619
  %v3436 = vunpack.c.l.b16 %v620
  %v3437 = vunpack.c.l.b16 %v621
  %v3438 = vunpack.c.l.b16 %v622
  %v3439 = vunpack.c.l.b16 %v623
  %v3440 = vunpack.c.l.b16 %v624
  %v3441 = vunpack.c.l.b16 %v625
  %v3442 = vunpack.c.l.b16 %v626
  %v3443 = vunpack.c.l.b16 %v627
  %v3444 = vunpack.c.l.b16 %v628
  %v3445 = vunpack.c.l.b16 %v629
  %v3446 = vunpack.c.l.b16 %v630
  %v3447 = vunpack.c.l.b16 %v631
  %v3448 = vunpack.c.l.b16 %v632
  %v3449 = vunpack.c.l.b16 %v633
  %v3450 = vunpack.c.l.b16 %v634
  %v3451 = vunpack.c.l.b16 %v635
  %v3452 = vunpack.c.l.b16 %v636
  %v3453 = vunpack.c.l.b16 %v637
  %v3454 = vunpack.c.l.b16 %v638
  %v3455 = vunpack.c.l.b16 %v639
  %v3456 = vunpack.c.l.b16 %v640
  %v3457 = vunpack.c.l.b16 %v641
  %v3458 = vunpack.c.l.b16 %v642
  %v3459 = vunpack.c.l.b16 %v643
  %v3460 = vunpack.c.l.b16 %v644
  %v3461 = vunpack.c.l.b16 %v645
  %v3462 = vunpack.c.l.b16 %v646
  %v3463 = vunpack.c.l.b16 %v647
  %v3464 = vunpack.c.l.b16 %v648
  %v3465 = vunpack.c.l.b16 %v649
  %v3466 = vunpack.c.l.b16 %v650
  %v3467 = vunpack.c.l.b16 %v651
  %v3468 = vunpack.c.l.b16 %v652
  %v3469 = vunpack.c.l.b16 %v653
  %v3470 = vunpack.c.l.b16 %v654
  %v3471 = vunpack.c.l.b16 %v655
  %v3472 = vunpack.c.l.b16 %v656
  %v3473 = vunpack.c.l.b16 %v657
  %v3474 = vunpack.c.l.b16 %v658
  %v3475 = vunpack.c.l.b16 %v659
  %v3476 = vunpack.c.l.b16 %v660
  %v3477 = vunpack.c.l.b16 %v661
  %v3478 = vunpack.c.l.b16 %v662
  %v3479 = vunpack.c.l.b16 %v663
  %v3480 = vunpack.c.l.b16 %v664
  %v3481 = vunpack.c.l.b16 %v665
  %v3482 = vunpack.c.l.b16 %v666
  %v3483 = vunpack.c.l.b16 %v667
  %v3484 = vunpack.c.l.b16 %v668
  %v3485 = vunpack.c.l.b16 %v669
  %v3486 = vunpack.c.l.b16 %v670
  %v3487 = vunpack.c.l.b16 %v671
  %v3488 = vunpack.c.l.b16 %v672
  %v3489 = vunpack.c.l.b16 %v673
  %v3490 = vunpack.c.l.b16 %v674
  %v3491 = vunpack.c.l.b16 %v675
  %v3492 = vunpack.c.l.b16 %v676
  %v3493 = vunpack.c.l.b16 %v677
  %v3494 = vunpack.c.l.b16 %v678
  %v3495 = vunpack.c.l.b16 %v679
  %v3496 = vunpack.c.l.b16 %v680
  %v3497 = vunpack.c.l.b16 %v681
  %v3498 = vunpack.c.l.b16 %v682
  %v3499 = vunpack.c.l.b16 %v683
  %v3500 = vunpack.c.l.b16 %v684
  %v3501 = vunpack.c.l.b16 %v685
  %v3502 = vunpack.c.l.b16 %v686
  %v3503 = vunpack.c.l.b16 %v687
  %v3504 = vunpack.c.l.b16 %v688
  %v3505 = vunpack.c.l.b16 %v689
  %v3506 = vunpack.c.l.b16 %v690
  %v3507 = vunpack.c.l.b16 %v691
  %v3508 = vunpack.c.l.b16 %v692
  %v3509 = vunpack.c.l.b16 %v693
  %v3510 = vunpack.c.l.b16 %v694
  %v3511 = vunpack.c.l.b16 %v695
  %v3512 = vunpack.c.l.b16 %v696
  %v3513 = vunpack.c.l.b16 %v697
  %v3514 = vunpack.c.l.b16 %v698
  %v3515 = vunpack.c.l.b16 %v699
  %v3516 = vunpack.c.l.b16 %v700
  %v3517 = vunpack.c.l.b16 %v701
  %v3518 = vunpack.c.l.b16 %v702
  %v3519 = vunpack.c.l.b16 %v703
  %v3520 = vunpack.c.l.b16 %v704
  %v3521 = vunpack.c.l.b16 %v705
  %v3522 = vunpack.c.l.b16 %v706
  %v3523 = vunpack.c.l.b16 %v707
  %v3524 = vunpack.c.l.b16 %v708
  %v3525 = vunpack.c.l.b16 %v709
  %v3526 = vunpack.c.l.b16 %v710
  %v3527 = vunpack.c.l.b16 %v711
  %v3528 = vunpack.c.l.b16 %v712
  %v3529 = vunpack.c.l.b16 %v713
  %v3530 = vunpack.c.l.b16 %v714
  %v3531 = vunpack.c.l.b16 %v715
  %v3532 = vunpack.c.l.b16 %v716
  %v3533 = vunpack.c.l.b16 %v717
  %v3534 = vunpack.c.l.b16 %v718
  %v3535 = vunpack.c.l.b16 %v719
  %v3536 = vunpack.c.l.b16 %v720
  %v3537 = vunpack.c.l.b16 %v721
  %v3538 = vunpack.c.l.b16 %v722
  %v3539 = vunpack.c.l.b16 %v723
  %v3540 = vunpack.c.l.b16 %v724
  %v3541 = vunpack.c.l.b16 %v725
  %v3542 = vunpack.c.l.b16 %v726
  %v3543 = vunpack.c.l.b16 %v727
  %v3544 = vunpack.c.l.b16 %v728
  %v3545 = vunpack.c.l.b16 %v729
  %v3546 = vunpack.c.l.b16 %v730
  %v3547 = vunpack.c.l.b16 %v731
  %v3548 = vunpack.c.l.b16 %v732
  %v3549 = vunpack.c.l.b16 %v733
  %v3550 = vunpack.c.l.b16 %v734
  %v3551 = vunpack.c.l.b16 %v735
  %v3552 = vunpack.c.l.b16 %v736
  %v3553 = vunpack.c.l.b16 %v737
  %v3554 = vunpack.c.l.b16 %v738
  %v3555 = vunpack.c.l.b16 %v739
  %v3556 = vunpack.c.l.b16 %v740
  %v3557 = vunpack.c.l.b16 %v741
  %v3558 = vunpack.c.l.b16 %v742
  %v3559 = vunpack.c.l.b16 %v743
  %v3560 = vunpack.c.l.b16 %v744
  %v3561 = vunpack.c.l.b16 %v745
  %v3562 = vunpack.c.l.b16 %v746
  %v3563 = vunpack.c.l.b16 %v747
  %v3564 = vunpack.c.l.b16 %v748
  %v3565 = vunpack.c.l.b16 %v749
  %v3566 = vunpack.c.l.b16 %v750
  %v3567 = vunpack.c.l.b16 %v751
  %v3568 = vunpack.c.l.b16 %v752
  %v3569 = vunpack.c.l.b16 %v753
  %v3570 = vunpack.c.l.b16 %v754
  %v3571 = vunpack.c.l.b16 %v755
  %v3572 = vunpack.c.l.b16 %v756
  %v3573 = vunpack.c.l.b16 %v757
  %v3574 = vunpack.c.l.b16 %v758
  %v3575 = vunpack.c.l.b16 %v759
  %v3576 = vunpack.c.l.b16 %v760
  %v3577 = vunpack.c.l.b16 %v761
  %v3578 = vunpack.c.l.b16 %v762
  %v3579 = vunpack.c.l.b16 %v763
  %v3580 = vunpack.c.l.b16 %v764
  %v3581 = vunpack.c.l.b16 %v765
  %v3582 = vunpack.c.l.b16 %v766
  %v3583 = vunpack.c.l.b16 %v767
  %v3584 = vunpack.c.l.b16 %v768
  %v3585 = vunpack.c.l.b16 %v769
  %v3586 = vunpack.c.l.b16 %v770
  %v3587 = vunpack.c.l.b16 %v771
  %v3588 = vunpack.c.l.b16 %v772
  %v3589 = vunpack.c.l.b16 %v773
  %v3590 = vunpack.c.l.b16 %v774
  %v3591 = vunpack.c.l.b16 %v775
  %v3592 = vunpack.c.l.b16 %v776
  %v3593 = vunpack.c.l.b16 %v777
  %v3594 = vunpack.c.l.b16 %v778
  %v3595 = vunpack.c.l.b16 %v779
  %v3596 = vunpack.c.l.b16 %v780
  %v3597 = vunpack.c.l.b16 %v781
  %v3598 = vunpack.c.l.b16 %v782
  %v3599 = vunpack.c.l.b16 %v783
  %v3600 = vunpack.c.l.b16 %v784
  %v3601 = vunpack.c.l.b16 %v785
  %v3602 = vunpack.c.l.b16 %v786
  %v3603 = vunpack.c.l.b16 %v787
  %v3604 = vunpack.c.l.b16 %v788
  %v3605 = vunpack.c.l.b16 %v789
  %v3606 = vunpack.c.l.b16 %v790
  %v3607 = vunpack.c.l.b16 %v791
  %v3608 = vunpack.c.l.b16 %v792
  %v3609 = vunpack.c.l.b16 %v793
  %v3610 = vunpack.c.l.b16 %v794
  %v3611 = vunpack.c.l.b16 %v795
  %v3612 = vunpack.c.l.b16 %v796
  %v3613 = vunpack.c.l.b16 %v797
  %v3614 = vunpack.c.l.b16 %v798
  %v3615 = vunpack.c.l.b16 %v799
  %v3616 = vunpack.c.l.b16 %v800
  %v3617 = vunpack.c.l.b16 %v801
  %v3618 = vunpack.c.l.b16 %v802
  %v3619 = vunpack.c.l.b16 %v803
  %v3620 = vunpack.c.l.b16 %v804
  %v3621 = vunpack.c.l.b16 %v805
  %v3622 = vunpack.c.l.b16 %v806
  %v3623 = vunpack.c.l.b16 %v807
  %v3624 = vunpack.c.l.b16 %v808
  %v3625 = vunpack.c.l.b16 %v809
  %v3626 = vunpack.c.l.b16 %v810
  %v3627 = vunpack.c.l.b16 %v811
  %v3628 = vunpack.c.l.b16 %v812
  %v3629 = vunpack.c.l.b16 %v813
  %v3630 = vunpack.c.l.b16 %v814
  %v3631 = vunpack.c.l.b16 %v815
  %v3632 = vunpack.c.l.b16 %v816
  %v3633 = vunpack.c.l.b16 %v817
  %v3634 = vunpack.c.l.b16 %v818
  %v3635 = vunpack.c.l.b16 %v819
  %v3636 = vunpack.c.l.b16 %v820
  %v3637 = vunpack.c.l.b16 %v821
  %v3638 = vunpack.c.l.b16 %v822
  %v3639 = vunpack.c.l.b16 %v823
  %v3640 = vunpack.c.l.b16 %v824
  %v3641 = vunpack.c.l.b16 %v825
  %v3642 = vunpack.c.l.b16 %v826
  %v3643 = vunpack.c.l.b16 %v827
  %v3644 = vunpack.c.l.b16 %v828
  %v3645 = vunpack.c.l.b16 %v829
  %v3646 = vunpack.c.l.b16 %v830
  %v3647 = vpack.c.b16 %v3248, %v3247
  %v3648 = vpack.c.b16 %v3250, %v3249
  %v3649 = vpack.c.b16 %v3252, %v3251
  %v3650 = vpack.c.b16 %v3254, %v3253
  %v3651 = vpack.c.b16 %v3256, %v3255
  %v3652 = vpack.c.b16 %v3258, %v3257
  %v3653 = vpack.c.b16 %v3260, %v3259
  %v3654 = vpack.c.b16 %v3262, %v3261
  %v3655 = vpack.c.b16 %v3264, %v3263
  %v3656 = vpack.c.b16 %v3266, %v3265
  %v3657 = vpack.c.b16 %v3268, %v3267
  %v3658 = vpack.c.b16 %v3270, %v3269
  %v3659 = vpack.c.b16 %v3272, %v3271
  %v3660 = vpack.c.b16 %v3274, %v3273
  %v3661 = vpack.c.b16 %v3276, %v3275
  %v3662 = vpack.c.b16 %v3278, %v3277
  %v3663 = vpack.c.b16 %v3280, %v3279
  %v3664 = vpack.c.b16 %v3282, %v3281
  %v3665 = vpack.c.b16 %v3284, %v3283
  %v3666 = vpack.c.b16 %v3286, %v3285
  %v3667 = vpack.c.b16 %v3288, %v3287
  %v3668 = vpack.c.b16 %v3290, %v3289
  %v3669 = vpack.c.b16 %v3292, %v3291
  %v3670 = vpack.c.b16 %v3294, %v3293
  %v3671 = vpack.c.b16 %v3296, %v3295
  %v3672 = vpack.c.b16 %v3298, %v3297
  %v3673 = vpack.c.b16 %v3300, %v3299
  %v3674 = vpack.c.b16 %v3302, %v3301
  %v3675 = vpack.c.b16 %v3304, %v3303
  %v3676 = vpack.c.b16 %v3306, %v3305
  %v3677 = vpack.c.b16 %v3308, %v3307
  %v3678 = vpack.c.b16 %v3310, %v3309
  %v3679 = vpack.c.b16 %v3312, %v3311
  %v3680 = vpack.c.b16 %v3314, %v3313
  %v3681 = vpack.c.b16 %v3316, %v3315
  %v3682 = vpack.c.b16 %v3318, %v3317
  %v3683 = vpack.c.b16 %v3320, %v3319
  %v3684 = vpack.c.b16 %v3322, %v3321
  %v3685 = vpack.c.b16 %v3324, %v3323
  %v3686 = vpack.c.b16 %v3326, %v3325
  %v3687 = vpack.c.b16 %v3328, %v3327
  %v3688 = vpack.c.b16 %v3330, %v3329
  %v3689 = vpack.c.b16 %v3332, %v3331
  %v3690 = vpack.c.b16 %v3334, %v3333
  %v3691 = vpack.c.b16 %v3336, %v3335
  %v3692 = vpack.c.b16 %v3338, %v3337
  %v3693 = vpack.c.b16 %v3340, %v3339
  %v3694 = vpack.c.b16 %v3342, %v3341
  %v3695 = vpack.c.b16 %v3344, %v3343
  %v3696 = vpack.c.b16 %v3346, %v3345
  %v3697 = vpack.c.b16 %v3348, %v3347
  %v3698 = vpack.c.b16 %v3350, %v3349
  %v3699 = vpack.c.b16 %v3352, %v3351
  %v3700 = vpack.c.b16 %v3354, %v3353
  %v3701 = vpack.c.b16 %v3356, %v3355
  %v3702 = vpack.c.b16 %v3358, %v3357
  %v3703 = vpack.c.b16 %v3360, %v3359
  %v3704 = vpack.c.b16 %v3362, %v3361
  %v3705 = vpack.c.b16 %v3364, %v3363
  %v3706 = vpack.c.b16 %v3366, %v3365
  %v3707 = vpack.c.b16 %v3368, %v3367
  %v3708 = vpack.c.b16 %v3370, %v3369
  %v3709 = vpack.c.b16 %v3372, %v3371
  %v3710 = vpack.c.b16 %v3374, %v3373
  %v3711 = vpack.c.b16 %v3376, %v3375
  %v3712 = vpack.c.b16 %v3378, %v3377
  %v3713 = vpack.c.b16 %v3380, %v3379
  %v3714 = vpack.c.b16 %v3382, %v3381
  %v3715 = vpack.c.b16 %v3384, %v3383
  %v3716 = vpack.c.b16 %v3386, %v3385
  %v3717 = vpack.c.b16 %v3388, %v3387
  %v3718 = vpack.c.b16 %v3390, %v3389
  %v3719 = vpack.c.b16 %v3392, %v3391
  %v3720 = vpack.c.b16 %v3394, %v3393
  %v3721 = vpack.c.b16 %v3396, %v3395
  %v3722 = vpack.c.b16 %v3398, %v3397
  %v3723 = vpack.c.b16 %v3400, %v3399
  %v3724 = vpack.c.b16 %v3402, %v3401
  %v3725 = vpack.c.b16 %v3404, %v3403
  %v3726 = vpack.c.b16 %v3406, %v3405
  %v3727 = vpack.c.b16 %v3408, %v3407
  %v3728 = vpack.c.b16 %v3410, %v3409
  %v3729 = vpack.c.b16 %v3412, %v3411
  %v3730 = vpack.c.b16 %v3414, %v3413
  %v3731 = vpack.c.b16 %v3416, %v3415
  %v3732 = vpack.c.b16 %v3418, %v3417
  %v3733 = vpack.c.b16 %v3420, %v3419
  %v3734 = vpack.c.b16 %v3422, %v3421
  %v3735 = vpack.c.b16 %v3424, %v3423
  %v3736 = vpack.c.b16 %v3426, %v3425
  %v3737 = vpack.c.b16 %v3428, %v3427
  %v3738 = vpack.c.b16 %v3430, %v3429
  %v3739 = vpack.c.b16 %v3432, %v3431
  %v3740 = vpack.c.b16 %v3434, %v3433
  %v3741 = vpack.c.b16 %v3436, %v3435
  %v3742 = vpack.c.b16 %v3438, %v3437
  %v3743 = vpack.c.b16 %v3440, %v3439
  %v3744 = vpack.c.b16 %v3442, %v3441
  %v3745 = vpack.c.b16 %v3444, %v3443
  %v3746 = vpack.c.b16 %v3446, %v3445
  %v3747 = vpack.c.b16 %v3448, %v3447
  %v3748 = vpack.c.b16 %v3450, %v3449
  %v3749 = vpack.c.b16 %v3452, %v3451
  %v3750 = vpack.c.b16 %v3454, %v3453
  %v3751 = vpack.c.b16 %v3456, %v3455
  %v3752 = vpack.c.b16 %v3458, %v3457
  %v3753 = vpack.c.b16 %v3460, %v3459
  %v3754 = vpack.c.b16 %v3462, %v3461
  %v3755 = vpack.c.b16 %v3464, %v3463
  %v3756 = vpack.c.b16 %v3466, %v3465
  %v3757 = vpack.c.b16 %v3468, %v3467
  %v3758 = vpack.c.b16 %v3470, %v3469
  %v3759 = vpack.c.b16 %v3472, %v3471
  %v3760 = vpack.c.b16 %v3474, %v3473
  %v3761 = vpack.c.b16 %v3476, %v3475
  %v3762 = vpack.c.b16 %v3478, %v3477
  %v3763 = vpack.c.b16 %v3480, %v3479
  %v3764 = vpack.c.b16 %v3482, %v3481
  %v3765 = vpack.c.b16 %v3484, %v3483
  %v3766 = vpack.c.b16 %v3486, %v3485
  %v3767 = vpack.c.b16 %v3488, %v3487
  %v3768 = vpack.c.b16 %v3490, %v3489
  %v3769 = vpack.c.b16 %v3492, %v3491
  %v3770 = vpack.c.b16 %v3494, %v3493
  %v3771 = vpack.c.b16 %v3496, %v3495
  %v3772 = vpack.c.b16 %v3498, %v3497
  %v3773 = vpack.c.b16 %v3500, %v3499
  %v3774 = vpack.c.b16 %v3502, %v3501
  %v3775 = vpack.c.b16 %v3504, %v3503
  %v3776 = vpack.c.b16 %v3506, %v3505
  %v3777 = vpack.c.b16 %v3508, %v3507
  %v3778 = vpack.c.b16 %v3510, %v3509
  %v3779 = vpack.c.b16 %v3512, %v3511
  %v3780 = vpack.c.b16 %v3514, %v3513
  %v3781 = vpack.c.b16 %v3516, %v3515
  %v3782 = vpack.c.b16 %v3518, %v3517
  %v3783 = vpack.c.b16 %v3520, %v3519
  %v3784 = vpack.c.b16 %v3522, %v3521
  %v3785 = vpack.c.b16 %v3524, %v3523
  %v3786 = vpack.c.b16 %v3526, %v3525
  %v3787 = vpack.c.b16 %v3528, %v3527
  %v3788 = vpack.c.b16 %v3530, %v3529
  %v3789 = vpack.c.b16 %v3532, %v3531
  %v3790 = vpack.c.b16 %v3534, %v3533
  %v3791 = vpack.c.b16 %v3536, %v3535
  %v3792 = vpack.c.b16 %v3538, %v3537
  %v3793 = vpack.c.b16 %v3540, %v3539
  %v3794 = vpack.c.b16 %v3542, %v3541
  %v3795 = vpack.c.b16 %v3544, %v3543
  %v3796 = vpack.c.b16 %v3546, %v3545
  %v3797 = vpack.c.b16 %v3548, %v3547
  %v3798 = vpack.c.b16 %v3550, %v3549
  %v3799 = vpack.c.b16 %v3552, %v3551
  %v3800 = vpack.c.b16 %v3554, %v3553
  %v3801 = vpack.c.b16 %v3556, %v3555
  %v3802 = vpack.c.b16 %v3558, %v3557
  %v3803 = vpack.c.b16 %v3560, %v3559
  %v3804 = vpack.c.b16 %v3562, %v3561
  %v3805 = vpack.c.b16 %v3564, %v3563
  %v3806 = vpack.c.b16 %v3566, %v3565
  %v3807 = vpack.c.b16 %v3568, %v3567
  %v3808 = vpack.c.b16 %v3570, %v3569
  %v3809 = vpack.c.b16 %v3572, %v3571
  %v3810 = vpack.c.b16 %v3574, %v3573
  %v3811 = vpack.c.b16 %v3576, %v3575
  %v3812 = vpack.c.b16 %v3578, %v3577
  %v3813 = vpack.c.b16 %v3580, %v3579
  %v3814 = vpack.c.b16 %v3582, %v3581
  %v3815 = vpack.c.b16 %v3584, %v3583
  %v3816 = vpack.c.b16 %v3586, %v3585
  %v3817 = vpack.c.b16 %v3588, %v3587
  %v3818 = vpack.c.b16 %v3590, %v3589
  %v3819 = vpack.c.b16 %v3592, %v3591
  %v3820 = vpack.c.b16 %v3594, %v3593
  %v3821 = vpack.c.b16 %v3596, %v3595
  %v3822 = vpack.c.b16 %v3598, %v3597
  %v3823 = vpack.c.b16 %v3600, %v3599
  %v3824 = vpack.c.b16 %v3602, %v3601
  %v3825 = vpack.c.b16 %v3604, %v3603
  %v3826 = vpack.c.b16 %v3606, %v3605
  %v3827 = vpack.c.b16 %v3608, %v3607
  %v3828 = vpack.c.b16 %v3610, %v3609
  %v3829 = vpack.c.b16 %v3612, %v3611
  %v3830 = vpack.c.b16 %v3614, %v3613
  %v3831 = vpack.c.b16 %v3616, %v3615
  %v3832 = vpack.c.b16 %v3618, %v3617
  %v3833 = vpack.c.b16 %v3620, %v3619
  %v3834 = vpack.c.b16 %v3622, %v3621
  %v3835 = vpack.c.b16 %v3624, %v3623
  %v3836 = vpack.c.b16 %v3626, %v3625
  %v3837 = vpack.c.b16 %v3628, %v3627
  %v3838 = vpack.c.b16 %v3630, %v3629
  %v3839 = vpack.c.b16 %v3632, %v3631
  %v3840 = vpack.c.b16 %v3634, %v3633
  %v3841 = vpack.c.b16 %v3636, %v3635
  %v3842 = vpack.c.b16 %v3638, %v3637
  %v3843 = vpack.c.b16 %v3640, %v3639
  %v3844 = vpack.c.b16 %v3642, %v3641
  %v3845 = vpack.c.b16 %v3644, %v3643
  %v3846 = vpack.c.b16 %v3646, %v3645
  %4047 = vmatprep.subr.bf16.mxu0 0
  %4048 = vmatpush1.bf16.msra.mxu0 %v3654
  %4049 = vmatprep.subr.bf16.mxu0 0
  %4050 = vmatpush1.bf16.msra.mxu0 %v3653
  %4051 = vmatprep.subr.bf16.mxu0 0
  %4052 = vmatpush1.bf16.msra.mxu0 %v3652
  %4053 = vmatprep.subr.bf16.mxu0 0
  %4054 = vmatpush1.bf16.msra.mxu0 %v3651
  %4055 = vmatprep.subr.bf16.mxu0 0
  %4056 = vmatpush1.bf16.msra.mxu0 %v3650
  %4057 = vmatprep.subr.bf16.mxu0 0
  %4058 = vmatpush1.bf16.msra.mxu0 %v3649
  %4059 = vmatprep.subr.bf16.mxu0 0
  %4060 = vmatpush1.bf16.msra.mxu0 %v3648
  %4061 = vmatprep.subr.bf16.mxu0 0
  %4062 = vmatpush1.bf16.msra.mxu0 %v3647
  %4063 = vmatprep.subr.bf16.mxu0 0
  %4064 = vmatpush2.bf16.msra.mxu0 %v3662
  %4065 = vmatprep.subr.bf16.mxu0 0
  %4066 = vmatpush2.bf16.msra.mxu0 %v3661
  %4067 = vmatprep.subr.bf16.mxu0 0
  %4068 = vmatpush2.bf16.msra.mxu0 %v3660
  %4069 = vmatprep.subr.bf16.mxu0 0
  %4070 = vmatpush2.bf16.msra.mxu0 %v3659
  %4071 = vmatprep.subr.bf16.mxu0 0
  %4072 = vmatpush2.bf16.msra.mxu0 %v3658
  %4073 = vmatprep.subr.bf16.mxu0 0
  %4074 = vmatpush2.bf16.msra.mxu0 %v3657
  %4075 = vmatprep.subr.bf16.mxu0 0
  %4076 = vmatpush2.bf16.msra.mxu0 %v3656
  %4077 = vmatprep.subr.bf16.mxu0 0
  %4078 = vmatpush2.bf16.msra.mxu0 %v3655
  %4079 = vmatprep.mubr.bf16.mxu0 %v2048
  %4080 = vmatmul.mubr.bf16.gmra.mxu0 %v2047
  %v4081 = vpop.f32.mrf.mxu0
  %v4082 = vadd.f32 0.0, %v4081
  %v4083 = vpop.f32.mrf.mxu0
  %v4084 = vpop.f32.mrf.mxu0
  %v4085 = vadd.f32 0.0, %v4084
  %v4086 = vpop.f32.mrf.mxu0
  %4087 = vmatprep.mubr.bf16.mxu0 %v2073
  %4088 = vmatmul.mubr.bf16.gmra.mxu0 %v2072
  %v4089 = vpop.f32.mrf.mxu0
  %v4090 = vadd.f32 0.0, %v4089
  %v4091 = vpop.f32.mrf.mxu0
  %v4092 = vpop.f32.mrf.mxu0
  %v4093 = vadd.f32 0.0, %v4092
  %v4094 = vpop.f32.mrf.mxu0
  %4095 = vmatprep.mubr.bf16.mxu0 %v2098
  %4096 = vmatmul.mubr.bf16.gmra.mxu0 %v2097
  %v4097 = vpop.f32.mrf.mxu0
  %v4098 = vadd.f32 0.0, %v4097
  %v4099 = vpop.f32.mrf.mxu0
  %v4100 = vpop.f32.mrf.mxu0
  %v4101 = vadd.f32 0.0, %v4100
  %v4102 = vpop.f32.mrf.mxu0
  %4103 = vmatprep.mubr.bf16.mxu0 %v2123
  %4104 = vmatmul.mubr.bf16.gmra.mxu0 %v2122
  %v4105 = vpop.f32.mrf.mxu0
  %v4106 = vadd.f32 0.0, %v4105
  %v4107 = vpop.f32.mrf.mxu0
  %v4108 = vpop.f32.mrf.mxu0
  %v4109 = vadd.f32 0.0, %v4108
  %v4110 = vpop.f32.mrf.mxu0
  %4111 = vmatprep.mubr.bf16.mxu0 %v2148
  %4112 = vmatmul.mubr.bf16.gmra.mxu0 %v2147
  %v4113 = vpop.f32.mrf.mxu0
  %v4114 = vadd.f32 0.0, %v4113
  %v4115 = vpop.f32.mrf.mxu0
  %v4116 = vpop.f32.mrf.mxu0
  %v4117 = vadd.f32 0.0, %v4116
  %v4118 = vpop.f32.mrf.mxu0
  %4119 = vmatprep.mubr.bf16.mxu0 %v2173
  %4120 = vmatmul.mubr.bf16.gmra.mxu0 %v2172
  %v4121 = vpop.f32.mrf.mxu0
  %v4122 = vadd.f32 0.0, %v4121
  %v4123 = vpop.f32.mrf.mxu0
  %v4124 = vpop.f32.mrf.mxu0
  %v4125 = vadd.f32 0.0, %v4124
  %v4126 = vpop.f32.mrf.mxu0
  %4127 = vmatprep.mubr.bf16.mxu0 %v2198
  %4128 = vmatmul.mubr.bf16.gmra.mxu0 %v2197
  %v4129 = vpop.f32.mrf.mxu0
  %v4130 = vadd.f32 0.0, %v4129
  %v4131 = vpop.f32.mrf.mxu0
  %v4132 = vpop.f32.mrf.mxu0
  %v4133 = vadd.f32 0.0, %v4132
  %v4134 = vpop.f32.mrf.mxu0
  %4135 = vmatprep.mubr.bf16.mxu0 %v2223
  %4136 = vmatmul.mubr.bf16.gmra.mxu0 %v2222
  %v4137 = vpop.f32.mrf.mxu0
  %v4138 = vadd.f32 0.0, %v4137
  %v4139 = vpop.f32.mrf.mxu0
  %v4140 = vpop.f32.mrf.mxu0
  %v4141 = vadd.f32 0.0, %v4140
  %v4142 = vpop.f32.mrf.mxu0
  %4143 = vmatprep.mubr.bf16.mxu0 %v2248
  %4144 = vmatmul.mubr.bf16.gmra.mxu0 %v2247
  %v4145 = vpop.f32.mrf.mxu0
  %v4146 = vadd.f32 0.0, %v4145
  %v4147 = vpop.f32.mrf.mxu0
  %v4148 = vpop.f32.mrf.mxu0
  %v4149 = vadd.f32 0.0, %v4148
  %v4150 = vpop.f32.mrf.mxu0
  %4151 = vmatprep.mubr.bf16.mxu0 %v2273
  %4152 = vmatmul.mubr.bf16.gmra.mxu0 %v2272
  %v4153 = vpop.f32.mrf.mxu0
  %v4154 = vadd.f32 0.0, %v4153
  %v4155 = vpop.f32.mrf.mxu0
  %v4156 = vpop.f32.mrf.mxu0
  %v4157 = vadd.f32 0.0, %v4156
  %v4158 = vpop.f32.mrf.mxu0
  %4159 = vmatprep.mubr.bf16.mxu0 %v2298
  %4160 = vmatmul.mubr.bf16.gmra.mxu0 %v2297
  %v4161 = vpop.f32.mrf.mxu0
  %v4162 = vadd.f32 0.0, %v4161
  %v4163 = vpop.f32.mrf.mxu0
  %v4164 = vpop.f32.mrf.mxu0
  %v4165 = vadd.f32 0.0, %v4164
  %v4166 = vpop.f32.mrf.mxu0
  %4167 = vmatprep.mubr.bf16.mxu0 %v2323
  %4168 = vmatmul.mubr.bf16.gmra.mxu0 %v2322
  %v4169 = vpop.f32.mrf.mxu0
  %v4170 = vadd.f32 0.0, %v4169
  %v4171 = vpop.f32.mrf.mxu0
  %v4172 = vpop.f32.mrf.mxu0
  %v4173 = vadd.f32 0.0, %v4172
  %v4174 = vpop.f32.mrf.mxu0
  %4175 = vmatprep.mubr.bf16.mxu0 %v2348
  %4176 = vmatmul.mubr.bf16.gmra.mxu0 %v2347
  %v4177 = vpop.f32.mrf.mxu0
  %v4178 = vadd.f32 0.0, %v4177
  %v4179 = vpop.f32.mrf.mxu0
  %v4180 = vpop.f32.mrf.mxu0
  %v4181 = vadd.f32 0.0, %v4180
  %v4182 = vpop.f32.mrf.mxu0
  %4183 = vmatprep.mubr.bf16.mxu0 %v2373
  %4184 = vmatmul.mubr.bf16.gmra.mxu0 %v2372
  %v4185 = vpop.f32.mrf.mxu0
  %v4186 = vadd.f32 0.0, %v4185
  %v4187 = vpop.f32.mrf.mxu0
  %v4188 = vpop.f32.mrf.mxu0
  %v4189 = vadd.f32 0.0, %v4188
  %v4190 = vpop.f32.mrf.mxu0
  %4191 = vmatprep.mubr.bf16.mxu0 %v2398
  %4192 = vmatmul.mubr.bf16.gmra.mxu0 %v2397
  %v4193 = vpop.f32.mrf.mxu0
  %v4194 = vadd.f32 0.0, %v4193
  %v4195 = vpop.f32.mrf.mxu0
  %v4196 = vpop.f32.mrf.mxu0
  %v4197 = vadd.f32 0.0, %v4196
  %v4198 = vpop.f32.mrf.mxu0
  %4199 = vmatprep.mubr.bf16.mxu0 %v2423
  %4200 = vmatmul.mubr.bf16.gmra.mxu0 %v2422
  %v4201 = vpop.f32.mrf.mxu0
  %v4202 = vadd.f32 0.0, %v4201
  %v4203 = vpop.f32.mrf.mxu0
  %v4204 = vpop.f32.mrf.mxu0
  %v4205 = vadd.f32 0.0, %v4204
  %v4206 = vpop.f32.mrf.mxu0
  %4207 = vdwg.mxu0
  %4208 = vmatprep.subr.bf16.mxu0 0
  %4209 = vmatpush1.bf16.msra.mxu0 %v3670
  %4210 = vmatprep.subr.bf16.mxu0 0
  %4211 = vmatpush1.bf16.msra.mxu0 %v3669
  %4212 = vmatprep.subr.bf16.mxu0 0
  %4213 = vmatpush1.bf16.msra.mxu0 %v3668
  %4214 = vmatprep.subr.bf16.mxu0 0
  %4215 = vmatpush1.bf16.msra.mxu0 %v3667
  %4216 = vmatprep.subr.bf16.mxu0 0
  %4217 = vmatpush1.bf16.msra.mxu0 %v3666
  %4218 = vmatprep.subr.bf16.mxu0 0
  %4219 = vmatpush1.bf16.msra.mxu0 %v3665
  %4220 = vmatprep.subr.bf16.mxu0 0
  %4221 = vmatpush1.bf16.msra.mxu0 %v3664
  %4222 = vmatprep.subr.bf16.mxu0 0
  %4223 = vmatpush1.bf16.msra.mxu0 %v3663
  %4224 = vmatprep.subr.bf16.mxu0 0
  %4225 = vmatpush2.bf16.msra.mxu0 %v3678
  %4226 = vmatprep.subr.bf16.mxu0 0
  %4227 = vmatpush2.bf16.msra.mxu0 %v3677
  %4228 = vmatprep.subr.bf16.mxu0 0
  %4229 = vmatpush2.bf16.msra.mxu0 %v3676
  %4230 = vmatprep.subr.bf16.mxu0 0
  %4231 = vmatpush2.bf16.msra.mxu0 %v3675
  %4232 = vmatprep.subr.bf16.mxu0 0
  %4233 = vmatpush2.bf16.msra.mxu0 %v3674
  %4234 = vmatprep.subr.bf16.mxu0 0
  %4235 = vmatpush2.bf16.msra.mxu0 %v3673
  %4236 = vmatprep.subr.bf16.mxu0 0
  %4237 = vmatpush2.bf16.msra.mxu0 %v3672
  %4238 = vmatprep.subr.bf16.mxu0 0
  %4239 = vmatpush2.bf16.msra.mxu0 %v3671
  %4240 = vmatprep.mubr.bf16.mxu0 %v2050
  %4241 = vmatmul.mubr.bf16.gmra.mxu0 %v2049
  %v4242 = vpop.f32.mrf.mxu0
  %v4243 = vadd.f32 %v4082, %v4242
  %v4244 = vpop.f32.mrf.mxu0
  %v4245 = vpop.f32.mrf.mxu0
  %v4246 = vadd.f32 %v4085, %v4245
  %v4247 = vpop.f32.mrf.mxu0
  %4248 = vmatprep.mubr.bf16.mxu0 %v2075
  %4249 = vmatmul.mubr.bf16.gmra.mxu0 %v2074
  %v4250 = vpop.f32.mrf.mxu0
  %v4251 = vadd.f32 %v4090, %v4250
  %v4252 = vpop.f32.mrf.mxu0
  %v4253 = vpop.f32.mrf.mxu0
  %v4254 = vadd.f32 %v4093, %v4253
  %v4255 = vpop.f32.mrf.mxu0
  %4256 = vmatprep.mubr.bf16.mxu0 %v2100
  %4257 = vmatmul.mubr.bf16.gmra.mxu0 %v2099
  %v4258 = vpop.f32.mrf.mxu0
  %v4259 = vadd.f32 %v4098, %v4258
  %v4260 = vpop.f32.mrf.mxu0
  %v4261 = vpop.f32.mrf.mxu0
  %v4262 = vadd.f32 %v4101, %v4261
  %v4263 = vpop.f32.mrf.mxu0
  %4264 = vmatprep.mubr.bf16.mxu0 %v2125
  %4265 = vmatmul.mubr.bf16.gmra.mxu0 %v2124
  %v4266 = vpop.f32.mrf.mxu0
  %v4267 = vadd.f32 %v4106, %v4266
  %v4268 = vpop.f32.mrf.mxu0
  %v4269 = vpop.f32.mrf.mxu0
  %v4270 = vadd.f32 %v4109, %v4269
  %v4271 = vpop.f32.mrf.mxu0
  %4272 = vmatprep.mubr.bf16.mxu0 %v2150
  %4273 = vmatmul.mubr.bf16.gmra.mxu0 %v2149
  %v4274 = vpop.f32.mrf.mxu0
  %v4275 = vadd.f32 %v4114, %v4274
  %v4276 = vpop.f32.mrf.mxu0
  %v4277 = vpop.f32.mrf.mxu0
  %v4278 = vadd.f32 %v4117, %v4277
  %v4279 = vpop.f32.mrf.mxu0
  %4280 = vmatprep.mubr.bf16.mxu0 %v2175
  %4281 = vmatmul.mubr.bf16.gmra.mxu0 %v2174
  %v4282 = vpop.f32.mrf.mxu0
  %v4283 = vadd.f32 %v4122, %v4282
  %v4284 = vpop.f32.mrf.mxu0
  %v4285 = vpop.f32.mrf.mxu0
  %v4286 = vadd.f32 %v4125, %v4285
  %v4287 = vpop.f32.mrf.mxu0
  %4288 = vmatprep.mubr.bf16.mxu0 %v2200
  %4289 = vmatmul.mubr.bf16.gmra.mxu0 %v2199
  %v4290 = vpop.f32.mrf.mxu0
  %v4291 = vadd.f32 %v4130, %v4290
  %v4292 = vpop.f32.mrf.mxu0
  %v4293 = vpop.f32.mrf.mxu0
  %v4294 = vadd.f32 %v4133, %v4293
  %v4295 = vpop.f32.mrf.mxu0
  %4296 = vmatprep.mubr.bf16.mxu0 %v2225
  %4297 = vmatmul.mubr.bf16.gmra.mxu0 %v2224
  %v4298 = vpop.f32.mrf.mxu0
  %v4299 = vadd.f32 %v4138, %v4298
  %v4300 = vpop.f32.mrf.mxu0
  %v4301 = vpop.f32.mrf.mxu0
  %v4302 = vadd.f32 %v4141, %v4301
  %v4303 = vpop.f32.mrf.mxu0
  %4304 = vmatprep.mubr.bf16.mxu0 %v2250
  %4305 = vmatmul.mubr.bf16.gmra.mxu0 %v2249
  %v4306 = vpop.f32.mrf.mxu0
  %v4307 = vadd.f32 %v4146, %v4306
  %v4308 = vpop.f32.mrf.mxu0
  %v4309 = vpop.f32.mrf.mxu0
  %v4310 = vadd.f32 %v4149, %v4309
  %v4311 = vpop.f32.mrf.mxu0
  %4312 = vmatprep.mubr.bf16.mxu0 %v2275
  %4313 = vmatmul.mubr.bf16.gmra.mxu0 %v2274
  %v4314 = vpop.f32.mrf.mxu0
  %v4315 = vadd.f32 %v4154, %v4314
  %v4316 = vpop.f32.mrf.mxu0
  %v4317 = vpop.f32.mrf.mxu0
  %v4318 = vadd.f32 %v4157, %v4317
  %v4319 = vpop.f32.mrf.mxu0
  %4320 = vmatprep.mubr.bf16.mxu0 %v2300
  %4321 = vmatmul.mubr.bf16.gmra.mxu0 %v2299
  %v4322 = vpop.f32.mrf.mxu0
  %v4323 = vadd.f32 %v4162, %v4322
  %v4324 = vpop.f32.mrf.mxu0
  %v4325 = vpop.f32.mrf.mxu0
  %v4326 = vadd.f32 %v4165, %v4325
  %v4327 = vpop.f32.mrf.mxu0
  %4328 = vmatprep.mubr.bf16.mxu0 %v2325
  %4329 = vmatmul.mubr.bf16.gmra.mxu0 %v2324
  %v4330 = vpop.f32.mrf.mxu0
  %v4331 = vadd.f32 %v4170, %v4330
  %v4332 = vpop.f32.mrf.mxu0
  %v4333 = vpop.f32.mrf.mxu0
  %v4334 = vadd.f32 %v4173, %v4333
  %v4335 = vpop.f32.mrf.mxu0
  %4336 = vmatprep.mubr.bf16.mxu0 %v2350
  %4337 = vmatmul.mubr.bf16.gmra.mxu0 %v2349
  %v4338 = vpop.f32.mrf.mxu0
  %v4339 = vadd.f32 %v4178, %v4338
  %v4340 = vpop.f32.mrf.mxu0
  %v4341 = vpop.f32.mrf.mxu0
  %v4342 = vadd.f32 %v4181, %v4341
  %v4343 = vpop.f32.mrf.mxu0
  %4344 = vmatprep.mubr.bf16.mxu0 %v2375
  %4345 = vmatmul.mubr.bf16.gmra.mxu0 %v2374
  %v4346 = vpop.f32.mrf.mxu0
  %v4347 = vadd.f32 %v4186, %v4346
  %v4348 = vpop.f32.mrf.mxu0
  %v4349 = vpop.f32.mrf.mxu0
  %v4350 = vadd.f32 %v4189, %v4349
  %v4351 = vpop.f32.mrf.mxu0
  %4352 = vmatprep.mubr.bf16.mxu0 %v2400
  %4353 = vmatmul.mubr.bf16.gmra.mxu0 %v2399
  %v4354 = vpop.f32.mrf.mxu0
  %v4355 = vadd.f32 %v4194, %v4354
  %v4356 = vpop.f32.mrf.mxu0
  %v4357 = vpop.f32.mrf.mxu0
  %v4358 = vadd.f32 %v4197, %v4357
  %v4359 = vpop.f32.mrf.mxu0
  %4360 = vmatprep.mubr.bf16.mxu0 %v2425
  %4361 = vmatmul.mubr.bf16.gmra.mxu0 %v2424
  %v4362 = vpop.f32.mrf.mxu0
  %v4363 = vadd.f32 %v4202, %v4362
  %v4364 = vpop.f32.mrf.mxu0
  %v4365 = vpop.f32.mrf.mxu0
  %v4366 = vadd.f32 %v4205, %v4365
  %v4367 = vpop.f32.mrf.mxu0
  %4368 = vdwg.mxu0
  %4369 = vmatprep.subr.bf16.mxu0 0
  %4370 = vmatpush1.bf16.msra.mxu0 %v3686
  %4371 = vmatprep.subr.bf16.mxu0 0
  %4372 = vmatpush1.bf16.msra.mxu0 %v3685
  %4373 = vmatprep.subr.bf16.mxu0 0
  %4374 = vmatpush1.bf16.msra.mxu0 %v3684
  %4375 = vmatprep.subr.bf16.mxu0 0
  %4376 = vmatpush1.bf16.msra.mxu0 %v3683
  %4377 = vmatprep.subr.bf16.mxu0 0
  %4378 = vmatpush1.bf16.msra.mxu0 %v3682
  %4379 = vmatprep.subr.bf16.mxu0 0
  %4380 = vmatpush1.bf16.msra.mxu0 %v3681
  %4381 = vmatprep.subr.bf16.mxu0 0
  %4382 = vmatpush1.bf16.msra.mxu0 %v3680
  %4383 = vmatprep.subr.bf16.mxu0 0
  %4384 = vmatpush1.bf16.msra.mxu0 %v3679
  %4385 = vmatprep.subr.bf16.mxu0 0
  %4386 = vmatpush2.bf16.msra.mxu0 %v3694
  %4387 = vmatprep.subr.bf16.mxu0 0
  %4388 = vmatpush2.bf16.msra.mxu0 %v3693
  %4389 = vmatprep.subr.bf16.mxu0 0
  %4390 = vmatpush2.bf16.msra.mxu0 %v3692
  %4391 = vmatprep.subr.bf16.mxu0 0
  %4392 = vmatpush2.bf16.msra.mxu0 %v3691
  %4393 = vmatprep.subr.bf16.mxu0 0
  %4394 = vmatpush2.bf16.msra.mxu0 %v3690
  %4395 = vmatprep.subr.bf16.mxu0 0
  %4396 = vmatpush2.bf16.msra.mxu0 %v3689
  %4397 = vmatprep.subr.bf16.mxu0 0
  %4398 = vmatpush2.bf16.msra.mxu0 %v3688
  %4399 = vmatprep.subr.bf16.mxu0 0
  %4400 = vmatpush2.bf16.msra.mxu0 %v3687
  %4401 = vmatprep.mubr.bf16.mxu0 %v2052
  %4402 = vmatmul.mubr.bf16.gmra.mxu0 %v2051
  %v4403 = vpop.f32.mrf.mxu0
  %v4404 = vadd.f32 %v4243, %v4403
  %v4405 = vpop.f32.mrf.mxu0
  %v4406 = vpop.f32.mrf.mxu0
  %v4407 = vadd.f32 %v4246, %v4406
  %v4408 = vpop.f32.mrf.mxu0
  %4409 = vmatprep.mubr.bf16.mxu0 %v2077
  %4410 = vmatmul.mubr.bf16.gmra.mxu0 %v2076
  %v4411 = vpop.f32.mrf.mxu0
  %v4412 = vadd.f32 %v4251, %v4411
  %v4413 = vpop.f32.mrf.mxu0
  %v4414 = vpop.f32.mrf.mxu0
  %v4415 = vadd.f32 %v4254, %v4414
  %v4416 = vpop.f32.mrf.mxu0
  %4417 = vmatprep.mubr.bf16.mxu0 %v2102
  %4418 = vmatmul.mubr.bf16.gmra.mxu0 %v2101
  %v4419 = vpop.f32.mrf.mxu0
  %v4420 = vadd.f32 %v4259, %v4419
  %v4421 = vpop.f32.mrf.mxu0
  %v4422 = vpop.f32.mrf.mxu0
  %v4423 = vadd.f32 %v4262, %v4422
  %v4424 = vpop.f32.mrf.mxu0
  %4425 = vmatprep.mubr.bf16.mxu0 %v2127
  %4426 = vmatmul.mubr.bf16.gmra.mxu0 %v2126
  %v4427 = vpop.f32.mrf.mxu0
  %v4428 = vadd.f32 %v4267, %v4427
  %v4429 = vpop.f32.mrf.mxu0
  %v4430 = vpop.f32.mrf.mxu0
  %v4431 = vadd.f32 %v4270, %v4430
  %v4432 = vpop.f32.mrf.mxu0
  %4433 = vmatprep.mubr.bf16.mxu0 %v2152
  %4434 = vmatmul.mubr.bf16.gmra.mxu0 %v2151
  %v4435 = vpop.f32.mrf.mxu0
  %v4436 = vadd.f32 %v4275, %v4435
  %v4437 = vpop.f32.mrf.mxu0
  %v4438 = vpop.f32.mrf.mxu0
  %v4439 = vadd.f32 %v4278, %v4438
  %v4440 = vpop.f32.mrf.mxu0
  %4441 = vmatprep.mubr.bf16.mxu0 %v2177
  %4442 = vmatmul.mubr.bf16.gmra.mxu0 %v2176
  %v4443 = vpop.f32.mrf.mxu0
  %v4444 = vadd.f32 %v4283, %v4443
  %v4445 = vpop.f32.mrf.mxu0
  %v4446 = vpop.f32.mrf.mxu0
  %v4447 = vadd.f32 %v4286, %v4446
  %v4448 = vpop.f32.mrf.mxu0
  %4449 = vmatprep.mubr.bf16.mxu0 %v2202
  %4450 = vmatmul.mubr.bf16.gmra.mxu0 %v2201
  %v4451 = vpop.f32.mrf.mxu0
  %v4452 = vadd.f32 %v4291, %v4451
  %v4453 = vpop.f32.mrf.mxu0
  %v4454 = vpop.f32.mrf.mxu0
  %v4455 = vadd.f32 %v4294, %v4454
  %v4456 = vpop.f32.mrf.mxu0
  %4457 = vmatprep.mubr.bf16.mxu0 %v2227
  %4458 = vmatmul.mubr.bf16.gmra.mxu0 %v2226
  %v4459 = vpop.f32.mrf.mxu0
  %v4460 = vadd.f32 %v4299, %v4459
  %v4461 = vpop.f32.mrf.mxu0
  %v4462 = vpop.f32.mrf.mxu0
  %v4463 = vadd.f32 %v4302, %v4462
  %v4464 = vpop.f32.mrf.mxu0
  %4465 = vmatprep.mubr.bf16.mxu0 %v2252
  %4466 = vmatmul.mubr.bf16.gmra.mxu0 %v2251
  %v4467 = vpop.f32.mrf.mxu0
  %v4468 = vadd.f32 %v4307, %v4467
  %v4469 = vpop.f32.mrf.mxu0
  %v4470 = vpop.f32.mrf.mxu0
  %v4471 = vadd.f32 %v4310, %v4470
  %v4472 = vpop.f32.mrf.mxu0
  %4473 = vmatprep.mubr.bf16.mxu0 %v2277
  %4474 = vmatmul.mubr.bf16.gmra.mxu0 %v2276
  %v4475 = vpop.f32.mrf.mxu0
  %v4476 = vadd.f32 %v4315, %v4475
  %v4477 = vpop.f32.mrf.mxu0
  %v4478 = vpop.f32.mrf.mxu0
  %v4479 = vadd.f32 %v4318, %v4478
  %v4480 = vpop.f32.mrf.mxu0
  %4481 = vmatprep.mubr.bf16.mxu0 %v2302
  %4482 = vmatmul.mubr.bf16.gmra.mxu0 %v2301
  %v4483 = vpop.f32.mrf.mxu0
  %v4484 = vadd.f32 %v4323, %v4483
  %v4485 = vpop.f32.mrf.mxu0
  %v4486 = vpop.f32.mrf.mxu0
  %v4487 = vadd.f32 %v4326, %v4486
  %v4488 = vpop.f32.mrf.mxu0
  %4489 = vmatprep.mubr.bf16.mxu0 %v2327
  %4490 = vmatmul.mubr.bf16.gmra.mxu0 %v2326
  %v4491 = vpop.f32.mrf.mxu0
  %v4492 = vadd.f32 %v4331, %v4491
  %v4493 = vpop.f32.mrf.mxu0
  %v4494 = vpop.f32.mrf.mxu0
  %v4495 = vadd.f32 %v4334, %v4494
  %v4496 = vpop.f32.mrf.mxu0
  %4497 = vmatprep.mubr.bf16.mxu0 %v2352
  %4498 = vmatmul.mubr.bf16.gmra.mxu0 %v2351
  %v4499 = vpop.f32.mrf.mxu0
  %v4500 = vadd.f32 %v4339, %v4499
  %v4501 = vpop.f32.mrf.mxu0
  %v4502 = vpop.f32.mrf.mxu0
  %v4503 = vadd.f32 %v4342, %v4502
  %v4504 = vpop.f32.mrf.mxu0
  %4505 = vmatprep.mubr.bf16.mxu0 %v2377
  %4506 = vmatmul.mubr.bf16.gmra.mxu0 %v2376
  %v4507 = vpop.f32.mrf.mxu0
  %v4508 = vadd.f32 %v4347, %v4507
  %v4509 = vpop.f32.mrf.mxu0
  %v4510 = vpop.f32.mrf.mxu0
  %v4511 = vadd.f32 %v4350, %v4510
  %v4512 = vpop.f32.mrf.mxu0
  %4513 = vmatprep.mubr.bf16.mxu0 %v2402
  %4514 = vmatmul.mubr.bf16.gmra.mxu0 %v2401
  %v4515 = vpop.f32.mrf.mxu0
  %v4516 = vadd.f32 %v4355, %v4515
  %v4517 = vpop.f32.mrf.mxu0
  %v4518 = vpop.f32.mrf.mxu0
  %v4519 = vadd.f32 %v4358, %v4518
  %v4520 = vpop.f32.mrf.mxu0
  %4521 = vmatprep.mubr.bf16.mxu0 %v2427
  %4522 = vmatmul.mubr.bf16.gmra.mxu0 %v2426
  %v4523 = vpop.f32.mrf.mxu0
  %v4524 = vadd.f32 %v4363, %v4523
  %v4525 = vpop.f32.mrf.mxu0
  %v4526 = vpop.f32.mrf.mxu0
  %v4527 = vadd.f32 %v4366, %v4526
  %v4528 = vpop.f32.mrf.mxu0
  %4529 = vdwg.mxu0
  %4530 = vmatprep.subr.bf16.mxu0 0
  %4531 = vmatpush1.bf16.msra.mxu0 %v3702
  %4532 = vmatprep.subr.bf16.mxu0 0
  %4533 = vmatpush1.bf16.msra.mxu0 %v3701
  %4534 = vmatprep.subr.bf16.mxu0 0
  %4535 = vmatpush1.bf16.msra.mxu0 %v3700
  %4536 = vmatprep.subr.bf16.mxu0 0
  %4537 = vmatpush1.bf16.msra.mxu0 %v3699
  %4538 = vmatprep.subr.bf16.mxu0 0
  %4539 = vmatpush1.bf16.msra.mxu0 %v3698
  %4540 = vmatprep.subr.bf16.mxu0 0
  %4541 = vmatpush1.bf16.msra.mxu0 %v3697
  %4542 = vmatprep.subr.bf16.mxu0 0
  %4543 = vmatpush1.bf16.msra.mxu0 %v3696
  %4544 = vmatprep.subr.bf16.mxu0 0
  %4545 = vmatpush1.bf16.msra.mxu0 %v3695
  %4546 = vmatprep.subr.bf16.mxu0 0
  %4547 = vmatpush2.bf16.msra.mxu0 %v3710
  %4548 = vmatprep.subr.bf16.mxu0 0
  %4549 = vmatpush2.bf16.msra.mxu0 %v3709
  %4550 = vmatprep.subr.bf16.mxu0 0
  %4551 = vmatpush2.bf16.msra.mxu0 %v3708
  %4552 = vmatprep.subr.bf16.mxu0 0
  %4553 = vmatpush2.bf16.msra.mxu0 %v3707
  %4554 = vmatprep.subr.bf16.mxu0 0
  %4555 = vmatpush2.bf16.msra.mxu0 %v3706
  %4556 = vmatprep.subr.bf16.mxu0 0
  %4557 = vmatpush2.bf16.msra.mxu0 %v3705
  %4558 = vmatprep.subr.bf16.mxu0 0
  %4559 = vmatpush2.bf16.msra.mxu0 %v3704
  %4560 = vmatprep.subr.bf16.mxu0 0
  %4561 = vmatpush2.bf16.msra.mxu0 %v3703
  %4562 = vmatprep.mubr.bf16.mxu0 %v2054
  %4563 = vmatmul.mubr.bf16.gmra.mxu0 %v2053
  %v4564 = vpop.f32.mrf.mxu0
  %v4565 = vadd.f32 %v4404, %v4564
  %v4566 = vpop.f32.mrf.mxu0
  %v4567 = vpop.f32.mrf.mxu0
  %v4568 = vadd.f32 %v4407, %v4567
  %v4569 = vpop.f32.mrf.mxu0
  %4570 = vmatprep.mubr.bf16.mxu0 %v2079
  %4571 = vmatmul.mubr.bf16.gmra.mxu0 %v2078
  %v4572 = vpop.f32.mrf.mxu0
  %v4573 = vadd.f32 %v4412, %v4572
  %v4574 = vpop.f32.mrf.mxu0
  %v4575 = vpop.f32.mrf.mxu0
  %v4576 = vadd.f32 %v4415, %v4575
  %v4577 = vpop.f32.mrf.mxu0
  %4578 = vmatprep.mubr.bf16.mxu0 %v2104
  %4579 = vmatmul.mubr.bf16.gmra.mxu0 %v2103
  %v4580 = vpop.f32.mrf.mxu0
  %v4581 = vadd.f32 %v4420, %v4580
  %v4582 = vpop.f32.mrf.mxu0
  %v4583 = vpop.f32.mrf.mxu0
  %v4584 = vadd.f32 %v4423, %v4583
  %v4585 = vpop.f32.mrf.mxu0
  %4586 = vmatprep.mubr.bf16.mxu0 %v2129
  %4587 = vmatmul.mubr.bf16.gmra.mxu0 %v2128
  %v4588 = vpop.f32.mrf.mxu0
  %v4589 = vadd.f32 %v4428, %v4588
  %v4590 = vpop.f32.mrf.mxu0
  %v4591 = vpop.f32.mrf.mxu0
  %v4592 = vadd.f32 %v4431, %v4591
  %v4593 = vpop.f32.mrf.mxu0
  %4594 = vmatprep.mubr.bf16.mxu0 %v2154
  %4595 = vmatmul.mubr.bf16.gmra.mxu0 %v2153
  %v4596 = vpop.f32.mrf.mxu0
  %v4597 = vadd.f32 %v4436, %v4596
  %v4598 = vpop.f32.mrf.mxu0
  %v4599 = vpop.f32.mrf.mxu0
  %v4600 = vadd.f32 %v4439, %v4599
  %v4601 = vpop.f32.mrf.mxu0
  %4602 = vmatprep.mubr.bf16.mxu0 %v2179
  %4603 = vmatmul.mubr.bf16.gmra.mxu0 %v2178
  %v4604 = vpop.f32.mrf.mxu0
  %v4605 = vadd.f32 %v4444, %v4604
  %v4606 = vpop.f32.mrf.mxu0
  %v4607 = vpop.f32.mrf.mxu0
  %v4608 = vadd.f32 %v4447, %v4607
  %v4609 = vpop.f32.mrf.mxu0
  %4610 = vmatprep.mubr.bf16.mxu0 %v2204
  %4611 = vmatmul.mubr.bf16.gmra.mxu0 %v2203
  %v4612 = vpop.f32.mrf.mxu0
  %v4613 = vadd.f32 %v4452, %v4612
  %v4614 = vpop.f32.mrf.mxu0
  %v4615 = vpop.f32.mrf.mxu0
  %v4616 = vadd.f32 %v4455, %v4615
  %v4617 = vpop.f32.mrf.mxu0
  %4618 = vmatprep.mubr.bf16.mxu0 %v2229
  %4619 = vmatmul.mubr.bf16.gmra.mxu0 %v2228
  %v4620 = vpop.f32.mrf.mxu0
  %v4621 = vadd.f32 %v4460, %v4620
  %v4622 = vpop.f32.mrf.mxu0
  %v4623 = vpop.f32.mrf.mxu0
  %v4624 = vadd.f32 %v4463, %v4623
  %v4625 = vpop.f32.mrf.mxu0
  %4626 = vmatprep.mubr.bf16.mxu0 %v2254
  %4627 = vmatmul.mubr.bf16.gmra.mxu0 %v2253
  %v4628 = vpop.f32.mrf.mxu0
  %v4629 = vadd.f32 %v4468, %v4628
  %v4630 = vpop.f32.mrf.mxu0
  %v4631 = vpop.f32.mrf.mxu0
  %v4632 = vadd.f32 %v4471, %v4631
  %v4633 = vpop.f32.mrf.mxu0
  %4634 = vmatprep.mubr.bf16.mxu0 %v2279
  %4635 = vmatmul.mubr.bf16.gmra.mxu0 %v2278
  %v4636 = vpop.f32.mrf.mxu0
  %v4637 = vadd.f32 %v4476, %v4636
  %v4638 = vpop.f32.mrf.mxu0
  %v4639 = vpop.f32.mrf.mxu0
  %v4640 = vadd.f32 %v4479, %v4639
  %v4641 = vpop.f32.mrf.mxu0
  %4642 = vmatprep.mubr.bf16.mxu0 %v2304
  %4643 = vmatmul.mubr.bf16.gmra.mxu0 %v2303
  %v4644 = vpop.f32.mrf.mxu0
  %v4645 = vadd.f32 %v4484, %v4644
  %v4646 = vpop.f32.mrf.mxu0
  %v4647 = vpop.f32.mrf.mxu0
  %v4648 = vadd.f32 %v4487, %v4647
  %v4649 = vpop.f32.mrf.mxu0
  %4650 = vmatprep.mubr.bf16.mxu0 %v2329
  %4651 = vmatmul.mubr.bf16.gmra.mxu0 %v2328
  %v4652 = vpop.f32.mrf.mxu0
  %v4653 = vadd.f32 %v4492, %v4652
  %v4654 = vpop.f32.mrf.mxu0
  %v4655 = vpop.f32.mrf.mxu0
  %v4656 = vadd.f32 %v4495, %v4655
  %v4657 = vpop.f32.mrf.mxu0
  %4658 = vmatprep.mubr.bf16.mxu0 %v2354
  %4659 = vmatmul.mubr.bf16.gmra.mxu0 %v2353
  %v4660 = vpop.f32.mrf.mxu0
  %v4661 = vadd.f32 %v4500, %v4660
  %v4662 = vpop.f32.mrf.mxu0
  %v4663 = vpop.f32.mrf.mxu0
  %v4664 = vadd.f32 %v4503, %v4663
  %v4665 = vpop.f32.mrf.mxu0
  %4666 = vmatprep.mubr.bf16.mxu0 %v2379
  %4667 = vmatmul.mubr.bf16.gmra.mxu0 %v2378
  %v4668 = vpop.f32.mrf.mxu0
  %v4669 = vadd.f32 %v4508, %v4668
  %v4670 = vpop.f32.mrf.mxu0
  %v4671 = vpop.f32.mrf.mxu0
  %v4672 = vadd.f32 %v4511, %v4671
  %v4673 = vpop.f32.mrf.mxu0
  %4674 = vmatprep.mubr.bf16.mxu0 %v2404
  %4675 = vmatmul.mubr.bf16.gmra.mxu0 %v2403
  %v4676 = vpop.f32.mrf.mxu0
  %v4677 = vadd.f32 %v4516, %v4676
  %v4678 = vpop.f32.mrf.mxu0
  %v4679 = vpop.f32.mrf.mxu0
  %v4680 = vadd.f32 %v4519, %v4679
  %v4681 = vpop.f32.mrf.mxu0
  %4682 = vmatprep.mubr.bf16.mxu0 %v2429
  %4683 = vmatmul.mubr.bf16.gmra.mxu0 %v2428
  %v4684 = vpop.f32.mrf.mxu0
  %v4685 = vadd.f32 %v4524, %v4684
  %v4686 = vpop.f32.mrf.mxu0
  %v4687 = vpop.f32.mrf.mxu0
  %v4688 = vadd.f32 %v4527, %v4687
  %v4689 = vpop.f32.mrf.mxu0
  %4690 = vdwg.mxu0
  %4691 = vmatprep.subr.bf16.mxu0 0
  %4692 = vmatpush1.bf16.msra.mxu0 %v3718
  %4693 = vmatprep.subr.bf16.mxu0 0
  %4694 = vmatpush1.bf16.msra.mxu0 %v3717
  %4695 = vmatprep.subr.bf16.mxu0 0
  %4696 = vmatpush1.bf16.msra.mxu0 %v3716
  %4697 = vmatprep.subr.bf16.mxu0 0
  %4698 = vmatpush1.bf16.msra.mxu0 %v3715
  %4699 = vmatprep.subr.bf16.mxu0 0
  %4700 = vmatpush1.bf16.msra.mxu0 %v3714
  %4701 = vmatprep.subr.bf16.mxu0 0
  %4702 = vmatpush1.bf16.msra.mxu0 %v3713
  %4703 = vmatprep.subr.bf16.mxu0 0
  %4704 = vmatpush1.bf16.msra.mxu0 %v3712
  %4705 = vmatprep.subr.bf16.mxu0 0
  %4706 = vmatpush1.bf16.msra.mxu0 %v3711
  %4707 = vmatprep.subr.bf16.mxu0 0
  %4708 = vmatpush2.bf16.msra.mxu0 %v3726
  %4709 = vmatprep.subr.bf16.mxu0 0
  %4710 = vmatpush2.bf16.msra.mxu0 %v3725
  %4711 = vmatprep.subr.bf16.mxu0 0
  %4712 = vmatpush2.bf16.msra.mxu0 %v3724
  %4713 = vmatprep.subr.bf16.mxu0 0
  %4714 = vmatpush2.bf16.msra.mxu0 %v3723
  %4715 = vmatprep.subr.bf16.mxu0 0
  %4716 = vmatpush2.bf16.msra.mxu0 %v3722
  %4717 = vmatprep.subr.bf16.mxu0 0
  %4718 = vmatpush2.bf16.msra.mxu0 %v3721
  %4719 = vmatprep.subr.bf16.mxu0 0
  %4720 = vmatpush2.bf16.msra.mxu0 %v3720
  %4721 = vmatprep.subr.bf16.mxu0 0
  %4722 = vmatpush2.bf16.msra.mxu0 %v3719
  %4723 = vmatprep.mubr.bf16.mxu0 %v2056
  %4724 = vmatmul.mubr.bf16.gmra.mxu0 %v2055
  %v4725 = vpop.f32.mrf.mxu0
  %v4726 = vadd.f32 %v4565, %v4725
  %v4727 = vpop.f32.mrf.mxu0
  %v4728 = vpop.f32.mrf.mxu0
  %v4729 = vadd.f32 %v4568, %v4728
  %v4730 = vpop.f32.mrf.mxu0
  %4731 = vmatprep.mubr.bf16.mxu0 %v2081
  %4732 = vmatmul.mubr.bf16.gmra.mxu0 %v2080
  %v4733 = vpop.f32.mrf.mxu0
  %v4734 = vadd.f32 %v4573, %v4733
  %v4735 = vpop.f32.mrf.mxu0
  %v4736 = vpop.f32.mrf.mxu0
  %v4737 = vadd.f32 %v4576, %v4736
  %v4738 = vpop.f32.mrf.mxu0
  %4739 = vmatprep.mubr.bf16.mxu0 %v2106
  %4740 = vmatmul.mubr.bf16.gmra.mxu0 %v2105
  %v4741 = vpop.f32.mrf.mxu0
  %v4742 = vadd.f32 %v4581, %v4741
  %v4743 = vpop.f32.mrf.mxu0
  %v4744 = vpop.f32.mrf.mxu0
  %v4745 = vadd.f32 %v4584, %v4744
  %v4746 = vpop.f32.mrf.mxu0
  %4747 = vmatprep.mubr.bf16.mxu0 %v2131
  %4748 = vmatmul.mubr.bf16.gmra.mxu0 %v2130
  %v4749 = vpop.f32.mrf.mxu0
  %v4750 = vadd.f32 %v4589, %v4749
  %v4751 = vpop.f32.mrf.mxu0
  %v4752 = vpop.f32.mrf.mxu0
  %v4753 = vadd.f32 %v4592, %v4752
  %v4754 = vpop.f32.mrf.mxu0
  %4755 = vmatprep.mubr.bf16.mxu0 %v2156
  %4756 = vmatmul.mubr.bf16.gmra.mxu0 %v2155
  %v4757 = vpop.f32.mrf.mxu0
  %v4758 = vadd.f32 %v4597, %v4757
  %v4759 = vpop.f32.mrf.mxu0
  %v4760 = vpop.f32.mrf.mxu0
  %v4761 = vadd.f32 %v4600, %v4760
  %v4762 = vpop.f32.mrf.mxu0
  %4763 = vmatprep.mubr.bf16.mxu0 %v2181
  %4764 = vmatmul.mubr.bf16.gmra.mxu0 %v2180
  %v4765 = vpop.f32.mrf.mxu0
  %v4766 = vadd.f32 %v4605, %v4765
  %v4767 = vpop.f32.mrf.mxu0
  %v4768 = vpop.f32.mrf.mxu0
  %v4769 = vadd.f32 %v4608, %v4768
  %v4770 = vpop.f32.mrf.mxu0
  %4771 = vmatprep.mubr.bf16.mxu0 %v2206
  %4772 = vmatmul.mubr.bf16.gmra.mxu0 %v2205
  %v4773 = vpop.f32.mrf.mxu0
  %v4774 = vadd.f32 %v4613, %v4773
  %v4775 = vpop.f32.mrf.mxu0
  %v4776 = vpop.f32.mrf.mxu0
  %v4777 = vadd.f32 %v4616, %v4776
  %v4778 = vpop.f32.mrf.mxu0
  %4779 = vmatprep.mubr.bf16.mxu0 %v2231
  %4780 = vmatmul.mubr.bf16.gmra.mxu0 %v2230
  %v4781 = vpop.f32.mrf.mxu0
  %v4782 = vadd.f32 %v4621, %v4781
  %v4783 = vpop.f32.mrf.mxu0
  %v4784 = vpop.f32.mrf.mxu0
  %v4785 = vadd.f32 %v4624, %v4784
  %v4786 = vpop.f32.mrf.mxu0
  %4787 = vmatprep.mubr.bf16.mxu0 %v2256
  %4788 = vmatmul.mubr.bf16.gmra.mxu0 %v2255
  %v4789 = vpop.f32.mrf.mxu0
  %v4790 = vadd.f32 %v4629, %v4789
  %v4791 = vpop.f32.mrf.mxu0
  %v4792 = vpop.f32.mrf.mxu0
  %v4793 = vadd.f32 %v4632, %v4792
  %v4794 = vpop.f32.mrf.mxu0
  %4795 = vmatprep.mubr.bf16.mxu0 %v2281
  %4796 = vmatmul.mubr.bf16.gmra.mxu0 %v2280
  %v4797 = vpop.f32.mrf.mxu0
  %v4798 = vadd.f32 %v4637, %v4797
  %v4799 = vpop.f32.mrf.mxu0
  %v4800 = vpop.f32.mrf.mxu0
  %v4801 = vadd.f32 %v4640, %v4800
  %v4802 = vpop.f32.mrf.mxu0
  %4803 = vmatprep.mubr.bf16.mxu0 %v2306
  %4804 = vmatmul.mubr.bf16.gmra.mxu0 %v2305
  %v4805 = vpop.f32.mrf.mxu0
  %v4806 = vadd.f32 %v4645, %v4805
  %v4807 = vpop.f32.mrf.mxu0
  %v4808 = vpop.f32.mrf.mxu0
  %v4809 = vadd.f32 %v4648, %v4808
  %v4810 = vpop.f32.mrf.mxu0
  %4811 = vmatprep.mubr.bf16.mxu0 %v2331
  %4812 = vmatmul.mubr.bf16.gmra.mxu0 %v2330
  %v4813 = vpop.f32.mrf.mxu0
  %v4814 = vadd.f32 %v4653, %v4813
  %v4815 = vpop.f32.mrf.mxu0
  %v4816 = vpop.f32.mrf.mxu0
  %v4817 = vadd.f32 %v4656, %v4816
  %v4818 = vpop.f32.mrf.mxu0
  %4819 = vmatprep.mubr.bf16.mxu0 %v2356
  %4820 = vmatmul.mubr.bf16.gmra.mxu0 %v2355
  %v4821 = vpop.f32.mrf.mxu0
  %v4822 = vadd.f32 %v4661, %v4821
  %v4823 = vpop.f32.mrf.mxu0
  %v4824 = vpop.f32.mrf.mxu0
  %v4825 = vadd.f32 %v4664, %v4824
  %v4826 = vpop.f32.mrf.mxu0
  %4827 = vmatprep.mubr.bf16.mxu0 %v2381
  %4828 = vmatmul.mubr.bf16.gmra.mxu0 %v2380
  %v4829 = vpop.f32.mrf.mxu0
  %v4830 = vadd.f32 %v4669, %v4829
  %v4831 = vpop.f32.mrf.mxu0
  %v4832 = vpop.f32.mrf.mxu0
  %v4833 = vadd.f32 %v4672, %v4832
  %v4834 = vpop.f32.mrf.mxu0
  %4835 = vmatprep.mubr.bf16.mxu0 %v2406
  %4836 = vmatmul.mubr.bf16.gmra.mxu0 %v2405
  %v4837 = vpop.f32.mrf.mxu0
  %v4838 = vadd.f32 %v4677, %v4837
  %v4839 = vpop.f32.mrf.mxu0
  %v4840 = vpop.f32.mrf.mxu0
  %v4841 = vadd.f32 %v4680, %v4840
  %v4842 = vpop.f32.mrf.mxu0
  %4843 = vmatprep.mubr.bf16.mxu0 %v2431
  %4844 = vmatmul.mubr.bf16.gmra.mxu0 %v2430
  %v4845 = vpop.f32.mrf.mxu0
  %v4846 = vadd.f32 %v4685, %v4845
  %v4847 = vpop.f32.mrf.mxu0
  %v4848 = vpop.f32.mrf.mxu0
  %v4849 = vadd.f32 %v4688, %v4848
  %v4850 = vpop.f32.mrf.mxu0
  %4851 = vdwg.mxu0
  %4852 = vmatprep.subr.bf16.mxu0 0
  %4853 = vmatpush1.bf16.msra.mxu0 %v3734
  %4854 = vmatprep.subr.bf16.mxu0 0
  %4855 = vmatpush1.bf16.msra.mxu0 %v3733
  %4856 = vmatprep.subr.bf16.mxu0 0
  %4857 = vmatpush1.bf16.msra.mxu0 %v3732
  %4858 = vmatprep.subr.bf16.mxu0 0
  %4859 = vmatpush1.bf16.msra.mxu0 %v3731
  %4860 = vmatprep.subr.bf16.mxu0 0
  %4861 = vmatpush1.bf16.msra.mxu0 %v3730
  %4862 = vmatprep.subr.bf16.mxu0 0
  %4863 = vmatpush1.bf16.msra.mxu0 %v3729
  %4864 = vmatprep.subr.bf16.mxu0 0
  %4865 = vmatpush1.bf16.msra.mxu0 %v3728
  %4866 = vmatprep.subr.bf16.mxu0 0
  %4867 = vmatpush1.bf16.msra.mxu0 %v3727
  %4868 = vmatprep.subr.bf16.mxu0 0
  %4869 = vmatpush2.bf16.msra.mxu0 %v3742
  %4870 = vmatprep.subr.bf16.mxu0 0
  %4871 = vmatpush2.bf16.msra.mxu0 %v3741
  %4872 = vmatprep.subr.bf16.mxu0 0
  %4873 = vmatpush2.bf16.msra.mxu0 %v3740
  %4874 = vmatprep.subr.bf16.mxu0 0
  %4875 = vmatpush2.bf16.msra.mxu0 %v3739
  %4876 = vmatprep.subr.bf16.mxu0 0
  %4877 = vmatpush2.bf16.msra.mxu0 %v3738
  %4878 = vmatprep.subr.bf16.mxu0 0
  %4879 = vmatpush2.bf16.msra.mxu0 %v3737
  %4880 = vmatprep.subr.bf16.mxu0 0
  %4881 = vmatpush2.bf16.msra.mxu0 %v3736
  %4882 = vmatprep.subr.bf16.mxu0 0
  %4883 = vmatpush2.bf16.msra.mxu0 %v3735
  %4884 = vmatprep.mubr.bf16.mxu0 %v2058
  %4885 = vmatmul.mubr.bf16.gmra.mxu0 %v2057
  %v4886 = vpop.f32.mrf.mxu0
  %v4887 = vadd.f32 %v4726, %v4886
  %v4888 = vpop.f32.mrf.mxu0
  %v4889 = vpop.f32.mrf.mxu0
  %v4890 = vadd.f32 %v4729, %v4889
  %v4891 = vpop.f32.mrf.mxu0
  %4892 = vmatprep.mubr.bf16.mxu0 %v2083
  %4893 = vmatmul.mubr.bf16.gmra.mxu0 %v2082
  %v4894 = vpop.f32.mrf.mxu0
  %v4895 = vadd.f32 %v4734, %v4894
  %v4896 = vpop.f32.mrf.mxu0
  %v4897 = vpop.f32.mrf.mxu0
  %v4898 = vadd.f32 %v4737, %v4897
  %v4899 = vpop.f32.mrf.mxu0
  %4900 = vmatprep.mubr.bf16.mxu0 %v2108
  %4901 = vmatmul.mubr.bf16.gmra.mxu0 %v2107
  %v4902 = vpop.f32.mrf.mxu0
  %v4903 = vadd.f32 %v4742, %v4902
  %v4904 = vpop.f32.mrf.mxu0
  %v4905 = vpop.f32.mrf.mxu0
  %v4906 = vadd.f32 %v4745, %v4905
  %v4907 = vpop.f32.mrf.mxu0
  %4908 = vmatprep.mubr.bf16.mxu0 %v2133
  %4909 = vmatmul.mubr.bf16.gmra.mxu0 %v2132
  %v4910 = vpop.f32.mrf.mxu0
  %v4911 = vadd.f32 %v4750, %v4910
  %v4912 = vpop.f32.mrf.mxu0
  %v4913 = vpop.f32.mrf.mxu0
  %v4914 = vadd.f32 %v4753, %v4913
  %v4915 = vpop.f32.mrf.mxu0
  %4916 = vmatprep.mubr.bf16.mxu0 %v2158
  %4917 = vmatmul.mubr.bf16.gmra.mxu0 %v2157
  %v4918 = vpop.f32.mrf.mxu0
  %v4919 = vadd.f32 %v4758, %v4918
  %v4920 = vpop.f32.mrf.mxu0
  %v4921 = vpop.f32.mrf.mxu0
  %v4922 = vadd.f32 %v4761, %v4921
  %v4923 = vpop.f32.mrf.mxu0
  %4924 = vmatprep.mubr.bf16.mxu0 %v2183
  %4925 = vmatmul.mubr.bf16.gmra.mxu0 %v2182
  %v4926 = vpop.f32.mrf.mxu0
  %v4927 = vadd.f32 %v4766, %v4926
  %v4928 = vpop.f32.mrf.mxu0
  %v4929 = vpop.f32.mrf.mxu0
  %v4930 = vadd.f32 %v4769, %v4929
  %v4931 = vpop.f32.mrf.mxu0
  %4932 = vmatprep.mubr.bf16.mxu0 %v2208
  %4933 = vmatmul.mubr.bf16.gmra.mxu0 %v2207
  %v4934 = vpop.f32.mrf.mxu0
  %v4935 = vadd.f32 %v4774, %v4934
  %v4936 = vpop.f32.mrf.mxu0
  %v4937 = vpop.f32.mrf.mxu0
  %v4938 = vadd.f32 %v4777, %v4937
  %v4939 = vpop.f32.mrf.mxu0
  %4940 = vmatprep.mubr.bf16.mxu0 %v2233
  %4941 = vmatmul.mubr.bf16.gmra.mxu0 %v2232
  %v4942 = vpop.f32.mrf.mxu0
  %v4943 = vadd.f32 %v4782, %v4942
  %v4944 = vpop.f32.mrf.mxu0
  %v4945 = vpop.f32.mrf.mxu0
  %v4946 = vadd.f32 %v4785, %v4945
  %v4947 = vpop.f32.mrf.mxu0
  %4948 = vmatprep.mubr.bf16.mxu0 %v2258
  %4949 = vmatmul.mubr.bf16.gmra.mxu0 %v2257
  %v4950 = vpop.f32.mrf.mxu0
  %v4951 = vadd.f32 %v4790, %v4950
  %v4952 = vpop.f32.mrf.mxu0
  %v4953 = vpop.f32.mrf.mxu0
  %v4954 = vadd.f32 %v4793, %v4953
  %v4955 = vpop.f32.mrf.mxu0
  %4956 = vmatprep.mubr.bf16.mxu0 %v2283
  %4957 = vmatmul.mubr.bf16.gmra.mxu0 %v2282
  %v4958 = vpop.f32.mrf.mxu0
  %v4959 = vadd.f32 %v4798, %v4958
  %v4960 = vpop.f32.mrf.mxu0
  %v4961 = vpop.f32.mrf.mxu0
  %v4962 = vadd.f32 %v4801, %v4961
  %v4963 = vpop.f32.mrf.mxu0
  %4964 = vmatprep.mubr.bf16.mxu0 %v2308
  %4965 = vmatmul.mubr.bf16.gmra.mxu0 %v2307
  %v4966 = vpop.f32.mrf.mxu0
  %v4967 = vadd.f32 %v4806, %v4966
  %v4968 = vpop.f32.mrf.mxu0
  %v4969 = vpop.f32.mrf.mxu0
  %v4970 = vadd.f32 %v4809, %v4969
  %v4971 = vpop.f32.mrf.mxu0
  %4972 = vmatprep.mubr.bf16.mxu0 %v2333
  %4973 = vmatmul.mubr.bf16.gmra.mxu0 %v2332
  %v4974 = vpop.f32.mrf.mxu0
  %v4975 = vadd.f32 %v4814, %v4974
  %v4976 = vpop.f32.mrf.mxu0
  %v4977 = vpop.f32.mrf.mxu0
  %v4978 = vadd.f32 %v4817, %v4977
  %v4979 = vpop.f32.mrf.mxu0
  %4980 = vmatprep.mubr.bf16.mxu0 %v2358
  %4981 = vmatmul.mubr.bf16.gmra.mxu0 %v2357
  %v4982 = vpop.f32.mrf.mxu0
  %v4983 = vadd.f32 %v4822, %v4982
  %v4984 = vpop.f32.mrf.mxu0
  %v4985 = vpop.f32.mrf.mxu0
  %v4986 = vadd.f32 %v4825, %v4985
  %v4987 = vpop.f32.mrf.mxu0
  %4988 = vmatprep.mubr.bf16.mxu0 %v2383
  %4989 = vmatmul.mubr.bf16.gmra.mxu0 %v2382
  %v4990 = vpop.f32.mrf.mxu0
  %v4991 = vadd.f32 %v4830, %v4990
  %v4992 = vpop.f32.mrf.mxu0
  %v4993 = vpop.f32.mrf.mxu0
  %v4994 = vadd.f32 %v4833, %v4993
  %v4995 = vpop.f32.mrf.mxu0
  %4996 = vmatprep.mubr.bf16.mxu0 %v2408
  %4997 = vmatmul.mubr.bf16.gmra.mxu0 %v2407
  %v4998 = vpop.f32.mrf.mxu0
  %v4999 = vadd.f32 %v4838, %v4998
  %v5000 = vpop.f32.mrf.mxu0
  %v5001 = vpop.f32.mrf.mxu0
  %v5002 = vadd.f32 %v4841, %v5001
  %v5003 = vpop.f32.mrf.mxu0
  %5004 = vmatprep.mubr.bf16.mxu0 %v2433
  %5005 = vmatmul.mubr.bf16.gmra.mxu0 %v2432
  %v5006 = vpop.f32.mrf.mxu0
  %v5007 = vadd.f32 %v4846, %v5006
  %v5008 = vpop.f32.mrf.mxu0
  %v5009 = vpop.f32.mrf.mxu0
  %v5010 = vadd.f32 %v4849, %v5009
  %v5011 = vpop.f32.mrf.mxu0
  %5012 = vdwg.mxu0
  %5013 = vmatprep.subr.bf16.mxu0 0
  %5014 = vmatpush1.bf16.msra.mxu0 %v3750
  %5015 = vmatprep.subr.bf16.mxu0 0
  %5016 = vmatpush1.bf16.msra.mxu0 %v3749
  %5017 = vmatprep.subr.bf16.mxu0 0
  %5018 = vmatpush1.bf16.msra.mxu0 %v3748
  %5019 = vmatprep.subr.bf16.mxu0 0
  %5020 = vmatpush1.bf16.msra.mxu0 %v3747
  %5021 = vmatprep.subr.bf16.mxu0 0
  %5022 = vmatpush1.bf16.msra.mxu0 %v3746
  %5023 = vmatprep.subr.bf16.mxu0 0
  %5024 = vmatpush1.bf16.msra.mxu0 %v3745
  %5025 = vmatprep.subr.bf16.mxu0 0
  %5026 = vmatpush1.bf16.msra.mxu0 %v3744
  %5027 = vmatprep.subr.bf16.mxu0 0
  %5028 = vmatpush1.bf16.msra.mxu0 %v3743
  %5029 = vmatprep.subr.bf16.mxu0 0
  %5030 = vmatpush2.bf16.msra.mxu0 %v3758
  %5031 = vmatprep.subr.bf16.mxu0 0
  %5032 = vmatpush2.bf16.msra.mxu0 %v3757
  %5033 = vmatprep.subr.bf16.mxu0 0
  %5034 = vmatpush2.bf16.msra.mxu0 %v3756
  %5035 = vmatprep.subr.bf16.mxu0 0
  %5036 = vmatpush2.bf16.msra.mxu0 %v3755
  %5037 = vmatprep.subr.bf16.mxu0 0
  %5038 = vmatpush2.bf16.msra.mxu0 %v3754
  %5039 = vmatprep.subr.bf16.mxu0 0
  %5040 = vmatpush2.bf16.msra.mxu0 %v3753
  %5041 = vmatprep.subr.bf16.mxu0 0
  %5042 = vmatpush2.bf16.msra.mxu0 %v3752
  %5043 = vmatprep.subr.bf16.mxu0 0
  %5044 = vmatpush2.bf16.msra.mxu0 %v3751
  %5045 = vmatprep.mubr.bf16.mxu0 %v2060
  %5046 = vmatmul.mubr.bf16.gmra.mxu0 %v2059
  %v5047 = vpop.f32.mrf.mxu0
  %v5048 = vadd.f32 %v4887, %v5047
  %v5049 = vpop.f32.mrf.mxu0
  %v5050 = vpop.f32.mrf.mxu0
  %v5051 = vadd.f32 %v4890, %v5050
  %v5052 = vpop.f32.mrf.mxu0
  %5053 = vmatprep.mubr.bf16.mxu0 %v2085
  %5054 = vmatmul.mubr.bf16.gmra.mxu0 %v2084
  %v5055 = vpop.f32.mrf.mxu0
  %v5056 = vadd.f32 %v4895, %v5055
  %v5057 = vpop.f32.mrf.mxu0
  %v5058 = vpop.f32.mrf.mxu0
  %v5059 = vadd.f32 %v4898, %v5058
  %v5060 = vpop.f32.mrf.mxu0
  %5061 = vmatprep.mubr.bf16.mxu0 %v2110
  %5062 = vmatmul.mubr.bf16.gmra.mxu0 %v2109
  %v5063 = vpop.f32.mrf.mxu0
  %v5064 = vadd.f32 %v4903, %v5063
  %v5065 = vpop.f32.mrf.mxu0
  %v5066 = vpop.f32.mrf.mxu0
  %v5067 = vadd.f32 %v4906, %v5066
  %v5068 = vpop.f32.mrf.mxu0
  %5069 = vmatprep.mubr.bf16.mxu0 %v2135
  %5070 = vmatmul.mubr.bf16.gmra.mxu0 %v2134
  %v5071 = vpop.f32.mrf.mxu0
  %v5072 = vadd.f32 %v4911, %v5071
  %v5073 = vpop.f32.mrf.mxu0
  %v5074 = vpop.f32.mrf.mxu0
  %v5075 = vadd.f32 %v4914, %v5074
  %v5076 = vpop.f32.mrf.mxu0
  %5077 = vmatprep.mubr.bf16.mxu0 %v2160
  %5078 = vmatmul.mubr.bf16.gmra.mxu0 %v2159
  %v5079 = vpop.f32.mrf.mxu0
  %v5080 = vadd.f32 %v4919, %v5079
  %v5081 = vpop.f32.mrf.mxu0
  %v5082 = vpop.f32.mrf.mxu0
  %v5083 = vadd.f32 %v4922, %v5082
  %v5084 = vpop.f32.mrf.mxu0
  %5085 = vmatprep.mubr.bf16.mxu0 %v2185
  %5086 = vmatmul.mubr.bf16.gmra.mxu0 %v2184
  %v5087 = vpop.f32.mrf.mxu0
  %v5088 = vadd.f32 %v4927, %v5087
  %v5089 = vpop.f32.mrf.mxu0
  %v5090 = vpop.f32.mrf.mxu0
  %v5091 = vadd.f32 %v4930, %v5090
  %v5092 = vpop.f32.mrf.mxu0
  %5093 = vmatprep.mubr.bf16.mxu0 %v2210
  %5094 = vmatmul.mubr.bf16.gmra.mxu0 %v2209
  %v5095 = vpop.f32.mrf.mxu0
  %v5096 = vadd.f32 %v4935, %v5095
  %v5097 = vpop.f32.mrf.mxu0
  %v5098 = vpop.f32.mrf.mxu0
  %v5099 = vadd.f32 %v4938, %v5098
  %v5100 = vpop.f32.mrf.mxu0
  %5101 = vmatprep.mubr.bf16.mxu0 %v2235
  %5102 = vmatmul.mubr.bf16.gmra.mxu0 %v2234
  %v5103 = vpop.f32.mrf.mxu0
  %v5104 = vadd.f32 %v4943, %v5103
  %v5105 = vpop.f32.mrf.mxu0
  %v5106 = vpop.f32.mrf.mxu0
  %v5107 = vadd.f32 %v4946, %v5106
  %v5108 = vpop.f32.mrf.mxu0
  %5109 = vmatprep.mubr.bf16.mxu0 %v2260
  %5110 = vmatmul.mubr.bf16.gmra.mxu0 %v2259
  %v5111 = vpop.f32.mrf.mxu0
  %v5112 = vadd.f32 %v4951, %v5111
  %v5113 = vpop.f32.mrf.mxu0
  %v5114 = vpop.f32.mrf.mxu0
  %v5115 = vadd.f32 %v4954, %v5114
  %v5116 = vpop.f32.mrf.mxu0
  %5117 = vmatprep.mubr.bf16.mxu0 %v2285
  %5118 = vmatmul.mubr.bf16.gmra.mxu0 %v2284
  %v5119 = vpop.f32.mrf.mxu0
  %v5120 = vadd.f32 %v4959, %v5119
  %v5121 = vpop.f32.mrf.mxu0
  %v5122 = vpop.f32.mrf.mxu0
  %v5123 = vadd.f32 %v4962, %v5122
  %v5124 = vpop.f32.mrf.mxu0
  %5125 = vmatprep.mubr.bf16.mxu0 %v2310
  %5126 = vmatmul.mubr.bf16.gmra.mxu0 %v2309
  %v5127 = vpop.f32.mrf.mxu0
  %v5128 = vadd.f32 %v4967, %v5127
  %v5129 = vpop.f32.mrf.mxu0
  %v5130 = vpop.f32.mrf.mxu0
  %v5131 = vadd.f32 %v4970, %v5130
  %v5132 = vpop.f32.mrf.mxu0
  %5133 = vmatprep.mubr.bf16.mxu0 %v2335
  %5134 = vmatmul.mubr.bf16.gmra.mxu0 %v2334
  %v5135 = vpop.f32.mrf.mxu0
  %v5136 = vadd.f32 %v4975, %v5135
  %v5137 = vpop.f32.mrf.mxu0
  %v5138 = vpop.f32.mrf.mxu0
  %v5139 = vadd.f32 %v4978, %v5138
  %v5140 = vpop.f32.mrf.mxu0
  %5141 = vmatprep.mubr.bf16.mxu0 %v2360
  %5142 = vmatmul.mubr.bf16.gmra.mxu0 %v2359
  %v5143 = vpop.f32.mrf.mxu0
  %v5144 = vadd.f32 %v4983, %v5143
  %v5145 = vpop.f32.mrf.mxu0
  %v5146 = vpop.f32.mrf.mxu0
  %v5147 = vadd.f32 %v4986, %v5146
  %v5148 = vpop.f32.mrf.mxu0
  %5149 = vmatprep.mubr.bf16.mxu0 %v2385
  %5150 = vmatmul.mubr.bf16.gmra.mxu0 %v2384
  %v5151 = vpop.f32.mrf.mxu0
  %v5152 = vadd.f32 %v4991, %v5151
  %v5153 = vpop.f32.mrf.mxu0
  %v5154 = vpop.f32.mrf.mxu0
  %v5155 = vadd.f32 %v4994, %v5154
  %v5156 = vpop.f32.mrf.mxu0
  %5157 = vmatprep.mubr.bf16.mxu0 %v2410
  %5158 = vmatmul.mubr.bf16.gmra.mxu0 %v2409
  %v5159 = vpop.f32.mrf.mxu0
  %v5160 = vadd.f32 %v4999, %v5159
  %v5161 = vpop.f32.mrf.mxu0
  %v5162 = vpop.f32.mrf.mxu0
  %v5163 = vadd.f32 %v5002, %v5162
  %v5164 = vpop.f32.mrf.mxu0
  %5165 = vmatprep.mubr.bf16.mxu0 %v2435
  %5166 = vmatmul.mubr.bf16.gmra.mxu0 %v2434
  %v5167 = vpop.f32.mrf.mxu0
  %v5168 = vadd.f32 %v5007, %v5167
  %v5169 = vpop.f32.mrf.mxu0
  %v5170 = vpop.f32.mrf.mxu0
  %v5171 = vadd.f32 %v5010, %v5170
  %v5172 = vpop.f32.mrf.mxu0
  %5173 = vdwg.mxu0
  %5174 = vmatprep.subr.bf16.mxu0 0
  %5175 = vmatpush1.bf16.msra.mxu0 %v3766
  %5176 = vmatprep.subr.bf16.mxu0 0
  %5177 = vmatpush1.bf16.msra.mxu0 %v3765
  %5178 = vmatprep.subr.bf16.mxu0 0
  %5179 = vmatpush1.bf16.msra.mxu0 %v3764
  %5180 = vmatprep.subr.bf16.mxu0 0
  %5181 = vmatpush1.bf16.msra.mxu0 %v3763
  %5182 = vmatprep.subr.bf16.mxu0 0
  %5183 = vmatpush1.bf16.msra.mxu0 %v3762
  %5184 = vmatprep.subr.bf16.mxu0 0
  %5185 = vmatpush1.bf16.msra.mxu0 %v3761
  %5186 = vmatprep.subr.bf16.mxu0 0
  %5187 = vmatpush1.bf16.msra.mxu0 %v3760
  %5188 = vmatprep.subr.bf16.mxu0 0
  %5189 = vmatpush1.bf16.msra.mxu0 %v3759
  %5190 = vmatprep.subr.bf16.mxu0 0
  %5191 = vmatpush2.bf16.msra.mxu0 %v3774
  %5192 = vmatprep.subr.bf16.mxu0 0
  %5193 = vmatpush2.bf16.msra.mxu0 %v3773
  %5194 = vmatprep.subr.bf16.mxu0 0
  %5195 = vmatpush2.bf16.msra.mxu0 %v3772
  %5196 = vmatprep.subr.bf16.mxu0 0
  %5197 = vmatpush2.bf16.msra.mxu0 %v3771
  %5198 = vmatprep.subr.bf16.mxu0 0
  %5199 = vmatpush2.bf16.msra.mxu0 %v3770
  %5200 = vmatprep.subr.bf16.mxu0 0
  %5201 = vmatpush2.bf16.msra.mxu0 %v3769
  %5202 = vmatprep.subr.bf16.mxu0 0
  %5203 = vmatpush2.bf16.msra.mxu0 %v3768
  %5204 = vmatprep.subr.bf16.mxu0 0
  %5205 = vmatpush2.bf16.msra.mxu0 %v3767
  %5206 = vmatprep.mubr.bf16.mxu0 %v2062
  %5207 = vmatmul.mubr.bf16.gmra.mxu0 %v2061
  %v5208 = vpop.f32.mrf.mxu0
  %v5209 = vadd.f32 %v5048, %v5208
  %v5210 = vpop.f32.mrf.mxu0
  %v5211 = vpop.f32.mrf.mxu0
  %v5212 = vadd.f32 %v5051, %v5211
  %v5213 = vpop.f32.mrf.mxu0
  %5214 = vmatprep.mubr.bf16.mxu0 %v2087
  %5215 = vmatmul.mubr.bf16.gmra.mxu0 %v2086
  %v5216 = vpop.f32.mrf.mxu0
  %v5217 = vadd.f32 %v5056, %v5216
  %v5218 = vpop.f32.mrf.mxu0
  %v5219 = vpop.f32.mrf.mxu0
  %v5220 = vadd.f32 %v5059, %v5219
  %v5221 = vpop.f32.mrf.mxu0
  %5222 = vmatprep.mubr.bf16.mxu0 %v2112
  %5223 = vmatmul.mubr.bf16.gmra.mxu0 %v2111
  %v5224 = vpop.f32.mrf.mxu0
  %v5225 = vadd.f32 %v5064, %v5224
  %v5226 = vpop.f32.mrf.mxu0
  %v5227 = vpop.f32.mrf.mxu0
  %v5228 = vadd.f32 %v5067, %v5227
  %v5229 = vpop.f32.mrf.mxu0
  %5230 = vmatprep.mubr.bf16.mxu0 %v2137
  %5231 = vmatmul.mubr.bf16.gmra.mxu0 %v2136
  %v5232 = vpop.f32.mrf.mxu0
  %v5233 = vadd.f32 %v5072, %v5232
  %v5234 = vpop.f32.mrf.mxu0
  %v5235 = vpop.f32.mrf.mxu0
  %v5236 = vadd.f32 %v5075, %v5235
  %v5237 = vpop.f32.mrf.mxu0
  %5238 = vmatprep.mubr.bf16.mxu0 %v2162
  %5239 = vmatmul.mubr.bf16.gmra.mxu0 %v2161
  %v5240 = vpop.f32.mrf.mxu0
  %v5241 = vadd.f32 %v5080, %v5240
  %v5242 = vpop.f32.mrf.mxu0
  %v5243 = vpop.f32.mrf.mxu0
  %v5244 = vadd.f32 %v5083, %v5243
  %v5245 = vpop.f32.mrf.mxu0
  %5246 = vmatprep.mubr.bf16.mxu0 %v2187
  %5247 = vmatmul.mubr.bf16.gmra.mxu0 %v2186
  %v5248 = vpop.f32.mrf.mxu0
  %v5249 = vadd.f32 %v5088, %v5248
  %v5250 = vpop.f32.mrf.mxu0
  %v5251 = vpop.f32.mrf.mxu0
  %v5252 = vadd.f32 %v5091, %v5251
  %v5253 = vpop.f32.mrf.mxu0
  %5254 = vmatprep.mubr.bf16.mxu0 %v2212
  %5255 = vmatmul.mubr.bf16.gmra.mxu0 %v2211
  %v5256 = vpop.f32.mrf.mxu0
  %v5257 = vadd.f32 %v5096, %v5256
  %v5258 = vpop.f32.mrf.mxu0
  %v5259 = vpop.f32.mrf.mxu0
  %v5260 = vadd.f32 %v5099, %v5259
  %v5261 = vpop.f32.mrf.mxu0
  %5262 = vmatprep.mubr.bf16.mxu0 %v2237
  %5263 = vmatmul.mubr.bf16.gmra.mxu0 %v2236
  %v5264 = vpop.f32.mrf.mxu0
  %v5265 = vadd.f32 %v5104, %v5264
  %v5266 = vpop.f32.mrf.mxu0
  %v5267 = vpop.f32.mrf.mxu0
  %v5268 = vadd.f32 %v5107, %v5267
  %v5269 = vpop.f32.mrf.mxu0
  %5270 = vmatprep.mubr.bf16.mxu0 %v2262
  %5271 = vmatmul.mubr.bf16.gmra.mxu0 %v2261
  %v5272 = vpop.f32.mrf.mxu0
  %v5273 = vadd.f32 %v5112, %v5272
  %v5274 = vpop.f32.mrf.mxu0
  %v5275 = vpop.f32.mrf.mxu0
  %v5276 = vadd.f32 %v5115, %v5275
  %v5277 = vpop.f32.mrf.mxu0
  %5278 = vmatprep.mubr.bf16.mxu0 %v2287
  %5279 = vmatmul.mubr.bf16.gmra.mxu0 %v2286
  %v5280 = vpop.f32.mrf.mxu0
  %v5281 = vadd.f32 %v5120, %v5280
  %v5282 = vpop.f32.mrf.mxu0
  %v5283 = vpop.f32.mrf.mxu0
  %v5284 = vadd.f32 %v5123, %v5283
  %v5285 = vpop.f32.mrf.mxu0
  %5286 = vmatprep.mubr.bf16.mxu0 %v2312
  %5287 = vmatmul.mubr.bf16.gmra.mxu0 %v2311
  %v5288 = vpop.f32.mrf.mxu0
  %v5289 = vadd.f32 %v5128, %v5288
  %v5290 = vpop.f32.mrf.mxu0
  %v5291 = vpop.f32.mrf.mxu0
  %v5292 = vadd.f32 %v5131, %v5291
  %v5293 = vpop.f32.mrf.mxu0
  %5294 = vmatprep.mubr.bf16.mxu0 %v2337
  %5295 = vmatmul.mubr.bf16.gmra.mxu0 %v2336
  %v5296 = vpop.f32.mrf.mxu0
  %v5297 = vadd.f32 %v5136, %v5296
  %v5298 = vpop.f32.mrf.mxu0
  %v5299 = vpop.f32.mrf.mxu0
  %v5300 = vadd.f32 %v5139, %v5299
  %v5301 = vpop.f32.mrf.mxu0
  %5302 = vmatprep.mubr.bf16.mxu0 %v2362
  %5303 = vmatmul.mubr.bf16.gmra.mxu0 %v2361
  %v5304 = vpop.f32.mrf.mxu0
  %v5305 = vadd.f32 %v5144, %v5304
  %v5306 = vpop.f32.mrf.mxu0
  %v5307 = vpop.f32.mrf.mxu0
  %v5308 = vadd.f32 %v5147, %v5307
  %v5309 = vpop.f32.mrf.mxu0
  %5310 = vmatprep.mubr.bf16.mxu0 %v2387
  %5311 = vmatmul.mubr.bf16.gmra.mxu0 %v2386
  %v5312 = vpop.f32.mrf.mxu0
  %v5313 = vadd.f32 %v5152, %v5312
  %v5314 = vpop.f32.mrf.mxu0
  %v5315 = vpop.f32.mrf.mxu0
  %v5316 = vadd.f32 %v5155, %v5315
  %v5317 = vpop.f32.mrf.mxu0
  %5318 = vmatprep.mubr.bf16.mxu0 %v2412
  %5319 = vmatmul.mubr.bf16.gmra.mxu0 %v2411
  %v5320 = vpop.f32.mrf.mxu0
  %v5321 = vadd.f32 %v5160, %v5320
  %v5322 = vpop.f32.mrf.mxu0
  %v5323 = vpop.f32.mrf.mxu0
  %v5324 = vadd.f32 %v5163, %v5323
  %v5325 = vpop.f32.mrf.mxu0
  %5326 = vmatprep.mubr.bf16.mxu0 %v2437
  %5327 = vmatmul.mubr.bf16.gmra.mxu0 %v2436
  %v5328 = vpop.f32.mrf.mxu0
  %v5329 = vadd.f32 %v5168, %v5328
  %v5330 = vpop.f32.mrf.mxu0
  %v5331 = vpop.f32.mrf.mxu0
  %v5332 = vadd.f32 %v5171, %v5331
  %v5333 = vpop.f32.mrf.mxu0
  %5334 = vdwg.mxu0
  %5335 = vmatprep.subr.bf16.mxu0 0
  %5336 = vmatpush1.bf16.msra.mxu0 %v3782
  %5337 = vmatprep.subr.bf16.mxu0 0
  %5338 = vmatpush1.bf16.msra.mxu0 %v3781
  %5339 = vmatprep.subr.bf16.mxu0 0
  %5340 = vmatpush1.bf16.msra.mxu0 %v3780
  %5341 = vmatprep.subr.bf16.mxu0 0
  %5342 = vmatpush1.bf16.msra.mxu0 %v3779
  %5343 = vmatprep.subr.bf16.mxu0 0
  %5344 = vmatpush1.bf16.msra.mxu0 %v3778
  %5345 = vmatprep.subr.bf16.mxu0 0
  %5346 = vmatpush1.bf16.msra.mxu0 %v3777
  %5347 = vmatprep.subr.bf16.mxu0 0
  %5348 = vmatpush1.bf16.msra.mxu0 %v3776
  %5349 = vmatprep.subr.bf16.mxu0 0
  %5350 = vmatpush1.bf16.msra.mxu0 %v3775
  %5351 = vmatprep.subr.bf16.mxu0 0
  %5352 = vmatpush2.bf16.msra.mxu0 %v3790
  %5353 = vmatprep.subr.bf16.mxu0 0
  %5354 = vmatpush2.bf16.msra.mxu0 %v3789
  %5355 = vmatprep.subr.bf16.mxu0 0
  %5356 = vmatpush2.bf16.msra.mxu0 %v3788
  %5357 = vmatprep.subr.bf16.mxu0 0
  %5358 = vmatpush2.bf16.msra.mxu0 %v3787
  %5359 = vmatprep.subr.bf16.mxu0 0
  %5360 = vmatpush2.bf16.msra.mxu0 %v3786
  %5361 = vmatprep.subr.bf16.mxu0 0
  %5362 = vmatpush2.bf16.msra.mxu0 %v3785
  %5363 = vmatprep.subr.bf16.mxu0 0
  %5364 = vmatpush2.bf16.msra.mxu0 %v3784
  %5365 = vmatprep.subr.bf16.mxu0 0
  %5366 = vmatpush2.bf16.msra.mxu0 %v3783
  %5367 = vmatprep.mubr.bf16.mxu0 %v2064
  %5368 = vmatmul.mubr.bf16.gmra.mxu0 %v2063
  %v5369 = vpop.f32.mrf.mxu0
  %v5370 = vadd.f32 %v5209, %v5369
  %v5371 = vpop.f32.mrf.mxu0
  %v5372 = vpop.f32.mrf.mxu0
  %v5373 = vadd.f32 %v5212, %v5372
  %v5374 = vpop.f32.mrf.mxu0
  %5375 = vmatprep.mubr.bf16.mxu0 %v2089
  %5376 = vmatmul.mubr.bf16.gmra.mxu0 %v2088
  %v5377 = vpop.f32.mrf.mxu0
  %v5378 = vadd.f32 %v5217, %v5377
  %v5379 = vpop.f32.mrf.mxu0
  %v5380 = vpop.f32.mrf.mxu0
  %v5381 = vadd.f32 %v5220, %v5380
  %v5382 = vpop.f32.mrf.mxu0
  %5383 = vmatprep.mubr.bf16.mxu0 %v2114
  %5384 = vmatmul.mubr.bf16.gmra.mxu0 %v2113
  %v5385 = vpop.f32.mrf.mxu0
  %v5386 = vadd.f32 %v5225, %v5385
  %v5387 = vpop.f32.mrf.mxu0
  %v5388 = vpop.f32.mrf.mxu0
  %v5389 = vadd.f32 %v5228, %v5388
  %v5390 = vpop.f32.mrf.mxu0
  %5391 = vmatprep.mubr.bf16.mxu0 %v2139
  %5392 = vmatmul.mubr.bf16.gmra.mxu0 %v2138
  %v5393 = vpop.f32.mrf.mxu0
  %v5394 = vadd.f32 %v5233, %v5393
  %v5395 = vpop.f32.mrf.mxu0
  %v5396 = vpop.f32.mrf.mxu0
  %v5397 = vadd.f32 %v5236, %v5396
  %v5398 = vpop.f32.mrf.mxu0
  %5399 = vmatprep.mubr.bf16.mxu0 %v2164
  %5400 = vmatmul.mubr.bf16.gmra.mxu0 %v2163
  %v5401 = vpop.f32.mrf.mxu0
  %v5402 = vadd.f32 %v5241, %v5401
  %v5403 = vpop.f32.mrf.mxu0
  %v5404 = vpop.f32.mrf.mxu0
  %v5405 = vadd.f32 %v5244, %v5404
  %v5406 = vpop.f32.mrf.mxu0
  %5407 = vmatprep.mubr.bf16.mxu0 %v2189
  %5408 = vmatmul.mubr.bf16.gmra.mxu0 %v2188
  %v5409 = vpop.f32.mrf.mxu0
  %v5410 = vadd.f32 %v5249, %v5409
  %v5411 = vpop.f32.mrf.mxu0
  %v5412 = vpop.f32.mrf.mxu0
  %v5413 = vadd.f32 %v5252, %v5412
  %v5414 = vpop.f32.mrf.mxu0
  %5415 = vmatprep.mubr.bf16.mxu0 %v2214
  %5416 = vmatmul.mubr.bf16.gmra.mxu0 %v2213
  %v5417 = vpop.f32.mrf.mxu0
  %v5418 = vadd.f32 %v5257, %v5417
  %v5419 = vpop.f32.mrf.mxu0
  %v5420 = vpop.f32.mrf.mxu0
  %v5421 = vadd.f32 %v5260, %v5420
  %v5422 = vpop.f32.mrf.mxu0
  %5423 = vmatprep.mubr.bf16.mxu0 %v2239
  %5424 = vmatmul.mubr.bf16.gmra.mxu0 %v2238
  %v5425 = vpop.f32.mrf.mxu0
  %v5426 = vadd.f32 %v5265, %v5425
  %v5427 = vpop.f32.mrf.mxu0
  %v5428 = vpop.f32.mrf.mxu0
  %v5429 = vadd.f32 %v5268, %v5428
  %v5430 = vpop.f32.mrf.mxu0
  %5431 = vmatprep.mubr.bf16.mxu0 %v2264
  %5432 = vmatmul.mubr.bf16.gmra.mxu0 %v2263
  %v5433 = vpop.f32.mrf.mxu0
  %v5434 = vadd.f32 %v5273, %v5433
  %v5435 = vpop.f32.mrf.mxu0
  %v5436 = vpop.f32.mrf.mxu0
  %v5437 = vadd.f32 %v5276, %v5436
  %v5438 = vpop.f32.mrf.mxu0
  %5439 = vmatprep.mubr.bf16.mxu0 %v2289
  %5440 = vmatmul.mubr.bf16.gmra.mxu0 %v2288
  %v5441 = vpop.f32.mrf.mxu0
  %v5442 = vadd.f32 %v5281, %v5441
  %v5443 = vpop.f32.mrf.mxu0
  %v5444 = vpop.f32.mrf.mxu0
  %v5445 = vadd.f32 %v5284, %v5444
  %v5446 = vpop.f32.mrf.mxu0
  %5447 = vmatprep.mubr.bf16.mxu0 %v2314
  %5448 = vmatmul.mubr.bf16.gmra.mxu0 %v2313
  %v5449 = vpop.f32.mrf.mxu0
  %v5450 = vadd.f32 %v5289, %v5449
  %v5451 = vpop.f32.mrf.mxu0
  %v5452 = vpop.f32.mrf.mxu0
  %v5453 = vadd.f32 %v5292, %v5452
  %v5454 = vpop.f32.mrf.mxu0
  %5455 = vmatprep.mubr.bf16.mxu0 %v2339
  %5456 = vmatmul.mubr.bf16.gmra.mxu0 %v2338
  %v5457 = vpop.f32.mrf.mxu0
  %v5458 = vadd.f32 %v5297, %v5457
  %v5459 = vpop.f32.mrf.mxu0
  %v5460 = vpop.f32.mrf.mxu0
  %v5461 = vadd.f32 %v5300, %v5460
  %v5462 = vpop.f32.mrf.mxu0
  %5463 = vmatprep.mubr.bf16.mxu0 %v2364
  %5464 = vmatmul.mubr.bf16.gmra.mxu0 %v2363
  %v5465 = vpop.f32.mrf.mxu0
  %v5466 = vadd.f32 %v5305, %v5465
  %v5467 = vpop.f32.mrf.mxu0
  %v5468 = vpop.f32.mrf.mxu0
  %v5469 = vadd.f32 %v5308, %v5468
  %v5470 = vpop.f32.mrf.mxu0
  %5471 = vmatprep.mubr.bf16.mxu0 %v2389
  %5472 = vmatmul.mubr.bf16.gmra.mxu0 %v2388
  %v5473 = vpop.f32.mrf.mxu0
  %v5474 = vadd.f32 %v5313, %v5473
  %v5475 = vpop.f32.mrf.mxu0
  %v5476 = vpop.f32.mrf.mxu0
  %v5477 = vadd.f32 %v5316, %v5476
  %v5478 = vpop.f32.mrf.mxu0
  %5479 = vmatprep.mubr.bf16.mxu0 %v2414
  %5480 = vmatmul.mubr.bf16.gmra.mxu0 %v2413
  %v5481 = vpop.f32.mrf.mxu0
  %v5482 = vadd.f32 %v5321, %v5481
  %v5483 = vpop.f32.mrf.mxu0
  %v5484 = vpop.f32.mrf.mxu0
  %v5485 = vadd.f32 %v5324, %v5484
  %v5486 = vpop.f32.mrf.mxu0
  %5487 = vmatprep.mubr.bf16.mxu0 %v2439
  %5488 = vmatmul.mubr.bf16.gmra.mxu0 %v2438
  %v5489 = vpop.f32.mrf.mxu0
  %v5490 = vadd.f32 %v5329, %v5489
  %v5491 = vpop.f32.mrf.mxu0
  %v5492 = vpop.f32.mrf.mxu0
  %v5493 = vadd.f32 %v5332, %v5492
  %v5494 = vpop.f32.mrf.mxu0
  %5495 = vdwg.mxu0
  %5496 = vmatprep.subr.bf16.mxu0 0
  %5497 = vmatpush1.bf16.msra.mxu0 %v3798
  %5498 = vmatprep.subr.bf16.mxu0 0
  %5499 = vmatpush1.bf16.msra.mxu0 %v3797
  %5500 = vmatprep.subr.bf16.mxu0 0
  %5501 = vmatpush1.bf16.msra.mxu0 %v3796
  %5502 = vmatprep.subr.bf16.mxu0 0
  %5503 = vmatpush1.bf16.msra.mxu0 %v3795
  %5504 = vmatprep.subr.bf16.mxu0 0
  %5505 = vmatpush1.bf16.msra.mxu0 %v3794
  %5506 = vmatprep.subr.bf16.mxu0 0
  %5507 = vmatpush1.bf16.msra.mxu0 %v3793
  %5508 = vmatprep.subr.bf16.mxu0 0
  %5509 = vmatpush1.bf16.msra.mxu0 %v3792
  %5510 = vmatprep.subr.bf16.mxu0 0
  %5511 = vmatpush1.bf16.msra.mxu0 %v3791
  %5512 = vmatprep.subr.bf16.mxu0 0
  %5513 = vmatpush2.bf16.msra.mxu0 %v3806
  %5514 = vmatprep.subr.bf16.mxu0 0
  %5515 = vmatpush2.bf16.msra.mxu0 %v3805
  %5516 = vmatprep.subr.bf16.mxu0 0
  %5517 = vmatpush2.bf16.msra.mxu0 %v3804
  %5518 = vmatprep.subr.bf16.mxu0 0
  %5519 = vmatpush2.bf16.msra.mxu0 %v3803
  %5520 = vmatprep.subr.bf16.mxu0 0
  %5521 = vmatpush2.bf16.msra.mxu0 %v3802
  %5522 = vmatprep.subr.bf16.mxu0 0
  %5523 = vmatpush2.bf16.msra.mxu0 %v3801
  %5524 = vmatprep.subr.bf16.mxu0 0
  %5525 = vmatpush2.bf16.msra.mxu0 %v3800
  %5526 = vmatprep.subr.bf16.mxu0 0
  %5527 = vmatpush2.bf16.msra.mxu0 %v3799
  %5528 = vmatprep.mubr.bf16.mxu0 %v2066
  %5529 = vmatmul.mubr.bf16.gmra.mxu0 %v2065
  %v5530 = vpop.f32.mrf.mxu0
  %v5531 = vadd.f32 %v5370, %v5530
  %v5532 = vpop.f32.mrf.mxu0
  %v5533 = vpop.f32.mrf.mxu0
  %v5534 = vadd.f32 %v5373, %v5533
  %v5535 = vpop.f32.mrf.mxu0
  %5536 = vmatprep.mubr.bf16.mxu0 %v2091
  %5537 = vmatmul.mubr.bf16.gmra.mxu0 %v2090
  %v5538 = vpop.f32.mrf.mxu0
  %v5539 = vadd.f32 %v5378, %v5538
  %v5540 = vpop.f32.mrf.mxu0
  %v5541 = vpop.f32.mrf.mxu0
  %v5542 = vadd.f32 %v5381, %v5541
  %v5543 = vpop.f32.mrf.mxu0
  %5544 = vmatprep.mubr.bf16.mxu0 %v2116
  %5545 = vmatmul.mubr.bf16.gmra.mxu0 %v2115
  %v5546 = vpop.f32.mrf.mxu0
  %v5547 = vadd.f32 %v5386, %v5546
  %v5548 = vpop.f32.mrf.mxu0
  %v5549 = vpop.f32.mrf.mxu0
  %v5550 = vadd.f32 %v5389, %v5549
  %v5551 = vpop.f32.mrf.mxu0
  %5552 = vmatprep.mubr.bf16.mxu0 %v2141
  %5553 = vmatmul.mubr.bf16.gmra.mxu0 %v2140
  %v5554 = vpop.f32.mrf.mxu0
  %v5555 = vadd.f32 %v5394, %v5554
  %v5556 = vpop.f32.mrf.mxu0
  %v5557 = vpop.f32.mrf.mxu0
  %v5558 = vadd.f32 %v5397, %v5557
  %v5559 = vpop.f32.mrf.mxu0
  %5560 = vmatprep.mubr.bf16.mxu0 %v2166
  %5561 = vmatmul.mubr.bf16.gmra.mxu0 %v2165
  %v5562 = vpop.f32.mrf.mxu0
  %v5563 = vadd.f32 %v5402, %v5562
  %v5564 = vpop.f32.mrf.mxu0
  %v5565 = vpop.f32.mrf.mxu0
  %v5566 = vadd.f32 %v5405, %v5565
  %v5567 = vpop.f32.mrf.mxu0
  %5568 = vmatprep.mubr.bf16.mxu0 %v2191
  %5569 = vmatmul.mubr.bf16.gmra.mxu0 %v2190
  %v5570 = vpop.f32.mrf.mxu0
  %v5571 = vadd.f32 %v5410, %v5570
  %v5572 = vpop.f32.mrf.mxu0
  %v5573 = vpop.f32.mrf.mxu0
  %v5574 = vadd.f32 %v5413, %v5573
  %v5575 = vpop.f32.mrf.mxu0
  %5576 = vmatprep.mubr.bf16.mxu0 %v2216
  %5577 = vmatmul.mubr.bf16.gmra.mxu0 %v2215
  %v5578 = vpop.f32.mrf.mxu0
  %v5579 = vadd.f32 %v5418, %v5578
  %v5580 = vpop.f32.mrf.mxu0
  %v5581 = vpop.f32.mrf.mxu0
  %v5582 = vadd.f32 %v5421, %v5581
  %v5583 = vpop.f32.mrf.mxu0
  %5584 = vmatprep.mubr.bf16.mxu0 %v2241
  %5585 = vmatmul.mubr.bf16.gmra.mxu0 %v2240
  %v5586 = vpop.f32.mrf.mxu0
  %v5587 = vadd.f32 %v5426, %v5586
  %v5588 = vpop.f32.mrf.mxu0
  %v5589 = vpop.f32.mrf.mxu0
  %v5590 = vadd.f32 %v5429, %v5589
  %v5591 = vpop.f32.mrf.mxu0
  %5592 = vmatprep.mubr.bf16.mxu0 %v2266
  %5593 = vmatmul.mubr.bf16.gmra.mxu0 %v2265
  %v5594 = vpop.f32.mrf.mxu0
  %v5595 = vadd.f32 %v5434, %v5594
  %v5596 = vpop.f32.mrf.mxu0
  %v5597 = vpop.f32.mrf.mxu0
  %v5598 = vadd.f32 %v5437, %v5597
  %v5599 = vpop.f32.mrf.mxu0
  %5600 = vmatprep.mubr.bf16.mxu0 %v2291
  %5601 = vmatmul.mubr.bf16.gmra.mxu0 %v2290
  %v5602 = vpop.f32.mrf.mxu0
  %v5603 = vadd.f32 %v5442, %v5602
  %v5604 = vpop.f32.mrf.mxu0
  %v5605 = vpop.f32.mrf.mxu0
  %v5606 = vadd.f32 %v5445, %v5605
  %v5607 = vpop.f32.mrf.mxu0
  %5608 = vmatprep.mubr.bf16.mxu0 %v2316
  %5609 = vmatmul.mubr.bf16.gmra.mxu0 %v2315
  %v5610 = vpop.f32.mrf.mxu0
  %v5611 = vadd.f32 %v5450, %v5610
  %v5612 = vpop.f32.mrf.mxu0
  %v5613 = vpop.f32.mrf.mxu0
  %v5614 = vadd.f32 %v5453, %v5613
  %v5615 = vpop.f32.mrf.mxu0
  %5616 = vmatprep.mubr.bf16.mxu0 %v2341
  %5617 = vmatmul.mubr.bf16.gmra.mxu0 %v2340
  %v5618 = vpop.f32.mrf.mxu0
  %v5619 = vadd.f32 %v5458, %v5618
  %v5620 = vpop.f32.mrf.mxu0
  %v5621 = vpop.f32.mrf.mxu0
  %v5622 = vadd.f32 %v5461, %v5621
  %v5623 = vpop.f32.mrf.mxu0
  %5624 = vmatprep.mubr.bf16.mxu0 %v2366
  %5625 = vmatmul.mubr.bf16.gmra.mxu0 %v2365
  %v5626 = vpop.f32.mrf.mxu0
  %v5627 = vadd.f32 %v5466, %v5626
  %v5628 = vpop.f32.mrf.mxu0
  %v5629 = vpop.f32.mrf.mxu0
  %v5630 = vadd.f32 %v5469, %v5629
  %v5631 = vpop.f32.mrf.mxu0
  %5632 = vmatprep.mubr.bf16.mxu0 %v2391
  %5633 = vmatmul.mubr.bf16.gmra.mxu0 %v2390
  %v5634 = vpop.f32.mrf.mxu0
  %v5635 = vadd.f32 %v5474, %v5634
  %v5636 = vpop.f32.mrf.mxu0
  %v5637 = vpop.f32.mrf.mxu0
  %v5638 = vadd.f32 %v5477, %v5637
  %v5639 = vpop.f32.mrf.mxu0
  %5640 = vmatprep.mubr.bf16.mxu0 %v2416
  %5641 = vmatmul.mubr.bf16.gmra.mxu0 %v2415
  %v5642 = vpop.f32.mrf.mxu0
  %v5643 = vadd.f32 %v5482, %v5642
  %v5644 = vpop.f32.mrf.mxu0
  %v5645 = vpop.f32.mrf.mxu0
  %v5646 = vadd.f32 %v5485, %v5645
  %v5647 = vpop.f32.mrf.mxu0
  %5648 = vmatprep.mubr.bf16.mxu0 %v2441
  %5649 = vmatmul.mubr.bf16.gmra.mxu0 %v2440
  %v5650 = vpop.f32.mrf.mxu0
  %v5651 = vadd.f32 %v5490, %v5650
  %v5652 = vpop.f32.mrf.mxu0
  %v5653 = vpop.f32.mrf.mxu0
  %v5654 = vadd.f32 %v5493, %v5653
  %v5655 = vpop.f32.mrf.mxu0
  %5656 = vdwg.mxu0
  %5657 = vmatprep.subr.bf16.mxu0 0
  %5658 = vmatpush1.bf16.msra.mxu0 %v3814
  %5659 = vmatprep.subr.bf16.mxu0 0
  %5660 = vmatpush1.bf16.msra.mxu0 %v3813
  %5661 = vmatprep.subr.bf16.mxu0 0
  %5662 = vmatpush1.bf16.msra.mxu0 %v3812
  %5663 = vmatprep.subr.bf16.mxu0 0
  %5664 = vmatpush1.bf16.msra.mxu0 %v3811
  %5665 = vmatprep.subr.bf16.mxu0 0
  %5666 = vmatpush1.bf16.msra.mxu0 %v3810
  %5667 = vmatprep.subr.bf16.mxu0 0
  %5668 = vmatpush1.bf16.msra.mxu0 %v3809
  %5669 = vmatprep.subr.bf16.mxu0 0
  %5670 = vmatpush1.bf16.msra.mxu0 %v3808
  %5671 = vmatprep.subr.bf16.mxu0 0
  %5672 = vmatpush1.bf16.msra.mxu0 %v3807
  %5673 = vmatprep.subr.bf16.mxu0 0
  %5674 = vmatpush2.bf16.msra.mxu0 %v3822
  %5675 = vmatprep.subr.bf16.mxu0 0
  %5676 = vmatpush2.bf16.msra.mxu0 %v3821
  %5677 = vmatprep.subr.bf16.mxu0 0
  %5678 = vmatpush2.bf16.msra.mxu0 %v3820
  %5679 = vmatprep.subr.bf16.mxu0 0
  %5680 = vmatpush2.bf16.msra.mxu0 %v3819
  %5681 = vmatprep.subr.bf16.mxu0 0
  %5682 = vmatpush2.bf16.msra.mxu0 %v3818
  %5683 = vmatprep.subr.bf16.mxu0 0
  %5684 = vmatpush2.bf16.msra.mxu0 %v3817
  %5685 = vmatprep.subr.bf16.mxu0 0
  %5686 = vmatpush2.bf16.msra.mxu0 %v3816
  %5687 = vmatprep.subr.bf16.mxu0 0
  %5688 = vmatpush2.bf16.msra.mxu0 %v3815
  %5689 = vmatprep.mubr.bf16.mxu0 %v2068
  %5690 = vmatmul.mubr.bf16.gmra.mxu0 %v2067
  %v5691 = vpop.f32.mrf.mxu0
  %v5692 = vadd.f32 %v5531, %v5691
  %v5693 = vpop.f32.mrf.mxu0
  %v5694 = vpop.f32.mrf.mxu0
  %v5695 = vadd.f32 %v5534, %v5694
  %v5696 = vpop.f32.mrf.mxu0
  %5697 = vmatprep.mubr.bf16.mxu0 %v2093
  %5698 = vmatmul.mubr.bf16.gmra.mxu0 %v2092
  %v5699 = vpop.f32.mrf.mxu0
  %v5700 = vadd.f32 %v5539, %v5699
  %v5701 = vpop.f32.mrf.mxu0
  %v5702 = vpop.f32.mrf.mxu0
  %v5703 = vadd.f32 %v5542, %v5702
  %v5704 = vpop.f32.mrf.mxu0
  %5705 = vmatprep.mubr.bf16.mxu0 %v2118
  %5706 = vmatmul.mubr.bf16.gmra.mxu0 %v2117
  %v5707 = vpop.f32.mrf.mxu0
  %v5708 = vadd.f32 %v5547, %v5707
  %v5709 = vpop.f32.mrf.mxu0
  %v5710 = vpop.f32.mrf.mxu0
  %v5711 = vadd.f32 %v5550, %v5710
  %v5712 = vpop.f32.mrf.mxu0
  %5713 = vmatprep.mubr.bf16.mxu0 %v2143
  %5714 = vmatmul.mubr.bf16.gmra.mxu0 %v2142
  %v5715 = vpop.f32.mrf.mxu0
  %v5716 = vadd.f32 %v5555, %v5715
  %v5717 = vpop.f32.mrf.mxu0
  %v5718 = vpop.f32.mrf.mxu0
  %v5719 = vadd.f32 %v5558, %v5718
  %v5720 = vpop.f32.mrf.mxu0
  %5721 = vmatprep.mubr.bf16.mxu0 %v2168
  %5722 = vmatmul.mubr.bf16.gmra.mxu0 %v2167
  %v5723 = vpop.f32.mrf.mxu0
  %v5724 = vadd.f32 %v5563, %v5723
  %v5725 = vpop.f32.mrf.mxu0
  %v5726 = vpop.f32.mrf.mxu0
  %v5727 = vadd.f32 %v5566, %v5726
  %v5728 = vpop.f32.mrf.mxu0
  %5729 = vmatprep.mubr.bf16.mxu0 %v2193
  %5730 = vmatmul.mubr.bf16.gmra.mxu0 %v2192
  %v5731 = vpop.f32.mrf.mxu0
  %v5732 = vadd.f32 %v5571, %v5731
  %v5733 = vpop.f32.mrf.mxu0
  %v5734 = vpop.f32.mrf.mxu0
  %v5735 = vadd.f32 %v5574, %v5734
  %v5736 = vpop.f32.mrf.mxu0
  %5737 = vmatprep.mubr.bf16.mxu0 %v2218
  %5738 = vmatmul.mubr.bf16.gmra.mxu0 %v2217
  %v5739 = vpop.f32.mrf.mxu0
  %v5740 = vadd.f32 %v5579, %v5739
  %v5741 = vpop.f32.mrf.mxu0
  %v5742 = vpop.f32.mrf.mxu0
  %v5743 = vadd.f32 %v5582, %v5742
  %v5744 = vpop.f32.mrf.mxu0
  %5745 = vmatprep.mubr.bf16.mxu0 %v2243
  %5746 = vmatmul.mubr.bf16.gmra.mxu0 %v2242
  %v5747 = vpop.f32.mrf.mxu0
  %v5748 = vadd.f32 %v5587, %v5747
  %v5749 = vpop.f32.mrf.mxu0
  %v5750 = vpop.f32.mrf.mxu0
  %v5751 = vadd.f32 %v5590, %v5750
  %v5752 = vpop.f32.mrf.mxu0
  %5753 = vmatprep.mubr.bf16.mxu0 %v2268
  %5754 = vmatmul.mubr.bf16.gmra.mxu0 %v2267
  %v5755 = vpop.f32.mrf.mxu0
  %v5756 = vadd.f32 %v5595, %v5755
  %v5757 = vpop.f32.mrf.mxu0
  %v5758 = vpop.f32.mrf.mxu0
  %v5759 = vadd.f32 %v5598, %v5758
  %v5760 = vpop.f32.mrf.mxu0
  %5761 = vmatprep.mubr.bf16.mxu0 %v2293
  %5762 = vmatmul.mubr.bf16.gmra.mxu0 %v2292
  %v5763 = vpop.f32.mrf.mxu0
  %v5764 = vadd.f32 %v5603, %v5763
  %v5765 = vpop.f32.mrf.mxu0
  %v5766 = vpop.f32.mrf.mxu0
  %v5767 = vadd.f32 %v5606, %v5766
  %v5768 = vpop.f32.mrf.mxu0
  %5769 = vmatprep.mubr.bf16.mxu0 %v2318
  %5770 = vmatmul.mubr.bf16.gmra.mxu0 %v2317
  %v5771 = vpop.f32.mrf.mxu0
  %v5772 = vadd.f32 %v5611, %v5771
  %v5773 = vpop.f32.mrf.mxu0
  %v5774 = vpop.f32.mrf.mxu0
  %v5775 = vadd.f32 %v5614, %v5774
  %v5776 = vpop.f32.mrf.mxu0
  %5777 = vmatprep.mubr.bf16.mxu0 %v2343
  %5778 = vmatmul.mubr.bf16.gmra.mxu0 %v2342
  %v5779 = vpop.f32.mrf.mxu0
  %v5780 = vadd.f32 %v5619, %v5779
  %v5781 = vpop.f32.mrf.mxu0
  %v5782 = vpop.f32.mrf.mxu0
  %v5783 = vadd.f32 %v5622, %v5782
  %v5784 = vpop.f32.mrf.mxu0
  %5785 = vmatprep.mubr.bf16.mxu0 %v2368
  %5786 = vmatmul.mubr.bf16.gmra.mxu0 %v2367
  %v5787 = vpop.f32.mrf.mxu0
  %v5788 = vadd.f32 %v5627, %v5787
  %v5789 = vpop.f32.mrf.mxu0
  %v5790 = vpop.f32.mrf.mxu0
  %v5791 = vadd.f32 %v5630, %v5790
  %v5792 = vpop.f32.mrf.mxu0
  %5793 = vmatprep.mubr.bf16.mxu0 %v2393
  %5794 = vmatmul.mubr.bf16.gmra.mxu0 %v2392
  %v5795 = vpop.f32.mrf.mxu0
  %v5796 = vadd.f32 %v5635, %v5795
  %v5797 = vpop.f32.mrf.mxu0
  %v5798 = vpop.f32.mrf.mxu0
  %v5799 = vadd.f32 %v5638, %v5798
  %v5800 = vpop.f32.mrf.mxu0
  %5801 = vmatprep.mubr.bf16.mxu0 %v2418
  %5802 = vmatmul.mubr.bf16.gmra.mxu0 %v2417
  %v5803 = vpop.f32.mrf.mxu0
  %v5804 = vadd.f32 %v5643, %v5803
  %v5805 = vpop.f32.mrf.mxu0
  %v5806 = vpop.f32.mrf.mxu0
  %v5807 = vadd.f32 %v5646, %v5806
  %v5808 = vpop.f32.mrf.mxu0
  %5809 = vmatprep.mubr.bf16.mxu0 %v2443
  %5810 = vmatmul.mubr.bf16.gmra.mxu0 %v2442
  %v5811 = vpop.f32.mrf.mxu0
  %v5812 = vadd.f32 %v5651, %v5811
  %v5813 = vpop.f32.mrf.mxu0
  %v5814 = vpop.f32.mrf.mxu0
  %v5815 = vadd.f32 %v5654, %v5814
  %v5816 = vpop.f32.mrf.mxu0
  %5817 = vdwg.mxu0
  %5818 = vmatprep.subr.bf16.mxu0 0
  %5819 = vmatpush1.bf16.msra.mxu0 %v3830
  %5820 = vmatprep.subr.bf16.mxu0 0
  %5821 = vmatpush1.bf16.msra.mxu0 %v3829
  %5822 = vmatprep.subr.bf16.mxu0 0
  %5823 = vmatpush1.bf16.msra.mxu0 %v3828
  %5824 = vmatprep.subr.bf16.mxu0 0
  %5825 = vmatpush1.bf16.msra.mxu0 %v3827
  %5826 = vmatprep.subr.bf16.mxu0 0
  %5827 = vmatpush1.bf16.msra.mxu0 %v3826
  %5828 = vmatprep.subr.bf16.mxu0 0
  %5829 = vmatpush1.bf16.msra.mxu0 %v3825
  %5830 = vmatprep.subr.bf16.mxu0 0
  %5831 = vmatpush1.bf16.msra.mxu0 %v3824
  %5832 = vmatprep.subr.bf16.mxu0 0
  %5833 = vmatpush1.bf16.msra.mxu0 %v3823
  %5834 = vmatprep.subr.bf16.mxu0 0
  %5835 = vmatpush2.bf16.msra.mxu0 %v3838
  %5836 = vmatprep.subr.bf16.mxu0 0
  %5837 = vmatpush2.bf16.msra.mxu0 %v3837
  %5838 = vmatprep.subr.bf16.mxu0 0
  %5839 = vmatpush2.bf16.msra.mxu0 %v3836
  %5840 = vmatprep.subr.bf16.mxu0 0
  %5841 = vmatpush2.bf16.msra.mxu0 %v3835
  %5842 = vmatprep.subr.bf16.mxu0 0
  %5843 = vmatpush2.bf16.msra.mxu0 %v3834
  %5844 = vmatprep.subr.bf16.mxu0 0
  %5845 = vmatpush2.bf16.msra.mxu0 %v3833
  %5846 = vmatprep.subr.bf16.mxu0 0
  %5847 = vmatpush2.bf16.msra.mxu0 %v3832
  %5848 = vmatprep.subr.bf16.mxu0 0
  %5849 = vmatpush2.bf16.msra.mxu0 %v3831
  %5850 = vmatprep.mubr.bf16.mxu0 %v2070
  %5851 = vmatmul.mubr.bf16.gmra.mxu0 %v2069
  %v5852 = vpop.f32.mrf.mxu0
  %v5853 = vadd.f32 %v5692, %v5852
  %v5854 = vpop.f32.mrf.mxu0
  %v5855 = vpop.f32.mrf.mxu0
  %v5856 = vadd.f32 %v5695, %v5855
  %v5857 = vpop.f32.mrf.mxu0
  %5858 = vmatprep.mubr.bf16.mxu0 %v2095
  %5859 = vmatmul.mubr.bf16.gmra.mxu0 %v2094
  %v5860 = vpop.f32.mrf.mxu0
  %v5861 = vadd.f32 %v5700, %v5860
  %v5862 = vpop.f32.mrf.mxu0
  %v5863 = vpop.f32.mrf.mxu0
  %v5864 = vadd.f32 %v5703, %v5863
  %v5865 = vpop.f32.mrf.mxu0
  %5866 = vmatprep.mubr.bf16.mxu0 %v2120
  %5867 = vmatmul.mubr.bf16.gmra.mxu0 %v2119
  %v5868 = vpop.f32.mrf.mxu0
  %v5869 = vadd.f32 %v5708, %v5868
  %v5870 = vpop.f32.mrf.mxu0
  %v5871 = vpop.f32.mrf.mxu0
  %v5872 = vadd.f32 %v5711, %v5871
  %v5873 = vpop.f32.mrf.mxu0
  %5874 = vmatprep.mubr.bf16.mxu0 %v2145
  %5875 = vmatmul.mubr.bf16.gmra.mxu0 %v2144
  %v5876 = vpop.f32.mrf.mxu0
  %v5877 = vadd.f32 %v5716, %v5876
  %v5878 = vpop.f32.mrf.mxu0
  %v5879 = vpop.f32.mrf.mxu0
  %v5880 = vadd.f32 %v5719, %v5879
  %v5881 = vpop.f32.mrf.mxu0
  %5882 = vmatprep.mubr.bf16.mxu0 %v2170
  %5883 = vmatmul.mubr.bf16.gmra.mxu0 %v2169
  %v5884 = vpop.f32.mrf.mxu0
  %v5885 = vadd.f32 %v5724, %v5884
  %v5886 = vpop.f32.mrf.mxu0
  %v5887 = vpop.f32.mrf.mxu0
  %v5888 = vadd.f32 %v5727, %v5887
  %v5889 = vpop.f32.mrf.mxu0
  %5890 = vmatprep.mubr.bf16.mxu0 %v2195
  %5891 = vmatmul.mubr.bf16.gmra.mxu0 %v2194
  %v5892 = vpop.f32.mrf.mxu0
  %v5893 = vadd.f32 %v5732, %v5892
  %v5894 = vpop.f32.mrf.mxu0
  %v5895 = vpop.f32.mrf.mxu0
  %v5896 = vadd.f32 %v5735, %v5895
  %v5897 = vpop.f32.mrf.mxu0
  %5898 = vmatprep.mubr.bf16.mxu0 %v2220
  %5899 = vmatmul.mubr.bf16.gmra.mxu0 %v2219
  %v5900 = vpop.f32.mrf.mxu0
  %v5901 = vadd.f32 %v5740, %v5900
  %v5902 = vpop.f32.mrf.mxu0
  %v5903 = vpop.f32.mrf.mxu0
  %v5904 = vadd.f32 %v5743, %v5903
  %v5905 = vpop.f32.mrf.mxu0
  %5906 = vmatprep.mubr.bf16.mxu0 %v2245
  %5907 = vmatmul.mubr.bf16.gmra.mxu0 %v2244
  %v5908 = vpop.f32.mrf.mxu0
  %v5909 = vadd.f32 %v5748, %v5908
  %v5910 = vpop.f32.mrf.mxu0
  %v5911 = vpop.f32.mrf.mxu0
  %v5912 = vadd.f32 %v5751, %v5911
  %v5913 = vpop.f32.mrf.mxu0
  %5914 = vmatprep.mubr.bf16.mxu0 %v2270
  %5915 = vmatmul.mubr.bf16.gmra.mxu0 %v2269
  %v5916 = vpop.f32.mrf.mxu0
  %v5917 = vadd.f32 %v5756, %v5916
  %v5918 = vpop.f32.mrf.mxu0
  %v5919 = vpop.f32.mrf.mxu0
  %v5920 = vadd.f32 %v5759, %v5919
  %v5921 = vpop.f32.mrf.mxu0
  %5922 = vmatprep.mubr.bf16.mxu0 %v2295
  %5923 = vmatmul.mubr.bf16.gmra.mxu0 %v2294
  %v5924 = vpop.f32.mrf.mxu0
  %v5925 = vadd.f32 %v5764, %v5924
  %v5926 = vpop.f32.mrf.mxu0
  %v5927 = vpop.f32.mrf.mxu0
  %v5928 = vadd.f32 %v5767, %v5927
  %v5929 = vpop.f32.mrf.mxu0
  %5930 = vmatprep.mubr.bf16.mxu0 %v2320
  %5931 = vmatmul.mubr.bf16.gmra.mxu0 %v2319
  %v5932 = vpop.f32.mrf.mxu0
  %v5933 = vadd.f32 %v5772, %v5932
  %v5934 = vpop.f32.mrf.mxu0
  %v5935 = vpop.f32.mrf.mxu0
  %v5936 = vadd.f32 %v5775, %v5935
  %v5937 = vpop.f32.mrf.mxu0
  %5938 = vmatprep.mubr.bf16.mxu0 %v2345
  %5939 = vmatmul.mubr.bf16.gmra.mxu0 %v2344
  %v5940 = vpop.f32.mrf.mxu0
  %v5941 = vadd.f32 %v5780, %v5940
  %v5942 = vpop.f32.mrf.mxu0
  %v5943 = vpop.f32.mrf.mxu0
  %v5944 = vadd.f32 %v5783, %v5943
  %v5945 = vpop.f32.mrf.mxu0
  %5946 = vmatprep.mubr.bf16.mxu0 %v2370
  %5947 = vmatmul.mubr.bf16.gmra.mxu0 %v2369
  %v5948 = vpop.f32.mrf.mxu0
  %v5949 = vadd.f32 %v5788, %v5948
  %v5950 = vpop.f32.mrf.mxu0
  %v5951 = vpop.f32.mrf.mxu0
  %v5952 = vadd.f32 %v5791, %v5951
  %v5953 = vpop.f32.mrf.mxu0
  %5954 = vmatprep.mubr.bf16.mxu0 %v2395
  %5955 = vmatmul.mubr.bf16.gmra.mxu0 %v2394
  %v5956 = vpop.f32.mrf.mxu0
  %v5957 = vadd.f32 %v5796, %v5956
  %v5958 = vpop.f32.mrf.mxu0
  %v5959 = vpop.f32.mrf.mxu0
  %v5960 = vadd.f32 %v5799, %v5959
  %v5961 = vpop.f32.mrf.mxu0
  %5962 = vmatprep.mubr.bf16.mxu0 %v2420
  %5963 = vmatmul.mubr.bf16.gmra.mxu0 %v2419
  %v5964 = vpop.f32.mrf.mxu0
  %v5965 = vadd.f32 %v5804, %v5964
  %v5966 = vpop.f32.mrf.mxu0
  %v5967 = vpop.f32.mrf.mxu0
  %v5968 = vadd.f32 %v5807, %v5967
  %v5969 = vpop.f32.mrf.mxu0
  %5970 = vmatprep.mubr.bf16.mxu0 %v2445
  %5971 = vmatmul.mubr.bf16.gmra.mxu0 %v2444
  %v5972 = vpop.f32.mrf.mxu0
  %v5973 = vadd.f32 %v5812, %v5972
  %v5974 = vpop.f32.mrf.mxu0
  %v5975 = vpop.f32.mrf.mxu0
  %v5976 = vadd.f32 %v5815, %v5975
  %v5977 = vpop.f32.mrf.mxu0
  %5978 = vdwg.mxu0
  %5979 = vmatprep.subr.bf16.mxu0 0
  %5980 = vmatpush1.bf16.msra.mxu0 %v3846
  %5981 = vmatprep.subr.bf16.mxu0 0
  %5982 = vmatpush1.bf16.msra.mxu0 %v3845
  %5983 = vmatprep.subr.bf16.mxu0 0
  %5984 = vmatpush1.bf16.msra.mxu0 %v3844
  %5985 = vmatprep.subr.bf16.mxu0 0
  %5986 = vmatpush1.bf16.msra.mxu0 %v3843
  %5987 = vmatprep.subr.bf16.mxu0 0
  %5988 = vmatpush1.bf16.msra.mxu0 %v3842
  %5989 = vmatprep.subr.bf16.mxu0 0
  %5990 = vmatpush1.bf16.msra.mxu0 %v3841
  %5991 = vmatprep.subr.bf16.mxu0 0
  %5992 = vmatpush1.bf16.msra.mxu0 %v3840
  %5993 = vmatprep.subr.bf16.mxu0 0
  %5994 = vmatpush1.bf16.msra.mxu0 %v3839
  %5995 = vmatprep.subr.bf16.mxu0 0
  %5996 = vmatpush2.bf16.msra.mxu0 0
  %5997 = vmatprep.subr.bf16.mxu0 0
  %5998 = vmatpush2.bf16.msra.mxu0 0
  %5999 = vmatprep.subr.bf16.mxu0 0
  %6000 = vmatpush2.bf16.msra.mxu0 0
  %6001 = vmatprep.subr.bf16.mxu0 0
  %6002 = vmatpush2.bf16.msra.mxu0 0
  %6003 = vmatprep.subr.bf16.mxu0 0
  %6004 = vmatpush2.bf16.msra.mxu0 0
  %6005 = vmatprep.subr.bf16.mxu0 0
  %6006 = vmatpush2.bf16.msra.mxu0 0
  %6007 = vmatprep.subr.bf16.mxu0 0
  %6008 = vmatpush2.bf16.msra.mxu0 0
  %6009 = vmatprep.subr.bf16.mxu0 0
  %6010 = vmatpush2.bf16.msra.mxu0 0
  %6011 = vmatprep.mubr.bf16.mxu0 0
  %6012 = vmatmul.mubr.bf16.gmra.mxu0 %v2071
  %v6013 = vpop.f32.mrf.mxu0
  %v6014 = vadd.f32 %v5853, %v6013
  %v6015 = vpop.f32.mrf.mxu0
  %v6016 = vpop.f32.mrf.mxu0
  %v6017 = vadd.f32 %v5856, %v6016
  %v6018 = vpop.f32.mrf.mxu0
  %6019 = vmatprep.mubr.bf16.mxu0 0
  %6020 = vmatmul.mubr.bf16.gmra.mxu0 %v2096
  %v6021 = vpop.f32.mrf.mxu0
  %v6022 = vadd.f32 %v5861, %v6021
  %v6023 = vpop.f32.mrf.mxu0
  %v6024 = vpop.f32.mrf.mxu0
  %v6025 = vadd.f32 %v5864, %v6024
  %v6026 = vpop.f32.mrf.mxu0
  %6027 = vmatprep.mubr.bf16.mxu0 0
  %6028 = vmatmul.mubr.bf16.gmra.mxu0 %v2121
  %v6029 = vpop.f32.mrf.mxu0
  %v6030 = vadd.f32 %v5869, %v6029
  %v6031 = vpop.f32.mrf.mxu0
  %v6032 = vpop.f32.mrf.mxu0
  %v6033 = vadd.f32 %v5872, %v6032
  %v6034 = vpop.f32.mrf.mxu0
  %6035 = vmatprep.mubr.bf16.mxu0 0
  %6036 = vmatmul.mubr.bf16.gmra.mxu0 %v2146
  %v6037 = vpop.f32.mrf.mxu0
  %v6038 = vadd.f32 %v5877, %v6037
  %v6039 = vpop.f32.mrf.mxu0
  %v6040 = vpop.f32.mrf.mxu0
  %v6041 = vadd.f32 %v5880, %v6040
  %v6042 = vpop.f32.mrf.mxu0
  %6043 = vmatprep.mubr.bf16.mxu0 0
  %6044 = vmatmul.mubr.bf16.gmra.mxu0 %v2171
  %v6045 = vpop.f32.mrf.mxu0
  %v6046 = vadd.f32 %v5885, %v6045
  %v6047 = vpop.f32.mrf.mxu0
  %v6048 = vpop.f32.mrf.mxu0
  %v6049 = vadd.f32 %v5888, %v6048
  %v6050 = vpop.f32.mrf.mxu0
  %6051 = vmatprep.mubr.bf16.mxu0 0
  %6052 = vmatmul.mubr.bf16.gmra.mxu0 %v2196
  %v6053 = vpop.f32.mrf.mxu0
  %v6054 = vadd.f32 %v5893, %v6053
  %v6055 = vpop.f32.mrf.mxu0
  %v6056 = vpop.f32.mrf.mxu0
  %v6057 = vadd.f32 %v5896, %v6056
  %v6058 = vpop.f32.mrf.mxu0
  %6059 = vmatprep.mubr.bf16.mxu0 0
  %6060 = vmatmul.mubr.bf16.gmra.mxu0 %v2221
  %v6061 = vpop.f32.mrf.mxu0
  %v6062 = vadd.f32 %v5901, %v6061
  %v6063 = vpop.f32.mrf.mxu0
  %v6064 = vpop.f32.mrf.mxu0
  %v6065 = vadd.f32 %v5904, %v6064
  %v6066 = vpop.f32.mrf.mxu0
  %6067 = vmatprep.mubr.bf16.mxu0 0
  %6068 = vmatmul.mubr.bf16.gmra.mxu0 %v2246
  %v6069 = vpop.f32.mrf.mxu0
  %v6070 = vadd.f32 %v5909, %v6069
  %v6071 = vpop.f32.mrf.mxu0
  %v6072 = vpop.f32.mrf.mxu0
  %v6073 = vadd.f32 %v5912, %v6072
  %v6074 = vpop.f32.mrf.mxu0
  %6075 = vmatprep.mubr.bf16.mxu0 0
  %6076 = vmatmul.mubr.bf16.gmra.mxu0 %v2271
  %v6077 = vpop.f32.mrf.mxu0
  %v6078 = vadd.f32 %v5917, %v6077
  %v6079 = vpop.f32.mrf.mxu0
  %v6080 = vpop.f32.mrf.mxu0
  %v6081 = vadd.f32 %v5920, %v6080
  %v6082 = vpop.f32.mrf.mxu0
  %6083 = vmatprep.mubr.bf16.mxu0 0
  %6084 = vmatmul.mubr.bf16.gmra.mxu0 %v2296
  %v6085 = vpop.f32.mrf.mxu0
  %v6086 = vadd.f32 %v5925, %v6085
  %v6087 = vpop.f32.mrf.mxu0
  %v6088 = vpop.f32.mrf.mxu0
  %v6089 = vadd.f32 %v5928, %v6088
  %v6090 = vpop.f32.mrf.mxu0
  %6091 = vmatprep.mubr.bf16.mxu0 0
  %6092 = vmatmul.mubr.bf16.gmra.mxu0 %v2321
  %v6093 = vpop.f32.mrf.mxu0
  %v6094 = vadd.f32 %v5933, %v6093
  %v6095 = vpop.f32.mrf.mxu0
  %v6096 = vpop.f32.mrf.mxu0
  %v6097 = vadd.f32 %v5936, %v6096
  %v6098 = vpop.f32.mrf.mxu0
  %6099 = vmatprep.mubr.bf16.mxu0 0
  %6100 = vmatmul.mubr.bf16.gmra.mxu0 %v2346
  %v6101 = vpop.f32.mrf.mxu0
  %v6102 = vadd.f32 %v5941, %v6101
  %v6103 = vpop.f32.mrf.mxu0
  %v6104 = vpop.f32.mrf.mxu0
  %v6105 = vadd.f32 %v5944, %v6104
  %v6106 = vpop.f32.mrf.mxu0
  %6107 = vmatprep.mubr.bf16.mxu0 0
  %6108 = vmatmul.mubr.bf16.gmra.mxu0 %v2371
  %v6109 = vpop.f32.mrf.mxu0
  %v6110 = vadd.f32 %v5949, %v6109
  %v6111 = vpop.f32.mrf.mxu0
  %v6112 = vpop.f32.mrf.mxu0
  %v6113 = vadd.f32 %v5952, %v6112
  %v6114 = vpop.f32.mrf.mxu0
  %6115 = vmatprep.mubr.bf16.mxu0 0
  %6116 = vmatmul.mubr.bf16.gmra.mxu0 %v2396
  %v6117 = vpop.f32.mrf.mxu0
  %v6118 = vadd.f32 %v5957, %v6117
  %v6119 = vpop.f32.mrf.mxu0
  %v6120 = vpop.f32.mrf.mxu0
  %v6121 = vadd.f32 %v5960, %v6120
  %v6122 = vpop.f32.mrf.mxu0
  %6123 = vmatprep.mubr.bf16.mxu0 0
  %6124 = vmatmul.mubr.bf16.gmra.mxu0 %v2421
  %v6125 = vpop.f32.mrf.mxu0
  %v6126 = vadd.f32 %v5965, %v6125
  %v6127 = vpop.f32.mrf.mxu0
  %v6128 = vpop.f32.mrf.mxu0
  %v6129 = vadd.f32 %v5968, %v6128
  %v6130 = vpop.f32.mrf.mxu0
  %6131 = vmatprep.mubr.bf16.mxu0 0
  %6132 = vmatmul.mubr.bf16.gmra.mxu0 %v2446
  %v6133 = vpop.f32.mrf.mxu0
  %v6134 = vadd.f32 %v5973, %v6133
  %v6135 = vpop.f32.mrf.mxu0
  %v6136 = vpop.f32.mrf.mxu0
  %v6137 = vadd.f32 %v5976, %v6136
  %v6138 = vpop.f32.mrf.mxu0
  %6139 = vdwg.mxu0
  %v6140 = vmax.f32 %v6014, %v6030
  %v6141 = vmax.f32 %v6017, %v6033
  %v6142 = vmax.f32 %v6022, %v6038
  %v6143 = vmax.f32 %v6025, %v6041
  %v6144 = vmax.f32 %v6078, %v6094
  %v6145 = vmax.f32 %v6081, %v6097
  %v6146 = vmax.f32 %v6086, %v6102
  %v6147 = vmax.f32 %v6089, %v6105
  %v6148 = vmax.f32 %v6046, %v6062
  %v6149 = vmax.f32 %v6049, %v6065
  %v6150 = vmax.f32 %v6054, %v6070
  %v6151 = vmax.f32 %v6057, %v6073
  %v6152 = vmax.f32 %v6110, %v6126
  %v6153 = vmax.f32 %v6113, %v6129
  %v6154 = vmax.f32 %v6118, %v6134
  %v6155 = vmax.f32 %v6121, %v6137
  %v6156 = vmax.f32 %v6140, %v6148
  %v6157 = vmax.f32 %v6141, %v6149
  %v6158 = vmax.f32 %v6142, %v6150
  %v6159 = vmax.f32 %v6143, %v6151
  %v6160 = vmax.f32 %v6144, %v6152
  %v6161 = vmax.f32 %v6145, %v6153
  %v6162 = vmax.f32 %v6146, %v6154
  %v6163 = vmax.f32 %v6147, %v6155
  %v6164 = vld [vmem:[%s2] sm:$0x1]
  %v6166 = vlaneseq
  %v6167 = vshrl.u32 %v6166, 7
  %v6168 = vsub.s32 0, %v6167
  %v6169 = vrot.slane %v6164, %v6168
  %v6171 = vadd.f32 %v6156, %v6169
  %v6172 = vadd.f32 %v6157, %v6169
  %v6173 = vadd.f32 %v6158, %v6169
  %v6174 = vadd.f32 %v6159, %v6169
  %v6175 = vadd.f32 %v6160, %v6169
  %v6176 = vadd.f32 %v6161, %v6169
  %v6177 = vadd.f32 %v6162, %v6169
  %v6178 = vadd.f32 %v6163, %v6169
  %v6179 = vmax.f32 %v6171, 0.0
  %v6180 = vmax.f32 %v6172, 0.0
  %v6181 = vmax.f32 %v6173, 0.0
  %v6182 = vmax.f32 %v6174, 0.0
  %v6183 = vmax.f32 %v6175, 0.0
  %v6184 = vmax.f32 %v6176, 0.0
  %v6185 = vmax.f32 %v6177, 0.0
  %v6186 = vmax.f32 %v6178, 0.0
  %v6187 = vpack.c.bf16 %v6180, %v6179
  %v6188 = vpack.c.bf16 %v6182, %v6181
  %v6189 = vpack.c.bf16 %v6184, %v6183
  %v6190 = vpack.c.bf16 %v6186, %v6185
  %v6195 = vunpack.c.l.b16 %v6187
  %v6196 = vunpack.c.h.b16 %v6187
  %v6197 = vunpack.c.l.b16 %v6188
  %v6198 = vunpack.c.h.b16 %v6188
  %v6199 = vunpack.c.l.b16 %v6189
  %v6200 = vunpack.c.h.b16 %v6189
  %v6201 = vunpack.c.l.b16 %v6190
  %v6202 = vunpack.c.h.b16 %v6190
  %v6203 = vpack.c.b16 %v6195, %v6195
  %v6204 = vpack.c.b16 %v6196, %v6196
  %v6205 = vpack.c.b16 %v6197, %v6197
  %v6206 = vpack.c.b16 %v6198, %v6198
  %v6207 = vpack.c.b16 %v6199, %v6199
  %v6208 = vpack.c.b16 %v6200, %v6200
  %v6209 = vpack.c.b16 %v6201, %v6201
  %v6210 = vpack.c.b16 %v6202, %v6202
  %6219 = vst [vmem:[%s3] sm:$0xf] %v6203
  %6220 = vst [vmem:[%s3 + $0x4] sm:$0xf] %v6204
  %6221 = vst [vmem:[%s3 + $0x8] sm:$0xf] %v6205
  %6222 = vst [vmem:[%s3 + $0xc] sm:$0xf] %v6206
  %6223 = vst [vmem:[%s3 + $0x10] sm:$0xf] %v6207
  %6224 = vst [vmem:[%s3 + $0x14] sm:$0xf] %v6208
  %6225 = vst [vmem:[%s3 + $0x18] sm:$0xf] %v6209
  %6226 = vst [vmem:[%s3 + $0x1c] sm:$0xf] %v6210
  // Predicated region
  $region14: #{net_forward.4} parent=0 // pred_check
    _
  $region15: #{net_forward.4} parent=0 // pred_check_branch
    %6228 = sbr.rel (0) target = $region17
  $region16: #{net_forward.4} parent=0 // pred_region
    _
  $region17: #{net_forward.4} parent=0 // pred_fallthru
    _
  // Predicated region
  $region18: #{net_forward.4} parent=0 // pred_check
    _
  $region19: #{net_forward.4} parent=0 // pred_check_branch
    %6230 = sbr.rel (0) target = $region21
  $region20: #{net_forward.4} parent=0 // pred_region
    _
  $region21: #{net_forward.4} parent=0 // pred_fallthru
    _

// kernel: net_forward.5
$region0: #{net_forward.5}
  #allocation0 [shape = 'u32[]', space=smem, size = 0x4, offset = 0x4, fixed_abs, tag = 'smem constant byte address 0x4 - core index']
  #allocation1 [shape = 'u32[144,128]{1,0:T(1,128)}', space=vmem, size = 0x12000, scoped, tag = 'internal scratch']
  %s0 = inlined_call_operand.vmem [shape: bf16[2,4096], index: 0, kind: input, shape index: {}]
  %s1 = inlined_call_operand.vmem [shape: bf16[4096,128], index: 1, kind: input, shape index: {}]
  %s2 = inlined_call_operand.vmem [shape: f32[1,128], index: 2, kind: input, shape index: {}]
  %s3 = inlined_call_operand.vmem [shape: bf16[128,128], index: 3, kind: input, shape index: {}]
  %s4 = inlined_call_operand.vmem [shape: f32[1,128], index: 4, kind: input, shape index: {}]
  %s5 = inlined_call_operand.vmem [shape: bf16[128,128], index: 5, kind: input, shape index: {}]
  %s6 = inlined_call_operand.vmem [shape: f32[1,128], index: 6, kind: input, shape index: {}]
  %s7 = inlined_call_operand.hbm [shape: f32[2,128], index: 7, kind: output, shape index: {}]
  %s8 = sld [smem:[#allocation0]]
  $region38: #{net_forward.5} parent=0
    _
  %s10 = ssub.s32 1, %s8
  %s11 = scalar_select 0, %s10, %s8
  $region1: #{net_forward.5} parent=0
    #allocation2 [shape = 'u8[1024]{0}', space=vmem, size = 0x400, scoped, tag = 'output window, operand 0, single buffered']
    #allocation3 [shape = 's32[1]{0}', space=sflag, size = 0x4, scoped, tag = 'scoped memory for net_forward.5']
    %12 = vsyncpa [#allocation3], 0
    // Predicated region
    $region2: #{net_forward.5} parent=1 // pred_check
      _
    $region3: #{net_forward.5} parent=1 // pred_check_branch
      %14 = sbr.rel (0) target = $region5
    $region4: #{net_forward.5} parent=1 // pred_region
      _
    $region5: #{net_forward.5} parent=1 // pred_fallthru
      _
    // Predicated region
    $region6: #{net_forward.5} parent=1 // pred_check
      _
    $region7: #{net_forward.5} parent=1 // pred_check_branch
      %16 = sbr.rel (0) target = $region9
    $region8: #{net_forward.5} parent=1 // pred_region
      _
    $region9: #{net_forward.5} parent=1 // pred_fallthru
      _
    // Predicated region
    $region10: #{net_forward.5} parent=1 // pred_check
      _
    $region11: #{net_forward.5} parent=1 // pred_check_branch
      %18 = sbr.rel (0) target = $region13
    $region12: #{net_forward.5} parent=1 // pred_region
      _
    $region13: #{net_forward.5} parent=1 // pred_fallthru
      _
    // Predicated region
    $region14: #{net_forward.5} parent=1 // pred_check
      _
    $region15: #{net_forward.5} parent=1 // pred_check_branch
      %20 = sbr.rel (0) target = $region17
    $region16: #{net_forward.5} parent=1 // pred_region
      _
    $region17: #{net_forward.5} parent=1 // pred_fallthru
      _
    // Predicated region
    $region18: #{net_forward.5} parent=1 // pred_check
      _
    $region19: #{net_forward.5} parent=1 // pred_check_branch
      %22 = sbr.rel (0) target = $region21
    $region20: #{net_forward.5} parent=1 // pred_region
      _
    $region21: #{net_forward.5} parent=1 // pred_fallthru
      _
    // Predicated region
    $region22: #{net_forward.5} parent=1 // pred_check
      _
    $region23: #{net_forward.5} parent=1 // pred_check_branch
      %24 = sbr.rel (0) target = $region25
    $region24: #{net_forward.5} parent=1 // pred_region
      _
    $region25: #{net_forward.5} parent=1 // pred_fallthru
      _
    // Predicated region
    $region26: #{net_forward.5} parent=1 // pred_check
      _
    $region27: #{net_forward.5} parent=1 // pred_check_branch
      %26 = sbr.rel (0) target = $region29
    $region28: #{net_forward.5} parent=1 // pred_region
      _
    $region29: #{net_forward.5} parent=1 // pred_fallthru
      _
    %v28 = vld [vmem:[%s0] sm:$0xff]
    %v29 = vld [vmem:[%s0 + $0x8] sm:$0xff]
    %v30 = vld [vmem:[%s0 + $0x10] sm:$0xff]
    %v31 = vld [vmem:[%s0 + $0x18] sm:$0xff]
    %v32 = vld [vmem:[%s1] sm:$0xf]
    %v33 = vld [vmem:[%s1 + $0x4] sm:$0xf]
    %v34 = vld [vmem:[%s1 + $0x8] sm:$0xf]
    %v35 = vld [vmem:[%s1 + $0xc] sm:$0xf]
    %v36 = vld [vmem:[%s1 + $0x10] sm:$0xf]
    %v37 = vld [vmem:[%s1 + $0x14] sm:$0xf]
    %v38 = vld [vmem:[%s1 + $0x18] sm:$0xf]
    %v39 = vld [vmem:[%s1 + $0x1c] sm:$0xf]
    %v40 = vld [vmem:[%s1 + $0x20] sm:$0xf]
    %v41 = vld [vmem:[%s1 + $0x24] sm:$0xf]
    %v42 = vld [vmem:[%s1 + $0x28] sm:$0xf]
    %v43 = vld [vmem:[%s1 + $0x2c] sm:$0xf]
    %v44 = vld [vmem:[%s1 + $0x30] sm:$0xf]
    %v45 = vld [vmem:[%s1 + $0x34] sm:$0xf]
    %v46 = vld [vmem:[%s1 + $0x38] sm:$0xf]
    %v47 = vld [vmem:[%s1 + $0x3c] sm:$0xf]
    %v48 = vld [vmem:[%s1 + $0x40] sm:$0xf]
    %v49 = vld [vmem:[%s1 + $0x44] sm:$0xf]
    %v50 = vld [vmem:[%s1 + $0x48] sm:$0xf]
    %v51 = vld [vmem:[%s1 + $0x4c] sm:$0xf]
    %v52 = vld [vmem:[%s1 + $0x50] sm:$0xf]
    %v53 = vld [vmem:[%s1 + $0x54] sm:$0xf]
    %v54 = vld [vmem:[%s1 + $0x58] sm:$0xf]
    %v55 = vld [vmem:[%s1 + $0x5c] sm:$0xf]
    %v56 = vld [vmem:[%s1 + $0x60] sm:$0xf]
    %v57 = vld [vmem:[%s1 + $0x64] sm:$0xf]
    %v58 = vld [vmem:[%s1 + $0x68] sm:$0xf]
    %v59 = vld [vmem:[%s1 + $0x6c] sm:$0xf]
    %v60 = vld [vmem:[%s1 + $0x70] sm:$0xf]
    %v61 = vld [vmem:[%s1 + $0x74] sm:$0xf]
    %v62 = vld [vmem:[%s1 + $0x78] sm:$0xf]
    %v63 = vld [vmem:[%s1 + $0x7c] sm:$0xf]
    %v64 = vld [vmem:[%s1 + $0x80] sm:$0xf]
    %v65 = vld [vmem:[%s1 + $0x84] sm:$0xf]
    %v66 = vld [vmem:[%s1 + $0x88] sm:$0xf]
    %v67 = vld [vmem:[%s1 + $0x8c] sm:$0xf]
    %v68 = vld [vmem:[%s1 + $0x90] sm:$0xf]
    %v69 = vld [vmem:[%s1 + $0x94] sm:$0xf]
    %v70 = vld [vmem:[%s1 + $0x98] sm:$0xf]
    %v71 = vld [vmem:[%s1 + $0x9c] sm:$0xf]
    %v72 = vld [vmem:[%s1 + $0xa0] sm:$0xf]
    %v73 = vld [vmem:[%s1 + $0xa4] sm:$0xf]
    %v74 = vld [vmem:[%s1 + $0xa8] sm:$0xf]
    %v75 = vld [vmem:[%s1 + $0xac] sm:$0xf]
    %v76 = vld [vmem:[%s1 + $0xb0] sm:$0xf]
    %v77 = vld [vmem:[%s1 + $0xb4] sm:$0xf]
    %v78 = vld [vmem:[%s1 + $0xb8] sm:$0xf]
    %v79 = vld [vmem:[%s1 + $0xbc] sm:$0xf]
    %v80 = vld [vmem:[%s1 + $0xc0] sm:$0xf]
    %v81 = vld [vmem:[%s1 + $0xc4] sm:$0xf]
    %v82 = vld [vmem:[%s1 + $0xc8] sm:$0xf]
    %v83 = vld [vmem:[%s1 + $0xcc] sm:$0xf]
    %v84 = vld [vmem:[%s1 + $0xd0] sm:$0xf]
    %v85 = vld [vmem:[%s1 + $0xd4] sm:$0xf]
    %v86 = vld [vmem:[%s1 + $0xd8] sm:$0xf]
    %v87 = vld [vmem:[%s1 + $0xdc] sm:$0xf]
    %v88 = vld [vmem:[%s1 + $0xe0] sm:$0xf]
    %v89 = vld [vmem:[%s1 + $0xe4] sm:$0xf]
    %v90 = vld [vmem:[%s1 + $0xe8] sm:$0xf]
    %v91 = vld [vmem:[%s1 + $0xec] sm:$0xf]
    %v92 = vld [vmem:[%s1 + $0xf0] sm:$0xf]
    %v93 = vld [vmem:[%s1 + $0xf4] sm:$0xf]
    %v94 = vld [vmem:[%s1 + $0xf8] sm:$0xf]
    %v95 = vld [vmem:[%s1 + $0xfc] sm:$0xf]
    %v96 = vld [vmem:[%s1 + $0x100] sm:$0xf]
    %v97 = vld [vmem:[%s1 + $0x104] sm:$0xf]
    %v98 = vld [vmem:[%s1 + $0x108] sm:$0xf]
    %v99 = vld [vmem:[%s1 + $0x10c] sm:$0xf]
    %v100 = vld [vmem:[%s1 + $0x110] sm:$0xf]
    %v101 = vld [vmem:[%s1 + $0x114] sm:$0xf]
    %v102 = vld [vmem:[%s1 + $0x118] sm:$0xf]
    %v103 = vld [vmem:[%s1 + $0x11c] sm:$0xf]
    %v104 = vld [vmem:[%s1 + $0x120] sm:$0xf]
    %v105 = vld [vmem:[%s1 + $0x124] sm:$0xf]
    %v106 = vld [vmem:[%s1 + $0x128] sm:$0xf]
    %v107 = vld [vmem:[%s1 + $0x12c] sm:$0xf]
    %v108 = vld [vmem:[%s1 + $0x130] sm:$0xf]
    %v109 = vld [vmem:[%s1 + $0x134] sm:$0xf]
    %v110 = vld [vmem:[%s1 + $0x138] sm:$0xf]
    %v111 = vld [vmem:[%s1 + $0x13c] sm:$0xf]
    %v112 = vld [vmem:[%s1 + $0x140] sm:$0xf]
    %v113 = vld [vmem:[%s1 + $0x144] sm:$0xf]
    %v114 = vld [vmem:[%s1 + $0x148] sm:$0xf]
    %v115 = vld [vmem:[%s1 + $0x14c] sm:$0xf]
    %v116 = vld [vmem:[%s1 + $0x150] sm:$0xf]
    %v117 = vld [vmem:[%s1 + $0x154] sm:$0xf]
    %v118 = vld [vmem:[%s1 + $0x158] sm:$0xf]
    %v119 = vld [vmem:[%s1 + $0x15c] sm:$0xf]
    %v120 = vld [vmem:[%s1 + $0x160] sm:$0xf]
    %v121 = vld [vmem:[%s1 + $0x164] sm:$0xf]
    %v122 = vld [vmem:[%s1 + $0x168] sm:$0xf]
    %v123 = vld [vmem:[%s1 + $0x16c] sm:$0xf]
    %v124 = vld [vmem:[%s1 + $0x170] sm:$0xf]
    %v125 = vld [vmem:[%s1 + $0x174] sm:$0xf]
    %v126 = vld [vmem:[%s1 + $0x178] sm:$0xf]
    %v127 = vld [vmem:[%s1 + $0x17c] sm:$0xf]
    %v128 = vld [vmem:[%s1 + $0x180] sm:$0xf]
    %v129 = vld [vmem:[%s1 + $0x184] sm:$0xf]
    %v130 = vld [vmem:[%s1 + $0x188] sm:$0xf]
    %v131 = vld [vmem:[%s1 + $0x18c] sm:$0xf]
    %v132 = vld [vmem:[%s1 + $0x190] sm:$0xf]
    %v133 = vld [vmem:[%s1 + $0x194] sm:$0xf]
    %v134 = vld [vmem:[%s1 + $0x198] sm:$0xf]
    %v135 = vld [vmem:[%s1 + $0x19c] sm:$0xf]
    %v136 = vld [vmem:[%s1 + $0x1a0] sm:$0xf]
    %v137 = vld [vmem:[%s1 + $0x1a4] sm:$0xf]
    %v138 = vld [vmem:[%s1 + $0x1a8] sm:$0xf]
    %v139 = vld [vmem:[%s1 + $0x1ac] sm:$0xf]
    %v140 = vld [vmem:[%s1 + $0x1b0] sm:$0xf]
    %v141 = vld [vmem:[%s1 + $0x1b4] sm:$0xf]
    %v142 = vld [vmem:[%s1 + $0x1b8] sm:$0xf]
    %v143 = vld [vmem:[%s1 + $0x1bc] sm:$0xf]
    %v144 = vld [vmem:[%s1 + $0x1c0] sm:$0xf]
    %v145 = vld [vmem:[%s1 + $0x1c4] sm:$0xf]
    %v146 = vld [vmem:[%s1 + $0x1c8] sm:$0xf]
    %v147 = vld [vmem:[%s1 + $0x1cc] sm:$0xf]
    %v148 = vld [vmem:[%s1 + $0x1d0] sm:$0xf]
    %v149 = vld [vmem:[%s1 + $0x1d4] sm:$0xf]
    %v150 = vld [vmem:[%s1 + $0x1d8] sm:$0xf]
    %v151 = vld [vmem:[%s1 + $0x1dc] sm:$0xf]
    %v152 = vld [vmem:[%s1 + $0x1e0] sm:$0xf]
    %v153 = vld [vmem:[%s1 + $0x1e4] sm:$0xf]
    %v154 = vld [vmem:[%s1 + $0x1e8] sm:$0xf]
    %v155 = vld [vmem:[%s1 + $0x1ec] sm:$0xf]
    %v156 = vld [vmem:[%s1 + $0x1f0] sm:$0xf]
    %v157 = vld [vmem:[%s1 + $0x1f4] sm:$0xf]
    %v158 = vld [vmem:[%s1 + $0x1f8] sm:$0xf]
    %v159 = vld [vmem:[%s1 + $0x1fc] sm:$0xf]
    %v160 = vld [vmem:[%s1 + $0x200] sm:$0xf]
    %v161 = vld [vmem:[%s1 + $0x204] sm:$0xf]
    %v162 = vld [vmem:[%s1 + $0x208] sm:$0xf]
    %v163 = vld [vmem:[%s1 + $0x20c] sm:$0xf]
    %v164 = vld [vmem:[%s1 + $0x210] sm:$0xf]
    %v165 = vld [vmem:[%s1 + $0x214] sm:$0xf]
    %v166 = vld [vmem:[%s1 + $0x218] sm:$0xf]
    %v167 = vld [vmem:[%s1 + $0x21c] sm:$0xf]
    %v168 = vld [vmem:[%s1 + $0x220] sm:$0xf]
    %v169 = vld [vmem:[%s1 + $0x224] sm:$0xf]
    %v170 = vld [vmem:[%s1 + $0x228] sm:$0xf]
    %v171 = vld [vmem:[%s1 + $0x22c] sm:$0xf]
    %v172 = vld [vmem:[%s1 + $0x230] sm:$0xf]
    %v173 = vld [vmem:[%s1 + $0x234] sm:$0xf]
    %v174 = vld [vmem:[%s1 + $0x238] sm:$0xf]
    %v175 = vld [vmem:[%s1 + $0x23c] sm:$0xf]
    %v176 = vld [vmem:[%s1 + $0x240] sm:$0xf]
    %v177 = vld [vmem:[%s1 + $0x244] sm:$0xf]
    %v178 = vld [vmem:[%s1 + $0x248] sm:$0xf]
    %v179 = vld [vmem:[%s1 + $0x24c] sm:$0xf]
    %v180 = vld [vmem:[%s1 + $0x250] sm:$0xf]
    %v181 = vld [vmem:[%s1 + $0x254] sm:$0xf]
    %v182 = vld [vmem:[%s1 + $0x258] sm:$0xf]
    %v183 = vld [vmem:[%s1 + $0x25c] sm:$0xf]
    %v184 = vld [vmem:[%s1 + $0x260] sm:$0xf]
    %v185 = vld [vmem:[%s1 + $0x264] sm:$0xf]
    %v186 = vld [vmem:[%s1 + $0x268] sm:$0xf]
    %v187 = vld [vmem:[%s1 + $0x26c] sm:$0xf]
    %v188 = vld [vmem:[%s1 + $0x270] sm:$0xf]
    %v189 = vld [vmem:[%s1 + $0x274] sm:$0xf]
    %v190 = vld [vmem:[%s1 + $0x278] sm:$0xf]
    %v191 = vld [vmem:[%s1 + $0x27c] sm:$0xf]
    %v192 = vld [vmem:[%s1 + $0x280] sm:$0xf]
    %v193 = vld [vmem:[%s1 + $0x284] sm:$0xf]
    %v194 = vld [vmem:[%s1 + $0x288] sm:$0xf]
    %v195 = vld [vmem:[%s1 + $0x28c] sm:$0xf]
    %v196 = vld [vmem:[%s1 + $0x290] sm:$0xf]
    %v197 = vld [vmem:[%s1 + $0x294] sm:$0xf]
    %v198 = vld [vmem:[%s1 + $0x298] sm:$0xf]
    %v199 = vld [vmem:[%s1 + $0x29c] sm:$0xf]
    %v200 = vld [vmem:[%s1 + $0x2a0] sm:$0xf]
    %v201 = vld [vmem:[%s1 + $0x2a4] sm:$0xf]
    %v202 = vld [vmem:[%s1 + $0x2a8] sm:$0xf]
    %v203 = vld [vmem:[%s1 + $0x2ac] sm:$0xf]
    %v204 = vld [vmem:[%s1 + $0x2b0] sm:$0xf]
    %v205 = vld [vmem:[%s1 + $0x2b4] sm:$0xf]
    %v206 = vld [vmem:[%s1 + $0x2b8] sm:$0xf]
    %v207 = vld [vmem:[%s1 + $0x2bc] sm:$0xf]
    %v208 = vld [vmem:[%s1 + $0x2c0] sm:$0xf]
    %v209 = vld [vmem:[%s1 + $0x2c4] sm:$0xf]
    %v210 = vld [vmem:[%s1 + $0x2c8] sm:$0xf]
    %v211 = vld [vmem:[%s1 + $0x2cc] sm:$0xf]
    %v212 = vld [vmem:[%s1 + $0x2d0] sm:$0xf]
    %v213 = vld [vmem:[%s1 + $0x2d4] sm:$0xf]
    %v214 = vld [vmem:[%s1 + $0x2d8] sm:$0xf]
    %v215 = vld [vmem:[%s1 + $0x2dc] sm:$0xf]
    %v216 = vld [vmem:[%s1 + $0x2e0] sm:$0xf]
    %v217 = vld [vmem:[%s1 + $0x2e4] sm:$0xf]
    %v218 = vld [vmem:[%s1 + $0x2e8] sm:$0xf]
    %v219 = vld [vmem:[%s1 + $0x2ec] sm:$0xf]
    %v220 = vld [vmem:[%s1 + $0x2f0] sm:$0xf]
    %v221 = vld [vmem:[%s1 + $0x2f4] sm:$0xf]
    %v222 = vld [vmem:[%s1 + $0x2f8] sm:$0xf]
    %v223 = vld [vmem:[%s1 + $0x2fc] sm:$0xf]
    %v224 = vld [vmem:[%s1 + $0x300] sm:$0xf]
    %v225 = vld [vmem:[%s1 + $0x304] sm:$0xf]
    %v226 = vld [vmem:[%s1 + $0x308] sm:$0xf]
    %v227 = vld [vmem:[%s1 + $0x30c] sm:$0xf]
    %v228 = vld [vmem:[%s1 + $0x310] sm:$0xf]
    %v229 = vld [vmem:[%s1 + $0x314] sm:$0xf]
    %v230 = vld [vmem:[%s1 + $0x318] sm:$0xf]
    %v231 = vld [vmem:[%s1 + $0x31c] sm:$0xf]
    %v232 = vld [vmem:[%s1 + $0x320] sm:$0xf]
    %v233 = vld [vmem:[%s1 + $0x324] sm:$0xf]
    %v234 = vld [vmem:[%s1 + $0x328] sm:$0xf]
    %v235 = vld [vmem:[%s1 + $0x32c] sm:$0xf]
    %v236 = vld [vmem:[%s1 + $0x330] sm:$0xf]
    %v237 = vld [vmem:[%s1 + $0x334] sm:$0xf]
    %v238 = vld [vmem:[%s1 + $0x338] sm:$0xf]
    %v239 = vld [vmem:[%s1 + $0x33c] sm:$0xf]
    %v240 = vld [vmem:[%s1 + $0x340] sm:$0xf]
    %v241 = vld [vmem:[%s1 + $0x344] sm:$0xf]
    %v242 = vld [vmem:[%s1 + $0x348] sm:$0xf]
    %v243 = vld [vmem:[%s1 + $0x34c] sm:$0xf]
    %v244 = vld [vmem:[%s1 + $0x350] sm:$0xf]
    %v245 = vld [vmem:[%s1 + $0x354] sm:$0xf]
    %v246 = vld [vmem:[%s1 + $0x358] sm:$0xf]
    %v247 = vld [vmem:[%s1 + $0x35c] sm:$0xf]
    %v248 = vld [vmem:[%s1 + $0x360] sm:$0xf]
    %v249 = vld [vmem:[%s1 + $0x364] sm:$0xf]
    %v250 = vld [vmem:[%s1 + $0x368] sm:$0xf]
    %v251 = vld [vmem:[%s1 + $0x36c] sm:$0xf]
    %v252 = vld [vmem:[%s1 + $0x370] sm:$0xf]
    %v253 = vld [vmem:[%s1 + $0x374] sm:$0xf]
    %v254 = vld [vmem:[%s1 + $0x378] sm:$0xf]
    %v255 = vld [vmem:[%s1 + $0x37c] sm:$0xf]
    %v256 = vld [vmem:[%s1 + $0x380] sm:$0xf]
    %v257 = vld [vmem:[%s1 + $0x384] sm:$0xf]
    %v258 = vld [vmem:[%s1 + $0x388] sm:$0xf]
    %v259 = vld [vmem:[%s1 + $0x38c] sm:$0xf]
    %v260 = vld [vmem:[%s1 + $0x390] sm:$0xf]
    %v261 = vld [vmem:[%s1 + $0x394] sm:$0xf]
    %v262 = vld [vmem:[%s1 + $0x398] sm:$0xf]
    %v263 = vld [vmem:[%s1 + $0x39c] sm:$0xf]
    %v264 = vld [vmem:[%s1 + $0x3a0] sm:$0xf]
    %v265 = vld [vmem:[%s1 + $0x3a4] sm:$0xf]
    %v266 = vld [vmem:[%s1 + $0x3a8] sm:$0xf]
    %v267 = vld [vmem:[%s1 + $0x3ac] sm:$0xf]
    %v268 = vld [vmem:[%s1 + $0x3b0] sm:$0xf]
    %v269 = vld [vmem:[%s1 + $0x3b4] sm:$0xf]
    %v270 = vld [vmem:[%s1 + $0x3b8] sm:$0xf]
    %v271 = vld [vmem:[%s1 + $0x3bc] sm:$0xf]
    %v272 = vld [vmem:[%s1 + $0x3c0] sm:$0xf]
    %v273 = vld [vmem:[%s1 + $0x3c4] sm:$0xf]
    %v274 = vld [vmem:[%s1 + $0x3c8] sm:$0xf]
    %v275 = vld [vmem:[%s1 + $0x3cc] sm:$0xf]
    %v276 = vld [vmem:[%s1 + $0x3d0] sm:$0xf]
    %v277 = vld [vmem:[%s1 + $0x3d4] sm:$0xf]
    %v278 = vld [vmem:[%s1 + $0x3d8] sm:$0xf]
    %v279 = vld [vmem:[%s1 + $0x3dc] sm:$0xf]
    %v280 = vld [vmem:[%s1 + $0x3e0] sm:$0xf]
    %v281 = vld [vmem:[%s1 + $0x3e4] sm:$0xf]
    %v282 = vld [vmem:[%s1 + $0x3e8] sm:$0xf]
    %v283 = vld [vmem:[%s1 + $0x3ec] sm:$0xf]
    %v284 = vld [vmem:[%s1 + $0x3f0] sm:$0xf]
    %v285 = vld [vmem:[%s1 + $0x3f4] sm:$0xf]
    %v286 = vld [vmem:[%s1 + $0x3f8] sm:$0xf]
    %v287 = vld [vmem:[%s1 + $0x3fc] sm:$0xf]
    %v288 = vld [vmem:[%s1 + $0x400] sm:$0xf]
    %v289 = vld [vmem:[%s1 + $0x404] sm:$0xf]
    %v290 = vld [vmem:[%s1 + $0x408] sm:$0xf]
    %v291 = vld [vmem:[%s1 + $0x40c] sm:$0xf]
    %v292 = vld [vmem:[%s1 + $0x410] sm:$0xf]
    %v293 = vld [vmem:[%s1 + $0x414] sm:$0xf]
    %v294 = vld [vmem:[%s1 + $0x418] sm:$0xf]
    %v295 = vld [vmem:[%s1 + $0x41c] sm:$0xf]
    %v296 = vld [vmem:[%s1 + $0x420] sm:$0xf]
    %v297 = vld [vmem:[%s1 + $0x424] sm:$0xf]
    %v298 = vld [vmem:[%s1 + $0x428] sm:$0xf]
    %v299 = vld [vmem:[%s1 + $0x42c] sm:$0xf]
    %v300 = vld [vmem:[%s1 + $0x430] sm:$0xf]
    %v301 = vld [vmem:[%s1 + $0x434] sm:$0xf]
    %v302 = vld [vmem:[%s1 + $0x438] sm:$0xf]
    %v303 = vld [vmem:[%s1 + $0x43c] sm:$0xf]
    %v304 = vld [vmem:[%s1 + $0x440] sm:$0xf]
    %v305 = vld [vmem:[%s1 + $0x444] sm:$0xf]
    %v306 = vld [vmem:[%s1 + $0x448] sm:$0xf]
    %v307 = vld [vmem:[%s1 + $0x44c] sm:$0xf]
    %v308 = vld [vmem:[%s1 + $0x450] sm:$0xf]
    %v309 = vld [vmem:[%s1 + $0x454] sm:$0xf]
    %v310 = vld [vmem:[%s1 + $0x458] sm:$0xf]
    %v311 = vld [vmem:[%s1 + $0x45c] sm:$0xf]
    %v312 = vld [vmem:[%s1 + $0x460] sm:$0xf]
    %v313 = vld [vmem:[%s1 + $0x464] sm:$0xf]
    %v314 = vld [vmem:[%s1 + $0x468] sm:$0xf]
    %v315 = vld [vmem:[%s1 + $0x46c] sm:$0xf]
    %v316 = vld [vmem:[%s1 + $0x470] sm:$0xf]
    %v317 = vld [vmem:[%s1 + $0x474] sm:$0xf]
    %v318 = vld [vmem:[%s1 + $0x478] sm:$0xf]
    %v319 = vld [vmem:[%s1 + $0x47c] sm:$0xf]
    %v320 = vld [vmem:[%s1 + $0x480] sm:$0xf]
    %v321 = vld [vmem:[%s1 + $0x484] sm:$0xf]
    %v322 = vld [vmem:[%s1 + $0x488] sm:$0xf]
    %v323 = vld [vmem:[%s1 + $0x48c] sm:$0xf]
    %v324 = vld [vmem:[%s1 + $0x490] sm:$0xf]
    %v325 = vld [vmem:[%s1 + $0x494] sm:$0xf]
    %v326 = vld [vmem:[%s1 + $0x498] sm:$0xf]
    %v327 = vld [vmem:[%s1 + $0x49c] sm:$0xf]
    %v328 = vld [vmem:[%s1 + $0x4a0] sm:$0xf]
    %v329 = vld [vmem:[%s1 + $0x4a4] sm:$0xf]
    %v330 = vld [vmem:[%s1 + $0x4a8] sm:$0xf]
    %v331 = vld [vmem:[%s1 + $0x4ac] sm:$0xf]
    %v332 = vld [vmem:[%s1 + $0x4b0] sm:$0xf]
    %v333 = vld [vmem:[%s1 + $0x4b4] sm:$0xf]
    %v334 = vld [vmem:[%s1 + $0x4b8] sm:$0xf]
    %v335 = vld [vmem:[%s1 + $0x4bc] sm:$0xf]
    %v336 = vld [vmem:[%s1 + $0x4c0] sm:$0xf]
    %v337 = vld [vmem:[%s1 + $0x4c4] sm:$0xf]
    %v338 = vld [vmem:[%s1 + $0x4c8] sm:$0xf]
    %v339 = vld [vmem:[%s1 + $0x4cc] sm:$0xf]
    %v340 = vld [vmem:[%s1 + $0x4d0] sm:$0xf]
    %v341 = vld [vmem:[%s1 + $0x4d4] sm:$0xf]
    %v342 = vld [vmem:[%s1 + $0x4d8] sm:$0xf]
    %v343 = vld [vmem:[%s1 + $0x4dc] sm:$0xf]
    %v344 = vld [vmem:[%s1 + $0x4e0] sm:$0xf]
    %v345 = vld [vmem:[%s1 + $0x4e4] sm:$0xf]
    %v346 = vld [vmem:[%s1 + $0x4e8] sm:$0xf]
    %v347 = vld [vmem:[%s1 + $0x4ec] sm:$0xf]
    %v348 = vld [vmem:[%s1 + $0x4f0] sm:$0xf]
    %v349 = vld [vmem:[%s1 + $0x4f4] sm:$0xf]
    %v350 = vld [vmem:[%s1 + $0x4f8] sm:$0xf]
    %v351 = vld [vmem:[%s1 + $0x4fc] sm:$0xf]
    %v352 = vld [vmem:[%s1 + $0x500] sm:$0xf]
    %v353 = vld [vmem:[%s1 + $0x504] sm:$0xf]
    %v354 = vld [vmem:[%s1 + $0x508] sm:$0xf]
    %v355 = vld [vmem:[%s1 + $0x50c] sm:$0xf]
    %v356 = vld [vmem:[%s1 + $0x510] sm:$0xf]
    %v357 = vld [vmem:[%s1 + $0x514] sm:$0xf]
    %v358 = vld [vmem:[%s1 + $0x518] sm:$0xf]
    %v359 = vld [vmem:[%s1 + $0x51c] sm:$0xf]
    %v360 = vld [vmem:[%s1 + $0x520] sm:$0xf]
    %v361 = vld [vmem:[%s1 + $0x524] sm:$0xf]
    %v362 = vld [vmem:[%s1 + $0x528] sm:$0xf]
    %v363 = vld [vmem:[%s1 + $0x52c] sm:$0xf]
    %v364 = vld [vmem:[%s1 + $0x530] sm:$0xf]
    %v365 = vld [vmem:[%s1 + $0x534] sm:$0xf]
    %v366 = vld [vmem:[%s1 + $0x538] sm:$0xf]
    %v367 = vld [vmem:[%s1 + $0x53c] sm:$0xf]
    %v368 = vld [vmem:[%s1 + $0x540] sm:$0xf]
    %v369 = vld [vmem:[%s1 + $0x544] sm:$0xf]
    %v370 = vld [vmem:[%s1 + $0x548] sm:$0xf]
    %v371 = vld [vmem:[%s1 + $0x54c] sm:$0xf]
    %v372 = vld [vmem:[%s1 + $0x550] sm:$0xf]
    %v373 = vld [vmem:[%s1 + $0x554] sm:$0xf]
    %v374 = vld [vmem:[%s1 + $0x558] sm:$0xf]
    %v375 = vld [vmem:[%s1 + $0x55c] sm:$0xf]
    %v376 = vld [vmem:[%s1 + $0x560] sm:$0xf]
    %v377 = vld [vmem:[%s1 + $0x564] sm:$0xf]
    %v378 = vld [vmem:[%s1 + $0x568] sm:$0xf]
    %v379 = vld [vmem:[%s1 + $0x56c] sm:$0xf]
    %v380 = vld [vmem:[%s1 + $0x570] sm:$0xf]
    %v381 = vld [vmem:[%s1 + $0x574] sm:$0xf]
    %v382 = vld [vmem:[%s1 + $0x578] sm:$0xf]
    %v383 = vld [vmem:[%s1 + $0x57c] sm:$0xf]
    %v384 = vld [vmem:[%s1 + $0x580] sm:$0xf]
    %v385 = vld [vmem:[%s1 + $0x584] sm:$0xf]
    %v386 = vld [vmem:[%s1 + $0x588] sm:$0xf]
    %v387 = vld [vmem:[%s1 + $0x58c] sm:$0xf]
    %v388 = vld [vmem:[%s1 + $0x590] sm:$0xf]
    %v389 = vld [vmem:[%s1 + $0x594] sm:$0xf]
    %v390 = vld [vmem:[%s1 + $0x598] sm:$0xf]
    %v391 = vld [vmem:[%s1 + $0x59c] sm:$0xf]
    %v392 = vld [vmem:[%s1 + $0x5a0] sm:$0xf]
    %v393 = vld [vmem:[%s1 + $0x5a4] sm:$0xf]
    %v394 = vld [vmem:[%s1 + $0x5a8] sm:$0xf]
    %v395 = vld [vmem:[%s1 + $0x5ac] sm:$0xf]
    %v396 = vld [vmem:[%s1 + $0x5b0] sm:$0xf]
    %v397 = vld [vmem:[%s1 + $0x5b4] sm:$0xf]
    %v398 = vld [vmem:[%s1 + $0x5b8] sm:$0xf]
    %v399 = vld [vmem:[%s1 + $0x5bc] sm:$0xf]
    %v400 = vld [vmem:[%s1 + $0x5c0] sm:$0xf]
    %v401 = vld [vmem:[%s1 + $0x5c4] sm:$0xf]
    %v402 = vld [vmem:[%s1 + $0x5c8] sm:$0xf]
    %v403 = vld [vmem:[%s1 + $0x5cc] sm:$0xf]
    %v404 = vld [vmem:[%s1 + $0x5d0] sm:$0xf]
    %v405 = vld [vmem:[%s1 + $0x5d4] sm:$0xf]
    %v406 = vld [vmem:[%s1 + $0x5d8] sm:$0xf]
    %v407 = vld [vmem:[%s1 + $0x5dc] sm:$0xf]
    %v408 = vld [vmem:[%s1 + $0x5e0] sm:$0xf]
    %v409 = vld [vmem:[%s1 + $0x5e4] sm:$0xf]
    %v410 = vld [vmem:[%s1 + $0x5e8] sm:$0xf]
    %v411 = vld [vmem:[%s1 + $0x5ec] sm:$0xf]
    %v412 = vld [vmem:[%s1 + $0x5f0] sm:$0xf]
    %v413 = vld [vmem:[%s1 + $0x5f4] sm:$0xf]
    %v414 = vld [vmem:[%s1 + $0x5f8] sm:$0xf]
    %v415 = vld [vmem:[%s1 + $0x5fc] sm:$0xf]
    %v416 = vld [vmem:[%s1 + $0x600] sm:$0xf]
    %v417 = vld [vmem:[%s1 + $0x604] sm:$0xf]
    %v418 = vld [vmem:[%s1 + $0x608] sm:$0xf]
    %v419 = vld [vmem:[%s1 + $0x60c] sm:$0xf]
    %v420 = vld [vmem:[%s1 + $0x610] sm:$0xf]
    %v421 = vld [vmem:[%s1 + $0x614] sm:$0xf]
    %v422 = vld [vmem:[%s1 + $0x618] sm:$0xf]
    %v423 = vld [vmem:[%s1 + $0x61c] sm:$0xf]
    %v424 = vld [vmem:[%s1 + $0x620] sm:$0xf]
    %v425 = vld [vmem:[%s1 + $0x624] sm:$0xf]
    %v426 = vld [vmem:[%s1 + $0x628] sm:$0xf]
    %v427 = vld [vmem:[%s1 + $0x62c] sm:$0xf]
    %v428 = vld [vmem:[%s1 + $0x630] sm:$0xf]
    %v429 = vld [vmem:[%s1 + $0x634] sm:$0xf]
    %v430 = vld [vmem:[%s1 + $0x638] sm:$0xf]
    %v431 = vld [vmem:[%s1 + $0x63c] sm:$0xf]
    %v432 = vld [vmem:[%s1 + $0x640] sm:$0xf]
    %v433 = vld [vmem:[%s1 + $0x644] sm:$0xf]
    %v434 = vld [vmem:[%s1 + $0x648] sm:$0xf]
    %v435 = vld [vmem:[%s1 + $0x64c] sm:$0xf]
    %v436 = vld [vmem:[%s1 + $0x650] sm:$0xf]
    %v437 = vld [vmem:[%s1 + $0x654] sm:$0xf]
    %v438 = vld [vmem:[%s1 + $0x658] sm:$0xf]
    %v439 = vld [vmem:[%s1 + $0x65c] sm:$0xf]
    %v440 = vld [vmem:[%s1 + $0x660] sm:$0xf]
    %v441 = vld [vmem:[%s1 + $0x664] sm:$0xf]
    %v442 = vld [vmem:[%s1 + $0x668] sm:$0xf]
    %v443 = vld [vmem:[%s1 + $0x66c] sm:$0xf]
    %v444 = vld [vmem:[%s1 + $0x670] sm:$0xf]
    %v445 = vld [vmem:[%s1 + $0x674] sm:$0xf]
    %v446 = vld [vmem:[%s1 + $0x678] sm:$0xf]
    %v447 = vld [vmem:[%s1 + $0x67c] sm:$0xf]
    %v448 = vld [vmem:[%s1 + $0x680] sm:$0xf]
    %v449 = vld [vmem:[%s1 + $0x684] sm:$0xf]
    %v450 = vld [vmem:[%s1 + $0x688] sm:$0xf]
    %v451 = vld [vmem:[%s1 + $0x68c] sm:$0xf]
    %v452 = vld [vmem:[%s1 + $0x690] sm:$0xf]
    %v453 = vld [vmem:[%s1 + $0x694] sm:$0xf]
    %v454 = vld [vmem:[%s1 + $0x698] sm:$0xf]
    %v455 = vld [vmem:[%s1 + $0x69c] sm:$0xf]
    %v456 = vld [vmem:[%s1 + $0x6a0] sm:$0xf]
    %v457 = vld [vmem:[%s1 + $0x6a4] sm:$0xf]
    %v458 = vld [vmem:[%s1 + $0x6a8] sm:$0xf]
    %v459 = vld [vmem:[%s1 + $0x6ac] sm:$0xf]
    %v460 = vld [vmem:[%s1 + $0x6b0] sm:$0xf]
    %v461 = vld [vmem:[%s1 + $0x6b4] sm:$0xf]
    %v462 = vld [vmem:[%s1 + $0x6b8] sm:$0xf]
    %v463 = vld [vmem:[%s1 + $0x6bc] sm:$0xf]
    %v464 = vld [vmem:[%s1 + $0x6c0] sm:$0xf]
    %v465 = vld [vmem:[%s1 + $0x6c4] sm:$0xf]
    %v466 = vld [vmem:[%s1 + $0x6c8] sm:$0xf]
    %v467 = vld [vmem:[%s1 + $0x6cc] sm:$0xf]
    %v468 = vld [vmem:[%s1 + $0x6d0] sm:$0xf]
    %v469 = vld [vmem:[%s1 + $0x6d4] sm:$0xf]
    %v470 = vld [vmem:[%s1 + $0x6d8] sm:$0xf]
    %v471 = vld [vmem:[%s1 + $0x6dc] sm:$0xf]
    %v472 = vld [vmem:[%s1 + $0x6e0] sm:$0xf]
    %v473 = vld [vmem:[%s1 + $0x6e4] sm:$0xf]
    %v474 = vld [vmem:[%s1 + $0x6e8] sm:$0xf]
    %v475 = vld [vmem:[%s1 + $0x6ec] sm:$0xf]
    %v476 = vld [vmem:[%s1 + $0x6f0] sm:$0xf]
    %v477 = vld [vmem:[%s1 + $0x6f4] sm:$0xf]
    %v478 = vld [vmem:[%s1 + $0x6f8] sm:$0xf]
    %v479 = vld [vmem:[%s1 + $0x6fc] sm:$0xf]
    %v480 = vld [vmem:[%s1 + $0x700] sm:$0xf]
    %v481 = vld [vmem:[%s1 + $0x704] sm:$0xf]
    %v482 = vld [vmem:[%s1 + $0x708] sm:$0xf]
    %v483 = vld [vmem:[%s1 + $0x70c] sm:$0xf]
    %v484 = vld [vmem:[%s1 + $0x710] sm:$0xf]
    %v485 = vld [vmem:[%s1 + $0x714] sm:$0xf]
    %v486 = vld [vmem:[%s1 + $0x718] sm:$0xf]
    %v487 = vld [vmem:[%s1 + $0x71c] sm:$0xf]
    %v488 = vld [vmem:[%s1 + $0x720] sm:$0xf]
    %v489 = vld [vmem:[%s1 + $0x724] sm:$0xf]
    %v490 = vld [vmem:[%s1 + $0x728] sm:$0xf]
    %v491 = vld [vmem:[%s1 + $0x72c] sm:$0xf]
    %v492 = vld [vmem:[%s1 + $0x730] sm:$0xf]
    %v493 = vld [vmem:[%s1 + $0x734] sm:$0xf]
    %v494 = vld [vmem:[%s1 + $0x738] sm:$0xf]
    %v495 = vld [vmem:[%s1 + $0x73c] sm:$0xf]
    %v496 = vld [vmem:[%s1 + $0x740] sm:$0xf]
    %v497 = vld [vmem:[%s1 + $0x744] sm:$0xf]
    %v498 = vld [vmem:[%s1 + $0x748] sm:$0xf]
    %v499 = vld [vmem:[%s1 + $0x74c] sm:$0xf]
    %v500 = vld [vmem:[%s1 + $0x750] sm:$0xf]
    %v501 = vld [vmem:[%s1 + $0x754] sm:$0xf]
    %v502 = vld [vmem:[%s1 + $0x758] sm:$0xf]
    %v503 = vld [vmem:[%s1 + $0x75c] sm:$0xf]
    %v504 = vld [vmem:[%s1 + $0x760] sm:$0xf]
    %v505 = vld [vmem:[%s1 + $0x764] sm:$0xf]
    %v506 = vld [vmem:[%s1 + $0x768] sm:$0xf]
    %v507 = vld [vmem:[%s1 + $0x76c] sm:$0xf]
    %v508 = vld [vmem:[%s1 + $0x770] sm:$0xf]
    %v509 = vld [vmem:[%s1 + $0x774] sm:$0xf]
    %v510 = vld [vmem:[%s1 + $0x778] sm:$0xf]
    %v511 = vld [vmem:[%s1 + $0x77c] sm:$0xf]
    %v512 = vld [vmem:[%s1 + $0x780] sm:$0xf]
    %v513 = vld [vmem:[%s1 + $0x784] sm:$0xf]
    %v514 = vld [vmem:[%s1 + $0x788] sm:$0xf]
    %v515 = vld [vmem:[%s1 + $0x78c] sm:$0xf]
    %v516 = vld [vmem:[%s1 + $0x790] sm:$0xf]
    %v517 = vld [vmem:[%s1 + $0x794] sm:$0xf]
    %v518 = vld [vmem:[%s1 + $0x798] sm:$0xf]
    %v519 = vld [vmem:[%s1 + $0x79c] sm:$0xf]
    %v520 = vld [vmem:[%s1 + $0x7a0] sm:$0xf]
    %v521 = vld [vmem:[%s1 + $0x7a4] sm:$0xf]
    %v522 = vld [vmem:[%s1 + $0x7a8] sm:$0xf]
    %v523 = vld [vmem:[%s1 + $0x7ac] sm:$0xf]
    %v524 = vld [vmem:[%s1 + $0x7b0] sm:$0xf]
    %v525 = vld [vmem:[%s1 + $0x7b4] sm:$0xf]
    %v526 = vld [vmem:[%s1 + $0x7b8] sm:$0xf]
    %v527 = vld [vmem:[%s1 + $0x7bc] sm:$0xf]
    %v528 = vld [vmem:[%s1 + $0x7c0] sm:$0xf]
    %v529 = vld [vmem:[%s1 + $0x7c4] sm:$0xf]
    %v530 = vld [vmem:[%s1 + $0x7c8] sm:$0xf]
    %v531 = vld [vmem:[%s1 + $0x7cc] sm:$0xf]
    %v532 = vld [vmem:[%s1 + $0x7d0] sm:$0xf]
    %v533 = vld [vmem:[%s1 + $0x7d4] sm:$0xf]
    %v534 = vld [vmem:[%s1 + $0x7d8] sm:$0xf]
    %v535 = vld [vmem:[%s1 + $0x7dc] sm:$0xf]
    %v536 = vld [vmem:[%s1 + $0x7e0] sm:$0xf]
    %v537 = vld [vmem:[%s1 + $0x7e4] sm:$0xf]
    %v538 = vld [vmem:[%s1 + $0x7e8] sm:$0xf]
    %v539 = vld [vmem:[%s1 + $0x7ec] sm:$0xf]
    %v540 = vld [vmem:[%s1 + $0x7f0] sm:$0xf]
    %v541 = vld [vmem:[%s1 + $0x7f4] sm:$0xf]
    %v542 = vld [vmem:[%s1 + $0x7f8] sm:$0xf]
    %v543 = vld [vmem:[%s1 + $0x7fc] sm:$0xf]
    %v544 = vld [vmem:[%s2] sm:$0x1]
    %v546 = vlaneseq
    %v547 = vshrl.u32 %v546, 7
    %v548 = vsub.s32 0, %v547
    %v549 = vrot.slane %v544, %v548
    %v555 = vcombine.high %v28, %v28
    %v557 = vunpack.c.l.s4 1966171168
    %v558 = vunpack.c.0.s8 %v557
    %v559 = vlaneseq
    %v560 = vshrl.u32 %v559, 7
    %v561 = vsub.s32 %v558, %v560
    %v562 = vrot.slane %v28, %v561
    %v564 = vunpack.c.l.s4 1966171168
    %v565 = vunpack.c.0.s8 %v564
    %v566 = vlaneseq
    %v567 = vshrl.u32 %v566, 7
    %v568 = vsub.s32 %v565, %v567
    %v569 = vrot.slane %v555, %v568
    %v570 = vcombine.high %v562, %v562
    %v571 = vcombine.high %v569, %v569
    %v573 = vunpack.c.l.s4 1966171168
    %v574 = vunpack.c.0.s8 %v573
    %v575 = vlaneseq
    %v576 = vshrl.u32 %v575, 7
    %v577 = vsub.s32 %v574, %v576
    %v578 = vrot.slane %v562, %v577
    %v580 = vunpack.c.l.s4 1966171168
    %v581 = vunpack.c.0.s8 %v580
    %v582 = vlaneseq
    %v583 = vshrl.u32 %v582, 7
    %v584 = vsub.s32 %v581, %v583
    %v585 = vrot.slane %v569, %v584
    %v587 = vunpack.c.l.s4 1966171168
    %v588 = vunpack.c.0.s8 %v587
    %v589 = vlaneseq
    %v590 = vshrl.u32 %v589, 7
    %v591 = vsub.s32 %v588, %v590
    %v592 = vrot.slane %v570, %v591
    %v594 = vunpack.c.l.s4 1966171168
    %v595 = vunpack.c.0.s8 %v594
    %v596 = vlaneseq
    %v597 = vshrl.u32 %v596, 7
    %v598 = vsub.s32 %v595, %v597
    %v599 = vrot.slane %v571, %v598
    %v600 = vcombine.high %v578, %v578
    %v601 = vcombine.high %v585, %v585
    %v602 = vcombine.high %v592, %v592
    %v603 = vcombine.high %v599, %v599
    %v604 = vcombine.high %v29, %v29
    %v606 = vunpack.c.l.s4 1966171168
    %v607 = vunpack.c.0.s8 %v606
    %v608 = vlaneseq
    %v609 = vshrl.u32 %v608, 7
    %v610 = vsub.s32 %v607, %v609
    %v611 = vrot.slane %v29, %v610
    %v613 = vunpack.c.l.s4 1966171168
    %v614 = vunpack.c.0.s8 %v613
    %v615 = vlaneseq
    %v616 = vshrl.u32 %v615, 7
    %v617 = vsub.s32 %v614, %v616
    %v618 = vrot.slane %v604, %v617
    %v619 = vcombine.high %v611, %v611
    %v620 = vcombine.high %v618, %v618
    %v622 = vunpack.c.l.s4 1966171168
    %v623 = vunpack.c.0.s8 %v622
    %v624 = vlaneseq
    %v625 = vshrl.u32 %v624, 7
    %v626 = vsub.s32 %v623, %v625
    %v627 = vrot.slane %v611, %v626
    %v629 = vunpack.c.l.s4 1966171168
    %v630 = vunpack.c.0.s8 %v629
    %v631 = vlaneseq
    %v632 = vshrl.u32 %v631, 7
    %v633 = vsub.s32 %v630, %v632
    %v634 = vrot.slane %v618, %v633
    %v636 = vunpack.c.l.s4 1966171168
    %v637 = vunpack.c.0.s8 %v636
    %v638 = vlaneseq
    %v639 = vshrl.u32 %v638, 7
    %v640 = vsub.s32 %v637, %v639
    %v641 = vrot.slane %v619, %v640
    %v643 = vunpack.c.l.s4 1966171168
    %v644 = vunpack.c.0.s8 %v643
    %v645 = vlaneseq
    %v646 = vshrl.u32 %v645, 7
    %v647 = vsub.s32 %v644, %v646
    %v648 = vrot.slane %v620, %v647
    %v649 = vcombine.high %v627, %v627
    %v650 = vcombine.high %v634, %v634
    %v651 = vcombine.high %v641, %v641
    %v652 = vcombine.high %v648, %v648
    %v653 = vcombine.high %v30, %v30
    %v655 = vunpack.c.l.s4 1966171168
    %v656 = vunpack.c.0.s8 %v655
    %v657 = vlaneseq
    %v658 = vshrl.u32 %v657, 7
    %v659 = vsub.s32 %v656, %v658
    %v660 = vrot.slane %v30, %v659
    %v662 = vunpack.c.l.s4 1966171168
    %v663 = vunpack.c.0.s8 %v662
    %v664 = vlaneseq
    %v665 = vshrl.u32 %v664, 7
    %v666 = vsub.s32 %v663, %v665
    %v667 = vrot.slane %v653, %v666
    %v668 = vcombine.high %v660, %v660
    %v669 = vcombine.high %v667, %v667
    %v671 = vunpack.c.l.s4 1966171168
    %v672 = vunpack.c.0.s8 %v671
    %v673 = vlaneseq
    %v674 = vshrl.u32 %v673, 7
    %v675 = vsub.s32 %v672, %v674
    %v676 = vrot.slane %v660, %v675
    %v678 = vunpack.c.l.s4 1966171168
    %v679 = vunpack.c.0.s8 %v678
    %v680 = vlaneseq
    %v681 = vshrl.u32 %v680, 7
    %v682 = vsub.s32 %v679, %v681
    %v683 = vrot.slane %v667, %v682
    %v685 = vunpack.c.l.s4 1966171168
    %v686 = vunpack.c.0.s8 %v685
    %v687 = vlaneseq
    %v688 = vshrl.u32 %v687, 7
    %v689 = vsub.s32 %v686, %v688
    %v690 = vrot.slane %v668, %v689
    %v692 = vunpack.c.l.s4 1966171168
    %v693 = vunpack.c.0.s8 %v692
    %v694 = vlaneseq
    %v695 = vshrl.u32 %v694, 7
    %v696 = vsub.s32 %v693, %v695
    %v697 = vrot.slane %v669, %v696
    %v698 = vcombine.high %v676, %v676
    %v699 = vcombine.high %v683, %v683
    %v700 = vcombine.high %v690, %v690
    %v701 = vcombine.high %v697, %v697
    %v702 = vcombine.high %v31, %v31
    %v704 = vunpack.c.l.s4 1966171168
    %v705 = vunpack.c.0.s8 %v704
    %v706 = vlaneseq
    %v707 = vshrl.u32 %v706, 7
    %v708 = vsub.s32 %v705, %v707
    %v709 = vrot.slane %v31, %v708
    %v711 = vunpack.c.l.s4 1966171168
    %v712 = vunpack.c.0.s8 %v711
    %v713 = vlaneseq
    %v714 = vshrl.u32 %v713, 7
    %v715 = vsub.s32 %v712, %v714
    %v716 = vrot.slane %v702, %v715
    %v717 = vcombine.high %v709, %v709
    %v718 = vcombine.high %v716, %v716
    %v720 = vunpack.c.l.s4 1966171168
    %v721 = vunpack.c.0.s8 %v720
    %v722 = vlaneseq
    %v723 = vshrl.u32 %v722, 7
    %v724 = vsub.s32 %v721, %v723
    %v725 = vrot.slane %v709, %v724
    %v727 = vunpack.c.l.s4 1966171168
    %v728 = vunpack.c.0.s8 %v727
    %v729 = vlaneseq
    %v730 = vshrl.u32 %v729, 7
    %v731 = vsub.s32 %v728, %v730
    %v732 = vrot.slane %v716, %v731
    %v734 = vunpack.c.l.s4 1966171168
    %v735 = vunpack.c.0.s8 %v734
    %v736 = vlaneseq
    %v737 = vshrl.u32 %v736, 7
    %v738 = vsub.s32 %v735, %v737
    %v739 = vrot.slane %v717, %v738
    %v741 = vunpack.c.l.s4 1966171168
    %v742 = vunpack.c.0.s8 %v741
    %v743 = vlaneseq
    %v744 = vshrl.u32 %v743, 7
    %v745 = vsub.s32 %v742, %v744
    %v746 = vrot.slane %v718, %v745
    %v747 = vcombine.high %v725, %v725
    %v748 = vcombine.high %v732, %v732
    %v749 = vcombine.high %v739, %v739
    %v750 = vcombine.high %v746, %v746
    %v1295 = vunpack.c.l.b16 %v32
    %v1296 = vunpack.c.l.b16 %v33
    %v1297 = vunpack.c.l.b16 %v34
    %v1298 = vunpack.c.l.b16 %v35
    %v1299 = vunpack.c.l.b16 %v36
    %v1300 = vunpack.c.l.b16 %v37
    %v1301 = vunpack.c.l.b16 %v38
    %v1302 = vunpack.c.l.b16 %v39
    %v1303 = vunpack.c.l.b16 %v40
    %v1304 = vunpack.c.l.b16 %v41
    %v1305 = vunpack.c.l.b16 %v42
    %v1306 = vunpack.c.l.b16 %v43
    %v1307 = vunpack.c.l.b16 %v44
    %v1308 = vunpack.c.l.b16 %v45
    %v1309 = vunpack.c.l.b16 %v46
    %v1310 = vunpack.c.l.b16 %v47
    %v1311 = vunpack.c.l.b16 %v48
    %v1312 = vunpack.c.l.b16 %v49
    %v1313 = vunpack.c.l.b16 %v50
    %v1314 = vunpack.c.l.b16 %v51
    %v1315 = vunpack.c.l.b16 %v52
    %v1316 = vunpack.c.l.b16 %v53
    %v1317 = vunpack.c.l.b16 %v54
    %v1318 = vunpack.c.l.b16 %v55
    %v1319 = vunpack.c.l.b16 %v56
    %v1320 = vunpack.c.l.b16 %v57
    %v1321 = vunpack.c.l.b16 %v58
    %v1322 = vunpack.c.l.b16 %v59
    %v1323 = vunpack.c.l.b16 %v60
    %v1324 = vunpack.c.l.b16 %v61
    %v1325 = vunpack.c.l.b16 %v62
    %v1326 = vunpack.c.l.b16 %v63
    %v1327 = vunpack.c.l.b16 %v64
    %v1328 = vunpack.c.l.b16 %v65
    %v1329 = vunpack.c.l.b16 %v66
    %v1330 = vunpack.c.l.b16 %v67
    %v1331 = vunpack.c.l.b16 %v68
    %v1332 = vunpack.c.l.b16 %v69
    %v1333 = vunpack.c.l.b16 %v70
    %v1334 = vunpack.c.l.b16 %v71
    %v1335 = vunpack.c.l.b16 %v72
    %v1336 = vunpack.c.l.b16 %v73
    %v1337 = vunpack.c.l.b16 %v74
    %v1338 = vunpack.c.l.b16 %v75
    %v1339 = vunpack.c.l.b16 %v76
    %v1340 = vunpack.c.l.b16 %v77
    %v1341 = vunpack.c.l.b16 %v78
    %v1342 = vunpack.c.l.b16 %v79
    %v1343 = vunpack.c.l.b16 %v80
    %v1344 = vunpack.c.l.b16 %v81
    %v1345 = vunpack.c.l.b16 %v82
    %v1346 = vunpack.c.l.b16 %v83
    %v1347 = vunpack.c.l.b16 %v84
    %v1348 = vunpack.c.l.b16 %v85
    %v1349 = vunpack.c.l.b16 %v86
    %v1350 = vunpack.c.l.b16 %v87
    %v1351 = vunpack.c.l.b16 %v88
    %v1352 = vunpack.c.l.b16 %v89
    %v1353 = vunpack.c.l.b16 %v90
    %v1354 = vunpack.c.l.b16 %v91
    %v1355 = vunpack.c.l.b16 %v92
    %v1356 = vunpack.c.l.b16 %v93
    %v1357 = vunpack.c.l.b16 %v94
    %v1358 = vunpack.c.l.b16 %v95
    %v1359 = vunpack.c.l.b16 %v96
    %v1360 = vunpack.c.l.b16 %v97
    %v1361 = vunpack.c.l.b16 %v98
    %v1362 = vunpack.c.l.b16 %v99
    %v1363 = vunpack.c.l.b16 %v100
    %v1364 = vunpack.c.l.b16 %v101
    %v1365 = vunpack.c.l.b16 %v102
    %v1366 = vunpack.c.l.b16 %v103
    %v1367 = vunpack.c.l.b16 %v104
    %v1368 = vunpack.c.l.b16 %v105
    %v1369 = vunpack.c.l.b16 %v106
    %v1370 = vunpack.c.l.b16 %v107
    %v1371 = vunpack.c.l.b16 %v108
    %v1372 = vunpack.c.l.b16 %v109
    %v1373 = vunpack.c.l.b16 %v110
    %v1374 = vunpack.c.l.b16 %v111
    %v1375 = vunpack.c.l.b16 %v112
    %v1376 = vunpack.c.l.b16 %v113
    %v1377 = vunpack.c.l.b16 %v114
    %v1378 = vunpack.c.l.b16 %v115
    %v1379 = vunpack.c.l.b16 %v116
    %v1380 = vunpack.c.l.b16 %v117
    %v1381 = vunpack.c.l.b16 %v118
    %v1382 = vunpack.c.l.b16 %v119
    %v1383 = vunpack.c.l.b16 %v120
    %v1384 = vunpack.c.l.b16 %v121
    %v1385 = vunpack.c.l.b16 %v122
    %v1386 = vunpack.c.l.b16 %v123
    %v1387 = vunpack.c.l.b16 %v124
    %v1388 = vunpack.c.l.b16 %v125
    %v1389 = vunpack.c.l.b16 %v126
    %v1390 = vunpack.c.l.b16 %v127
    %v1391 = vunpack.c.l.b16 %v128
    %v1392 = vunpack.c.l.b16 %v129
    %v1393 = vunpack.c.l.b16 %v130
    %v1394 = vunpack.c.l.b16 %v131
    %v1395 = vunpack.c.l.b16 %v132
    %v1396 = vunpack.c.l.b16 %v133
    %v1397 = vunpack.c.l.b16 %v134
    %v1398 = vunpack.c.l.b16 %v135
    %v1399 = vunpack.c.l.b16 %v136
    %v1400 = vunpack.c.l.b16 %v137
    %v1401 = vunpack.c.l.b16 %v138
    %v1402 = vunpack.c.l.b16 %v139
    %v1403 = vunpack.c.l.b16 %v140
    %v1404 = vunpack.c.l.b16 %v141
    %v1405 = vunpack.c.l.b16 %v142
    %v1406 = vunpack.c.l.b16 %v143
    %v1407 = vunpack.c.l.b16 %v144
    %v1408 = vunpack.c.l.b16 %v145
    %v1409 = vunpack.c.l.b16 %v146
    %v1410 = vunpack.c.l.b16 %v147
    %v1411 = vunpack.c.l.b16 %v148
    %v1412 = vunpack.c.l.b16 %v149
    %v1413 = vunpack.c.l.b16 %v150
    %v1414 = vunpack.c.l.b16 %v151
    %v1415 = vunpack.c.l.b16 %v152
    %v1416 = vunpack.c.l.b16 %v153
    %v1417 = vunpack.c.l.b16 %v154
    %v1418 = vunpack.c.l.b16 %v155
    %v1419 = vunpack.c.l.b16 %v156
    %v1420 = vunpack.c.l.b16 %v157
    %v1421 = vunpack.c.l.b16 %v158
    %v1422 = vunpack.c.l.b16 %v159
    %v1423 = vunpack.c.l.b16 %v160
    %v1424 = vunpack.c.l.b16 %v161
    %v1425 = vunpack.c.l.b16 %v162
    %v1426 = vunpack.c.l.b16 %v163
    %v1427 = vunpack.c.l.b16 %v164
    %v1428 = vunpack.c.l.b16 %v165
    %v1429 = vunpack.c.l.b16 %v166
    %v1430 = vunpack.c.l.b16 %v167
    %v1431 = vunpack.c.l.b16 %v168
    %v1432 = vunpack.c.l.b16 %v169
    %v1433 = vunpack.c.l.b16 %v170
    %v1434 = vunpack.c.l.b16 %v171
    %v1435 = vunpack.c.l.b16 %v172
    %v1436 = vunpack.c.l.b16 %v173
    %v1437 = vunpack.c.l.b16 %v174
    %v1438 = vunpack.c.l.b16 %v175
    %v1439 = vunpack.c.l.b16 %v176
    %v1440 = vunpack.c.l.b16 %v177
    %v1441 = vunpack.c.l.b16 %v178
    %v1442 = vunpack.c.l.b16 %v179
    %v1443 = vunpack.c.l.b16 %v180
    %v1444 = vunpack.c.l.b16 %v181
    %v1445 = vunpack.c.l.b16 %v182
    %v1446 = vunpack.c.l.b16 %v183
    %v1447 = vunpack.c.l.b16 %v184
    %v1448 = vunpack.c.l.b16 %v185
    %v1449 = vunpack.c.l.b16 %v186
    %v1450 = vunpack.c.l.b16 %v187
    %v1451 = vunpack.c.l.b16 %v188
    %v1452 = vunpack.c.l.b16 %v189
    %v1453 = vunpack.c.l.b16 %v190
    %v1454 = vunpack.c.l.b16 %v191
    %v1455 = vunpack.c.l.b16 %v192
    %v1456 = vunpack.c.l.b16 %v193
    %v1457 = vunpack.c.l.b16 %v194
    %v1458 = vunpack.c.l.b16 %v195
    %v1459 = vunpack.c.l.b16 %v196
    %v1460 = vunpack.c.l.b16 %v197
    %v1461 = vunpack.c.l.b16 %v198
    %v1462 = vunpack.c.l.b16 %v199
    %v1463 = vunpack.c.l.b16 %v200
    %v1464 = vunpack.c.l.b16 %v201
    %v1465 = vunpack.c.l.b16 %v202
    %v1466 = vunpack.c.l.b16 %v203
    %v1467 = vunpack.c.l.b16 %v204
    %v1468 = vunpack.c.l.b16 %v205
    %v1469 = vunpack.c.l.b16 %v206
    %v1470 = vunpack.c.l.b16 %v207
    %v1471 = vunpack.c.l.b16 %v208
    %v1472 = vunpack.c.l.b16 %v209
    %v1473 = vunpack.c.l.b16 %v210
    %v1474 = vunpack.c.l.b16 %v211
    %v1475 = vunpack.c.l.b16 %v212
    %v1476 = vunpack.c.l.b16 %v213
    %v1477 = vunpack.c.l.b16 %v214
    %v1478 = vunpack.c.l.b16 %v215
    %v1479 = vunpack.c.l.b16 %v216
    %v1480 = vunpack.c.l.b16 %v217
    %v1481 = vunpack.c.l.b16 %v218
    %v1482 = vunpack.c.l.b16 %v219
    %v1483 = vunpack.c.l.b16 %v220
    %v1484 = vunpack.c.l.b16 %v221
    %v1485 = vunpack.c.l.b16 %v222
    %v1486 = vunpack.c.l.b16 %v223
    %v1487 = vunpack.c.l.b16 %v224
    %v1488 = vunpack.c.l.b16 %v225
    %v1489 = vunpack.c.l.b16 %v226
    %v1490 = vunpack.c.l.b16 %v227
    %v1491 = vunpack.c.l.b16 %v228
    %v1492 = vunpack.c.l.b16 %v229
    %v1493 = vunpack.c.l.b16 %v230
    %v1494 = vunpack.c.l.b16 %v231
    %v1495 = vunpack.c.l.b16 %v232
    %v1496 = vunpack.c.l.b16 %v233
    %v1497 = vunpack.c.l.b16 %v234
    %v1498 = vunpack.c.l.b16 %v235
    %v1499 = vunpack.c.l.b16 %v236
    %v1500 = vunpack.c.l.b16 %v237
    %v1501 = vunpack.c.l.b16 %v238
    %v1502 = vunpack.c.l.b16 %v239
    %v1503 = vunpack.c.l.b16 %v240
    %v1504 = vunpack.c.l.b16 %v241
    %v1505 = vunpack.c.l.b16 %v242
    %v1506 = vunpack.c.l.b16 %v243
    %v1507 = vunpack.c.l.b16 %v244
    %v1508 = vunpack.c.l.b16 %v245
    %v1509 = vunpack.c.l.b16 %v246
    %v1510 = vunpack.c.l.b16 %v247
    %v1511 = vunpack.c.l.b16 %v248
    %v1512 = vunpack.c.l.b16 %v249
    %v1513 = vunpack.c.l.b16 %v250
    %v1514 = vunpack.c.l.b16 %v251
    %v1515 = vunpack.c.l.b16 %v252
    %v1516 = vunpack.c.l.b16 %v253
    %v1517 = vunpack.c.l.b16 %v254
    %v1518 = vunpack.c.l.b16 %v255
    %v1519 = vunpack.c.l.b16 %v256
    %v1520 = vunpack.c.l.b16 %v257
    %v1521 = vunpack.c.l.b16 %v258
    %v1522 = vunpack.c.l.b16 %v259
    %v1523 = vunpack.c.l.b16 %v260
    %v1524 = vunpack.c.l.b16 %v261
    %v1525 = vunpack.c.l.b16 %v262
    %v1526 = vunpack.c.l.b16 %v263
    %v1527 = vunpack.c.l.b16 %v264
    %v1528 = vunpack.c.l.b16 %v265
    %v1529 = vunpack.c.l.b16 %v266
    %v1530 = vunpack.c.l.b16 %v267
    %v1531 = vunpack.c.l.b16 %v268
    %v1532 = vunpack.c.l.b16 %v269
    %v1533 = vunpack.c.l.b16 %v270
    %v1534 = vunpack.c.l.b16 %v271
    %v1535 = vunpack.c.l.b16 %v272
    %v1536 = vunpack.c.l.b16 %v273
    %v1537 = vunpack.c.l.b16 %v274
    %v1538 = vunpack.c.l.b16 %v275
    %v1539 = vunpack.c.l.b16 %v276
    %v1540 = vunpack.c.l.b16 %v277
    %v1541 = vunpack.c.l.b16 %v278
    %v1542 = vunpack.c.l.b16 %v279
    %v1543 = vunpack.c.l.b16 %v280
    %v1544 = vunpack.c.l.b16 %v281
    %v1545 = vunpack.c.l.b16 %v282
    %v1546 = vunpack.c.l.b16 %v283
    %v1547 = vunpack.c.l.b16 %v284
    %v1548 = vunpack.c.l.b16 %v285
    %v1549 = vunpack.c.l.b16 %v286
    %v1550 = vunpack.c.l.b16 %v287
    %v1551 = vunpack.c.l.b16 %v288
    %v1552 = vunpack.c.l.b16 %v289
    %v1553 = vunpack.c.l.b16 %v290
    %v1554 = vunpack.c.l.b16 %v291
    %v1555 = vunpack.c.l.b16 %v292
    %v1556 = vunpack.c.l.b16 %v293
    %v1557 = vunpack.c.l.b16 %v294
    %v1558 = vunpack.c.l.b16 %v295
    %v1559 = vunpack.c.l.b16 %v296
    %v1560 = vunpack.c.l.b16 %v297
    %v1561 = vunpack.c.l.b16 %v298
    %v1562 = vunpack.c.l.b16 %v299
    %v1563 = vunpack.c.l.b16 %v300
    %v1564 = vunpack.c.l.b16 %v301
    %v1565 = vunpack.c.l.b16 %v302
    %v1566 = vunpack.c.l.b16 %v303
    %v1567 = vunpack.c.l.b16 %v304
    %v1568 = vunpack.c.l.b16 %v305
    %v1569 = vunpack.c.l.b16 %v306
    %v1570 = vunpack.c.l.b16 %v307
    %v1571 = vunpack.c.l.b16 %v308
    %v1572 = vunpack.c.l.b16 %v309
    %v1573 = vunpack.c.l.b16 %v310
    %v1574 = vunpack.c.l.b16 %v311
    %v1575 = vunpack.c.l.b16 %v312
    %v1576 = vunpack.c.l.b16 %v313
    %v1577 = vunpack.c.l.b16 %v314
    %v1578 = vunpack.c.l.b16 %v315
    %v1579 = vunpack.c.l.b16 %v316
    %v1580 = vunpack.c.l.b16 %v317
    %v1581 = vunpack.c.l.b16 %v318
    %v1582 = vunpack.c.l.b16 %v319
    %v1583 = vunpack.c.l.b16 %v320
    %v1584 = vunpack.c.l.b16 %v321
    %v1585 = vunpack.c.l.b16 %v322
    %v1586 = vunpack.c.l.b16 %v323
    %v1587 = vunpack.c.l.b16 %v324
    %v1588 = vunpack.c.l.b16 %v325
    %v1589 = vunpack.c.l.b16 %v326
    %v1590 = vunpack.c.l.b16 %v327
    %v1591 = vunpack.c.l.b16 %v328
    %v1592 = vunpack.c.l.b16 %v329
    %v1593 = vunpack.c.l.b16 %v330
    %v1594 = vunpack.c.l.b16 %v331
    %v1595 = vunpack.c.l.b16 %v332
    %v1596 = vunpack.c.l.b16 %v333
    %v1597 = vunpack.c.l.b16 %v334
    %v1598 = vunpack.c.l.b16 %v335
    %v1599 = vunpack.c.l.b16 %v336
    %v1600 = vunpack.c.l.b16 %v337
    %v1601 = vunpack.c.l.b16 %v338
    %v1602 = vunpack.c.l.b16 %v339
    %v1603 = vunpack.c.l.b16 %v340
    %v1604 = vunpack.c.l.b16 %v341
    %v1605 = vunpack.c.l.b16 %v342
    %v1606 = vunpack.c.l.b16 %v343
    %v1607 = vunpack.c.l.b16 %v344
    %v1608 = vunpack.c.l.b16 %v345
    %v1609 = vunpack.c.l.b16 %v346
    %v1610 = vunpack.c.l.b16 %v347
    %v1611 = vunpack.c.l.b16 %v348
    %v1612 = vunpack.c.l.b16 %v349
    %v1613 = vunpack.c.l.b16 %v350
    %v1614 = vunpack.c.l.b16 %v351
    %v1615 = vunpack.c.l.b16 %v352
    %v1616 = vunpack.c.l.b16 %v353
    %v1617 = vunpack.c.l.b16 %v354
    %v1618 = vunpack.c.l.b16 %v355
    %v1619 = vunpack.c.l.b16 %v356
    %v1620 = vunpack.c.l.b16 %v357
    %v1621 = vunpack.c.l.b16 %v358
    %v1622 = vunpack.c.l.b16 %v359
    %v1623 = vunpack.c.l.b16 %v360
    %v1624 = vunpack.c.l.b16 %v361
    %v1625 = vunpack.c.l.b16 %v362
    %v1626 = vunpack.c.l.b16 %v363
    %v1627 = vunpack.c.l.b16 %v364
    %v1628 = vunpack.c.l.b16 %v365
    %v1629 = vunpack.c.l.b16 %v366
    %v1630 = vunpack.c.l.b16 %v367
    %v1631 = vunpack.c.l.b16 %v368
    %v1632 = vunpack.c.l.b16 %v369
    %v1633 = vunpack.c.l.b16 %v370
    %v1634 = vunpack.c.l.b16 %v371
    %v1635 = vunpack.c.l.b16 %v372
    %v1636 = vunpack.c.l.b16 %v373
    %v1637 = vunpack.c.l.b16 %v374
    %v1638 = vunpack.c.l.b16 %v375
    %v1639 = vunpack.c.l.b16 %v376
    %v1640 = vunpack.c.l.b16 %v377
    %v1641 = vunpack.c.l.b16 %v378
    %v1642 = vunpack.c.l.b16 %v379
    %v1643 = vunpack.c.l.b16 %v380
    %v1644 = vunpack.c.l.b16 %v381
    %v1645 = vunpack.c.l.b16 %v382
    %v1646 = vunpack.c.l.b16 %v383
    %v1647 = vunpack.c.l.b16 %v384
    %v1648 = vunpack.c.l.b16 %v385
    %v1649 = vunpack.c.l.b16 %v386
    %v1650 = vunpack.c.l.b16 %v387
    %v1651 = vunpack.c.l.b16 %v388
    %v1652 = vunpack.c.l.b16 %v389
    %v1653 = vunpack.c.l.b16 %v390
    %v1654 = vunpack.c.l.b16 %v391
    %v1655 = vunpack.c.l.b16 %v392
    %v1656 = vunpack.c.l.b16 %v393
    %v1657 = vunpack.c.l.b16 %v394
    %v1658 = vunpack.c.l.b16 %v395
    %v1659 = vunpack.c.l.b16 %v396
    %v1660 = vunpack.c.l.b16 %v397
    %v1661 = vunpack.c.l.b16 %v398
    %v1662 = vunpack.c.l.b16 %v399
    %v1663 = vunpack.c.l.b16 %v400
    %v1664 = vunpack.c.l.b16 %v401
    %v1665 = vunpack.c.l.b16 %v402
    %v1666 = vunpack.c.l.b16 %v403
    %v1667 = vunpack.c.l.b16 %v404
    %v1668 = vunpack.c.l.b16 %v405
    %v1669 = vunpack.c.l.b16 %v406
    %v1670 = vunpack.c.l.b16 %v407
    %v1671 = vunpack.c.l.b16 %v408
    %v1672 = vunpack.c.l.b16 %v409
    %v1673 = vunpack.c.l.b16 %v410
    %v1674 = vunpack.c.l.b16 %v411
    %v1675 = vunpack.c.l.b16 %v412
    %v1676 = vunpack.c.l.b16 %v413
    %v1677 = vunpack.c.l.b16 %v414
    %v1678 = vunpack.c.l.b16 %v415
    %v1679 = vunpack.c.l.b16 %v416
    %v1680 = vunpack.c.l.b16 %v417
    %v1681 = vunpack.c.l.b16 %v418
    %v1682 = vunpack.c.l.b16 %v419
    %v1683 = vunpack.c.l.b16 %v420
    %v1684 = vunpack.c.l.b16 %v421
    %v1685 = vunpack.c.l.b16 %v422
    %v1686 = vunpack.c.l.b16 %v423
    %v1687 = vunpack.c.l.b16 %v424
    %v1688 = vunpack.c.l.b16 %v425
    %v1689 = vunpack.c.l.b16 %v426
    %v1690 = vunpack.c.l.b16 %v427
    %v1691 = vunpack.c.l.b16 %v428
    %v1692 = vunpack.c.l.b16 %v429
    %v1693 = vunpack.c.l.b16 %v430
    %v1694 = vunpack.c.l.b16 %v431
    %v1695 = vunpack.c.l.b16 %v432
    %v1696 = vunpack.c.l.b16 %v433
    %v1697 = vunpack.c.l.b16 %v434
    %v1698 = vunpack.c.l.b16 %v435
    %v1699 = vunpack.c.l.b16 %v436
    %v1700 = vunpack.c.l.b16 %v437
    %v1701 = vunpack.c.l.b16 %v438
    %v1702 = vunpack.c.l.b16 %v439
    %v1703 = vunpack.c.l.b16 %v440
    %v1704 = vunpack.c.l.b16 %v441
    %v1705 = vunpack.c.l.b16 %v442
    %v1706 = vunpack.c.l.b16 %v443
    %v1707 = vunpack.c.l.b16 %v444
    %v1708 = vunpack.c.l.b16 %v445
    %v1709 = vunpack.c.l.b16 %v446
    %v1710 = vunpack.c.l.b16 %v447
    %v1711 = vunpack.c.l.b16 %v448
    %v1712 = vunpack.c.l.b16 %v449
    %v1713 = vunpack.c.l.b16 %v450
    %v1714 = vunpack.c.l.b16 %v451
    %v1715 = vunpack.c.l.b16 %v452
    %v1716 = vunpack.c.l.b16 %v453
    %v1717 = vunpack.c.l.b16 %v454
    %v1718 = vunpack.c.l.b16 %v455
    %v1719 = vunpack.c.l.b16 %v456
    %v1720 = vunpack.c.l.b16 %v457
    %v1721 = vunpack.c.l.b16 %v458
    %v1722 = vunpack.c.l.b16 %v459
    %v1723 = vunpack.c.l.b16 %v460
    %v1724 = vunpack.c.l.b16 %v461
    %v1725 = vunpack.c.l.b16 %v462
    %v1726 = vunpack.c.l.b16 %v463
    %v1727 = vunpack.c.l.b16 %v464
    %v1728 = vunpack.c.l.b16 %v465
    %v1729 = vunpack.c.l.b16 %v466
    %v1730 = vunpack.c.l.b16 %v467
    %v1731 = vunpack.c.l.b16 %v468
    %v1732 = vunpack.c.l.b16 %v469
    %v1733 = vunpack.c.l.b16 %v470
    %v1734 = vunpack.c.l.b16 %v471
    %v1735 = vunpack.c.l.b16 %v472
    %v1736 = vunpack.c.l.b16 %v473
    %v1737 = vunpack.c.l.b16 %v474
    %v1738 = vunpack.c.l.b16 %v475
    %v1739 = vunpack.c.l.b16 %v476
    %v1740 = vunpack.c.l.b16 %v477
    %v1741 = vunpack.c.l.b16 %v478
    %v1742 = vunpack.c.l.b16 %v479
    %v1743 = vunpack.c.l.b16 %v480
    %v1744 = vunpack.c.l.b16 %v481
    %v1745 = vunpack.c.l.b16 %v482
    %v1746 = vunpack.c.l.b16 %v483
    %v1747 = vunpack.c.l.b16 %v484
    %v1748 = vunpack.c.l.b16 %v485
    %v1749 = vunpack.c.l.b16 %v486
    %v1750 = vunpack.c.l.b16 %v487
    %v1751 = vunpack.c.l.b16 %v488
    %v1752 = vunpack.c.l.b16 %v489
    %v1753 = vunpack.c.l.b16 %v490
    %v1754 = vunpack.c.l.b16 %v491
    %v1755 = vunpack.c.l.b16 %v492
    %v1756 = vunpack.c.l.b16 %v493
    %v1757 = vunpack.c.l.b16 %v494
    %v1758 = vunpack.c.l.b16 %v495
    %v1759 = vunpack.c.l.b16 %v496
    %v1760 = vunpack.c.l.b16 %v497
    %v1761 = vunpack.c.l.b16 %v498
    %v1762 = vunpack.c.l.b16 %v499
    %v1763 = vunpack.c.l.b16 %v500
    %v1764 = vunpack.c.l.b16 %v501
    %v1765 = vunpack.c.l.b16 %v502
    %v1766 = vunpack.c.l.b16 %v503
    %v1767 = vunpack.c.l.b16 %v504
    %v1768 = vunpack.c.l.b16 %v505
    %v1769 = vunpack.c.l.b16 %v506
    %v1770 = vunpack.c.l.b16 %v507
    %v1771 = vunpack.c.l.b16 %v508
    %v1772 = vunpack.c.l.b16 %v509
    %v1773 = vunpack.c.l.b16 %v510
    %v1774 = vunpack.c.l.b16 %v511
    %v1775 = vunpack.c.l.b16 %v512
    %v1776 = vunpack.c.l.b16 %v513
    %v1777 = vunpack.c.l.b16 %v514
    %v1778 = vunpack.c.l.b16 %v515
    %v1779 = vunpack.c.l.b16 %v516
    %v1780 = vunpack.c.l.b16 %v517
    %v1781 = vunpack.c.l.b16 %v518
    %v1782 = vunpack.c.l.b16 %v519
    %v1783 = vunpack.c.l.b16 %v520
    %v1784 = vunpack.c.l.b16 %v521
    %v1785 = vunpack.c.l.b16 %v522
    %v1786 = vunpack.c.l.b16 %v523
    %v1787 = vunpack.c.l.b16 %v524
    %v1788 = vunpack.c.l.b16 %v525
    %v1789 = vunpack.c.l.b16 %v526
    %v1790 = vunpack.c.l.b16 %v527
    %v1791 = vunpack.c.l.b16 %v528
    %v1792 = vunpack.c.l.b16 %v529
    %v1793 = vunpack.c.l.b16 %v530
    %v1794 = vunpack.c.l.b16 %v531
    %v1795 = vunpack.c.l.b16 %v532
    %v1796 = vunpack.c.l.b16 %v533
    %v1797 = vunpack.c.l.b16 %v534
    %v1798 = vunpack.c.l.b16 %v535
    %v1799 = vunpack.c.l.b16 %v536
    %v1800 = vunpack.c.l.b16 %v537
    %v1801 = vunpack.c.l.b16 %v538
    %v1802 = vunpack.c.l.b16 %v539
    %v1803 = vunpack.c.l.b16 %v540
    %v1804 = vunpack.c.l.b16 %v541
    %v1805 = vunpack.c.l.b16 %v542
    %v1806 = vunpack.c.l.b16 %v543
    %v1807 = vpack.c.b16 %v1296, %v1295
    %v1808 = vpack.c.b16 %v1298, %v1297
    %v1809 = vpack.c.b16 %v1300, %v1299
    %v1810 = vpack.c.b16 %v1302, %v1301
    %v1811 = vpack.c.b16 %v1304, %v1303
    %v1812 = vpack.c.b16 %v1306, %v1305
    %v1813 = vpack.c.b16 %v1308, %v1307
    %v1814 = vpack.c.b16 %v1310, %v1309
    %v1815 = vpack.c.b16 %v1312, %v1311
    %v1816 = vpack.c.b16 %v1314, %v1313
    %v1817 = vpack.c.b16 %v1316, %v1315
    %v1818 = vpack.c.b16 %v1318, %v1317
    %v1819 = vpack.c.b16 %v1320, %v1319
    %v1820 = vpack.c.b16 %v1322, %v1321
    %v1821 = vpack.c.b16 %v1324, %v1323
    %v1822 = vpack.c.b16 %v1326, %v1325
    %v1823 = vpack.c.b16 %v1328, %v1327
    %v1824 = vpack.c.b16 %v1330, %v1329
    %v1825 = vpack.c.b16 %v1332, %v1331
    %v1826 = vpack.c.b16 %v1334, %v1333
    %v1827 = vpack.c.b16 %v1336, %v1335
    %v1828 = vpack.c.b16 %v1338, %v1337
    %v1829 = vpack.c.b16 %v1340, %v1339
    %v1830 = vpack.c.b16 %v1342, %v1341
    %v1831 = vpack.c.b16 %v1344, %v1343
    %v1832 = vpack.c.b16 %v1346, %v1345
    %v1833 = vpack.c.b16 %v1348, %v1347
    %v1834 = vpack.c.b16 %v1350, %v1349
    %v1835 = vpack.c.b16 %v1352, %v1351
    %v1836 = vpack.c.b16 %v1354, %v1353
    %v1837 = vpack.c.b16 %v1356, %v1355
    %v1838 = vpack.c.b16 %v1358, %v1357
    %v1839 = vpack.c.b16 %v1360, %v1359
    %v1840 = vpack.c.b16 %v1362, %v1361
    %v1841 = vpack.c.b16 %v1364, %v1363
    %v1842 = vpack.c.b16 %v1366, %v1365
    %v1843 = vpack.c.b16 %v1368, %v1367
    %v1844 = vpack.c.b16 %v1370, %v1369
    %v1845 = vpack.c.b16 %v1372, %v1371
    %v1846 = vpack.c.b16 %v1374, %v1373
    %v1847 = vpack.c.b16 %v1376, %v1375
    %v1848 = vpack.c.b16 %v1378, %v1377
    %v1849 = vpack.c.b16 %v1380, %v1379
    %v1850 = vpack.c.b16 %v1382, %v1381
    %v1851 = vpack.c.b16 %v1384, %v1383
    %v1852 = vpack.c.b16 %v1386, %v1385
    %v1853 = vpack.c.b16 %v1388, %v1387
    %v1854 = vpack.c.b16 %v1390, %v1389
    %v1855 = vpack.c.b16 %v1392, %v1391
    %v1856 = vpack.c.b16 %v1394, %v1393
    %v1857 = vpack.c.b16 %v1396, %v1395
    %v1858 = vpack.c.b16 %v1398, %v1397
    %v1859 = vpack.c.b16 %v1400, %v1399
    %v1860 = vpack.c.b16 %v1402, %v1401
    %v1861 = vpack.c.b16 %v1404, %v1403
    %v1862 = vpack.c.b16 %v1406, %v1405
    %v1863 = vpack.c.b16 %v1408, %v1407
    %v1864 = vpack.c.b16 %v1410, %v1409
    %v1865 = vpack.c.b16 %v1412, %v1411
    %v1866 = vpack.c.b16 %v1414, %v1413
    %v1867 = vpack.c.b16 %v1416, %v1415
    %v1868 = vpack.c.b16 %v1418, %v1417
    %v1869 = vpack.c.b16 %v1420, %v1419
    %v1870 = vpack.c.b16 %v1422, %v1421
    %v1871 = vpack.c.b16 %v1424, %v1423
    %v1872 = vpack.c.b16 %v1426, %v1425
    %v1873 = vpack.c.b16 %v1428, %v1427
    %v1874 = vpack.c.b16 %v1430, %v1429
    %v1875 = vpack.c.b16 %v1432, %v1431
    %v1876 = vpack.c.b16 %v1434, %v1433
    %v1877 = vpack.c.b16 %v1436, %v1435
    %v1878 = vpack.c.b16 %v1438, %v1437
    %v1879 = vpack.c.b16 %v1440, %v1439
    %v1880 = vpack.c.b16 %v1442, %v1441
    %v1881 = vpack.c.b16 %v1444, %v1443
    %v1882 = vpack.c.b16 %v1446, %v1445
    %v1883 = vpack.c.b16 %v1448, %v1447
    %v1884 = vpack.c.b16 %v1450, %v1449
    %v1885 = vpack.c.b16 %v1452, %v1451
    %v1886 = vpack.c.b16 %v1454, %v1453
    %v1887 = vpack.c.b16 %v1456, %v1455
    %v1888 = vpack.c.b16 %v1458, %v1457
    %v1889 = vpack.c.b16 %v1460, %v1459
    %v1890 = vpack.c.b16 %v1462, %v1461
    %v1891 = vpack.c.b16 %v1464, %v1463
    %v1892 = vpack.c.b16 %v1466, %v1465
    %v1893 = vpack.c.b16 %v1468, %v1467
    %v1894 = vpack.c.b16 %v1470, %v1469
    %v1895 = vpack.c.b16 %v1472, %v1471
    %v1896 = vpack.c.b16 %v1474, %v1473
    %v1897 = vpack.c.b16 %v1476, %v1475
    %v1898 = vpack.c.b16 %v1478, %v1477
    %v1899 = vpack.c.b16 %v1480, %v1479
    %v1900 = vpack.c.b16 %v1482, %v1481
    %v1901 = vpack.c.b16 %v1484, %v1483
    %v1902 = vpack.c.b16 %v1486, %v1485
    %v1903 = vpack.c.b16 %v1488, %v1487
    %v1904 = vpack.c.b16 %v1490, %v1489
    %v1905 = vpack.c.b16 %v1492, %v1491
    %v1906 = vpack.c.b16 %v1494, %v1493
    %v1907 = vpack.c.b16 %v1496, %v1495
    %v1908 = vpack.c.b16 %v1498, %v1497
    %v1909 = vpack.c.b16 %v1500, %v1499
    %v1910 = vpack.c.b16 %v1502, %v1501
    %v1911 = vpack.c.b16 %v1504, %v1503
    %v1912 = vpack.c.b16 %v1506, %v1505
    %v1913 = vpack.c.b16 %v1508, %v1507
    %v1914 = vpack.c.b16 %v1510, %v1509
    %v1915 = vpack.c.b16 %v1512, %v1511
    %v1916 = vpack.c.b16 %v1514, %v1513
    %v1917 = vpack.c.b16 %v1516, %v1515
    %v1918 = vpack.c.b16 %v1518, %v1517
    %v1919 = vpack.c.b16 %v1520, %v1519
    %v1920 = vpack.c.b16 %v1522, %v1521
    %v1921 = vpack.c.b16 %v1524, %v1523
    %v1922 = vpack.c.b16 %v1526, %v1525
    %v1923 = vpack.c.b16 %v1528, %v1527
    %v1924 = vpack.c.b16 %v1530, %v1529
    %v1925 = vpack.c.b16 %v1532, %v1531
    %v1926 = vpack.c.b16 %v1534, %v1533
    %v1927 = vpack.c.b16 %v1536, %v1535
    %v1928 = vpack.c.b16 %v1538, %v1537
    %v1929 = vpack.c.b16 %v1540, %v1539
    %v1930 = vpack.c.b16 %v1542, %v1541
    %v1931 = vpack.c.b16 %v1544, %v1543
    %v1932 = vpack.c.b16 %v1546, %v1545
    %v1933 = vpack.c.b16 %v1548, %v1547
    %v1934 = vpack.c.b16 %v1550, %v1549
    %v1935 = vpack.c.b16 %v1552, %v1551
    %v1936 = vpack.c.b16 %v1554, %v1553
    %v1937 = vpack.c.b16 %v1556, %v1555
    %v1938 = vpack.c.b16 %v1558, %v1557
    %v1939 = vpack.c.b16 %v1560, %v1559
    %v1940 = vpack.c.b16 %v1562, %v1561
    %v1941 = vpack.c.b16 %v1564, %v1563
    %v1942 = vpack.c.b16 %v1566, %v1565
    %v1943 = vpack.c.b16 %v1568, %v1567
    %v1944 = vpack.c.b16 %v1570, %v1569
    %v1945 = vpack.c.b16 %v1572, %v1571
    %v1946 = vpack.c.b16 %v1574, %v1573
    %v1947 = vpack.c.b16 %v1576, %v1575
    %v1948 = vpack.c.b16 %v1578, %v1577
    %v1949 = vpack.c.b16 %v1580, %v1579
    %v1950 = vpack.c.b16 %v1582, %v1581
    %v1951 = vpack.c.b16 %v1584, %v1583
    %v1952 = vpack.c.b16 %v1586, %v1585
    %v1953 = vpack.c.b16 %v1588, %v1587
    %v1954 = vpack.c.b16 %v1590, %v1589
    %v1955 = vpack.c.b16 %v1592, %v1591
    %v1956 = vpack.c.b16 %v1594, %v1593
    %v1957 = vpack.c.b16 %v1596, %v1595
    %v1958 = vpack.c.b16 %v1598, %v1597
    %v1959 = vpack.c.b16 %v1600, %v1599
    %v1960 = vpack.c.b16 %v1602, %v1601
    %v1961 = vpack.c.b16 %v1604, %v1603
    %v1962 = vpack.c.b16 %v1606, %v1605
    %v1963 = vpack.c.b16 %v1608, %v1607
    %v1964 = vpack.c.b16 %v1610, %v1609
    %v1965 = vpack.c.b16 %v1612, %v1611
    %v1966 = vpack.c.b16 %v1614, %v1613
    %v1967 = vpack.c.b16 %v1616, %v1615
    %v1968 = vpack.c.b16 %v1618, %v1617
    %v1969 = vpack.c.b16 %v1620, %v1619
    %v1970 = vpack.c.b16 %v1622, %v1621
    %v1971 = vpack.c.b16 %v1624, %v1623
    %v1972 = vpack.c.b16 %v1626, %v1625
    %v1973 = vpack.c.b16 %v1628, %v1627
    %v1974 = vpack.c.b16 %v1630, %v1629
    %v1975 = vpack.c.b16 %v1632, %v1631
    %v1976 = vpack.c.b16 %v1634, %v1633
    %v1977 = vpack.c.b16 %v1636, %v1635
    %v1978 = vpack.c.b16 %v1638, %v1637
    %v1979 = vpack.c.b16 %v1640, %v1639
    %v1980 = vpack.c.b16 %v1642, %v1641
    %v1981 = vpack.c.b16 %v1644, %v1643
    %v1982 = vpack.c.b16 %v1646, %v1645
    %v1983 = vpack.c.b16 %v1648, %v1647
    %v1984 = vpack.c.b16 %v1650, %v1649
    %v1985 = vpack.c.b16 %v1652, %v1651
    %v1986 = vpack.c.b16 %v1654, %v1653
    %v1987 = vpack.c.b16 %v1656, %v1655
    %v1988 = vpack.c.b16 %v1658, %v1657
    %v1989 = vpack.c.b16 %v1660, %v1659
    %v1990 = vpack.c.b16 %v1662, %v1661
    %v1991 = vpack.c.b16 %v1664, %v1663
    %v1992 = vpack.c.b16 %v1666, %v1665
    %v1993 = vpack.c.b16 %v1668, %v1667
    %v1994 = vpack.c.b16 %v1670, %v1669
    %v1995 = vpack.c.b16 %v1672, %v1671
    %v1996 = vpack.c.b16 %v1674, %v1673
    %v1997 = vpack.c.b16 %v1676, %v1675
    %v1998 = vpack.c.b16 %v1678, %v1677
    %v1999 = vpack.c.b16 %v1680, %v1679
    %v2000 = vpack.c.b16 %v1682, %v1681
    %v2001 = vpack.c.b16 %v1684, %v1683
    %v2002 = vpack.c.b16 %v1686, %v1685
    %v2003 = vpack.c.b16 %v1688, %v1687
    %v2004 = vpack.c.b16 %v1690, %v1689
    %v2005 = vpack.c.b16 %v1692, %v1691
    %v2006 = vpack.c.b16 %v1694, %v1693
    %v2007 = vpack.c.b16 %v1696, %v1695
    %v2008 = vpack.c.b16 %v1698, %v1697
    %v2009 = vpack.c.b16 %v1700, %v1699
    %v2010 = vpack.c.b16 %v1702, %v1701
    %v2011 = vpack.c.b16 %v1704, %v1703
    %v2012 = vpack.c.b16 %v1706, %v1705
    %v2013 = vpack.c.b16 %v1708, %v1707
    %v2014 = vpack.c.b16 %v1710, %v1709
    %v2015 = vpack.c.b16 %v1712, %v1711
    %v2016 = vpack.c.b16 %v1714, %v1713
    %v2017 = vpack.c.b16 %v1716, %v1715
    %v2018 = vpack.c.b16 %v1718, %v1717
    %v2019 = vpack.c.b16 %v1720, %v1719
    %v2020 = vpack.c.b16 %v1722, %v1721
    %v2021 = vpack.c.b16 %v1724, %v1723
    %v2022 = vpack.c.b16 %v1726, %v1725
    %v2023 = vpack.c.b16 %v1728, %v1727
    %v2024 = vpack.c.b16 %v1730, %v1729
    %v2025 = vpack.c.b16 %v1732, %v1731
    %v2026 = vpack.c.b16 %v1734, %v1733
    %v2027 = vpack.c.b16 %v1736, %v1735
    %v2028 = vpack.c.b16 %v1738, %v1737
    %v2029 = vpack.c.b16 %v1740, %v1739
    %v2030 = vpack.c.b16 %v1742, %v1741
    %v2031 = vpack.c.b16 %v1744, %v1743
    %v2032 = vpack.c.b16 %v1746, %v1745
    %v2033 = vpack.c.b16 %v1748, %v1747
    %v2034 = vpack.c.b16 %v1750, %v1749
    %v2035 = vpack.c.b16 %v1752, %v1751
    %v2036 = vpack.c.b16 %v1754, %v1753
    %v2037 = vpack.c.b16 %v1756, %v1755
    %v2038 = vpack.c.b16 %v1758, %v1757
    %v2039 = vpack.c.b16 %v1760, %v1759
    %v2040 = vpack.c.b16 %v1762, %v1761
    %v2041 = vpack.c.b16 %v1764, %v1763
    %v2042 = vpack.c.b16 %v1766, %v1765
    %v2043 = vpack.c.b16 %v1768, %v1767
    %v2044 = vpack.c.b16 %v1770, %v1769
    %v2045 = vpack.c.b16 %v1772, %v1771
    %v2046 = vpack.c.b16 %v1774, %v1773
    %v2047 = vpack.c.b16 %v1776, %v1775
    %v2048 = vpack.c.b16 %v1778, %v1777
    %v2049 = vpack.c.b16 %v1780, %v1779
    %v2050 = vpack.c.b16 %v1782, %v1781
    %v2051 = vpack.c.b16 %v1784, %v1783
    %v2052 = vpack.c.b16 %v1786, %v1785
    %v2053 = vpack.c.b16 %v1788, %v1787
    %v2054 = vpack.c.b16 %v1790, %v1789
    %v2055 = vpack.c.b16 %v1792, %v1791
    %v2056 = vpack.c.b16 %v1794, %v1793
    %v2057 = vpack.c.b16 %v1796, %v1795
    %v2058 = vpack.c.b16 %v1798, %v1797
    %v2059 = vpack.c.b16 %v1800, %v1799
    %v2060 = vpack.c.b16 %v1802, %v1801
    %v2061 = vpack.c.b16 %v1804, %v1803
    %v2062 = vpack.c.b16 %v1806, %v1805
    %2319 = vmatprep.subr.bf16.mxu0 0
    %2320 = vmatpush1.bf16.msra.mxu0 %v1814
    %2321 = vmatprep.subr.bf16.mxu0 0
    %2322 = vmatpush1.bf16.msra.mxu0 %v1813
    %2323 = vmatprep.subr.bf16.mxu0 0
    %2324 = vmatpush1.bf16.msra.mxu0 %v1812
    %2325 = vmatprep.subr.bf16.mxu0 0
    %2326 = vmatpush1.bf16.msra.mxu0 %v1811
    %2327 = vmatprep.subr.bf16.mxu0 0
    %2328 = vmatpush1.bf16.msra.mxu0 %v1810
    %2329 = vmatprep.subr.bf16.mxu0 0
    %2330 = vmatpush1.bf16.msra.mxu0 %v1809
    %2331 = vmatprep.subr.bf16.mxu0 0
    %2332 = vmatpush1.bf16.msra.mxu0 %v1808
    %2333 = vmatprep.subr.bf16.mxu0 0
    %2334 = vmatpush1.bf16.msra.mxu0 %v1807
    %2335 = vmatprep.subr.bf16.mxu0 0
    %2336 = vmatpush2.bf16.msra.mxu0 %v1822
    %2337 = vmatprep.subr.bf16.mxu0 0
    %2338 = vmatpush2.bf16.msra.mxu0 %v1821
    %2339 = vmatprep.subr.bf16.mxu0 0
    %2340 = vmatpush2.bf16.msra.mxu0 %v1820
    %2341 = vmatprep.subr.bf16.mxu0 0
    %2342 = vmatpush2.bf16.msra.mxu0 %v1819
    %2343 = vmatprep.subr.bf16.mxu0 0
    %2344 = vmatpush2.bf16.msra.mxu0 %v1818
    %2345 = vmatprep.subr.bf16.mxu0 0
    %2346 = vmatpush2.bf16.msra.mxu0 %v1817
    %2347 = vmatprep.subr.bf16.mxu0 0
    %2348 = vmatpush2.bf16.msra.mxu0 %v1816
    %2349 = vmatprep.subr.bf16.mxu0 0
    %2350 = vmatpush2.bf16.msra.mxu0 %v1815
    %2351 = vmatprep.mubr.bf16.mxu0 %v592
    %2352 = vmatmul.mubr.bf16.gmra.mxu0 %v578
    %v2353 = vpop.f32.mrf.mxu0
    %v2354 = vadd.f32 %v549, %v2353
    %v2355 = vpop.f32.mrf.mxu0
    %v2356 = vpop.f32.mrf.mxu0
    %v2357 = vpop.f32.mrf.mxu0
    %2358 = vdwg.mxu0
    %2359 = vmatprep.subr.bf16.mxu0 0
    %2360 = vmatpush1.bf16.msra.mxu0 %v1830
    %2361 = vmatprep.subr.bf16.mxu0 0
    %2362 = vmatpush1.bf16.msra.mxu0 %v1829
    %2363 = vmatprep.subr.bf16.mxu0 0
    %2364 = vmatpush1.bf16.msra.mxu0 %v1828
    %2365 = vmatprep.subr.bf16.mxu0 0
    %2366 = vmatpush1.bf16.msra.mxu0 %v1827
    %2367 = vmatprep.subr.bf16.mxu0 0
    %2368 = vmatpush1.bf16.msra.mxu0 %v1826
    %2369 = vmatprep.subr.bf16.mxu0 0
    %2370 = vmatpush1.bf16.msra.mxu0 %v1825
    %2371 = vmatprep.subr.bf16.mxu0 0
    %2372 = vmatpush1.bf16.msra.mxu0 %v1824
    %2373 = vmatprep.subr.bf16.mxu0 0
    %2374 = vmatpush1.bf16.msra.mxu0 %v1823
    %2375 = vmatprep.subr.bf16.mxu0 0
    %2376 = vmatpush2.bf16.msra.mxu0 %v1838
    %2377 = vmatprep.subr.bf16.mxu0 0
    %2378 = vmatpush2.bf16.msra.mxu0 %v1837
    %2379 = vmatprep.subr.bf16.mxu0 0
    %2380 = vmatpush2.bf16.msra.mxu0 %v1836
    %2381 = vmatprep.subr.bf16.mxu0 0
    %2382 = vmatpush2.bf16.msra.mxu0 %v1835
    %2383 = vmatprep.subr.bf16.mxu0 0
    %2384 = vmatpush2.bf16.msra.mxu0 %v1834
    %2385 = vmatprep.subr.bf16.mxu0 0
    %2386 = vmatpush2.bf16.msra.mxu0 %v1833
    %2387 = vmatprep.subr.bf16.mxu0 0
    %2388 = vmatpush2.bf16.msra.mxu0 %v1832
    %2389 = vmatprep.subr.bf16.mxu0 0
    %2390 = vmatpush2.bf16.msra.mxu0 %v1831
    %2391 = vmatprep.mubr.bf16.mxu0 %v602
    %2392 = vmatmul.mubr.bf16.gmra.mxu0 %v600
    %v2393 = vpop.f32.mrf.mxu0
    %v2394 = vadd.f32 %v2354, %v2393
    %v2395 = vpop.f32.mrf.mxu0
    %v2396 = vpop.f32.mrf.mxu0
    %v2397 = vpop.f32.mrf.mxu0
    %2398 = vdwg.mxu0
    %2399 = vmatprep.subr.bf16.mxu0 0
    %2400 = vmatpush1.bf16.msra.mxu0 %v1846
    %2401 = vmatprep.subr.bf16.mxu0 0
    %2402 = vmatpush1.bf16.msra.mxu0 %v1845
    %2403 = vmatprep.subr.bf16.mxu0 0
    %2404 = vmatpush1.bf16.msra.mxu0 %v1844
    %2405 = vmatprep.subr.bf16.mxu0 0
    %2406 = vmatpush1.bf16.msra.mxu0 %v1843
    %2407 = vmatprep.subr.bf16.mxu0 0
    %2408 = vmatpush1.bf16.msra.mxu0 %v1842
    %2409 = vmatprep.subr.bf16.mxu0 0
    %2410 = vmatpush1.bf16.msra.mxu0 %v1841
    %2411 = vmatprep.subr.bf16.mxu0 0
    %2412 = vmatpush1.bf16.msra.mxu0 %v1840
    %2413 = vmatprep.subr.bf16.mxu0 0
    %2414 = vmatpush1.bf16.msra.mxu0 %v1839
    %2415 = vmatprep.subr.bf16.mxu0 0
    %2416 = vmatpush2.bf16.msra.mxu0 %v1854
    %2417 = vmatprep.subr.bf16.mxu0 0
    %2418 = vmatpush2.bf16.msra.mxu0 %v1853
    %2419 = vmatprep.subr.bf16.mxu0 0
    %2420 = vmatpush2.bf16.msra.mxu0 %v1852
    %2421 = vmatprep.subr.bf16.mxu0 0
    %2422 = vmatpush2.bf16.msra.mxu0 %v1851
    %2423 = vmatprep.subr.bf16.mxu0 0
    %2424 = vmatpush2.bf16.msra.mxu0 %v1850
    %2425 = vmatprep.subr.bf16.mxu0 0
    %2426 = vmatpush2.bf16.msra.mxu0 %v1849
    %2427 = vmatprep.subr.bf16.mxu0 0
    %2428 = vmatpush2.bf16.msra.mxu0 %v1848
    %2429 = vmatprep.subr.bf16.mxu0 0
    %2430 = vmatpush2.bf16.msra.mxu0 %v1847
    %2431 = vmatprep.mubr.bf16.mxu0 %v599
    %2432 = vmatmul.mubr.bf16.gmra.mxu0 %v585
    %v2433 = vpop.f32.mrf.mxu0
    %v2434 = vadd.f32 %v2394, %v2433
    %v2435 = vpop.f32.mrf.mxu0
    %v2436 = vpop.f32.mrf.mxu0
    %v2437 = vpop.f32.mrf.mxu0
    %2438 = vdwg.mxu0
    %2439 = vmatprep.subr.bf16.mxu0 0
    %2440 = vmatpush1.bf16.msra.mxu0 %v1862
    %2441 = vmatprep.subr.bf16.mxu0 0
    %2442 = vmatpush1.bf16.msra.mxu0 %v1861
    %2443 = vmatprep.subr.bf16.mxu0 0
    %2444 = vmatpush1.bf16.msra.mxu0 %v1860
    %2445 = vmatprep.subr.bf16.mxu0 0
    %2446 = vmatpush1.bf16.msra.mxu0 %v1859
    %2447 = vmatprep.subr.bf16.mxu0 0
    %2448 = vmatpush1.bf16.msra.mxu0 %v1858
    %2449 = vmatprep.subr.bf16.mxu0 0
    %2450 = vmatpush1.bf16.msra.mxu0 %v1857
    %2451 = vmatprep.subr.bf16.mxu0 0
    %2452 = vmatpush1.bf16.msra.mxu0 %v1856
    %2453 = vmatprep.subr.bf16.mxu0 0
    %2454 = vmatpush1.bf16.msra.mxu0 %v1855
    %2455 = vmatprep.subr.bf16.mxu0 0
    %2456 = vmatpush2.bf16.msra.mxu0 %v1870
    %2457 = vmatprep.subr.bf16.mxu0 0
    %2458 = vmatpush2.bf16.msra.mxu0 %v1869
    %2459 = vmatprep.subr.bf16.mxu0 0
    %2460 = vmatpush2.bf16.msra.mxu0 %v1868
    %2461 = vmatprep.subr.bf16.mxu0 0
    %2462 = vmatpush2.bf16.msra.mxu0 %v1867
    %2463 = vmatprep.subr.bf16.mxu0 0
    %2464 = vmatpush2.bf16.msra.mxu0 %v1866
    %2465 = vmatprep.subr.bf16.mxu0 0
    %2466 = vmatpush2.bf16.msra.mxu0 %v1865
    %2467 = vmatprep.subr.bf16.mxu0 0
    %2468 = vmatpush2.bf16.msra.mxu0 %v1864
    %2469 = vmatprep.subr.bf16.mxu0 0
    %2470 = vmatpush2.bf16.msra.mxu0 %v1863
    %2471 = vmatprep.mubr.bf16.mxu0 %v603
    %2472 = vmatmul.mubr.bf16.gmra.mxu0 %v601
    %v2473 = vpop.f32.mrf.mxu0
    %v2474 = vadd.f32 %v2434, %v2473
    %v2475 = vpop.f32.mrf.mxu0
    %v2476 = vpop.f32.mrf.mxu0
    %v2477 = vpop.f32.mrf.mxu0
    %2478 = vdwg.mxu0
    %2479 = vmatprep.subr.bf16.mxu0 0
    %2480 = vmatpush1.bf16.msra.mxu0 %v1878
    %2481 = vmatprep.subr.bf16.mxu0 0
    %2482 = vmatpush1.bf16.msra.mxu0 %v1877
    %2483 = vmatprep.subr.bf16.mxu0 0
    %2484 = vmatpush1.bf16.msra.mxu0 %v1876
    %2485 = vmatprep.subr.bf16.mxu0 0
    %2486 = vmatpush1.bf16.msra.mxu0 %v1875
    %2487 = vmatprep.subr.bf16.mxu0 0
    %2488 = vmatpush1.bf16.msra.mxu0 %v1874
    %2489 = vmatprep.subr.bf16.mxu0 0
    %2490 = vmatpush1.bf16.msra.mxu0 %v1873
    %2491 = vmatprep.subr.bf16.mxu0 0
    %2492 = vmatpush1.bf16.msra.mxu0 %v1872
    %2493 = vmatprep.subr.bf16.mxu0 0
    %2494 = vmatpush1.bf16.msra.mxu0 %v1871
    %2495 = vmatprep.subr.bf16.mxu0 0
    %2496 = vmatpush2.bf16.msra.mxu0 %v1886
    %2497 = vmatprep.subr.bf16.mxu0 0
    %2498 = vmatpush2.bf16.msra.mxu0 %v1885
    %2499 = vmatprep.subr.bf16.mxu0 0
    %2500 = vmatpush2.bf16.msra.mxu0 %v1884
    %2501 = vmatprep.subr.bf16.mxu0 0
    %2502 = vmatpush2.bf16.msra.mxu0 %v1883
    %2503 = vmatprep.subr.bf16.mxu0 0
    %2504 = vmatpush2.bf16.msra.mxu0 %v1882
    %2505 = vmatprep.subr.bf16.mxu0 0
    %2506 = vmatpush2.bf16.msra.mxu0 %v1881
    %2507 = vmatprep.subr.bf16.mxu0 0
    %2508 = vmatpush2.bf16.msra.mxu0 %v1880
    %2509 = vmatprep.subr.bf16.mxu0 0
    %2510 = vmatpush2.bf16.msra.mxu0 %v1879
    %2511 = vmatprep.mubr.bf16.mxu0 %v641
    %2512 = vmatmul.mubr.bf16.gmra.mxu0 %v627
    %v2513 = vpop.f32.mrf.mxu0
    %v2514 = vadd.f32 %v2474, %v2513
    %v2515 = vpop.f32.mrf.mxu0
    %v2516 = vpop.f32.mrf.mxu0
    %v2517 = vpop.f32.mrf.mxu0
    %2518 = vdwg.mxu0
    %2519 = vmatprep.subr.bf16.mxu0 0
    %2520 = vmatpush1.bf16.msra.mxu0 %v1894
    %2521 = vmatprep.subr.bf16.mxu0 0
    %2522 = vmatpush1.bf16.msra.mxu0 %v1893
    %2523 = vmatprep.subr.bf16.mxu0 0
    %2524 = vmatpush1.bf16.msra.mxu0 %v1892
    %2525 = vmatprep.subr.bf16.mxu0 0
    %2526 = vmatpush1.bf16.msra.mxu0 %v1891
    %2527 = vmatprep.subr.bf16.mxu0 0
    %2528 = vmatpush1.bf16.msra.mxu0 %v1890
    %2529 = vmatprep.subr.bf16.mxu0 0
    %2530 = vmatpush1.bf16.msra.mxu0 %v1889
    %2531 = vmatprep.subr.bf16.mxu0 0
    %2532 = vmatpush1.bf16.msra.mxu0 %v1888
    %2533 = vmatprep.subr.bf16.mxu0 0
    %2534 = vmatpush1.bf16.msra.mxu0 %v1887
    %2535 = vmatprep.subr.bf16.mxu0 0
    %2536 = vmatpush2.bf16.msra.mxu0 %v1902
    %2537 = vmatprep.subr.bf16.mxu0 0
    %2538 = vmatpush2.bf16.msra.mxu0 %v1901
    %2539 = vmatprep.subr.bf16.mxu0 0
    %2540 = vmatpush2.bf16.msra.mxu0 %v1900
    %2541 = vmatprep.subr.bf16.mxu0 0
    %2542 = vmatpush2.bf16.msra.mxu0 %v1899
    %2543 = vmatprep.subr.bf16.mxu0 0
    %2544 = vmatpush2.bf16.msra.mxu0 %v1898
    %2545 = vmatprep.subr.bf16.mxu0 0
    %2546 = vmatpush2.bf16.msra.mxu0 %v1897
    %2547 = vmatprep.subr.bf16.mxu0 0
    %2548 = vmatpush2.bf16.msra.mxu0 %v1896
    %2549 = vmatprep.subr.bf16.mxu0 0
    %2550 = vmatpush2.bf16.msra.mxu0 %v1895
    %2551 = vmatprep.mubr.bf16.mxu0 %v651
    %2552 = vmatmul.mubr.bf16.gmra.mxu0 %v649
    %v2553 = vpop.f32.mrf.mxu0
    %v2554 = vadd.f32 %v2514, %v2553
    %v2555 = vpop.f32.mrf.mxu0
    %v2556 = vpop.f32.mrf.mxu0
    %v2557 = vpop.f32.mrf.mxu0
    %2558 = vdwg.mxu0
    %2559 = vmatprep.subr.bf16.mxu0 0
    %2560 = vmatpush1.bf16.msra.mxu0 %v1910
    %2561 = vmatprep.subr.bf16.mxu0 0
    %2562 = vmatpush1.bf16.msra.mxu0 %v1909
    %2563 = vmatprep.subr.bf16.mxu0 0
    %2564 = vmatpush1.bf16.msra.mxu0 %v1908
    %2565 = vmatprep.subr.bf16.mxu0 0
    %2566 = vmatpush1.bf16.msra.mxu0 %v1907
    %2567 = vmatprep.subr.bf16.mxu0 0
    %2568 = vmatpush1.bf16.msra.mxu0 %v1906
    %2569 = vmatprep.subr.bf16.mxu0 0
    %2570 = vmatpush1.bf16.msra.mxu0 %v1905
    %2571 = vmatprep.subr.bf16.mxu0 0
    %2572 = vmatpush1.bf16.msra.mxu0 %v1904
    %2573 = vmatprep.subr.bf16.mxu0 0
    %2574 = vmatpush1.bf16.msra.mxu0 %v1903
    %2575 = vmatprep.subr.bf16.mxu0 0
    %2576 = vmatpush2.bf16.msra.mxu0 %v1918
    %2577 = vmatprep.subr.bf16.mxu0 0
    %2578 = vmatpush2.bf16.msra.mxu0 %v1917
    %2579 = vmatprep.subr.bf16.mxu0 0
    %2580 = vmatpush2.bf16.msra.mxu0 %v1916
    %2581 = vmatprep.subr.bf16.mxu0 0
    %2582 = vmatpush2.bf16.msra.mxu0 %v1915
    %2583 = vmatprep.subr.bf16.mxu0 0
    %2584 = vmatpush2.bf16.msra.mxu0 %v1914
    %2585 = vmatprep.subr.bf16.mxu0 0
    %2586 = vmatpush2.bf16.msra.mxu0 %v1913
    %2587 = vmatprep.subr.bf16.mxu0 0
    %2588 = vmatpush2.bf16.msra.mxu0 %v1912
    %2589 = vmatprep.subr.bf16.mxu0 0
    %2590 = vmatpush2.bf16.msra.mxu0 %v1911
    %2591 = vmatprep.mubr.bf16.mxu0 %v648
    %2592 = vmatmul.mubr.bf16.gmra.mxu0 %v634
    %v2593 = vpop.f32.mrf.mxu0
    %v2594 = vadd.f32 %v2554, %v2593
    %v2595 = vpop.f32.mrf.mxu0
    %v2596 = vpop.f32.mrf.mxu0
    %v2597 = vpop.f32.mrf.mxu0
    %2598 = vdwg.mxu0
    %2599 = vmatprep.subr.bf16.mxu0 0
    %2600 = vmatpush1.bf16.msra.mxu0 %v1926
    %2601 = vmatprep.subr.bf16.mxu0 0
    %2602 = vmatpush1.bf16.msra.mxu0 %v1925
    %2603 = vmatprep.subr.bf16.mxu0 0
    %2604 = vmatpush1.bf16.msra.mxu0 %v1924
    %2605 = vmatprep.subr.bf16.mxu0 0
    %2606 = vmatpush1.bf16.msra.mxu0 %v1923
    %2607 = vmatprep.subr.bf16.mxu0 0
    %2608 = vmatpush1.bf16.msra.mxu0 %v1922
    %2609 = vmatprep.subr.bf16.mxu0 0
    %2610 = vmatpush1.bf16.msra.mxu0 %v1921
    %2611 = vmatprep.subr.bf16.mxu0 0
    %2612 = vmatpush1.bf16.msra.mxu0 %v1920
    %2613 = vmatprep.subr.bf16.mxu0 0
    %2614 = vmatpush1.bf16.msra.mxu0 %v1919
    %2615 = vmatprep.subr.bf16.mxu0 0
    %2616 = vmatpush2.bf16.msra.mxu0 %v1934
    %2617 = vmatprep.subr.bf16.mxu0 0
    %2618 = vmatpush2.bf16.msra.mxu0 %v1933
    %2619 = vmatprep.subr.bf16.mxu0 0
    %2620 = vmatpush2.bf16.msra.mxu0 %v1932
    %2621 = vmatprep.subr.bf16.mxu0 0
    %2622 = vmatpush2.bf16.msra.mxu0 %v1931
    %2623 = vmatprep.subr.bf16.mxu0 0
    %2624 = vmatpush2.bf16.msra.mxu0 %v1930
    %2625 = vmatprep.subr.bf16.mxu0 0
    %2626 = vmatpush2.bf16.msra.mxu0 %v1929
    %2627 = vmatprep.subr.bf16.mxu0 0
    %2628 = vmatpush2.bf16.msra.mxu0 %v1928
    %2629 = vmatprep.subr.bf16.mxu0 0
    %2630 = vmatpush2.bf16.msra.mxu0 %v1927
    %2631 = vmatprep.mubr.bf16.mxu0 %v652
    %2632 = vmatmul.mubr.bf16.gmra.mxu0 %v650
    %v2633 = vpop.f32.mrf.mxu0
    %v2634 = vadd.f32 %v2594, %v2633
    %v2635 = vpop.f32.mrf.mxu0
    %v2636 = vpop.f32.mrf.mxu0
    %v2637 = vpop.f32.mrf.mxu0
    %2638 = vdwg.mxu0
    %2639 = vmatprep.subr.bf16.mxu0 0
    %2640 = vmatpush1.bf16.msra.mxu0 %v1942
    %2641 = vmatprep.subr.bf16.mxu0 0
    %2642 = vmatpush1.bf16.msra.mxu0 %v1941
    %2643 = vmatprep.subr.bf16.mxu0 0
    %2644 = vmatpush1.bf16.msra.mxu0 %v1940
    %2645 = vmatprep.subr.bf16.mxu0 0
    %2646 = vmatpush1.bf16.msra.mxu0 %v1939
    %2647 = vmatprep.subr.bf16.mxu0 0
    %2648 = vmatpush1.bf16.msra.mxu0 %v1938
    %2649 = vmatprep.subr.bf16.mxu0 0
    %2650 = vmatpush1.bf16.msra.mxu0 %v1937
    %2651 = vmatprep.subr.bf16.mxu0 0
    %2652 = vmatpush1.bf16.msra.mxu0 %v1936
    %2653 = vmatprep.subr.bf16.mxu0 0
    %2654 = vmatpush1.bf16.msra.mxu0 %v1935
    %2655 = vmatprep.subr.bf16.mxu0 0
    %2656 = vmatpush2.bf16.msra.mxu0 %v1950
    %2657 = vmatprep.subr.bf16.mxu0 0
    %2658 = vmatpush2.bf16.msra.mxu0 %v1949
    %2659 = vmatprep.subr.bf16.mxu0 0
    %2660 = vmatpush2.bf16.msra.mxu0 %v1948
    %2661 = vmatprep.subr.bf16.mxu0 0
    %2662 = vmatpush2.bf16.msra.mxu0 %v1947
    %2663 = vmatprep.subr.bf16.mxu0 0
    %2664 = vmatpush2.bf16.msra.mxu0 %v1946
    %2665 = vmatprep.subr.bf16.mxu0 0
    %2666 = vmatpush2.bf16.msra.mxu0 %v1945
    %2667 = vmatprep.subr.bf16.mxu0 0
    %2668 = vmatpush2.bf16.msra.mxu0 %v1944
    %2669 = vmatprep.subr.bf16.mxu0 0
    %2670 = vmatpush2.bf16.msra.mxu0 %v1943
    %2671 = vmatprep.mubr.bf16.mxu0 %v690
    %2672 = vmatmul.mubr.bf16.gmra.mxu0 %v676
    %v2673 = vpop.f32.mrf.mxu0
    %v2674 = vadd.f32 %v2634, %v2673
    %v2675 = vpop.f32.mrf.mxu0
    %v2676 = vpop.f32.mrf.mxu0
    %v2677 = vpop.f32.mrf.mxu0
    %2678 = vdwg.mxu0
    %2679 = vmatprep.subr.bf16.mxu0 0
    %2680 = vmatpush1.bf16.msra.mxu0 %v1958
    %2681 = vmatprep.subr.bf16.mxu0 0
    %2682 = vmatpush1.bf16.msra.mxu0 %v1957
    %2683 = vmatprep.subr.bf16.mxu0 0
    %2684 = vmatpush1.bf16.msra.mxu0 %v1956
    %2685 = vmatprep.subr.bf16.mxu0 0
    %2686 = vmatpush1.bf16.msra.mxu0 %v1955
    %2687 = vmatprep.subr.bf16.mxu0 0
    %2688 = vmatpush1.bf16.msra.mxu0 %v1954
    %2689 = vmatprep.subr.bf16.mxu0 0
    %2690 = vmatpush1.bf16.msra.mxu0 %v1953
    %2691 = vmatprep.subr.bf16.mxu0 0
    %2692 = vmatpush1.bf16.msra.mxu0 %v1952
    %2693 = vmatprep.subr.bf16.mxu0 0
    %2694 = vmatpush1.bf16.msra.mxu0 %v1951
    %2695 = vmatprep.subr.bf16.mxu0 0
    %2696 = vmatpush2.bf16.msra.mxu0 %v1966
    %2697 = vmatprep.subr.bf16.mxu0 0
    %2698 = vmatpush2.bf16.msra.mxu0 %v1965
    %2699 = vmatprep.subr.bf16.mxu0 0
    %2700 = vmatpush2.bf16.msra.mxu0 %v1964
    %2701 = vmatprep.subr.bf16.mxu0 0
    %2702 = vmatpush2.bf16.msra.mxu0 %v1963
    %2703 = vmatprep.subr.bf16.mxu0 0
    %2704 = vmatpush2.bf16.msra.mxu0 %v1962
    %2705 = vmatprep.subr.bf16.mxu0 0
    %2706 = vmatpush2.bf16.msra.mxu0 %v1961
    %2707 = vmatprep.subr.bf16.mxu0 0
    %2708 = vmatpush2.bf16.msra.mxu0 %v1960
    %2709 = vmatprep.subr.bf16.mxu0 0
    %2710 = vmatpush2.bf16.msra.mxu0 %v1959
    %2711 = vmatprep.mubr.bf16.mxu0 %v700
    %2712 = vmatmul.mubr.bf16.gmra.mxu0 %v698
    %v2713 = vpop.f32.mrf.mxu0
    %v2714 = vadd.f32 %v2674, %v2713
    %v2715 = vpop.f32.mrf.mxu0
    %v2716 = vpop.f32.mrf.mxu0
    %v2717 = vpop.f32.mrf.mxu0
    %2718 = vdwg.mxu0
    %2719 = vmatprep.subr.bf16.mxu0 0
    %2720 = vmatpush1.bf16.msra.mxu0 %v1974
    %2721 = vmatprep.subr.bf16.mxu0 0
    %2722 = vmatpush1.bf16.msra.mxu0 %v1973
    %2723 = vmatprep.subr.bf16.mxu0 0
    %2724 = vmatpush1.bf16.msra.mxu0 %v1972
    %2725 = vmatprep.subr.bf16.mxu0 0
    %2726 = vmatpush1.bf16.msra.mxu0 %v1971
    %2727 = vmatprep.subr.bf16.mxu0 0
    %2728 = vmatpush1.bf16.msra.mxu0 %v1970
    %2729 = vmatprep.subr.bf16.mxu0 0
    %2730 = vmatpush1.bf16.msra.mxu0 %v1969
    %2731 = vmatprep.subr.bf16.mxu0 0
    %2732 = vmatpush1.bf16.msra.mxu0 %v1968
    %2733 = vmatprep.subr.bf16.mxu0 0
    %2734 = vmatpush1.bf16.msra.mxu0 %v1967
    %2735 = vmatprep.subr.bf16.mxu0 0
    %2736 = vmatpush2.bf16.msra.mxu0 %v1982
    %2737 = vmatprep.subr.bf16.mxu0 0
    %2738 = vmatpush2.bf16.msra.mxu0 %v1981
    %2739 = vmatprep.subr.bf16.mxu0 0
    %2740 = vmatpush2.bf16.msra.mxu0 %v1980
    %2741 = vmatprep.subr.bf16.mxu0 0
    %2742 = vmatpush2.bf16.msra.mxu0 %v1979
    %2743 = vmatprep.subr.bf16.mxu0 0
    %2744 = vmatpush2.bf16.msra.mxu0 %v1978
    %2745 = vmatprep.subr.bf16.mxu0 0
    %2746 = vmatpush2.bf16.msra.mxu0 %v1977
    %2747 = vmatprep.subr.bf16.mxu0 0
    %2748 = vmatpush2.bf16.msra.mxu0 %v1976
    %2749 = vmatprep.subr.bf16.mxu0 0
    %2750 = vmatpush2.bf16.msra.mxu0 %v1975
    %2751 = vmatprep.mubr.bf16.mxu0 %v697
    %2752 = vmatmul.mubr.bf16.gmra.mxu0 %v683
    %v2753 = vpop.f32.mrf.mxu0
    %v2754 = vadd.f32 %v2714, %v2753
    %v2755 = vpop.f32.mrf.mxu0
    %v2756 = vpop.f32.mrf.mxu0
    %v2757 = vpop.f32.mrf.mxu0
    %2758 = vdwg.mxu0
    %2759 = vmatprep.subr.bf16.mxu0 0
    %2760 = vmatpush1.bf16.msra.mxu0 %v1990
    %2761 = vmatprep.subr.bf16.mxu0 0
    %2762 = vmatpush1.bf16.msra.mxu0 %v1989
    %2763 = vmatprep.subr.bf16.mxu0 0
    %2764 = vmatpush1.bf16.msra.mxu0 %v1988
    %2765 = vmatprep.subr.bf16.mxu0 0
    %2766 = vmatpush1.bf16.msra.mxu0 %v1987
    %2767 = vmatprep.subr.bf16.mxu0 0
    %2768 = vmatpush1.bf16.msra.mxu0 %v1986
    %2769 = vmatprep.subr.bf16.mxu0 0
    %2770 = vmatpush1.bf16.msra.mxu0 %v1985
    %2771 = vmatprep.subr.bf16.mxu0 0
    %2772 = vmatpush1.bf16.msra.mxu0 %v1984
    %2773 = vmatprep.subr.bf16.mxu0 0
    %2774 = vmatpush1.bf16.msra.mxu0 %v1983
    %2775 = vmatprep.subr.bf16.mxu0 0
    %2776 = vmatpush2.bf16.msra.mxu0 %v1998
    %2777 = vmatprep.subr.bf16.mxu0 0
    %2778 = vmatpush2.bf16.msra.mxu0 %v1997
    %2779 = vmatprep.subr.bf16.mxu0 0
    %2780 = vmatpush2.bf16.msra.mxu0 %v1996
    %2781 = vmatprep.subr.bf16.mxu0 0
    %2782 = vmatpush2.bf16.msra.mxu0 %v1995
    %2783 = vmatprep.subr.bf16.mxu0 0
    %2784 = vmatpush2.bf16.msra.mxu0 %v1994
    %2785 = vmatprep.subr.bf16.mxu0 0
    %2786 = vmatpush2.bf16.msra.mxu0 %v1993
    %2787 = vmatprep.subr.bf16.mxu0 0
    %2788 = vmatpush2.bf16.msra.mxu0 %v1992
    %2789 = vmatprep.subr.bf16.mxu0 0
    %2790 = vmatpush2.bf16.msra.mxu0 %v1991
    %2791 = vmatprep.mubr.bf16.mxu0 %v701
    %2792 = vmatmul.mubr.bf16.gmra.mxu0 %v699
    %v2793 = vpop.f32.mrf.mxu0
    %v2794 = vadd.f32 %v2754, %v2793
    %v2795 = vpop.f32.mrf.mxu0
    %v2796 = vpop.f32.mrf.mxu0
    %v2797 = vpop.f32.mrf.mxu0
    %2798 = vdwg.mxu0
    %2799 = vmatprep.subr.bf16.mxu0 0
    %2800 = vmatpush1.bf16.msra.mxu0 %v2006
    %2801 = vmatprep.subr.bf16.mxu0 0
    %2802 = vmatpush1.bf16.msra.mxu0 %v2005
    %2803 = vmatprep.subr.bf16.mxu0 0
    %2804 = vmatpush1.bf16.msra.mxu0 %v2004
    %2805 = vmatprep.subr.bf16.mxu0 0
    %2806 = vmatpush1.bf16.msra.mxu0 %v2003
    %2807 = vmatprep.subr.bf16.mxu0 0
    %2808 = vmatpush1.bf16.msra.mxu0 %v2002
    %2809 = vmatprep.subr.bf16.mxu0 0
    %2810 = vmatpush1.bf16.msra.mxu0 %v2001
    %2811 = vmatprep.subr.bf16.mxu0 0
    %2812 = vmatpush1.bf16.msra.mxu0 %v2000
    %2813 = vmatprep.subr.bf16.mxu0 0
    %2814 = vmatpush1.bf16.msra.mxu0 %v1999
    %2815 = vmatprep.subr.bf16.mxu0 0
    %2816 = vmatpush2.bf16.msra.mxu0 %v2014
    %2817 = vmatprep.subr.bf16.mxu0 0
    %2818 = vmatpush2.bf16.msra.mxu0 %v2013
    %2819 = vmatprep.subr.bf16.mxu0 0
    %2820 = vmatpush2.bf16.msra.mxu0 %v2012
    %2821 = vmatprep.subr.bf16.mxu0 0
    %2822 = vmatpush2.bf16.msra.mxu0 %v2011
    %2823 = vmatprep.subr.bf16.mxu0 0
    %2824 = vmatpush2.bf16.msra.mxu0 %v2010
    %2825 = vmatprep.subr.bf16.mxu0 0
    %2826 = vmatpush2.bf16.msra.mxu0 %v2009
    %2827 = vmatprep.subr.bf16.mxu0 0
    %2828 = vmatpush2.bf16.msra.mxu0 %v2008
    %2829 = vmatprep.subr.bf16.mxu0 0
    %2830 = vmatpush2.bf16.msra.mxu0 %v2007
    %2831 = vmatprep.mubr.bf16.mxu0 %v739
    %2832 = vmatmul.mubr.bf16.gmra.mxu0 %v725
    %v2833 = vpop.f32.mrf.mxu0
    %v2834 = vadd.f32 %v2794, %v2833
    %v2835 = vpop.f32.mrf.mxu0
    %v2836 = vpop.f32.mrf.mxu0
    %v2837 = vpop.f32.mrf.mxu0
    %2838 = vdwg.mxu0
    %2839 = vmatprep.subr.bf16.mxu0 0
    %2840 = vmatpush1.bf16.msra.mxu0 %v2022
    %2841 = vmatprep.subr.bf16.mxu0 0
    %2842 = vmatpush1.bf16.msra.mxu0 %v2021
    %2843 = vmatprep.subr.bf16.mxu0 0
    %2844 = vmatpush1.bf16.msra.mxu0 %v2020
    %2845 = vmatprep.subr.bf16.mxu0 0
    %2846 = vmatpush1.bf16.msra.mxu0 %v2019
    %2847 = vmatprep.subr.bf16.mxu0 0
    %2848 = vmatpush1.bf16.msra.mxu0 %v2018
    %2849 = vmatprep.subr.bf16.mxu0 0
    %2850 = vmatpush1.bf16.msra.mxu0 %v2017
    %2851 = vmatprep.subr.bf16.mxu0 0
    %2852 = vmatpush1.bf16.msra.mxu0 %v2016
    %2853 = vmatprep.subr.bf16.mxu0 0
    %2854 = vmatpush1.bf16.msra.mxu0 %v2015
    %2855 = vmatprep.subr.bf16.mxu0 0
    %2856 = vmatpush2.bf16.msra.mxu0 %v2030
    %2857 = vmatprep.subr.bf16.mxu0 0
    %2858 = vmatpush2.bf16.msra.mxu0 %v2029
    %2859 = vmatprep.subr.bf16.mxu0 0
    %2860 = vmatpush2.bf16.msra.mxu0 %v2028
    %2861 = vmatprep.subr.bf16.mxu0 0
    %2862 = vmatpush2.bf16.msra.mxu0 %v2027
    %2863 = vmatprep.subr.bf16.mxu0 0
    %2864 = vmatpush2.bf16.msra.mxu0 %v2026
    %2865 = vmatprep.subr.bf16.mxu0 0
    %2866 = vmatpush2.bf16.msra.mxu0 %v2025
    %2867 = vmatprep.subr.bf16.mxu0 0
    %2868 = vmatpush2.bf16.msra.mxu0 %v2024
    %2869 = vmatprep.subr.bf16.mxu0 0
    %2870 = vmatpush2.bf16.msra.mxu0 %v2023
    %2871 = vmatprep.mubr.bf16.mxu0 %v749
    %2872 = vmatmul.mubr.bf16.gmra.mxu0 %v747
    %v2873 = vpop.f32.mrf.mxu0
    %v2874 = vadd.f32 %v2834, %v2873
    %v2875 = vpop.f32.mrf.mxu0
    %v2876 = vpop.f32.mrf.mxu0
    %v2877 = vpop.f32.mrf.mxu0
    %2878 = vdwg.mxu0
    %2879 = vmatprep.subr.bf16.mxu0 0
    %2880 = vmatpush1.bf16.msra.mxu0 %v2038
    %2881 = vmatprep.subr.bf16.mxu0 0
    %2882 = vmatpush1.bf16.msra.mxu0 %v2037
    %2883 = vmatprep.subr.bf16.mxu0 0
    %2884 = vmatpush1.bf16.msra.mxu0 %v2036
    %2885 = vmatprep.subr.bf16.mxu0 0
    %2886 = vmatpush1.bf16.msra.mxu0 %v2035
    %2887 = vmatprep.subr.bf16.mxu0 0
    %2888 = vmatpush1.bf16.msra.mxu0 %v2034
    %2889 = vmatprep.subr.bf16.mxu0 0
    %2890 = vmatpush1.bf16.msra.mxu0 %v2033
    %2891 = vmatprep.subr.bf16.mxu0 0
    %2892 = vmatpush1.bf16.msra.mxu0 %v2032
    %2893 = vmatprep.subr.bf16.mxu0 0
    %2894 = vmatpush1.bf16.msra.mxu0 %v2031
    %2895 = vmatprep.subr.bf16.mxu0 0
    %2896 = vmatpush2.bf16.msra.mxu0 %v2046
    %2897 = vmatprep.subr.bf16.mxu0 0
    %2898 = vmatpush2.bf16.msra.mxu0 %v2045
    %2899 = vmatprep.subr.bf16.mxu0 0
    %2900 = vmatpush2.bf16.msra.mxu0 %v2044
    %2901 = vmatprep.subr.bf16.mxu0 0
    %2902 = vmatpush2.bf16.msra.mxu0 %v2043
    %2903 = vmatprep.subr.bf16.mxu0 0
    %2904 = vmatpush2.bf16.msra.mxu0 %v2042
    %2905 = vmatprep.subr.bf16.mxu0 0
    %2906 = vmatpush2.bf16.msra.mxu0 %v2041
    %2907 = vmatprep.subr.bf16.mxu0 0
    %2908 = vmatpush2.bf16.msra.mxu0 %v2040
    %2909 = vmatprep.subr.bf16.mxu0 0
    %2910 = vmatpush2.bf16.msra.mxu0 %v2039
    %2911 = vmatprep.mubr.bf16.mxu0 %v746
    %2912 = vmatmul.mubr.bf16.gmra.mxu0 %v732
    %v2913 = vpop.f32.mrf.mxu0
    %v2914 = vadd.f32 %v2874, %v2913
    %v2915 = vpop.f32.mrf.mxu0
    %v2916 = vpop.f32.mrf.mxu0
    %v2917 = vpop.f32.mrf.mxu0
    %2918 = vdwg.mxu0
    %2919 = vmatprep.subr.bf16.mxu0 0
    %2920 = vmatpush1.bf16.msra.mxu0 %v2054
    %2921 = vmatprep.subr.bf16.mxu0 0
    %2922 = vmatpush1.bf16.msra.mxu0 %v2053
    %2923 = vmatprep.subr.bf16.mxu0 0
    %2924 = vmatpush1.bf16.msra.mxu0 %v2052
    %2925 = vmatprep.subr.bf16.mxu0 0
    %2926 = vmatpush1.bf16.msra.mxu0 %v2051
    %2927 = vmatprep.subr.bf16.mxu0 0
    %2928 = vmatpush1.bf16.msra.mxu0 %v2050
    %2929 = vmatprep.subr.bf16.mxu0 0
    %2930 = vmatpush1.bf16.msra.mxu0 %v2049
    %2931 = vmatprep.subr.bf16.mxu0 0
    %2932 = vmatpush1.bf16.msra.mxu0 %v2048
    %2933 = vmatprep.subr.bf16.mxu0 0
    %2934 = vmatpush1.bf16.msra.mxu0 %v2047
    %2935 = vmatprep.subr.bf16.mxu0 0
    %2936 = vmatpush2.bf16.msra.mxu0 %v2062
    %2937 = vmatprep.subr.bf16.mxu0 0
    %2938 = vmatpush2.bf16.msra.mxu0 %v2061
    %2939 = vmatprep.subr.bf16.mxu0 0
    %2940 = vmatpush2.bf16.msra.mxu0 %v2060
    %2941 = vmatprep.subr.bf16.mxu0 0
    %2942 = vmatpush2.bf16.msra.mxu0 %v2059
    %2943 = vmatprep.subr.bf16.mxu0 0
    %2944 = vmatpush2.bf16.msra.mxu0 %v2058
    %2945 = vmatprep.subr.bf16.mxu0 0
    %2946 = vmatpush2.bf16.msra.mxu0 %v2057
    %2947 = vmatprep.subr.bf16.mxu0 0
    %2948 = vmatpush2.bf16.msra.mxu0 %v2056
    %2949 = vmatprep.subr.bf16.mxu0 0
    %2950 = vmatpush2.bf16.msra.mxu0 %v2055
    %2951 = vmatprep.mubr.bf16.mxu0 %v750
    %2952 = vmatmul.mubr.bf16.gmra.mxu0 %v748
    %v2953 = vpop.f32.mrf.mxu0
    %v2954 = vadd.f32 %v2914, %v2953
    %v2955 = vpop.f32.mrf.mxu0
    %v2956 = vpop.f32.mrf.mxu0
    %v2957 = vpop.f32.mrf.mxu0
    %2958 = vdwg.mxu0
    %v2959 = vmax.f32 %v2954, 0.0
    %v2960 = vpack.c.bf16 %v2959, %v2959
    %v2961 = vld [vmem:[%s3] sm:$0xf]
    %v2962 = vld [vmem:[%s3 + $0x4] sm:$0xf]
    %v2963 = vld [vmem:[%s3 + $0x8] sm:$0xf]
    %v2964 = vld [vmem:[%s3 + $0xc] sm:$0xf]
    %v2965 = vld [vmem:[%s3 + $0x10] sm:$0xf]
    %v2966 = vld [vmem:[%s3 + $0x14] sm:$0xf]
    %v2967 = vld [vmem:[%s3 + $0x18] sm:$0xf]
    %v2968 = vld [vmem:[%s3 + $0x1c] sm:$0xf]
    %v2969 = vld [vmem:[%s3 + $0x20] sm:$0xf]
    %v2970 = vld [vmem:[%s3 + $0x24] sm:$0xf]
    %v2971 = vld [vmem:[%s3 + $0x28] sm:$0xf]
    %v2972 = vld [vmem:[%s3 + $0x2c] sm:$0xf]
    %v2973 = vld [vmem:[%s3 + $0x30] sm:$0xf]
    %v2974 = vld [vmem:[%s3 + $0x34] sm:$0xf]
    %v2975 = vld [vmem:[%s3 + $0x38] sm:$0xf]
    %v2976 = vld [vmem:[%s3 + $0x3c] sm:$0xf]
    %v2977 = vld [vmem:[%s4] sm:$0x1]
    %v2979 = vlaneseq
    %v2980 = vshrl.u32 %v2979, 7
    %v2981 = vsub.s32 0, %v2980
    %v2982 = vrot.slane %v2977, %v2981
    %v3000 = vunpack.c.l.b16 %v2961
    %v3001 = vunpack.c.l.b16 %v2962
    %v3002 = vunpack.c.l.b16 %v2963
    %v3003 = vunpack.c.l.b16 %v2964
    %v3004 = vunpack.c.l.b16 %v2965
    %v3005 = vunpack.c.l.b16 %v2966
    %v3006 = vunpack.c.l.b16 %v2967
    %v3007 = vunpack.c.l.b16 %v2968
    %v3008 = vunpack.c.l.b16 %v2969
    %v3009 = vunpack.c.l.b16 %v2970
    %v3010 = vunpack.c.l.b16 %v2971
    %v3011 = vunpack.c.l.b16 %v2972
    %v3012 = vunpack.c.l.b16 %v2973
    %v3013 = vunpack.c.l.b16 %v2974
    %v3014 = vunpack.c.l.b16 %v2975
    %v3015 = vunpack.c.l.b16 %v2976
    %v3016 = vpack.c.b16 %v3001, %v3000
    %v3017 = vpack.c.b16 %v3003, %v3002
    %v3018 = vpack.c.b16 %v3005, %v3004
    %v3019 = vpack.c.b16 %v3007, %v3006
    %v3020 = vpack.c.b16 %v3009, %v3008
    %v3021 = vpack.c.b16 %v3011, %v3010
    %v3022 = vpack.c.b16 %v3013, %v3012
    %v3023 = vpack.c.b16 %v3015, %v3014
    %3032 = vmatprep.subr.bf16.mxu0 0
    %3033 = vmatpush1.bf16.msra.mxu0 %v3023
    %3034 = vmatprep.subr.bf16.mxu0 0
    %3035 = vmatpush1.bf16.msra.mxu0 %v3022
    %3036 = vmatprep.subr.bf16.mxu0 0
    %3037 = vmatpush1.bf16.msra.mxu0 %v3021
    %3038 = vmatprep.subr.bf16.mxu0 0
    %3039 = vmatpush1.bf16.msra.mxu0 %v3020
    %3040 = vmatprep.subr.bf16.mxu0 0
    %3041 = vmatpush1.bf16.msra.mxu0 %v3019
    %3042 = vmatprep.subr.bf16.mxu0 0
    %3043 = vmatpush1.bf16.msra.mxu0 %v3018
    %3044 = vmatprep.subr.bf16.mxu0 0
    %3045 = vmatpush1.bf16.msra.mxu0 %v3017
    %3046 = vmatprep.subr.bf16.mxu0 0
    %3047 = vmatpush1.bf16.msra.mxu0 %v3016
    %3048 = vmatprep.subr.bf16.mxu0 0
    %3049 = vmatpush2.bf16.msra.mxu0 0
    %3050 = vmatprep.subr.bf16.mxu0 0
    %3051 = vmatpush2.bf16.msra.mxu0 0
    %3052 = vmatprep.subr.bf16.mxu0 0
    %3053 = vmatpush2.bf16.msra.mxu0 0
    %3054 = vmatprep.subr.bf16.mxu0 0
    %3055 = vmatpush2.bf16.msra.mxu0 0
    %3056 = vmatprep.subr.bf16.mxu0 0
    %3057 = vmatpush2.bf16.msra.mxu0 0
    %3058 = vmatprep.subr.bf16.mxu0 0
    %3059 = vmatpush2.bf16.msra.mxu0 0
    %3060 = vmatprep.subr.bf16.mxu0 0
    %3061 = vmatpush2.bf16.msra.mxu0 0
    %3062 = vmatprep.subr.bf16.mxu0 0
    %3063 = vmatpush2.bf16.msra.mxu0 0
    %3064 = vmatprep.mubr.bf16.mxu0 0
    %3065 = vmatmul.mubr.bf16.gmra.mxu0 %v2960
    %v3066 = vpop.f32.mrf.mxu0
    %v3067 = vadd.f32 %v2982, %v3066
    %v3068 = vpop.f32.mrf.mxu0
    %v3069 = vpop.f32.mrf.mxu0
    %v3070 = vpop.f32.mrf.mxu0
    %3071 = vdwg.mxu0
    %v3072 = vmax.f32 %v3067, 0.0
    %v3073 = vpack.c.bf16 %v3072, %v3072
    %v3074 = vld [vmem:[%s5] sm:$0xf]
    %v3075 = vld [vmem:[%s5 + $0x4] sm:$0xf]
    %v3076 = vld [vmem:[%s5 + $0x8] sm:$0xf]
    %v3077 = vld [vmem:[%s5 + $0xc] sm:$0xf]
    %v3078 = vld [vmem:[%s5 + $0x10] sm:$0xf]
    %v3079 = vld [vmem:[%s5 + $0x14] sm:$0xf]
    %v3080 = vld [vmem:[%s5 + $0x18] sm:$0xf]
    %v3081 = vld [vmem:[%s5 + $0x1c] sm:$0xf]
    %v3082 = vld [vmem:[%s5 + $0x20] sm:$0xf]
    %v3083 = vld [vmem:[%s5 + $0x24] sm:$0xf]
    %v3084 = vld [vmem:[%s5 + $0x28] sm:$0xf]
    %v3085 = vld [vmem:[%s5 + $0x2c] sm:$0xf]
    %v3086 = vld [vmem:[%s5 + $0x30] sm:$0xf]
    %v3087 = vld [vmem:[%s5 + $0x34] sm:$0xf]
    %v3088 = vld [vmem:[%s5 + $0x38] sm:$0xf]
    %v3089 = vld [vmem:[%s5 + $0x3c] sm:$0xf]
    %v3090 = vld [vmem:[%s6] sm:$0x1]
    %v3092 = vlaneseq
    %v3093 = vshrl.u32 %v3092, 7
    %v3094 = vsub.s32 0, %v3093
    %v3095 = vrot.slane %v3090, %v3094
    %v3113 = vunpack.c.l.b16 %v3074
    %v3114 = vunpack.c.l.b16 %v3075
    %v3115 = vunpack.c.l.b16 %v3076
    %v3116 = vunpack.c.l.b16 %v3077
    %v3117 = vunpack.c.l.b16 %v3078
    %v3118 = vunpack.c.l.b16 %v3079
    %v3119 = vunpack.c.l.b16 %v3080
    %v3120 = vunpack.c.l.b16 %v3081
    %v3121 = vunpack.c.l.b16 %v3082
    %v3122 = vunpack.c.l.b16 %v3083
    %v3123 = vunpack.c.l.b16 %v3084
    %v3124 = vunpack.c.l.b16 %v3085
    %v3125 = vunpack.c.l.b16 %v3086
    %v3126 = vunpack.c.l.b16 %v3087
    %v3127 = vunpack.c.l.b16 %v3088
    %v3128 = vunpack.c.l.b16 %v3089
    %v3129 = vpack.c.b16 %v3114, %v3113
    %v3130 = vpack.c.b16 %v3116, %v3115
    %v3131 = vpack.c.b16 %v3118, %v3117
    %v3132 = vpack.c.b16 %v3120, %v3119
    %v3133 = vpack.c.b16 %v3122, %v3121
    %v3134 = vpack.c.b16 %v3124, %v3123
    %v3135 = vpack.c.b16 %v3126, %v3125
    %v3136 = vpack.c.b16 %v3128, %v3127
    %3145 = vmatprep.subr.bf16.mxu0 0
    %3146 = vmatpush1.bf16.msra.mxu0 %v3136
    %3147 = vmatprep.subr.bf16.mxu0 0
    %3148 = vmatpush1.bf16.msra.mxu0 %v3135
    %3149 = vmatprep.subr.bf16.mxu0 0
    %3150 = vmatpush1.bf16.msra.mxu0 %v3134
    %3151 = vmatprep.subr.bf16.mxu0 0
    %3152 = vmatpush1.bf16.msra.mxu0 %v3133
    %3153 = vmatprep.subr.bf16.mxu0 0
    %3154 = vmatpush1.bf16.msra.mxu0 %v3132
    %3155 = vmatprep.subr.bf16.mxu0 0
    %3156 = vmatpush1.bf16.msra.mxu0 %v3131
    %3157 = vmatprep.subr.bf16.mxu0 0
    %3158 = vmatpush1.bf16.msra.mxu0 %v3130
    %3159 = vmatprep.subr.bf16.mxu0 0
    %3160 = vmatpush1.bf16.msra.mxu0 %v3129
    %3161 = vmatprep.subr.bf16.mxu0 0
    %3162 = vmatpush2.bf16.msra.mxu0 0
    %3163 = vmatprep.subr.bf16.mxu0 0
    %3164 = vmatpush2.bf16.msra.mxu0 0
    %3165 = vmatprep.subr.bf16.mxu0 0
    %3166 = vmatpush2.bf16.msra.mxu0 0
    %3167 = vmatprep.subr.bf16.mxu0 0
    %3168 = vmatpush2.bf16.msra.mxu0 0
    %3169 = vmatprep.subr.bf16.mxu0 0
    %3170 = vmatpush2.bf16.msra.mxu0 0
    %3171 = vmatprep.subr.bf16.mxu0 0
    %3172 = vmatpush2.bf16.msra.mxu0 0
    %3173 = vmatprep.subr.bf16.mxu0 0
    %3174 = vmatpush2.bf16.msra.mxu0 0
    %3175 = vmatprep.subr.bf16.mxu0 0
    %3176 = vmatpush2.bf16.msra.mxu0 0
    %3177 = vmatprep.mubr.bf16.mxu0 0
    %3178 = vmatmul.mubr.bf16.gmra.mxu0 %v3073
    %v3179 = vpop.f32.mrf.mxu0
    %v3180 = vadd.f32 %v3095, %v3179
    %v3181 = vpop.f32.mrf.mxu0
    %v3182 = vpop.f32.mrf.mxu0
    %v3183 = vpop.f32.mrf.mxu0
    %3184 = vdwg.mxu0
    %3185 = vst [vmem:[#allocation2] sm:$0x3] %v3180
    // Predicated region
    $region30: #{net_forward.5} parent=1 // pred_check
      _
    $region31: #{net_forward.5} parent=1 // pred_check_branch
      %3187 = sbr.rel (0) target = $region33
    $region32: #{net_forward.5} parent=1 // pred_region
      %s3189 = ssub.s32 32, 32
      %3190 = vsyncadd [#allocation3], %s3189
      %s3192 = sshll.u32 [#allocation2], 4
      %s3193 = int_to_ptr.vmem [resolvable:$true] %s3192
      %3195 = dma.vmem_to_hbm [thread:$0]  %s3193, 32, %s7, [#allocation3]
    $region33: #{net_forward.5} parent=1 // pred_fallthru
      _
    // Predicated region
    $region34: #{net_forward.5} parent=1 // pred_check
      _
    $region35: #{net_forward.5} parent=1 // pred_check_branch
      %3197 = sbr.rel (0) target = $region37
    $region36: #{net_forward.5} parent=1 // pred_region
      %3198 = dma.done [#allocation3], 32
    $region37: #{net_forward.5} parent=1 // pred_fallthru
      _
    %3199 = vsyncpa [#allocation3], 1

</llo_original>
